<compile_context>
chip_gen: v5e
topology: v5e:2x2
jax: 0.10.0
libtpu: 0.0.40
codegen_flags: <defaults>
</compile_context>

<pallas_src>
import jax
import jax.numpy as jnp
from jax.experimental import pallas as pl
from jax.experimental.pallas import tpu as pltpu

STATE_DIM = 16
ACTION_DIM = 4
N_ATOMS = 51
HIDDEN = 256
MLP_OUT = 64
ATOM_PAD = 128           # atoms padded 51 -> 128 (one full vreg lane width)
PAD_NEG = -1e30          # f32 bias for padded atom lanes (exp -> 0 in softmax)


# --------------------------------------------------------------------------
# Fused kernel: MLP -> LSTM -> dueling heads + softmax
# --------------------------------------------------------------------------
def _fused_kernel(x_ref, w1, b1, w2, b2, w3, b3,
                  wih, whh, bl, h0_ref, c0_ref,
                  bv1, ba1, bhead,
                  wv1_hbm, wa1_hbm, wv2_hbm, wa2_hbm,
                  o_ref, hN_ref, cN_ref,
                  lo_ref, wv1_v, wa1_v, wv2_v, wa2_v, dma_sem):
    f32 = jnp.float32
    bf16 = jnp.bfloat16
    N = x_ref.shape[0]                 # T * B_pad rows, time-major
    Bp, H = h0_ref.shape
    T = N // Bp

    # ---- start head-weight DMA; it hides behind the MLP + recurrence -----
    head_copies = (
        pltpu.make_async_copy(wv1_hbm, wv1_v, dma_sem.at[0]),
        pltpu.make_async_copy(wa1_hbm, wa1_v, dma_sem.at[1]),
        pltpu.make_async_copy(wv2_hbm, wv2_v, dma_sem.at[2]),
        pltpu.make_async_copy(wa2_hbm, wa2_v, dma_sem.at[3]),
    )
    for cp in head_copies:
        cp.start()

    # ---- MLP on all T*B_pad rows (bf16 operands, f32 accumulate) ---------
    h = jnp.maximum(
        jnp.dot(x_ref[...].astype(bf16), w1[...],
                preferred_element_type=f32) + b1[...], 0.0)
    h = jnp.maximum(
        jnp.dot(h.astype(bf16), w2[...],
                preferred_element_type=f32) + b2[...], 0.0)
    feat = jnp.maximum(
        jnp.dot(h.astype(bf16), w3[...],
                preferred_element_type=f32) + b3[...], 0.0)              # (N,64)

    # ---- LSTM input projection hoisted out of the time loop --------------
    gx = jnp.dot(feat.astype(bf16), wih[...],
                 preferred_element_type=f32) + bl[...]                   # (N,4H)

    # ---- recurrence: fully unrolled, f32 state, bf16 h_t @ whh -----------
    h_t = h0_ref[...]
    c_t = c0_ref[...]
    for t in range(T):
        g = gx[t * Bp:(t + 1) * Bp, :] + jnp.dot(
            h_t.astype(bf16), whh[...], preferred_element_type=f32)      # (Bp,4H)
        # PyTorch LSTM gate order: i, f, g, o
        i_g = jax.nn.sigmoid(g[:, 0 * H:1 * H])
        f_g = jax.nn.sigmoid(g[:, 1 * H:2 * H])
        g_g = jnp.tanh(g[:, 2 * H:3 * H])
        o_g = jax.nn.sigmoid(g[:, 3 * H:4 * H])
        c_t = f_g * c_t + i_g * g_g
        h_t = o_g * jnp.tanh(c_t)
        lo_ref[t * Bp:(t + 1) * Bp, :] = h_t         # aligned (8,256) store
    hN_ref[...] = h_t
    cN_ref[...] = c_t

    # ---- wait for head weights, then dueling heads on all rows -----------
    for cp in head_copies:
        cp.wait()

    lf = lo_ref[...].astype(bf16)                                        # (N,H)
    hv = jnp.maximum(
        jnp.dot(lf, wv1_v[...], preferred_element_type=f32) + bv1[...], 0.0)
    ha = jnp.maximum(
        jnp.dot(lf, wa1_v[...], preferred_element_type=f32) + ba1[...], 0.0)
    # value replicated per action-group + mean-centered advantage; padded
    # atoms carry a -1e30 f32 bias: logits == value + adv - mean(adv) exactly.
    logits = (jnp.dot(hv.astype(bf16), wv2_v[...], preferred_element_type=f32)
              + jnp.dot(ha.astype(bf16), wa2_v[...], preferred_element_type=f32)
              + bhead[...])                                              # (N,A*128)

    # ---- per-action softmax, one full vreg lane-group per action ----------
    A = logits.shape[1] // ATOM_PAD
    for a in range(A):
        ga = logits[:, a * ATOM_PAD:(a + 1) * ATOM_PAD]
        m = jnp.max(ga, axis=-1, keepdims=True)
        e = jnp.exp(ga - m)
        s = jnp.sum(e, axis=-1, keepdims=True)
        inv = pl.reciprocal(s, approx=True)
        inv = inv * (2.0 - s * inv)              # one Newton step (exact-ish)
        o_ref[:, a * ATOM_PAD:(a + 1) * ATOM_PAD] = e * inv


def _full_spec(a):
    # Whole-array block (last two block dims == full array dims -> legal).
    return pl.BlockSpec(a.shape, lambda i, nd=a.ndim: (0,) * nd)


# --------------------------------------------------------------------------
# Forward wrapper
# --------------------------------------------------------------------------
def rdqn_lstm_forward(state, params, hidden=None):
    B, T, _ = state.shape
    Bp = ((B + 7) // 8) * 8                        # sublane-aligned batch
    N = T * Bp

    # Time-major rows, batch zero-padded to Bp (padded rows are independent
    # in the LSTM recurrence and are dropped after the kernel).
    x_tm = jnp.transpose(state, (1, 0, 2))                       # (T, B, 16)
    x_tm = jnp.pad(x_tm, ((0, 0), (0, Bp - B), (0, 0))).reshape(N, STATE_DIM)

    if hidden is None:
        h0 = jnp.zeros((Bp, HIDDEN), jnp.float32)
        c0 = jnp.zeros((Bp, HIDDEN), jnp.float32)
    else:
        h0 = jnp.pad(hidden[0].reshape(B, HIDDEN), ((0, Bp - B), (0, 0)))
        c0 = jnp.pad(hidden[1].reshape(B, HIDDEN), ((0, Bp - B), (0, 0)))

    vmem_inputs = ((x_tm,) + params["mlp"] + params["lstm"] + (h0, c0)
                   + params["head_small"])
    any_inputs = params["head_big"]

    in_specs = ([_full_spec(a) for a in vmem_inputs]
                + [pl.BlockSpec(memory_space=pl.ANY) for _ in any_inputs])

    q_pad, h_n, c_n = pl.pallas_call(
        _fused_kernel,
        grid=(1,),
        in_specs=in_specs,
        out_specs=[
            pl.BlockSpec((N, ACTION_DIM * ATOM_PAD), lambda i: (0, 0)),
            pl.BlockSpec((Bp, HIDDEN), lambda i: (0, 0)),
            pl.BlockSpec((Bp, HIDDEN), lambda i: (0, 0)),
        ],
        out_shape=(
            jax.ShapeDtypeStruct((N, ACTION_DIM * ATOM_PAD), jnp.float32),
            jax.ShapeDtypeStruct((Bp, HIDDEN), jnp.float32),
            jax.ShapeDtypeStruct((Bp, HIDDEN), jnp.float32),
        ),
        scratch_shapes=[
            pltpu.VMEM((N, HIDDEN), jnp.float32),                       # lstm out
            pltpu.VMEM((HIDDEN, HIDDEN), jnp.bfloat16),                 # wv1
            pltpu.VMEM((HIDDEN, HIDDEN), jnp.bfloat16),                 # wa1
            pltpu.VMEM((HIDDEN, ACTION_DIM * ATOM_PAD), jnp.bfloat16),  # wv2p
            pltpu.VMEM((HIDDEN, ACTION_DIM * ATOM_PAD), jnp.bfloat16),  # wa2c
            pltpu.SemaphoreType.DMA((4,)),
        ],
        compiler_params=pltpu.CompilerParams(
            dimension_semantics=("arbitrary",)),
    )(*(vmem_inputs + any_inputs))

    # Tiny post-processing: drop padded atoms / padded batch rows, go back
    # to batch-major.
    q = q_pad.reshape(T, Bp, ACTION_DIM, ATOM_PAD)[:, :B, :, :N_ATOMS]
    q_dist = jnp.transpose(q, (1, 0, 2, 3))                 # (B, T, A, n_atoms)
    return q_dist, (h_n[:B][None], c_n[:B][None])


# --------------------------------------------------------------------------
# Parameter initialization (PyTorch-equivalent raw params) + kernel packing
# --------------------------------------------------------------------------
def _linear_params(key, fan_in, fan_out):
    kw, kb = jax.random.split(key)
    bound = 1.0 / jnp.sqrt(float(fan_in))
    w = jax.random.uniform(kw, (fan_in, fan_out), jnp.float32, -bound, bound)
    b = jax.random.uniform(kb, (1, fan_out), jnp.float32, -bound, bound)
    return w, b


def init_params(key):
    keys = jax.random.split(key, 8)
    # MLP
    w1, b1 = _linear_params(keys[0], STATE_DIM, 256)
    w2, b2 = _linear_params(keys[1], 256, 128)
    w3, b3 = _linear_params(keys[2], 128, MLP_OUT)
    # LSTM (PyTorch-style uniform(-1/sqrt(H), 1/sqrt(H)); b = b_ih + b_hh)
    bound = 1.0 / jnp.sqrt(float(HIDDEN))
    kih, khh, kb1, kb2 = jax.random.split(keys[3], 4)
    wih = jax.random.uniform(kih, (MLP_OUT, 4 * HIDDEN), jnp.float32, -bound, bound)
    whh = jax.random.uniform(khh, (HIDDEN, 4 * HIDDEN), jnp.float32, -bound, bound)
    b_ih = jax.random.uniform(kb1, (1, 4 * HIDDEN), jnp.float32, -bound, bound)
    b_hh = jax.random.uniform(kb2, (1, 4 * HIDDEN), jnp.float32, -bound, bound)
    # Heads (NoisyLinear -> deterministic mu weights, eval-mode)
    wv1, bv1 = _linear_params(keys[4], HIDDEN, HIDDEN)
    wv2, bv2 = _linear_params(keys[5], HIDDEN, N_ATOMS)
    wa1, ba1 = _linear_params(keys[6], HIDDEN, HIDDEN)
    wa2, ba2 = _linear_params(keys[7], HIDDEN, ACTION_DIM * N_ATOMS)
    return {
        "mlp": (w1, b1, w2, b2, w3, b3),
        "lstm": (wih, whh, b_ih + b_hh),
        "value": (wv1, bv1, wv2, bv2),
        "adv": (wa1, ba1, wa2, ba2),
    }


def pack_params(raw):
    """Kernel-ready params: weights pre-cast to bf16 (f32 biases), dueling
    mean folded into the (linear) final advantage layer, value weights
    replicated per action-group, atoms padded 51->128 with a -1e30 f32 bias
    on padded lanes for a lane-dense, vreg-aligned (N, 512) head output."""
    A, K, GA = ACTION_DIM, N_ATOMS, ATOM_PAD
    assert K <= GA
    wv1, bv1, wv2, bv2 = raw["value"]
    wa1, ba1, wa2, ba2 = raw["adv"]
    H = wv1.shape[0]

    wa2_r = wa2.reshape(H, A, K)
    ba2_r = ba2.reshape(1, A, K)
    wa2_c = wa2_r - jnp.mean(wa2_r, axis=1, keepdims=True)   # adv - mean(adv)
    ba2_c = ba2_r - jnp.mean(ba2_r, axis=1, keepdims=True)

    wv2_r = jnp.broadcast_to(wv2[:, None, :], (H, A, K))     # value per group
    bv2_r = jnp.broadcast_to(bv2.reshape(1, 1, K), (1, A, K))

    def pad_atoms(x, fill=0.0):
        pad_width = [(0, 0)] * (x.ndim - 1) + [(0, GA - K)]
        xp = jnp.pad(x, pad_width, constant_values=fill)
        return xp.reshape(x.shape[0], A * GA)

    bf = lambda a: a.astype(jnp.bfloat16)
    w1, b1, w2, b2, w3, b3 = raw["mlp"]
    wih, whh, bl = raw["lstm"]

    return {
        "mlp": (bf(w1), b1, bf(w2), b2, bf(w3), b3),
        "lstm": (bf(wih), bf(whh), bl),
        # small head params, auto-DMA'd to VMEM (bhead stays f32: PAD_NEG)
        "head_small": (bv1, ba1, pad_atoms(bv2_r + ba2_c, fill=PAD_NEG)),
        # big head slabs, left in HBM (pl.ANY) and fetched by manual DMA
        "head_big": (bf(wv1), bf(wa1), bf(pad_atoms(wv2_r)), bf(pad_atoms(wa2_c))),
    }


# --------------------------------------------------------------------------
# Pure-JAX f32 reference (uses raw, un-packed params) for numerical checking
# --------------------------------------------------------------------------
def reference_forward(state, raw):
    B, T, _ = state.shape
    w1, b1, w2, b2, w3, b3 = raw["mlp"]
    x = state.reshape(-1, STATE_DIM)
    h = jax.nn.relu(x @ w1 + b1)
    h = jax.nn.relu(h @ w2 + b2)
    h = jax.nn.relu(h @ w3 + b3)
    feat = h.reshape(B, T, MLP_OUT)

    wih, whh, b = raw["lstm"]
    H = HIDDEN
    hh = jnp.zeros((B, H), jnp.float32)
    cc = jnp.zeros((B, H), jnp.float32)
    outs = []
    for t in range(T):
        gates = feat[:, t] @ wih + hh @ whh + b
        i_g = jax.nn.sigmoid(gates[:, :H])
        f_g = jax.nn.sigmoid(gates[:, H:2 * H])
        g_g = jnp.tanh(gates[:, 2 * H:3 * H])
        o_g = jax.nn.sigmoid(gates[:, 3 * H:])
        cc = f_g * cc + i_g * g_g
        hh = o_g * jnp.tanh(cc)
        outs.append(hh)
    lstm_out = jnp.stack(outs, axis=1)                        # (B, T, H)
    flat = lstm_out.reshape(-1, H)

    wv1, bv1, wv2, bv2 = raw["value"]
    wa1, ba1, wa2, ba2 = raw["adv"]
    value = (jax.nn.relu(flat @ wv1 + bv1) @ wv2 + bv2)[:, None, :]
    adv = (jax.nn.relu(flat @ wa1 + ba1) @ wa2 + ba2).reshape(
        -1, ACTION_DIM, N_ATOMS)
    q = value + adv - adv.mean(axis=1, keepdims=True)
    q = jax.nn.softmax(q, axis=-1)
    return q.reshape(B, T, ACTION_DIM, N_ATOMS), (hh[None], cc[None])


if __name__ == "__main__":
    key = jax.random.PRNGKey(0)
    k_params, k_state = jax.random.split(key)

    B, T = 2, 8
    state = jax.random.normal(k_state, (B, T, STATE_DIM), jnp.float32)
    raw_params = init_params(k_params)
    params = pack_params(raw_params)

    fwd = jax.jit(rdqn_lstm_forward)
    q_dist, (h_n, c_n) = fwd(state, params)
    q_dist = jax.block_until_ready(q_dist)
    h_n = jax.block_until_ready(h_n)
    c_n = jax.block_until_ready(c_n)

    assert q_dist.shape == (B, T, ACTION_DIM, N_ATOMS)
    assert h_n.shape == (1, B, HIDDEN) and c_n.shape == (1, B, HIDDEN)
    # Distributions must sum to 1 over atoms (Newton-refined reciprocal).
    sums = jnp.sum(q_dist, axis=-1)
    assert bool(jnp.all(jnp.abs(sums - 1.0) < 2e-3)), "softmax not normalized"

    ref_q, (ref_h, ref_c) = reference_forward(state, raw_params)
    # Tolerances re-baselined for bf16 MXU operands (f32 accumulation); the
    # recurrent state compounds bf16 error over T=8 steps.
    assert bool(jnp.allclose(q_dist, ref_q, atol=2e-3, rtol=2e-2)), \
        float(jnp.max(jnp.abs(q_dist - ref_q)))
    assert bool(jnp.allclose(h_n, ref_h, atol=5e-3, rtol=2e-2)), \
        float(jnp.max(jnp.abs(h_n - ref_h)))
    assert bool(jnp.allclose(c_n, ref_c, atol=5e-3, rtol=2e-2)), \
        float(jnp.max(jnp.abs(c_n - ref_c)))

    print("KERNEL_OK")
</pallas_src>

<mosaic_0001>
module attributes {stable_mosaic.version = 11 : i64} {
  func.func @_fused_kernel(%arg0: i32, %arg1: memref<64x16xf32, #tpu.memory_space<vmem>>, %arg2: memref<16x256xbf16, #tpu.memory_space<vmem>>, %arg3: memref<1x256xf32, #tpu.memory_space<vmem>>, %arg4: memref<256x128xbf16, #tpu.memory_space<vmem>>, %arg5: memref<1x128xf32, #tpu.memory_space<vmem>>, %arg6: memref<128x64xbf16, #tpu.memory_space<vmem>>, %arg7: memref<1x64xf32, #tpu.memory_space<vmem>>, %arg8: memref<64x1024xbf16, #tpu.memory_space<vmem>>, %arg9: memref<256x1024xbf16, #tpu.memory_space<vmem>>, %arg10: memref<1x1024xf32, #tpu.memory_space<vmem>>, %arg11: memref<8x256xf32, #tpu.memory_space<vmem>>, %arg12: memref<8x256xf32, #tpu.memory_space<vmem>>, %arg13: memref<1x256xf32, #tpu.memory_space<vmem>>, %arg14: memref<1x256xf32, #tpu.memory_space<vmem>>, %arg15: memref<1x512xf32, #tpu.memory_space<vmem>>, %arg16: memref<256x256xbf16, #tpu.memory_space<any>>, %arg17: memref<256x256xbf16, #tpu.memory_space<any>>, %arg18: memref<256x512xbf16, #tpu.memory_space<any>>, %arg19: memref<256x512xbf16, #tpu.memory_space<any>>, %arg20: memref<64x512xf32, #tpu.memory_space<vmem>>, %arg21: memref<8x256xf32, #tpu.memory_space<vmem>>, %arg22: memref<8x256xf32, #tpu.memory_space<vmem>>, %arg23: memref<64x256xf32, #tpu.memory_space<vmem>>, %arg24: memref<256x256xbf16, #tpu.memory_space<vmem>>, %arg25: memref<256x256xbf16, #tpu.memory_space<vmem>>, %arg26: memref<256x512xbf16, #tpu.memory_space<vmem>>, %arg27: memref<256x512xbf16, #tpu.memory_space<vmem>>, %arg28: memref<4x!tpu.dma_semaphore, #tpu.memory_space<semaphore_mem>>) attributes {dimension_semantics = [#tpu.dimension_semantics<arbitrary>], iteration_bounds = array<i64: 1>, scalar_prefetch = 0 : i64, scratch_operands = 6 : i64, tpu.core_type = #tpu.core_type<tc>, window_params = [{pipeline_mode = #tpu.pipeline_mode<synchronous>, transform_indices = @transform_0, window_bounds = array<i64: 64, 16>}, {pipeline_mode = #tpu.pipeline_mode<synchronous>, transform_indices = @transform_1, window_bounds = array<i64: 16, 256>}, {pipeline_mode = #tpu.pipeline_mode<synchronous>, transform_indices = @transform_2, window_bounds = array<i64: 1, 256>}, {pipeline_mode = #tpu.pipeline_mode<synchronous>, transform_indices = @transform_3, window_bounds = array<i64: 256, 128>}, {pipeline_mode = #tpu.pipeline_mode<synchronous>, transform_indices = @transform_4, window_bounds = array<i64: 1, 128>}, {pipeline_mode = #tpu.pipeline_mode<synchronous>, transform_indices = @transform_5, window_bounds = array<i64: 128, 64>}, {pipeline_mode = #tpu.pipeline_mode<synchronous>, transform_indices = @transform_6, window_bounds = array<i64: 1, 64>}, {pipeline_mode = #tpu.pipeline_mode<synchronous>, transform_indices = @transform_7, window_bounds = array<i64: 64, 1024>}, {pipeline_mode = #tpu.pipeline_mode<synchronous>, transform_indices = @transform_8, window_bounds = array<i64: 256, 1024>}, {pipeline_mode = #tpu.pipeline_mode<synchronous>, transform_indices = @transform_9, window_bounds = array<i64: 1, 1024>}, {pipeline_mode = #tpu.pipeline_mode<synchronous>, transform_indices = @transform_10, window_bounds = array<i64: 8, 256>}, {pipeline_mode = #tpu.pipeline_mode<synchronous>, transform_indices = @transform_11, window_bounds = array<i64: 8, 256>}, {pipeline_mode = #tpu.pipeline_mode<synchronous>, transform_indices = @transform_12, window_bounds = array<i64: 1, 256>}, {pipeline_mode = #tpu.pipeline_mode<synchronous>, transform_indices = @transform_13, window_bounds = array<i64: 1, 256>}, {pipeline_mode = #tpu.pipeline_mode<synchronous>, transform_indices = @transform_14, window_bounds = array<i64: 1, 512>}, {}, {}, {}, {}, {pipeline_mode = #tpu.pipeline_mode<synchronous>, transform_indices = @transform_19, window_bounds = array<i64: 64, 512>}, {pipeline_mode = #tpu.pipeline_mode<synchronous>, transform_indices = @transform_20, window_bounds = array<i64: 8, 256>}, {pipeline_mode = #tpu.pipeline_mode<synchronous>, transform_indices = @transform_21, window_bounds = array<i64: 8, 256>}]} {
    %c0_i32 = arith.constant 0 : i32
    %0 = tpu.memref_slice %arg28[%c0_i32] : memref<4x!tpu.dma_semaphore, #tpu.memory_space<semaphore_mem>> -> memref<1x!tpu.dma_semaphore, #tpu.memory_space<semaphore_mem>>
    %1 = tpu.memref_squeeze %0 : memref<1x!tpu.dma_semaphore, #tpu.memory_space<semaphore_mem>> -> memref<!tpu.dma_semaphore, #tpu.memory_space<semaphore_mem>>
    tpu.enqueue_dma source(%arg16 : memref<256x256xbf16, #tpu.memory_space<any>>) target(%arg24 : memref<256x256xbf16, #tpu.memory_space<vmem>>) target_semaphore(%1 : memref<!tpu.dma_semaphore, #tpu.memory_space<semaphore_mem>>)
    %c1_i32 = arith.constant 1 : i32
    %2 = tpu.memref_slice %arg28[%c1_i32] : memref<4x!tpu.dma_semaphore, #tpu.memory_space<semaphore_mem>> -> memref<1x!tpu.dma_semaphore, #tpu.memory_space<semaphore_mem>>
    %3 = tpu.memref_squeeze %2 : memref<1x!tpu.dma_semaphore, #tpu.memory_space<semaphore_mem>> -> memref<!tpu.dma_semaphore, #tpu.memory_space<semaphore_mem>>
    tpu.enqueue_dma source(%arg17 : memref<256x256xbf16, #tpu.memory_space<any>>) target(%arg25 : memref<256x256xbf16, #tpu.memory_space<vmem>>) target_semaphore(%3 : memref<!tpu.dma_semaphore, #tpu.memory_space<semaphore_mem>>)
    %c2_i32 = arith.constant 2 : i32
    %4 = tpu.memref_slice %arg28[%c2_i32] : memref<4x!tpu.dma_semaphore, #tpu.memory_space<semaphore_mem>> -> memref<1x!tpu.dma_semaphore, #tpu.memory_space<semaphore_mem>>
    %5 = tpu.memref_squeeze %4 : memref<1x!tpu.dma_semaphore, #tpu.memory_space<semaphore_mem>> -> memref<!tpu.dma_semaphore, #tpu.memory_space<semaphore_mem>>
    tpu.enqueue_dma source(%arg18 : memref<256x512xbf16, #tpu.memory_space<any>>) target(%arg26 : memref<256x512xbf16, #tpu.memory_space<vmem>>) target_semaphore(%5 : memref<!tpu.dma_semaphore, #tpu.memory_space<semaphore_mem>>)
    %c3_i32 = arith.constant 3 : i32
    %6 = tpu.memref_slice %arg28[%c3_i32] : memref<4x!tpu.dma_semaphore, #tpu.memory_space<semaphore_mem>> -> memref<1x!tpu.dma_semaphore, #tpu.memory_space<semaphore_mem>>
    %7 = tpu.memref_squeeze %6 : memref<1x!tpu.dma_semaphore, #tpu.memory_space<semaphore_mem>> -> memref<!tpu.dma_semaphore, #tpu.memory_space<semaphore_mem>>
    tpu.enqueue_dma source(%arg19 : memref<256x512xbf16, #tpu.memory_space<any>>) target(%arg27 : memref<256x512xbf16, #tpu.memory_space<vmem>>) target_semaphore(%7 : memref<!tpu.dma_semaphore, #tpu.memory_space<semaphore_mem>>)
    %c0 = arith.constant 0 : index
    %c0_0 = arith.constant 0 : index
    %8 = vector.load %arg1[%c0, %c0_0] : memref<64x16xf32, #tpu.memory_space<vmem>>, vector<64x16xf32>
    %9 = arith.truncf %8 : vector<64x16xf32> to vector<64x16xbf16>
    %c0_1 = arith.constant 0 : index
    %c0_2 = arith.constant 0 : index
    %10 = vector.load %arg2[%c0_1, %c0_2] : memref<16x256xbf16, #tpu.memory_space<vmem>>, vector<16x256xbf16>
    %cst = arith.constant dense<0.000000e+00> : vector<64x256xf32>
    %11 = tpu.matmul %9, %10, %cst {dimension_numbers = #tpu.dot_dimension_numbers<[1], [0], [0], [1], [0, 0, 1, 1], [], []>} : vector<64x16xbf16>, vector<16x256xbf16>, vector<64x256xf32> -> vector<64x256xf32>
    %c0_3 = arith.constant 0 : index
    %c0_4 = arith.constant 0 : index
    %12 = vector.load %arg3[%c0_3, %c0_4] : memref<1x256xf32, #tpu.memory_space<vmem>>, vector<1x256xf32>
    %13 = vector.broadcast %12 : vector<1x256xf32> to vector<64x256xf32>
    %14 = arith.addf %11, %13 : vector<64x256xf32>
    %cst_5 = arith.constant 0.000000e+00 : f32
    %15 = vector.broadcast %cst_5 : f32 to vector<64x256xf32>
    %16 = arith.maximumf %14, %15 : vector<64x256xf32>
    %17 = arith.truncf %16 : vector<64x256xf32> to vector<64x256xbf16>
    %c0_6 = arith.constant 0 : index
    %c0_7 = arith.constant 0 : index
    %18 = vector.load %arg4[%c0_6, %c0_7] : memref<256x128xbf16, #tpu.memory_space<vmem>>, vector<256x128xbf16>
    %cst_8 = arith.constant dense<0.000000e+00> : vector<64x128xf32>
    %19 = tpu.matmul %17, %18, %cst_8 {dimension_numbers = #tpu.dot_dimension_numbers<[1], [0], [0], [1], [0, 0, 1, 1], [], []>} : vector<64x256xbf16>, vector<256x128xbf16>, vector<64x128xf32> -> vector<64x128xf32>
    %c0_9 = arith.constant 0 : index
    %c0_10 = arith.constant 0 : index
    %20 = vector.load %arg5[%c0_9, %c0_10] : memref<1x128xf32, #tpu.memory_space<vmem>>, vector<1x128xf32>
    %21 = vector.broadcast %20 : vector<1x128xf32> to vector<64x128xf32>
    %22 = arith.addf %19, %21 : vector<64x128xf32>
    %cst_11 = arith.constant 0.000000e+00 : f32
    %23 = vector.broadcast %cst_11 : f32 to vector<64x128xf32>
    %24 = arith.maximumf %22, %23 : vector<64x128xf32>
    %25 = arith.truncf %24 : vector<64x128xf32> to vector<64x128xbf16>
    %c0_12 = arith.constant 0 : index
    %c0_13 = arith.constant 0 : index
    %26 = vector.load %arg6[%c0_12, %c0_13] : memref<128x64xbf16, #tpu.memory_space<vmem>>, vector<128x64xbf16>
    %cst_14 = arith.constant dense<0.000000e+00> : vector<64x64xf32>
    %27 = tpu.matmul %25, %26, %cst_14 {dimension_numbers = #tpu.dot_dimension_numbers<[1], [0], [0], [1], [0, 0, 1, 1], [], []>} : vector<64x128xbf16>, vector<128x64xbf16>, vector<64x64xf32> -> vector<64x64xf32>
    %c0_15 = arith.constant 0 : index
    %c0_16 = arith.constant 0 : index
    %28 = vector.load %arg7[%c0_15, %c0_16] : memref<1x64xf32, #tpu.memory_space<vmem>>, vector<1x64xf32>
    %29 = vector.broadcast %28 : vector<1x64xf32> to vector<64x64xf32>
    %30 = arith.addf %27, %29 : vector<64x64xf32>
    %cst_17 = arith.constant 0.000000e+00 : f32
    %31 = vector.broadcast %cst_17 : f32 to vector<64x64xf32>
    %32 = arith.maximumf %30, %31 : vector<64x64xf32>
    %33 = arith.truncf %32 : vector<64x64xf32> to vector<64x64xbf16>
    %c0_18 = arith.constant 0 : index
    %c0_19 = arith.constant 0 : index
    %34 = vector.load %arg8[%c0_18, %c0_19] : memref<64x1024xbf16, #tpu.memory_space<vmem>>, vector<64x1024xbf16>
    %cst_20 = arith.constant dense<0.000000e+00> : vector<64x1024xf32>
    %35 = tpu.matmul %33, %34, %cst_20 {dimension_numbers = #tpu.dot_dimension_numbers<[1], [0], [0], [1], [0, 0, 1, 1], [], []>} : vector<64x64xbf16>, vector<64x1024xbf16>, vector<64x1024xf32> -> vector<64x1024xf32>
    %c0_21 = arith.constant 0 : index
    %c0_22 = arith.constant 0 : index
    %36 = vector.load %arg10[%c0_21, %c0_22] : memref<1x1024xf32, #tpu.memory_space<vmem>>, vector<1x1024xf32>
    %37 = vector.broadcast %36 : vector<1x1024xf32> to vector<64x1024xf32>
    %38 = arith.addf %35, %37 : vector<64x1024xf32>
    %c0_23 = arith.constant 0 : index
    %c0_24 = arith.constant 0 : index
    %39 = vector.load %arg11[%c0_23, %c0_24] : memref<8x256xf32, #tpu.memory_space<vmem>>, vector<8x256xf32>
    %c0_25 = arith.constant 0 : index
    %c0_26 = arith.constant 0 : index
    %40 = vector.load %arg12[%c0_25, %c0_26] : memref<8x256xf32, #tpu.memory_space<vmem>>, vector<8x256xf32>
    %41 = vector.extract_strided_slice %38 {offsets = [0, 0], sizes = [8, 1024], strides = [1, 1]} : vector<64x1024xf32> to vector<8x1024xf32>
    %42 = arith.truncf %39 : vector<8x256xf32> to vector<8x256xbf16>
    %c0_27 = arith.constant 0 : index
    %c0_28 = arith.constant 0 : index
    %43 = vector.load %arg9[%c0_27, %c0_28] : memref<256x1024xbf16, #tpu.memory_space<vmem>>, vector<256x1024xbf16>
    %cst_29 = arith.constant dense<0.000000e+00> : vector<8x1024xf32>
    %44 = tpu.matmul %42, %43, %cst_29 {dimension_numbers = #tpu.dot_dimension_numbers<[1], [0], [0], [1], [0, 0, 1, 1], [], []>} : vector<8x256xbf16>, vector<256x1024xbf16>, vector<8x1024xf32> -> vector<8x1024xf32>
    %45 = arith.addf %41, %44 : vector<8x1024xf32>
    %46 = vector.extract_strided_slice %45 {offsets = [0, 0], sizes = [8, 256], strides = [1, 1]} : vector<8x1024xf32> to vector<8x256xf32>
    %47 = arith.negf %46 : vector<8x256xf32>
    %48 = math.exp %47 : vector<8x256xf32>
    %cst_30 = arith.constant 1.000000e+00 : f32
    %49 = vector.broadcast %cst_30 : f32 to vector<8x256xf32>
    %50 = arith.addf %49, %48 : vector<8x256xf32>
    %51 = arith.divf %49, %50 : vector<8x256xf32>
    %52 = vector.extract_strided_slice %45 {offsets = [0, 256], sizes = [8, 256], strides = [1, 1]} : vector<8x1024xf32> to vector<8x256xf32>
    %53 = arith.negf %52 : vector<8x256xf32>
    %54 = math.exp %53 : vector<8x256xf32>
    %cst_31 = arith.constant 1.000000e+00 : f32
    %55 = vector.broadcast %cst_31 : f32 to vector<8x256xf32>
    %56 = arith.addf %55, %54 : vector<8x256xf32>
    %57 = arith.divf %55, %56 : vector<8x256xf32>
    %58 = vector.extract_strided_slice %45 {offsets = [0, 512], sizes = [8, 256], strides = [1, 1]} : vector<8x1024xf32> to vector<8x256xf32>
    %59 = math.tanh %58 : vector<8x256xf32>
    %60 = vector.extract_strided_slice %45 {offsets = [0, 768], sizes = [8, 256], strides = [1, 1]} : vector<8x1024xf32> to vector<8x256xf32>
    %61 = arith.negf %60 : vector<8x256xf32>
    %62 = math.exp %61 : vector<8x256xf32>
    %cst_32 = arith.constant 1.000000e+00 : f32
    %63 = vector.broadcast %cst_32 : f32 to vector<8x256xf32>
    %64 = arith.addf %63, %62 : vector<8x256xf32>
    %65 = arith.divf %63, %64 : vector<8x256xf32>
    %66 = arith.mulf %57, %40 : vector<8x256xf32>
    %67 = arith.mulf %51, %59 : vector<8x256xf32>
    %68 = arith.addf %66, %67 : vector<8x256xf32>
    %69 = math.tanh %68 : vector<8x256xf32>
    %70 = arith.mulf %65, %69 : vector<8x256xf32>
    %c0_33 = arith.constant 0 : index
    %c0_34 = arith.constant 0 : index
    %71 = vector.load %arg23[%c0_33, %c0_34] : memref<64x256xf32, #tpu.memory_space<vmem>>, vector<8x256xf32>
    tpu.vector_store %arg23[%c0_33, %c0_34], %70 {strides = array<i32>} : memref<64x256xf32, #tpu.memory_space<vmem>>, vector<8x256xf32>,
    %72 = vector.extract_strided_slice %38 {offsets = [8, 0], sizes = [8, 1024], strides = [1, 1]} : vector<64x1024xf32> to vector<8x1024xf32>
    %73 = arith.truncf %70 : vector<8x256xf32> to vector<8x256xbf16>
    %c0_35 = arith.constant 0 : index
    %c0_36 = arith.constant 0 : index
    %74 = vector.load %arg9[%c0_35, %c0_36] : memref<256x1024xbf16, #tpu.memory_space<vmem>>, vector<256x1024xbf16>
    %cst_37 = arith.constant dense<0.000000e+00> : vector<8x1024xf32>
    %75 = tpu.matmul %73, %74, %cst_37 {dimension_numbers = #tpu.dot_dimension_numbers<[1], [0], [0], [1], [0, 0, 1, 1], [], []>} : vector<8x256xbf16>, vector<256x1024xbf16>, vector<8x1024xf32> -> vector<8x1024xf32>
    %76 = arith.addf %72, %75 : vector<8x1024xf32>
    %77 = vector.extract_strided_slice %76 {offsets = [0, 0], sizes = [8, 256], strides = [1, 1]} : vector<8x1024xf32> to vector<8x256xf32>
    %78 = arith.negf %77 : vector<8x256xf32>
    %79 = math.exp %78 : vector<8x256xf32>
    %cst_38 = arith.constant 1.000000e+00 : f32
    %80 = vector.broadcast %cst_38 : f32 to vector<8x256xf32>
    %81 = arith.addf %80, %79 : vector<8x256xf32>
    %82 = arith.divf %80, %81 : vector<8x256xf32>
    %83 = vector.extract_strided_slice %76 {offsets = [0, 256], sizes = [8, 256], strides = [1, 1]} : vector<8x1024xf32> to vector<8x256xf32>
    %84 = arith.negf %83 : vector<8x256xf32>
    %85 = math.exp %84 : vector<8x256xf32>
    %cst_39 = arith.constant 1.000000e+00 : f32
    %86 = vector.broadcast %cst_39 : f32 to vector<8x256xf32>
    %87 = arith.addf %86, %85 : vector<8x256xf32>
    %88 = arith.divf %86, %87 : vector<8x256xf32>
    %89 = vector.extract_strided_slice %76 {offsets = [0, 512], sizes = [8, 256], strides = [1, 1]} : vector<8x1024xf32> to vector<8x256xf32>
    %90 = math.tanh %89 : vector<8x256xf32>
    %91 = vector.extract_strided_slice %76 {offsets = [0, 768], sizes = [8, 256], strides = [1, 1]} : vector<8x1024xf32> to vector<8x256xf32>
    %92 = arith.negf %91 : vector<8x256xf32>
    %93 = math.exp %92 : vector<8x256xf32>
    %cst_40 = arith.constant 1.000000e+00 : f32
    %94 = vector.broadcast %cst_40 : f32 to vector<8x256xf32>
    %95 = arith.addf %94, %93 : vector<8x256xf32>
    %96 = arith.divf %94, %95 : vector<8x256xf32>
    %97 = arith.mulf %88, %68 : vector<8x256xf32>
    %98 = arith.mulf %82, %90 : vector<8x256xf32>
    %99 = arith.addf %97, %98 : vector<8x256xf32>
    %100 = math.tanh %99 : vector<8x256xf32>
    %101 = arith.mulf %96, %100 : vector<8x256xf32>
    %c8 = arith.constant 8 : index
    %c0_41 = arith.constant 0 : index
    %102 = vector.load %arg23[%c8, %c0_41] : memref<64x256xf32, #tpu.memory_space<vmem>>, vector<8x256xf32>
    tpu.vector_store %arg23[%c8, %c0_41], %101 {strides = array<i32>} : memref<64x256xf32, #tpu.memory_space<vmem>>, vector<8x256xf32>,
    %103 = vector.extract_strided_slice %38 {offsets = [16, 0], sizes = [8, 1024], strides = [1, 1]} : vector<64x1024xf32> to vector<8x1024xf32>
    %104 = arith.truncf %101 : vector<8x256xf32> to vector<8x256xbf16>
    %c0_42 = arith.constant 0 : index
    %c0_43 = arith.constant 0 : index
    %105 = vector.load %arg9[%c0_42, %c0_43] : memref<256x1024xbf16, #tpu.memory_space<vmem>>, vector<256x1024xbf16>
    %cst_44 = arith.constant dense<0.000000e+00> : vector<8x1024xf32>
    %106 = tpu.matmul %104, %105, %cst_44 {dimension_numbers = #tpu.dot_dimension_numbers<[1], [0], [0], [1], [0, 0, 1, 1], [], []>} : vector<8x256xbf16>, vector<256x1024xbf16>, vector<8x1024xf32> -> vector<8x1024xf32>
    %107 = arith.addf %103, %106 : vector<8x1024xf32>
    %108 = vector.extract_strided_slice %107 {offsets = [0, 0], sizes = [8, 256], strides = [1, 1]} : vector<8x1024xf32> to vector<8x256xf32>
    %109 = arith.negf %108 : vector<8x256xf32>
    %110 = math.exp %109 : vector<8x256xf32>
    %cst_45 = arith.constant 1.000000e+00 : f32
    %111 = vector.broadcast %cst_45 : f32 to vector<8x256xf32>
    %112 = arith.addf %111, %110 : vector<8x256xf32>
    %113 = arith.divf %111, %112 : vector<8x256xf32>
    %114 = vector.extract_strided_slice %107 {offsets = [0, 256], sizes = [8, 256], strides = [1, 1]} : vector<8x1024xf32> to vector<8x256xf32>
    %115 = arith.negf %114 : vector<8x256xf32>
    %116 = math.exp %115 : vector<8x256xf32>
    %cst_46 = arith.constant 1.000000e+00 : f32
    %117 = vector.broadcast %cst_46 : f32 to vector<8x256xf32>
    %118 = arith.addf %117, %116 : vector<8x256xf32>
    %119 = arith.divf %117, %118 : vector<8x256xf32>
    %120 = vector.extract_strided_slice %107 {offsets = [0, 512], sizes = [8, 256], strides = [1, 1]} : vector<8x1024xf32> to vector<8x256xf32>
    %121 = math.tanh %120 : vector<8x256xf32>
    %122 = vector.extract_strided_slice %107 {offsets = [0, 768], sizes = [8, 256], strides = [1, 1]} : vector<8x1024xf32> to vector<8x256xf32>
    %123 = arith.negf %122 : vector<8x256xf32>
    %124 = math.exp %123 : vector<8x256xf32>
    %cst_47 = arith.constant 1.000000e+00 : f32
    %125 = vector.broadcast %cst_47 : f32 to vector<8x256xf32>
    %126 = arith.addf %125, %124 : vector<8x256xf32>
    %127 = arith.divf %125, %126 : vector<8x256xf32>
    %128 = arith.mulf %119, %99 : vector<8x256xf32>
    %129 = arith.mulf %113, %121 : vector<8x256xf32>
    %130 = arith.addf %128, %129 : vector<8x256xf32>
    %131 = math.tanh %130 : vector<8x256xf32>
    %132 = arith.mulf %127, %131 : vector<8x256xf32>
    %c16 = arith.constant 16 : index
    %c0_48 = arith.constant 0 : index
    %133 = vector.load %arg23[%c16, %c0_48] : memref<64x256xf32, #tpu.memory_space<vmem>>, vector<8x256xf32>
    tpu.vector_store %arg23[%c16, %c0_48], %132 {strides = array<i32>} : memref<64x256xf32, #tpu.memory_space<vmem>>, vector<8x256xf32>,
    %134 = vector.extract_strided_slice %38 {offsets = [24, 0], sizes = [8, 1024], strides = [1, 1]} : vector<64x1024xf32> to vector<8x1024xf32>
    %135 = arith.truncf %132 : vector<8x256xf32> to vector<8x256xbf16>
    %c0_49 = arith.constant 0 : index
    %c0_50 = arith.constant 0 : index
    %136 = vector.load %arg9[%c0_49, %c0_50] : memref<256x1024xbf16, #tpu.memory_space<vmem>>, vector<256x1024xbf16>
    %cst_51 = arith.constant dense<0.000000e+00> : vector<8x1024xf32>
    %137 = tpu.matmul %135, %136, %cst_51 {dimension_numbers = #tpu.dot_dimension_numbers<[1], [0], [0], [1], [0, 0, 1, 1], [], []>} : vector<8x256xbf16>, vector<256x1024xbf16>, vector<8x1024xf32> -> vector<8x1024xf32>
    %138 = arith.addf %134, %137 : vector<8x1024xf32>
    %139 = vector.extract_strided_slice %138 {offsets = [0, 0], sizes = [8, 256], strides = [1, 1]} : vector<8x1024xf32> to vector<8x256xf32>
    %140 = arith.negf %139 : vector<8x256xf32>
    %141 = math.exp %140 : vector<8x256xf32>
    %cst_52 = arith.constant 1.000000e+00 : f32
    %142 = vector.broadcast %cst_52 : f32 to vector<8x256xf32>
    %143 = arith.addf %142, %141 : vector<8x256xf32>
    %144 = arith.divf %142, %143 : vector<8x256xf32>
    %145 = vector.extract_strided_slice %138 {offsets = [0, 256], sizes = [8, 256], strides = [1, 1]} : vector<8x1024xf32> to vector<8x256xf32>
    %146 = arith.negf %145 : vector<8x256xf32>
    %147 = math.exp %146 : vector<8x256xf32>
    %cst_53 = arith.constant 1.000000e+00 : f32
    %148 = vector.broadcast %cst_53 : f32 to vector<8x256xf32>
    %149 = arith.addf %148, %147 : vector<8x256xf32>
    %150 = arith.divf %148, %149 : vector<8x256xf32>
    %151 = vector.extract_strided_slice %138 {offsets = [0, 512], sizes = [8, 256], strides = [1, 1]} : vector<8x1024xf32> to vector<8x256xf32>
    %152 = math.tanh %151 : vector<8x256xf32>
    %153 = vector.extract_strided_slice %138 {offsets = [0, 768], sizes = [8, 256], strides = [1, 1]} : vector<8x1024xf32> to vector<8x256xf32>
    %154 = arith.negf %153 : vector<8x256xf32>
    %155 = math.exp %154 : vector<8x256xf32>
    %cst_54 = arith.constant 1.000000e+00 : f32
    %156 = vector.broadcast %cst_54 : f32 to vector<8x256xf32>
    %157 = arith.addf %156, %155 : vector<8x256xf32>
    %158 = arith.divf %156, %157 : vector<8x256xf32>
    %159 = arith.mulf %150, %130 : vector<8x256xf32>
    %160 = arith.mulf %144, %152 : vector<8x256xf32>
    %161 = arith.addf %159, %160 : vector<8x256xf32>
    %162 = math.tanh %161 : vector<8x256xf32>
    %163 = arith.mulf %158, %162 : vector<8x256xf32>
    %c24 = arith.constant 24 : index
    %c0_55 = arith.constant 0 : index
    %164 = vector.load %arg23[%c24, %c0_55] : memref<64x256xf32, #tpu.memory_space<vmem>>, vector<8x256xf32>
    tpu.vector_store %arg23[%c24, %c0_55], %163 {strides = array<i32>} : memref<64x256xf32, #tpu.memory_space<vmem>>, vector<8x256xf32>,
    %165 = vector.extract_strided_slice %38 {offsets = [32, 0], sizes = [8, 1024], strides = [1, 1]} : vector<64x1024xf32> to vector<8x1024xf32>
    %166 = arith.truncf %163 : vector<8x256xf32> to vector<8x256xbf16>
    %c0_56 = arith.constant 0 : index
    %c0_57 = arith.constant 0 : index
    %167 = vector.load %arg9[%c0_56, %c0_57] : memref<256x1024xbf16, #tpu.memory_space<vmem>>, vector<256x1024xbf16>
    %cst_58 = arith.constant dense<0.000000e+00> : vector<8x1024xf32>
    %168 = tpu.matmul %166, %167, %cst_58 {dimension_numbers = #tpu.dot_dimension_numbers<[1], [0], [0], [1], [0, 0, 1, 1], [], []>} : vector<8x256xbf16>, vector<256x1024xbf16>, vector<8x1024xf32> -> vector<8x1024xf32>
    %169 = arith.addf %165, %168 : vector<8x1024xf32>
    %170 = vector.extract_strided_slice %169 {offsets = [0, 0], sizes = [8, 256], strides = [1, 1]} : vector<8x1024xf32> to vector<8x256xf32>
    %171 = arith.negf %170 : vector<8x256xf32>
    %172 = math.exp %171 : vector<8x256xf32>
    %cst_59 = arith.constant 1.000000e+00 : f32
    %173 = vector.broadcast %cst_59 : f32 to vector<8x256xf32>
    %174 = arith.addf %173, %172 : vector<8x256xf32>
    %175 = arith.divf %173, %174 : vector<8x256xf32>
    %176 = vector.extract_strided_slice %169 {offsets = [0, 256], sizes = [8, 256], strides = [1, 1]} : vector<8x1024xf32> to vector<8x256xf32>
    %177 = arith.negf %176 : vector<8x256xf32>
    %178 = math.exp %177 : vector<8x256xf32>
    %cst_60 = arith.constant 1.000000e+00 : f32
    %179 = vector.broadcast %cst_60 : f32 to vector<8x256xf32>
    %180 = arith.addf %179, %178 : vector<8x256xf32>
    %181 = arith.divf %179, %180 : vector<8x256xf32>
    %182 = vector.extract_strided_slice %169 {offsets = [0, 512], sizes = [8, 256], strides = [1, 1]} : vector<8x1024xf32> to vector<8x256xf32>
    %183 = math.tanh %182 : vector<8x256xf32>
    %184 = vector.extract_strided_slice %169 {offsets = [0, 768], sizes = [8, 256], strides = [1, 1]} : vector<8x1024xf32> to vector<8x256xf32>
    %185 = arith.negf %184 : vector<8x256xf32>
    %186 = math.exp %185 : vector<8x256xf32>
    %cst_61 = arith.constant 1.000000e+00 : f32
    %187 = vector.broadcast %cst_61 : f32 to vector<8x256xf32>
    %188 = arith.addf %187, %186 : vector<8x256xf32>
    %189 = arith.divf %187, %188 : vector<8x256xf32>
    %190 = arith.mulf %181, %161 : vector<8x256xf32>
    %191 = arith.mulf %175, %183 : vector<8x256xf32>
    %192 = arith.addf %190, %191 : vector<8x256xf32>
    %193 = math.tanh %192 : vector<8x256xf32>
    %194 = arith.mulf %189, %193 : vector<8x256xf32>
    %c32 = arith.constant 32 : index
    %c0_62 = arith.constant 0 : index
    %195 = vector.load %arg23[%c32, %c0_62] : memref<64x256xf32, #tpu.memory_space<vmem>>, vector<8x256xf32>
    tpu.vector_store %arg23[%c32, %c0_62], %194 {strides = array<i32>} : memref<64x256xf32, #tpu.memory_space<vmem>>, vector<8x256xf32>,
    %196 = vector.extract_strided_slice %38 {offsets = [40, 0], sizes = [8, 1024], strides = [1, 1]} : vector<64x1024xf32> to vector<8x1024xf32>
    %197 = arith.truncf %194 : vector<8x256xf32> to vector<8x256xbf16>
    %c0_63 = arith.constant 0 : index
    %c0_64 = arith.constant 0 : index
    %198 = vector.load %arg9[%c0_63, %c0_64] : memref<256x1024xbf16, #tpu.memory_space<vmem>>, vector<256x1024xbf16>
    %cst_65 = arith.constant dense<0.000000e+00> : vector<8x1024xf32>
    %199 = tpu.matmul %197, %198, %cst_65 {dimension_numbers = #tpu.dot_dimension_numbers<[1], [0], [0], [1], [0, 0, 1, 1], [], []>} : vector<8x256xbf16>, vector<256x1024xbf16>, vector<8x1024xf32> -> vector<8x1024xf32>
    %200 = arith.addf %196, %199 : vector<8x1024xf32>
    %201 = vector.extract_strided_slice %200 {offsets = [0, 0], sizes = [8, 256], strides = [1, 1]} : vector<8x1024xf32> to vector<8x256xf32>
    %202 = arith.negf %201 : vector<8x256xf32>
    %203 = math.exp %202 : vector<8x256xf32>
    %cst_66 = arith.constant 1.000000e+00 : f32
    %204 = vector.broadcast %cst_66 : f32 to vector<8x256xf32>
    %205 = arith.addf %204, %203 : vector<8x256xf32>
    %206 = arith.divf %204, %205 : vector<8x256xf32>
    %207 = vector.extract_strided_slice %200 {offsets = [0, 256], sizes = [8, 256], strides = [1, 1]} : vector<8x1024xf32> to vector<8x256xf32>
    %208 = arith.negf %207 : vector<8x256xf32>
    %209 = math.exp %208 : vector<8x256xf32>
    %cst_67 = arith.constant 1.000000e+00 : f32
    %210 = vector.broadcast %cst_67 : f32 to vector<8x256xf32>
    %211 = arith.addf %210, %209 : vector<8x256xf32>
    %212 = arith.divf %210, %211 : vector<8x256xf32>
    %213 = vector.extract_strided_slice %200 {offsets = [0, 512], sizes = [8, 256], strides = [1, 1]} : vector<8x1024xf32> to vector<8x256xf32>
    %214 = math.tanh %213 : vector<8x256xf32>
    %215 = vector.extract_strided_slice %200 {offsets = [0, 768], sizes = [8, 256], strides = [1, 1]} : vector<8x1024xf32> to vector<8x256xf32>
    %216 = arith.negf %215 : vector<8x256xf32>
    %217 = math.exp %216 : vector<8x256xf32>
    %cst_68 = arith.constant 1.000000e+00 : f32
    %218 = vector.broadcast %cst_68 : f32 to vector<8x256xf32>
    %219 = arith.addf %218, %217 : vector<8x256xf32>
    %220 = arith.divf %218, %219 : vector<8x256xf32>
    %221 = arith.mulf %212, %192 : vector<8x256xf32>
    %222 = arith.mulf %206, %214 : vector<8x256xf32>
    %223 = arith.addf %221, %222 : vector<8x256xf32>
    %224 = math.tanh %223 : vector<8x256xf32>
    %225 = arith.mulf %220, %224 : vector<8x256xf32>
    %c40 = arith.constant 40 : index
    %c0_69 = arith.constant 0 : index
    %226 = vector.load %arg23[%c40, %c0_69] : memref<64x256xf32, #tpu.memory_space<vmem>>, vector<8x256xf32>
    tpu.vector_store %arg23[%c40, %c0_69], %225 {strides = array<i32>} : memref<64x256xf32, #tpu.memory_space<vmem>>, vector<8x256xf32>,
    %227 = vector.extract_strided_slice %38 {offsets = [48, 0], sizes = [8, 1024], strides = [1, 1]} : vector<64x1024xf32> to vector<8x1024xf32>
    %228 = arith.truncf %225 : vector<8x256xf32> to vector<8x256xbf16>
    %c0_70 = arith.constant 0 : index
    %c0_71 = arith.constant 0 : index
    %229 = vector.load %arg9[%c0_70, %c0_71] : memref<256x1024xbf16, #tpu.memory_space<vmem>>, vector<256x1024xbf16>
    %cst_72 = arith.constant dense<0.000000e+00> : vector<8x1024xf32>
    %230 = tpu.matmul %228, %229, %cst_72 {dimension_numbers = #tpu.dot_dimension_numbers<[1], [0], [0], [1], [0, 0, 1, 1], [], []>} : vector<8x256xbf16>, vector<256x1024xbf16>, vector<8x1024xf32> -> vector<8x1024xf32>
    %231 = arith.addf %227, %230 : vector<8x1024xf32>
    %232 = vector.extract_strided_slice %231 {offsets = [0, 0], sizes = [8, 256], strides = [1, 1]} : vector<8x1024xf32> to vector<8x256xf32>
    %233 = arith.negf %232 : vector<8x256xf32>
    %234 = math.exp %233 : vector<8x256xf32>
    %cst_73 = arith.constant 1.000000e+00 : f32
    %235 = vector.broadcast %cst_73 : f32 to vector<8x256xf32>
    %236 = arith.addf %235, %234 : vector<8x256xf32>
    %237 = arith.divf %235, %236 : vector<8x256xf32>
    %238 = vector.extract_strided_slice %231 {offsets = [0, 256], sizes = [8, 256], strides = [1, 1]} : vector<8x1024xf32> to vector<8x256xf32>
    %239 = arith.negf %238 : vector<8x256xf32>
    %240 = math.exp %239 : vector<8x256xf32>
    %cst_74 = arith.constant 1.000000e+00 : f32
    %241 = vector.broadcast %cst_74 : f32 to vector<8x256xf32>
    %242 = arith.addf %241, %240 : vector<8x256xf32>
    %243 = arith.divf %241, %242 : vector<8x256xf32>
    %244 = vector.extract_strided_slice %231 {offsets = [0, 512], sizes = [8, 256], strides = [1, 1]} : vector<8x1024xf32> to vector<8x256xf32>
    %245 = math.tanh %244 : vector<8x256xf32>
    %246 = vector.extract_strided_slice %231 {offsets = [0, 768], sizes = [8, 256], strides = [1, 1]} : vector<8x1024xf32> to vector<8x256xf32>
    %247 = arith.negf %246 : vector<8x256xf32>
    %248 = math.exp %247 : vector<8x256xf32>
    %cst_75 = arith.constant 1.000000e+00 : f32
    %249 = vector.broadcast %cst_75 : f32 to vector<8x256xf32>
    %250 = arith.addf %249, %248 : vector<8x256xf32>
    %251 = arith.divf %249, %250 : vector<8x256xf32>
    %252 = arith.mulf %243, %223 : vector<8x256xf32>
    %253 = arith.mulf %237, %245 : vector<8x256xf32>
    %254 = arith.addf %252, %253 : vector<8x256xf32>
    %255 = math.tanh %254 : vector<8x256xf32>
    %256 = arith.mulf %251, %255 : vector<8x256xf32>
    %c48 = arith.constant 48 : index
    %c0_76 = arith.constant 0 : index
    %257 = vector.load %arg23[%c48, %c0_76] : memref<64x256xf32, #tpu.memory_space<vmem>>, vector<8x256xf32>
    tpu.vector_store %arg23[%c48, %c0_76], %256 {strides = array<i32>} : memref<64x256xf32, #tpu.memory_space<vmem>>, vector<8x256xf32>,
    %258 = vector.extract_strided_slice %38 {offsets = [56, 0], sizes = [8, 1024], strides = [1, 1]} : vector<64x1024xf32> to vector<8x1024xf32>
    %259 = arith.truncf %256 : vector<8x256xf32> to vector<8x256xbf16>
    %c0_77 = arith.constant 0 : index
    %c0_78 = arith.constant 0 : index
    %260 = vector.load %arg9[%c0_77, %c0_78] : memref<256x1024xbf16, #tpu.memory_space<vmem>>, vector<256x1024xbf16>
    %cst_79 = arith.constant dense<0.000000e+00> : vector<8x1024xf32>
    %261 = tpu.matmul %259, %260, %cst_79 {dimension_numbers = #tpu.dot_dimension_numbers<[1], [0], [0], [1], [0, 0, 1, 1], [], []>} : vector<8x256xbf16>, vector<256x1024xbf16>, vector<8x1024xf32> -> vector<8x1024xf32>
    %262 = arith.addf %258, %261 : vector<8x1024xf32>
    %263 = vector.extract_strided_slice %262 {offsets = [0, 0], sizes = [8, 256], strides = [1, 1]} : vector<8x1024xf32> to vector<8x256xf32>
    %264 = arith.negf %263 : vector<8x256xf32>
    %265 = math.exp %264 : vector<8x256xf32>
    %cst_80 = arith.constant 1.000000e+00 : f32
    %266 = vector.broadcast %cst_80 : f32 to vector<8x256xf32>
    %267 = arith.addf %266, %265 : vector<8x256xf32>
    %268 = arith.divf %266, %267 : vector<8x256xf32>
    %269 = vector.extract_strided_slice %262 {offsets = [0, 256], sizes = [8, 256], strides = [1, 1]} : vector<8x1024xf32> to vector<8x256xf32>
    %270 = arith.negf %269 : vector<8x256xf32>
    %271 = math.exp %270 : vector<8x256xf32>
    %cst_81 = arith.constant 1.000000e+00 : f32
    %272 = vector.broadcast %cst_81 : f32 to vector<8x256xf32>
    %273 = arith.addf %272, %271 : vector<8x256xf32>
    %274 = arith.divf %272, %273 : vector<8x256xf32>
    %275 = vector.extract_strided_slice %262 {offsets = [0, 512], sizes = [8, 256], strides = [1, 1]} : vector<8x1024xf32> to vector<8x256xf32>
    %276 = math.tanh %275 : vector<8x256xf32>
    %277 = vector.extract_strided_slice %262 {offsets = [0, 768], sizes = [8, 256], strides = [1, 1]} : vector<8x1024xf32> to vector<8x256xf32>
    %278 = arith.negf %277 : vector<8x256xf32>
    %279 = math.exp %278 : vector<8x256xf32>
    %cst_82 = arith.constant 1.000000e+00 : f32
    %280 = vector.broadcast %cst_82 : f32 to vector<8x256xf32>
    %281 = arith.addf %280, %279 : vector<8x256xf32>
    %282 = arith.divf %280, %281 : vector<8x256xf32>
    %283 = arith.mulf %274, %254 : vector<8x256xf32>
    %284 = arith.mulf %268, %276 : vector<8x256xf32>
    %285 = arith.addf %283, %284 : vector<8x256xf32>
    %286 = math.tanh %285 : vector<8x256xf32>
    %287 = arith.mulf %282, %286 : vector<8x256xf32>
    %c56 = arith.constant 56 : index
    %c0_83 = arith.constant 0 : index
    %288 = vector.load %arg23[%c56, %c0_83] : memref<64x256xf32, #tpu.memory_space<vmem>>, vector<8x256xf32>
    tpu.vector_store %arg23[%c56, %c0_83], %287 {strides = array<i32>} : memref<64x256xf32, #tpu.memory_space<vmem>>, vector<8x256xf32>,
    %c0_84 = arith.constant 0 : index
    %c0_85 = arith.constant 0 : index
    %289 = vector.load %arg21[%c0_84, %c0_85] : memref<8x256xf32, #tpu.memory_space<vmem>>, vector<8x256xf32>
    tpu.vector_store %arg21[%c0_84, %c0_85], %287 {strides = array<i32>} : memref<8x256xf32, #tpu.memory_space<vmem>>, vector<8x256xf32>,
    %c0_86 = arith.constant 0 : index
    %c0_87 = arith.constant 0 : index
    %290 = vector.load %arg22[%c0_86, %c0_87] : memref<8x256xf32, #tpu.memory_space<vmem>>, vector<8x256xf32>
    tpu.vector_store %arg22[%c0_86, %c0_87], %285 {strides = array<i32>} : memref<8x256xf32, #tpu.memory_space<vmem>>, vector<8x256xf32>,
    %c0_i32_88 = arith.constant 0 : i32
    %291 = tpu.memref_slice %arg28[%c0_i32_88] : memref<4x!tpu.dma_semaphore, #tpu.memory_space<semaphore_mem>> -> memref<1x!tpu.dma_semaphore, #tpu.memory_space<semaphore_mem>>
    %292 = tpu.memref_squeeze %291 : memref<1x!tpu.dma_semaphore, #tpu.memory_space<semaphore_mem>> -> memref<!tpu.dma_semaphore, #tpu.memory_space<semaphore_mem>>
    tpu.wait_dma2 semaphore(%292 : memref<!tpu.dma_semaphore, #tpu.memory_space<semaphore_mem>>) src(%arg16 : memref<256x256xbf16, #tpu.memory_space<any>>) dst(%arg24 : memref<256x256xbf16, #tpu.memory_space<vmem>>)
    %c1_i32_89 = arith.constant 1 : i32
    %293 = tpu.memref_slice %arg28[%c1_i32_89] : memref<4x!tpu.dma_semaphore, #tpu.memory_space<semaphore_mem>> -> memref<1x!tpu.dma_semaphore, #tpu.memory_space<semaphore_mem>>
    %294 = tpu.memref_squeeze %293 : memref<1x!tpu.dma_semaphore, #tpu.memory_space<semaphore_mem>> -> memref<!tpu.dma_semaphore, #tpu.memory_space<semaphore_mem>>
    tpu.wait_dma2 semaphore(%294 : memref<!tpu.dma_semaphore, #tpu.memory_space<semaphore_mem>>) src(%arg17 : memref<256x256xbf16, #tpu.memory_space<any>>) dst(%arg25 : memref<256x256xbf16, #tpu.memory_space<vmem>>)
    %c2_i32_90 = arith.constant 2 : i32
    %295 = tpu.memref_slice %arg28[%c2_i32_90] : memref<4x!tpu.dma_semaphore, #tpu.memory_space<semaphore_mem>> -> memref<1x!tpu.dma_semaphore, #tpu.memory_space<semaphore_mem>>
    %296 = tpu.memref_squeeze %295 : memref<1x!tpu.dma_semaphore, #tpu.memory_space<semaphore_mem>> -> memref<!tpu.dma_semaphore, #tpu.memory_space<semaphore_mem>>
    tpu.wait_dma2 semaphore(%296 : memref<!tpu.dma_semaphore, #tpu.memory_space<semaphore_mem>>) src(%arg18 : memref<256x512xbf16, #tpu.memory_space<any>>) dst(%arg26 : memref<256x512xbf16, #tpu.memory_space<vmem>>)
    %c3_i32_91 = arith.constant 3 : i32
    %297 = tpu.memref_slice %arg28[%c3_i32_91] : memref<4x!tpu.dma_semaphore, #tpu.memory_space<semaphore_mem>> -> memref<1x!tpu.dma_semaphore, #tpu.memory_space<semaphore_mem>>
    %298 = tpu.memref_squeeze %297 : memref<1x!tpu.dma_semaphore, #tpu.memory_space<semaphore_mem>> -> memref<!tpu.dma_semaphore, #tpu.memory_space<semaphore_mem>>
    tpu.wait_dma2 semaphore(%298 : memref<!tpu.dma_semaphore, #tpu.memory_space<semaphore_mem>>) src(%arg19 : memref<256x512xbf16, #tpu.memory_space<any>>) dst(%arg27 : memref<256x512xbf16, #tpu.memory_space<vmem>>)
    %c0_92 = arith.constant 0 : index
    %c0_93 = arith.constant 0 : index
    %299 = vector.load %arg23[%c0_92, %c0_93] : memref<64x256xf32, #tpu.memory_space<vmem>>, vector<64x256xf32>
    %300 = arith.truncf %299 : vector<64x256xf32> to vector<64x256xbf16>
    %c0_94 = arith.constant 0 : index
    %c0_95 = arith.constant 0 : index
    %301 = vector.load %arg24[%c0_94, %c0_95] : memref<256x256xbf16, #tpu.memory_space<vmem>>, vector<256x256xbf16>
    %cst_96 = arith.constant dense<0.000000e+00> : vector<64x256xf32>
    %302 = tpu.matmul %300, %301, %cst_96 {dimension_numbers = #tpu.dot_dimension_numbers<[1], [0], [0], [1], [0, 0, 1, 1], [], []>} : vector<64x256xbf16>, vector<256x256xbf16>, vector<64x256xf32> -> vector<64x256xf32>
    %c0_97 = arith.constant 0 : index
    %c0_98 = arith.constant 0 : index
    %303 = vector.load %arg13[%c0_97, %c0_98] : memref<1x256xf32, #tpu.memory_space<vmem>>, vector<1x256xf32>
    %304 = vector.broadcast %303 : vector<1x256xf32> to vector<64x256xf32>
    %305 = arith.addf %302, %304 : vector<64x256xf32>
    %cst_99 = arith.constant 0.000000e+00 : f32
    %306 = vector.broadcast %cst_99 : f32 to vector<64x256xf32>
    %307 = arith.maximumf %305, %306 : vector<64x256xf32>
    %c0_100 = arith.constant 0 : index
    %c0_101 = arith.constant 0 : index
    %308 = vector.load %arg25[%c0_100, %c0_101] : memref<256x256xbf16, #tpu.memory_space<vmem>>, vector<256x256xbf16>
    %cst_102 = arith.constant dense<0.000000e+00> : vector<64x256xf32>
    %309 = tpu.matmul %300, %308, %cst_102 {dimension_numbers = #tpu.dot_dimension_numbers<[1], [0], [0], [1], [0, 0, 1, 1], [], []>} : vector<64x256xbf16>, vector<256x256xbf16>, vector<64x256xf32> -> vector<64x256xf32>
    %c0_103 = arith.constant 0 : index
    %c0_104 = arith.constant 0 : index
    %310 = vector.load %arg14[%c0_103, %c0_104] : memref<1x256xf32, #tpu.memory_space<vmem>>, vector<1x256xf32>
    %311 = vector.broadcast %310 : vector<1x256xf32> to vector<64x256xf32>
    %312 = arith.addf %309, %311 : vector<64x256xf32>
    %cst_105 = arith.constant 0.000000e+00 : f32
    %313 = vector.broadcast %cst_105 : f32 to vector<64x256xf32>
    %314 = arith.maximumf %312, %313 : vector<64x256xf32>
    %315 = arith.truncf %307 : vector<64x256xf32> to vector<64x256xbf16>
    %c0_106 = arith.constant 0 : index
    %c0_107 = arith.constant 0 : index
    %316 = vector.load %arg26[%c0_106, %c0_107] : memref<256x512xbf16, #tpu.memory_space<vmem>>, vector<256x512xbf16>
    %cst_108 = arith.constant dense<0.000000e+00> : vector<64x512xf32>
    %317 = tpu.matmul %315, %316, %cst_108 {dimension_numbers = #tpu.dot_dimension_numbers<[1], [0], [0], [1], [0, 0, 1, 1], [], []>} : vector<64x256xbf16>, vector<256x512xbf16>, vector<64x512xf32> -> vector<64x512xf32>
    %318 = arith.truncf %314 : vector<64x256xf32> to vector<64x256xbf16>
    %c0_109 = arith.constant 0 : index
    %c0_110 = arith.constant 0 : index
    %319 = vector.load %arg27[%c0_109, %c0_110] : memref<256x512xbf16, #tpu.memory_space<vmem>>, vector<256x512xbf16>
    %cst_111 = arith.constant dense<0.000000e+00> : vector<64x512xf32>
    %320 = tpu.matmul %318, %319, %cst_111 {dimension_numbers = #tpu.dot_dimension_numbers<[1], [0], [0], [1], [0, 0, 1, 1], [], []>} : vector<64x256xbf16>, vector<256x512xbf16>, vector<64x512xf32> -> vector<64x512xf32>
    %321 = arith.addf %317, %320 : vector<64x512xf32>
    %c0_112 = arith.constant 0 : index
    %c0_113 = arith.constant 0 : index
    %322 = vector.load %arg15[%c0_112, %c0_113] : memref<1x512xf32, #tpu.memory_space<vmem>>, vector<1x512xf32>
    %323 = vector.broadcast %322 : vector<1x512xf32> to vector<64x512xf32>
    %324 = arith.addf %321, %323 : vector<64x512xf32>
    %325 = vector.extract_strided_slice %324 {offsets = [0, 0], sizes = [64, 128], strides = [1, 1]} : vector<64x512xf32> to vector<64x128xf32>
    %cst_114 = arith.constant dense<0xFF800000> : vector<64xf32>
    %326 = vector.multi_reduction <maximumf>, %325, %cst_114 [1] : vector<64x128xf32> to vector<64xf32>
    %327 = vector.shape_cast %326 : vector<64xf32> to vector<64x1xf32>
    %328 = vector.broadcast %327 : vector<64x1xf32> to vector<64x128xf32>
    %329 = arith.subf %325, %328 : vector<64x128xf32>
    %330 = math.exp %329 : vector<64x128xf32>
    %cst_115 = arith.constant dense<0.000000e+00> : vector<64xf32>
    %331 = vector.multi_reduction <add>, %330, %cst_115 [1] : vector<64x128xf32> to vector<64xf32>
    %332 = vector.shape_cast %331 : vector<64xf32> to vector<64x1xf32>
    %333 = tpu.reciprocal %332 {approx = true} : vector<64x1xf32> -> vector<64x1xf32>
    %334 = arith.mulf %332, %333 : vector<64x1xf32>
    %cst_116 = arith.constant 2.000000e+00 : f32
    %335 = vector.broadcast %cst_116 : f32 to vector<64x1xf32>
    %336 = arith.subf %335, %334 : vector<64x1xf32>
    %337 = arith.mulf %333, %336 : vector<64x1xf32>
    %338 = vector.broadcast %337 : vector<64x1xf32> to vector<64x128xf32>
    %339 = arith.mulf %330, %338 : vector<64x128xf32>
    %c0_117 = arith.constant 0 : index
    %c0_118 = arith.constant 0 : index
    %340 = vector.load %arg20[%c0_117, %c0_118] : memref<64x512xf32, #tpu.memory_space<vmem>>, vector<64x128xf32>
    tpu.vector_store %arg20[%c0_117, %c0_118], %339 {strides = array<i32>} : memref<64x512xf32, #tpu.memory_space<vmem>>, vector<64x128xf32>,
    %341 = vector.extract_strided_slice %324 {offsets = [0, 128], sizes = [64, 128], strides = [1, 1]} : vector<64x512xf32> to vector<64x128xf32>
    %cst_119 = arith.constant dense<0xFF800000> : vector<64xf32>
    %342 = vector.multi_reduction <maximumf>, %341, %cst_119 [1] : vector<64x128xf32> to vector<64xf32>
    %343 = vector.shape_cast %342 : vector<64xf32> to vector<64x1xf32>
    %344 = vector.broadcast %343 : vector<64x1xf32> to vector<64x128xf32>
    %345 = arith.subf %341, %344 : vector<64x128xf32>
    %346 = math.exp %345 : vector<64x128xf32>
    %cst_120 = arith.constant dense<0.000000e+00> : vector<64xf32>
    %347 = vector.multi_reduction <add>, %346, %cst_120 [1] : vector<64x128xf32> to vector<64xf32>
    %348 = vector.shape_cast %347 : vector<64xf32> to vector<64x1xf32>
    %349 = tpu.reciprocal %348 {approx = true} : vector<64x1xf32> -> vector<64x1xf32>
    %350 = arith.mulf %348, %349 : vector<64x1xf32>
    %cst_121 = arith.constant 2.000000e+00 : f32
    %351 = vector.broadcast %cst_121 : f32 to vector<64x1xf32>
    %352 = arith.subf %351, %350 : vector<64x1xf32>
    %353 = arith.mulf %349, %352 : vector<64x1xf32>
    %354 = vector.broadcast %353 : vector<64x1xf32> to vector<64x128xf32>
    %355 = arith.mulf %346, %354 : vector<64x128xf32>
    %c0_122 = arith.constant 0 : index
    %c128 = arith.constant 128 : index
    %356 = vector.load %arg20[%c0_122, %c128] : memref<64x512xf32, #tpu.memory_space<vmem>>, vector<64x128xf32>
    tpu.vector_store %arg20[%c0_122, %c128], %355 {strides = array<i32>} : memref<64x512xf32, #tpu.memory_space<vmem>>, vector<64x128xf32>,
    %357 = vector.extract_strided_slice %324 {offsets = [0, 256], sizes = [64, 128], strides = [1, 1]} : vector<64x512xf32> to vector<64x128xf32>
    %cst_123 = arith.constant dense<0xFF800000> : vector<64xf32>
    %358 = vector.multi_reduction <maximumf>, %357, %cst_123 [1] : vector<64x128xf32> to vector<64xf32>
    %359 = vector.shape_cast %358 : vector<64xf32> to vector<64x1xf32>
    %360 = vector.broadcast %359 : vector<64x1xf32> to vector<64x128xf32>
    %361 = arith.subf %357, %360 : vector<64x128xf32>
    %362 = math.exp %361 : vector<64x128xf32>
    %cst_124 = arith.constant dense<0.000000e+00> : vector<64xf32>
    %363 = vector.multi_reduction <add>, %362, %cst_124 [1] : vector<64x128xf32> to vector<64xf32>
    %364 = vector.shape_cast %363 : vector<64xf32> to vector<64x1xf32>
    %365 = tpu.reciprocal %364 {approx = true} : vector<64x1xf32> -> vector<64x1xf32>
    %366 = arith.mulf %364, %365 : vector<64x1xf32>
    %cst_125 = arith.constant 2.000000e+00 : f32
    %367 = vector.broadcast %cst_125 : f32 to vector<64x1xf32>
    %368 = arith.subf %367, %366 : vector<64x1xf32>
    %369 = arith.mulf %365, %368 : vector<64x1xf32>
    %370 = vector.broadcast %369 : vector<64x1xf32> to vector<64x128xf32>
    %371 = arith.mulf %362, %370 : vector<64x128xf32>
    %c0_126 = arith.constant 0 : index
    %c256 = arith.constant 256 : index
    %372 = vector.load %arg20[%c0_126, %c256] : memref<64x512xf32, #tpu.memory_space<vmem>>, vector<64x128xf32>
    tpu.vector_store %arg20[%c0_126, %c256], %371 {strides = array<i32>} : memref<64x512xf32, #tpu.memory_space<vmem>>, vector<64x128xf32>,
    %373 = vector.extract_strided_slice %324 {offsets = [0, 384], sizes = [64, 128], strides = [1, 1]} : vector<64x512xf32> to vector<64x128xf32>
    %cst_127 = arith.constant dense<0xFF800000> : vector<64xf32>
    %374 = vector.multi_reduction <maximumf>, %373, %cst_127 [1] : vector<64x128xf32> to vector<64xf32>
    %375 = vector.shape_cast %374 : vector<64xf32> to vector<64x1xf32>
    %376 = vector.broadcast %375 : vector<64x1xf32> to vector<64x128xf32>
    %377 = arith.subf %373, %376 : vector<64x128xf32>
    %378 = math.exp %377 : vector<64x128xf32>
    %cst_128 = arith.constant dense<0.000000e+00> : vector<64xf32>
    %379 = vector.multi_reduction <add>, %378, %cst_128 [1] : vector<64x128xf32> to vector<64xf32>
    %380 = vector.shape_cast %379 : vector<64xf32> to vector<64x1xf32>
    %381 = tpu.reciprocal %380 {approx = true} : vector<64x1xf32> -> vector<64x1xf32>
    %382 = arith.mulf %380, %381 : vector<64x1xf32>
    %cst_129 = arith.constant 2.000000e+00 : f32
    %383 = vector.broadcast %cst_129 : f32 to vector<64x1xf32>
    %384 = arith.subf %383, %382 : vector<64x1xf32>
    %385 = arith.mulf %381, %384 : vector<64x1xf32>
    %386 = vector.broadcast %385 : vector<64x1xf32> to vector<64x128xf32>
    %387 = arith.mulf %378, %386 : vector<64x128xf32>
    %c0_130 = arith.constant 0 : index
    %c384 = arith.constant 384 : index
    %388 = vector.load %arg20[%c0_130, %c384] : memref<64x512xf32, #tpu.memory_space<vmem>>, vector<64x128xf32>
    tpu.vector_store %arg20[%c0_130, %c384], %387 {strides = array<i32>} : memref<64x512xf32, #tpu.memory_space<vmem>>, vector<64x128xf32>,
    return
  }
  func.func @transform_0(%arg0: i32) -> (i32, i32) {
    %c0_i32 = arith.constant 0 : i32
    %c0_i32_0 = arith.constant 0 : i32
    %c0_i32_1 = arith.constant 0 : i32
    return %c0_i32, %c0_i32_0 : i32, i32
  }
  func.func @transform_1(%arg0: i32) -> (i32, i32) {
    %c0_i32 = arith.constant 0 : i32
    %c0_i32_0 = arith.constant 0 : i32
    %c0_i32_1 = arith.constant 0 : i32
    return %c0_i32, %c0_i32_0 : i32, i32
  }
  func.func @transform_2(%arg0: i32) -> (i32, i32) {
    %c0_i32 = arith.constant 0 : i32
    %c0_i32_0 = arith.constant 0 : i32
    %c0_i32_1 = arith.constant 0 : i32
    return %c0_i32, %c0_i32_0 : i32, i32
  }
  func.func @transform_3(%arg0: i32) -> (i32, i32) {
    %c0_i32 = arith.constant 0 : i32
    %c0_i32_0 = arith.constant 0 : i32
    %c0_i32_1 = arith.constant 0 : i32
    return %c0_i32, %c0_i32_0 : i32, i32
  }
  func.func @transform_4(%arg0: i32) -> (i32, i32) {
    %c0_i32 = arith.constant 0 : i32
    %c0_i32_0 = arith.constant 0 : i32
    %c0_i32_1 = arith.constant 0 : i32
    return %c0_i32, %c0_i32_0 : i32, i32
  }
  func.func @transform_5(%arg0: i32) -> (i32, i32) {
    %c0_i32 = arith.constant 0 : i32
    %c0_i32_0 = arith.constant 0 : i32
    %c0_i32_1 = arith.constant 0 : i32
    return %c0_i32, %c0_i32_0 : i32, i32
  }
  func.func @transform_6(%arg0: i32) -> (i32, i32) {
    %c0_i32 = arith.constant 0 : i32
    %c0_i32_0 = arith.constant 0 : i32
    %c0_i32_1 = arith.constant 0 : i32
    return %c0_i32, %c0_i32_0 : i32, i32
  }
  func.func @transform_7(%arg0: i32) -> (i32, i32) {
    %c0_i32 = arith.constant 0 : i32
    %c0_i32_0 = arith.constant 0 : i32
    %c0_i32_1 = arith.constant 0 : i32
    return %c0_i32, %c0_i32_0 : i32, i32
  }
  func.func @transform_8(%arg0: i32) -> (i32, i32) {
    %c0_i32 = arith.constant 0 : i32
    %c0_i32_0 = arith.constant 0 : i32
    %c0_i32_1 = arith.constant 0 : i32
    return %c0_i32, %c0_i32_0 : i32, i32
  }
  func.func @transform_9(%arg0: i32) -> (i32, i32) {
    %c0_i32 = arith.constant 0 : i32
    %c0_i32_0 = arith.constant 0 : i32
    %c0_i32_1 = arith.constant 0 : i32
    return %c0_i32, %c0_i32_0 : i32, i32
  }
  func.func @transform_10(%arg0: i32) -> (i32, i32) {
    %c0_i32 = arith.constant 0 : i32
    %c0_i32_0 = arith.constant 0 : i32
    %c0_i32_1 = arith.constant 0 : i32
    return %c0_i32, %c0_i32_0 : i32, i32
  }
  func.func @transform_11(%arg0: i32) -> (i32, i32) {
    %c0_i32 = arith.constant 0 : i32
    %c0_i32_0 = arith.constant 0 : i32
    %c0_i32_1 = arith.constant 0 : i32
    return %c0_i32, %c0_i32_0 : i32, i32
  }
  func.func @transform_12(%arg0: i32) -> (i32, i32) {
    %c0_i32 = arith.constant 0 : i32
    %c0_i32_0 = arith.constant 0 : i32
    %c0_i32_1 = arith.constant 0 : i32
    return %c0_i32, %c0_i32_0 : i32, i32
  }
  func.func @transform_13(%arg0: i32) -> (i32, i32) {
    %c0_i32 = arith.constant 0 : i32
    %c0_i32_0 = arith.constant 0 : i32
    %c0_i32_1 = arith.constant 0 : i32
    return %c0_i32, %c0_i32_0 : i32, i32
  }
  func.func @transform_14(%arg0: i32) -> (i32, i32) {
    %c0_i32 = arith.constant 0 : i32
    %c0_i32_0 = arith.constant 0 : i32
    %c0_i32_1 = arith.constant 0 : i32
    return %c0_i32, %c0_i32_0 : i32, i32
  }
  func.func @transform_19(%arg0: i32) -> (i32, i32) {
    %c0_i32 = arith.constant 0 : i32
    %c0_i32_0 = arith.constant 0 : i32
    %c0_i32_1 = arith.constant 0 : i32
    return %c0_i32, %c0_i32_0 : i32, i32
  }
  func.func @transform_20(%arg0: i32) -> (i32, i32) {
    %c0_i32 = arith.constant 0 : i32
    %c0_i32_0 = arith.constant 0 : i32
    %c0_i32_1 = arith.constant 0 : i32
    return %c0_i32, %c0_i32_0 : i32, i32
  }
  func.func @transform_21(%arg0: i32) -> (i32, i32) {
    %c0_i32 = arith.constant 0 : i32
    %c0_i32_0 = arith.constant 0 : i32
    %c0_i32_1 = arith.constant 0 : i32
    return %c0_i32, %c0_i32_0 : i32, i32
  }
}

</mosaic_0001>

<llo_original>
// kernel: rdqn_lstm_forward.1
$region0: #{rdqn_lstm_forward.1}
  #allocation0 [shape = 'u32[]', space=smem, size = 0x4, offset = 0x4, fixed_abs, tag = 'smem constant byte address 0x4 - core index']
  #allocation1 [shape = 'u32[72,128]{1,0:T(1,128)}', space=vmem, size = 0x9000, scoped, tag = 'internal scratch']
  #allocation2 [shape = 'f32[64,256]{1,0:T(8,128)}', space=vmem, size = 0x10000, scoped, tag = 'scratch operand']
  #allocation3 [shape = 'bf16[256,256]{1,0:T(8,128)(2,1)}', space=vmem, size = 0x20000, scoped, tag = 'scratch operand']
  #allocation4 [shape = 'bf16[256,256]{1,0:T(8,128)(2,1)}', space=vmem, size = 0x20000, scoped, tag = 'scratch operand']
  #allocation5 [shape = 'bf16[256,512]{1,0:T(8,128)(2,1)}', space=vmem, size = 0x40000, scoped, tag = 'scratch operand']
  #allocation6 [shape = 'bf16[256,512]{1,0:T(8,128)(2,1)}', space=vmem, size = 0x40000, scoped, tag = 'scratch operand']
  #allocation7 [shape = 's32[4]{0}', space=sflag, size = 0x10, scoped, tag = 'scratch operand']
  #allocation12 [shape = 's32[]', space=sflag, size = 0x4, offset = 0, fixed_abs, tag = 'sflag constant byte address 0x0 - dummy sync flag']
  #allocation13 [shape = 's32[]', space=sflag, size = 0x4, offset = 0, fixed_abs, tag = 'sflag constant byte address 0x0 - dummy sync flag']
  #allocation14 [shape = 'u32[]', space=smem, size = 0x4, offset = 0x44, fixed_abs, tag = 'smem constant byte address 0x44 - assertion arg 0']
  #allocation15 [shape = 'u32[]', space=smem, size = 0x4, offset = 0x48, fixed_abs, tag = 'smem constant byte address 0x48 - assertion arg 1']
  #allocation16 [shape = 's32[]', space=sflag, size = 0x4, offset = 0, fixed_abs, tag = 'sflag constant byte address 0x0 - dummy sync flag']
  #allocation17 [shape = 's32[]', space=sflag, size = 0x4, offset = 0, fixed_abs, tag = 'sflag constant byte address 0x0 - dummy sync flag']
  #allocation18 [shape = 's32[]', space=sflag, size = 0x4, offset = 0, fixed_abs, tag = 'sflag constant byte address 0x0 - dummy sync flag']
  #allocation19 [shape = 's32[]', space=sflag, size = 0x4, offset = 0, fixed_abs, tag = 'sflag constant byte address 0x0 - dummy sync flag']
  #allocation20 [shape = 's32[]', space=sflag, size = 0x4, offset = 0, fixed_abs, tag = 'sflag constant byte address 0x0 - dummy sync flag']
  #allocation21 [shape = 's32[]', space=sflag, size = 0x4, offset = 0, fixed_abs, tag = 'sflag constant byte address 0x0 - dummy sync flag']
  %s0 = inlined_call_operand.vmem [shape: f32[64,16], index: 0, kind: input, shape index: {}]
  %s1 = inlined_call_operand.vmem [shape: bf16[16,256], index: 1, kind: input, shape index: {}]
  %s2 = inlined_call_operand.vmem [shape: f32[1,256], index: 2, kind: input, shape index: {}]
  %s3 = inlined_call_operand.vmem [shape: bf16[256,128], index: 3, kind: input, shape index: {}]
  %s4 = inlined_call_operand.vmem [shape: f32[1,128], index: 4, kind: input, shape index: {}]
  %s5 = inlined_call_operand.vmem [shape: bf16[128,64], index: 5, kind: input, shape index: {}]
  %s6 = inlined_call_operand.vmem [shape: f32[1,64], index: 6, kind: input, shape index: {}]
  %s7 = inlined_call_operand.hbm [shape: bf16[64,1024], index: 7, kind: input, shape index: {}]
  %s8 = inlined_call_operand.hbm [shape: bf16[256,1024], index: 8, kind: input, shape index: {}]
  %s9 = inlined_call_operand.vmem [shape: f32[1,1024], index: 9, kind: input, shape index: {}]
  %s10 = inlined_call_operand.vmem [shape: f32[8,256], index: 10, kind: input, shape index: {}, may-alias: {10,11}]
  %s11 = inlined_call_operand.vmem [shape: f32[8,256], index: 11, kind: input, shape index: {}, may-alias: {10,11}]
  %s12 = inlined_call_operand.vmem [shape: f32[1,256], index: 12, kind: input, shape index: {}]
  %s13 = inlined_call_operand.vmem [shape: f32[1,256], index: 13, kind: input, shape index: {}]
  %s14 = inlined_call_operand.vmem [shape: f32[1,512], index: 14, kind: input, shape index: {}]
  %s15 = inlined_call_operand.hbm [shape: bf16[256,256], index: 15, kind: input, shape index: {}]
  %s16 = inlined_call_operand.hbm [shape: bf16[256,256], index: 16, kind: input, shape index: {}]
  %s17 = inlined_call_operand.hbm [shape: bf16[256,512], index: 17, kind: input, shape index: {}]
  %s18 = inlined_call_operand.hbm [shape: bf16[256,512], index: 18, kind: input, shape index: {}]
  %s19 = inlined_call_operand.vmem [shape: f32[64,512], index: 19, kind: output, shape index: {0}]
  %s20 = inlined_call_operand.vmem [shape: f32[8,256], index: 20, kind: output, shape index: {1}]
  %s21 = inlined_call_operand.vmem [shape: f32[8,256], index: 21, kind: output, shape index: {2}]
  %22 = xla_tuple %s19, %s20, %s21
  %s23 = sld [smem:[#allocation0]]
  $region110: #{rdqn_lstm_forward.1} parent=0
    _
  %s25 = ssub.s32 1, %s23
  %s26 = scalar_select 0, %s25, %s23
  $region1: #{rdqn_lstm_forward.1} parent=0
    #allocation8 [shape = 'u8[131072]{0}', space=vmem, size = 0x20000, scoped, tag = 'input window, operand 7, single buffered']
    #allocation9 [shape = 's32[1]{0}', space=sflag, size = 0x4, scoped, tag = 'scoped memory for rdqn_lstm_forward.1']
    #allocation10 [shape = 'u8[524288]{0}', space=vmem, size = 0x80000, scoped, tag = 'input window, operand 8, single buffered']
    #allocation11 [shape = 's32[1]{0}', space=sflag, size = 0x4, scoped, tag = 'scoped memory for rdqn_lstm_forward.1']
    %27 = vsyncpa [#allocation9], 0
    %28 = vsyncpa [#allocation11], 0
    // Predicated region
    $region2: #{rdqn_lstm_forward.1} parent=1 // pred_check
      _
    $region3: #{rdqn_lstm_forward.1} parent=1 // pred_check_branch
      %30 = sbr.rel (0) target = $region5
    $region4: #{rdqn_lstm_forward.1} parent=1 // pred_region
      _
    $region5: #{rdqn_lstm_forward.1} parent=1 // pred_fallthru
      _
    // Predicated region
    $region6: #{rdqn_lstm_forward.1} parent=1 // pred_check
      _
    $region7: #{rdqn_lstm_forward.1} parent=1 // pred_check_branch
      %32 = sbr.rel (0) target = $region9
    $region8: #{rdqn_lstm_forward.1} parent=1 // pred_region
      _
    $region9: #{rdqn_lstm_forward.1} parent=1 // pred_fallthru
      _
    // Predicated region
    $region10: #{rdqn_lstm_forward.1} parent=1 // pred_check
      _
    $region11: #{rdqn_lstm_forward.1} parent=1 // pred_check_branch
      %34 = sbr.rel (0) target = $region13
    $region12: #{rdqn_lstm_forward.1} parent=1 // pred_region
      _
    $region13: #{rdqn_lstm_forward.1} parent=1 // pred_fallthru
      _
    // Predicated region
    $region14: #{rdqn_lstm_forward.1} parent=1 // pred_check
      _
    $region15: #{rdqn_lstm_forward.1} parent=1 // pred_check_branch
      %36 = sbr.rel (0) target = $region17
    $region16: #{rdqn_lstm_forward.1} parent=1 // pred_region
      _
    $region17: #{rdqn_lstm_forward.1} parent=1 // pred_fallthru
      _
    // Predicated region
    $region18: #{rdqn_lstm_forward.1} parent=1 // pred_check
      _
    $region19: #{rdqn_lstm_forward.1} parent=1 // pred_check_branch
      %38 = sbr.rel (0) target = $region21
    $region20: #{rdqn_lstm_forward.1} parent=1 // pred_region
      _
    $region21: #{rdqn_lstm_forward.1} parent=1 // pred_fallthru
      _
    // Predicated region
    $region22: #{rdqn_lstm_forward.1} parent=1 // pred_check
      _
    $region23: #{rdqn_lstm_forward.1} parent=1 // pred_check_branch
      %40 = sbr.rel (0) target = $region25
    $region24: #{rdqn_lstm_forward.1} parent=1 // pred_region
      _
    $region25: #{rdqn_lstm_forward.1} parent=1 // pred_fallthru
      _
    // Predicated region
    $region26: #{rdqn_lstm_forward.1} parent=1 // pred_check
      _
    $region27: #{rdqn_lstm_forward.1} parent=1 // pred_check_branch
      %42 = sbr.rel (0) target = $region29
    $region28: #{rdqn_lstm_forward.1} parent=1 // pred_region
      _
    $region29: #{rdqn_lstm_forward.1} parent=1 // pred_fallthru
      _
    // Predicated region
    $region30: #{rdqn_lstm_forward.1} parent=1 // pred_check
      _
    $region31: #{rdqn_lstm_forward.1} parent=1 // pred_check_branch
      %44 = sbr.rel (0) target = $region33
    $region32: #{rdqn_lstm_forward.1} parent=1 // pred_region
      %46 = vsyncadd [#allocation9], 0
      %s47 = sshll.u32 %s7, 4
      %s48 = int_to_ptr.hbm [resolvable:$true] %s47
      %s49 = sshll.u32 [#allocation8], 4
      %s50 = int_to_ptr.vmem [resolvable:$true] %s49
      %55 = dma.hbm_to_vmem [thread:$0]  %s48, 4096, %s50, [#allocation9], 512, 512, 32
    $region33: #{rdqn_lstm_forward.1} parent=1 // pred_fallthru
      _
    // Predicated region
    $region34: #{rdqn_lstm_forward.1} parent=1 // pred_check
      _
    $region35: #{rdqn_lstm_forward.1} parent=1 // pred_check_branch
      %57 = sbr.rel (0) target = $region37
    $region36: #{rdqn_lstm_forward.1} parent=1 // pred_region
      %59 = vsyncadd [#allocation11], 0
      %s60 = sshll.u32 %s8, 4
      %s61 = int_to_ptr.hbm [resolvable:$true] %s60
      %s62 = sshll.u32 [#allocation10], 4
      %s63 = int_to_ptr.vmem [resolvable:$true] %s62
      %68 = dma.hbm_to_vmem [thread:$0]  %s61, 16384, %s63, [#allocation11], 512, 512, 32
    $region37: #{rdqn_lstm_forward.1} parent=1 // pred_fallthru
      _
    // Predicated region
    $region38: #{rdqn_lstm_forward.1} parent=1 // pred_check
      _
    $region39: #{rdqn_lstm_forward.1} parent=1 // pred_check_branch
      %70 = sbr.rel (0) target = $region41
    $region40: #{rdqn_lstm_forward.1} parent=1 // pred_region
      _
    $region41: #{rdqn_lstm_forward.1} parent=1 // pred_fallthru
      _
    // Predicated region
    $region42: #{rdqn_lstm_forward.1} parent=1 // pred_check
      _
    $region43: #{rdqn_lstm_forward.1} parent=1 // pred_check_branch
      %72 = sbr.rel (0) target = $region45
    $region44: #{rdqn_lstm_forward.1} parent=1 // pred_region
      _
    $region45: #{rdqn_lstm_forward.1} parent=1 // pred_fallthru
      _
    // Predicated region
    $region46: #{rdqn_lstm_forward.1} parent=1 // pred_check
      _
    $region47: #{rdqn_lstm_forward.1} parent=1 // pred_check_branch
      %74 = sbr.rel (0) target = $region49
    $region48: #{rdqn_lstm_forward.1} parent=1 // pred_region
      _
    $region49: #{rdqn_lstm_forward.1} parent=1 // pred_fallthru
      _
    // Predicated region
    $region50: #{rdqn_lstm_forward.1} parent=1 // pred_check
      _
    $region51: #{rdqn_lstm_forward.1} parent=1 // pred_check_branch
      %76 = sbr.rel (0) target = $region53
    $region52: #{rdqn_lstm_forward.1} parent=1 // pred_region
      _
    $region53: #{rdqn_lstm_forward.1} parent=1 // pred_fallthru
      _
    // Predicated region
    $region54: #{rdqn_lstm_forward.1} parent=1 // pred_check
      _
    $region55: #{rdqn_lstm_forward.1} parent=1 // pred_check_branch
      %78 = sbr.rel (0) target = $region57
    $region56: #{rdqn_lstm_forward.1} parent=1 // pred_region
      _
    $region57: #{rdqn_lstm_forward.1} parent=1 // pred_fallthru
      _
    // Predicated region
    $region58: #{rdqn_lstm_forward.1} parent=1 // pred_check
      _
    $region59: #{rdqn_lstm_forward.1} parent=1 // pred_check_branch
      %80 = sbr.rel (0) target = $region61
    $region60: #{rdqn_lstm_forward.1} parent=1 // pred_region
      _
    $region61: #{rdqn_lstm_forward.1} parent=1 // pred_fallthru
      _
    // Predicated region
    $region62: #{rdqn_lstm_forward.1} parent=1 // pred_check
      _
    $region63: #{rdqn_lstm_forward.1} parent=1 // pred_check_branch
      %82 = sbr.rel (0) target = $region65
    $region64: #{rdqn_lstm_forward.1} parent=1 // pred_region
      %84 = dma.done [#allocation9], 4096
    $region65: #{rdqn_lstm_forward.1} parent=1 // pred_fallthru
      _
    // Predicated region
    $region66: #{rdqn_lstm_forward.1} parent=1 // pred_check
      _
    $region67: #{rdqn_lstm_forward.1} parent=1 // pred_check_branch
      %86 = sbr.rel (0) target = $region69
    $region68: #{rdqn_lstm_forward.1} parent=1 // pred_region
      %88 = dma.done [#allocation11], 16384
    $region69: #{rdqn_lstm_forward.1} parent=1 // pred_fallthru
      _
    // Predicated region
    $region70: #{rdqn_lstm_forward.1} parent=1 // pred_check
      _
    $region71: #{rdqn_lstm_forward.1} parent=1 // pred_check_branch
      %91 = sbr.rel target = $region73
    $region72: #{rdqn_lstm_forward.1} parent=1 // pred_region
      %92 = sst [smem:[#allocation14]] [#allocation13]
      %93 = sst [smem:[#allocation15]] [#allocation12]
    $region73: #{rdqn_lstm_forward.1} parent=1 // pred_fallthru
      _
    %95 = shalt.err (0)
    %s97 = sshll.u32 %s15, 4
    %s98 = int_to_ptr.hbm [resolvable:$true] %s97
    %s99 = sshll.u32 [#allocation3], 4
    %s100 = int_to_ptr.vmem [resolvable:$true] %s99
    %102 = dma.hbm_to_vmem [thread:$0]  %s98, 4096, %s100, [#allocation7]
    %s103 = scalar_lea.sflag [#allocation7], 1
    // Predicated region
    $region74: #{rdqn_lstm_forward.1} parent=1 // pred_check
      _
    $region75: #{rdqn_lstm_forward.1} parent=1 // pred_check_branch
      %105 = sbr.rel target = $region77
    $region76: #{rdqn_lstm_forward.1} parent=1 // pred_region
      %106 = sst [smem:[#allocation14]] [#allocation17]
      %107 = sst [smem:[#allocation15]] [#allocation16]
    $region77: #{rdqn_lstm_forward.1} parent=1 // pred_fallthru
      _
    %109 = shalt.err (0)
    %s111 = sshll.u32 %s16, 4
    %s112 = int_to_ptr.hbm [resolvable:$true] %s111
    %s113 = sshll.u32 [#allocation4], 4
    %s114 = int_to_ptr.vmem [resolvable:$true] %s113
    %116 = dma.hbm_to_vmem [thread:$0]  %s112, 4096, %s114, %s103
    %s117 = scalar_lea.sflag [#allocation7], 2
    // Predicated region
    $region78: #{rdqn_lstm_forward.1} parent=1 // pred_check
      _
    $region79: #{rdqn_lstm_forward.1} parent=1 // pred_check_branch
      %119 = sbr.rel target = $region81
    $region80: #{rdqn_lstm_forward.1} parent=1 // pred_region
      %120 = sst [smem:[#allocation14]] [#allocation19]
      %121 = sst [smem:[#allocation15]] [#allocation18]
    $region81: #{rdqn_lstm_forward.1} parent=1 // pred_fallthru
      _
    %123 = shalt.err (0)
    %s125 = sshll.u32 %s17, 4
    %s126 = int_to_ptr.hbm [resolvable:$true] %s125
    %s127 = sshll.u32 [#allocation5], 4
    %s128 = int_to_ptr.vmem [resolvable:$true] %s127
    %130 = dma.hbm_to_vmem [thread:$0]  %s126, 8192, %s128, %s117
    %s131 = scalar_lea.sflag [#allocation7], 3
    // Predicated region
    $region82: #{rdqn_lstm_forward.1} parent=1 // pred_check
      _
    $region83: #{rdqn_lstm_forward.1} parent=1 // pred_check_branch
      %133 = sbr.rel target = $region85
    $region84: #{rdqn_lstm_forward.1} parent=1 // pred_region
      %134 = sst [smem:[#allocation14]] [#allocation21]
      %135 = sst [smem:[#allocation15]] [#allocation20]
    $region85: #{rdqn_lstm_forward.1} parent=1 // pred_fallthru
      _
    %137 = shalt.err (0)
    %s139 = sshll.u32 %s18, 4
    %s140 = int_to_ptr.hbm [resolvable:$true] %s139
    %s141 = sshll.u32 [#allocation6], 4
    %s142 = int_to_ptr.vmem [resolvable:$true] %s141
    %144 = dma.hbm_to_vmem [thread:$0]  %s140, 8192, %s142, %s131
    %v145 = vld [vmem:[%s0] sm:$0xff]
    %v146 = vld [vmem:[%s0 + $0x8] sm:$0xff]
    %v147 = vld [vmem:[%s0 + $0x10] sm:$0xff]
    %v148 = vld [vmem:[%s0 + $0x18] sm:$0xff]
    %v149 = vld [vmem:[%s0 + $0x20] sm:$0xff]
    %v150 = vld [vmem:[%s0 + $0x28] sm:$0xff]
    %v151 = vld [vmem:[%s0 + $0x30] sm:$0xff]
    %v152 = vld [vmem:[%s0 + $0x38] sm:$0xff]
    %v153 = vpack.c.bf16 %v146, %v145
    %v154 = vpack.c.bf16 %v148, %v147
    %v155 = vpack.c.bf16 %v150, %v149
    %v156 = vpack.c.bf16 %v152, %v151
    %v157 = vld [vmem:[%s1] sm:$0xff]
    %v158 = vld [vmem:[%s1 + $0x8] sm:$0xff]
    %v159 = vld [vmem:[%s2] sm:$0x3]
    %v161 = vperm.slane %v159, 0
    %v162 = vperm.slane %v159, 1
    %v167 = vunpack.c.l.b16 %v157
    %v168 = vunpack.c.h.b16 %v157
    %v169 = vunpack.c.l.b16 %v158
    %v170 = vunpack.c.h.b16 %v158
    %v171 = vpack.c.b16 %v169, %v167
    %v172 = vpack.c.b16 %v170, %v168
    %vm175 = vcmask 130048
    %v177 = vsel %vm175, %v153, 0
    %v180 = vsel %vm175, %v154, 0
    %v183 = vsel %vm175, %v155, 0
    %v186 = vsel %vm175, %v156, 0
    %188 = vmatpush.bf16.msra.mxu0 0
    %189 = vmatpush.bf16.msra.mxu0 0
    %190 = vmatpush.bf16.msra.mxu0 0
    %191 = vmatpush.bf16.msra.mxu0 0
    %192 = vmatpush.bf16.msra.mxu0 0
    %193 = vmatpush.bf16.msra.mxu0 0
    %194 = vmatpush.bf16.msra.mxu0 0
    %195 = vmatpush.bf16.msra.mxu0 %v171
    %196 = vmatmul.bf16.gmra.mxu0 %v177
    %v197 = vpop.f32.mrf.mxu0
    %v198 = vadd.f32 %v161, %v197
    %v199 = vpop.f32.mrf.mxu0
    %v200 = vadd.f32 %v161, %v199
    %201 = vmatmul.bf16.gmra.mxu0 %v180
    %v202 = vpop.f32.mrf.mxu0
    %v203 = vadd.f32 %v161, %v202
    %v204 = vpop.f32.mrf.mxu0
    %v205 = vadd.f32 %v161, %v204
    %206 = vmatmul.bf16.gmra.mxu0 %v183
    %v207 = vpop.f32.mrf.mxu0
    %v208 = vadd.f32 %v161, %v207
    %v209 = vpop.f32.mrf.mxu0
    %v210 = vadd.f32 %v161, %v209
    %211 = vmatmul.bf16.gmra.mxu0 %v186
    %v212 = vpop.f32.mrf.mxu0
    %v213 = vadd.f32 %v161, %v212
    %v214 = vpop.f32.mrf.mxu0
    %v215 = vadd.f32 %v161, %v214
    %216 = vdwg.mxu0
    %217 = vmatpush.bf16.msra.mxu0 0
    %218 = vmatpush.bf16.msra.mxu0 0
    %219 = vmatpush.bf16.msra.mxu0 0
    %220 = vmatpush.bf16.msra.mxu0 0
    %221 = vmatpush.bf16.msra.mxu0 0
    %222 = vmatpush.bf16.msra.mxu0 0
    %223 = vmatpush.bf16.msra.mxu0 0
    %224 = vmatpush.bf16.msra.mxu0 %v172
    %225 = vmatmul.bf16.gmra.mxu0 %v177
    %v226 = vpop.f32.mrf.mxu0
    %v227 = vadd.f32 %v162, %v226
    %v228 = vpop.f32.mrf.mxu0
    %v229 = vadd.f32 %v162, %v228
    %230 = vmatmul.bf16.gmra.mxu0 %v180
    %v231 = vpop.f32.mrf.mxu0
    %v232 = vadd.f32 %v162, %v231
    %v233 = vpop.f32.mrf.mxu0
    %v234 = vadd.f32 %v162, %v233
    %235 = vmatmul.bf16.gmra.mxu0 %v183
    %v236 = vpop.f32.mrf.mxu0
    %v237 = vadd.f32 %v162, %v236
    %v238 = vpop.f32.mrf.mxu0
    %v239 = vadd.f32 %v162, %v238
    %240 = vmatmul.bf16.gmra.mxu0 %v186
    %v241 = vpop.f32.mrf.mxu0
    %v242 = vadd.f32 %v162, %v241
    %v243 = vpop.f32.mrf.mxu0
    %v244 = vadd.f32 %v162, %v243
    %245 = vdwg.mxu0
    %v246 = vmax.f32 %v198, 0.0
    %v247 = vmax.f32 %v227, 0.0
    %v248 = vmax.f32 %v200, 0.0
    %v249 = vmax.f32 %v229, 0.0
    %v250 = vmax.f32 %v203, 0.0
    %v251 = vmax.f32 %v232, 0.0
    %v252 = vmax.f32 %v205, 0.0
    %v253 = vmax.f32 %v234, 0.0
    %v254 = vmax.f32 %v208, 0.0
    %v255 = vmax.f32 %v237, 0.0
    %v256 = vmax.f32 %v210, 0.0
    %v257 = vmax.f32 %v239, 0.0
    %v258 = vmax.f32 %v213, 0.0
    %v259 = vmax.f32 %v242, 0.0
    %v260 = vmax.f32 %v215, 0.0
    %v261 = vmax.f32 %v244, 0.0
    %v262 = vpack.c.bf16 %v248, %v246
    %v263 = vpack.c.bf16 %v249, %v247
    %v264 = vpack.c.bf16 %v252, %v250
    %v265 = vpack.c.bf16 %v253, %v251
    %v266 = vpack.c.bf16 %v256, %v254
    %v267 = vpack.c.bf16 %v257, %v255
    %v268 = vpack.c.bf16 %v260, %v258
    %v269 = vpack.c.bf16 %v261, %v259
    %v270 = vld [vmem:[%s3] sm:$0xf]
    %v271 = vld [vmem:[%s3 + $0x4] sm:$0xf]
    %v272 = vld [vmem:[%s3 + $0x8] sm:$0xf]
    %v273 = vld [vmem:[%s3 + $0xc] sm:$0xf]
    %v274 = vld [vmem:[%s3 + $0x10] sm:$0xf]
    %v275 = vld [vmem:[%s3 + $0x14] sm:$0xf]
    %v276 = vld [vmem:[%s3 + $0x18] sm:$0xf]
    %v277 = vld [vmem:[%s3 + $0x1c] sm:$0xf]
    %v278 = vld [vmem:[%s3 + $0x20] sm:$0xf]
    %v279 = vld [vmem:[%s3 + $0x24] sm:$0xf]
    %v280 = vld [vmem:[%s3 + $0x28] sm:$0xf]
    %v281 = vld [vmem:[%s3 + $0x2c] sm:$0xf]
    %v282 = vld [vmem:[%s3 + $0x30] sm:$0xf]
    %v283 = vld [vmem:[%s3 + $0x34] sm:$0xf]
    %v284 = vld [vmem:[%s3 + $0x38] sm:$0xf]
    %v285 = vld [vmem:[%s3 + $0x3c] sm:$0xf]
    %v286 = vld [vmem:[%s3 + $0x40] sm:$0xf]
    %v287 = vld [vmem:[%s3 + $0x44] sm:$0xf]
    %v288 = vld [vmem:[%s3 + $0x48] sm:$0xf]
    %v289 = vld [vmem:[%s3 + $0x4c] sm:$0xf]
    %v290 = vld [vmem:[%s3 + $0x50] sm:$0xf]
    %v291 = vld [vmem:[%s3 + $0x54] sm:$0xf]
    %v292 = vld [vmem:[%s3 + $0x58] sm:$0xf]
    %v293 = vld [vmem:[%s3 + $0x5c] sm:$0xf]
    %v294 = vld [vmem:[%s3 + $0x60] sm:$0xf]
    %v295 = vld [vmem:[%s3 + $0x64] sm:$0xf]
    %v296 = vld [vmem:[%s3 + $0x68] sm:$0xf]
    %v297 = vld [vmem:[%s3 + $0x6c] sm:$0xf]
    %v298 = vld [vmem:[%s3 + $0x70] sm:$0xf]
    %v299 = vld [vmem:[%s3 + $0x74] sm:$0xf]
    %v300 = vld [vmem:[%s3 + $0x78] sm:$0xf]
    %v301 = vld [vmem:[%s3 + $0x7c] sm:$0xf]
    %v302 = vld [vmem:[%s4] sm:$0x1]
    %v304 = vperm.slane %v302, 0
    %v338 = vunpack.c.l.b16 %v270
    %v339 = vunpack.c.l.b16 %v271
    %v340 = vunpack.c.l.b16 %v272
    %v341 = vunpack.c.l.b16 %v273
    %v342 = vunpack.c.l.b16 %v274
    %v343 = vunpack.c.l.b16 %v275
    %v344 = vunpack.c.l.b16 %v276
    %v345 = vunpack.c.l.b16 %v277
    %v346 = vunpack.c.l.b16 %v278
    %v347 = vunpack.c.l.b16 %v279
    %v348 = vunpack.c.l.b16 %v280
    %v349 = vunpack.c.l.b16 %v281
    %v350 = vunpack.c.l.b16 %v282
    %v351 = vunpack.c.l.b16 %v283
    %v352 = vunpack.c.l.b16 %v284
    %v353 = vunpack.c.l.b16 %v285
    %v354 = vunpack.c.l.b16 %v286
    %v355 = vunpack.c.l.b16 %v287
    %v356 = vunpack.c.l.b16 %v288
    %v357 = vunpack.c.l.b16 %v289
    %v358 = vunpack.c.l.b16 %v290
    %v359 = vunpack.c.l.b16 %v291
    %v360 = vunpack.c.l.b16 %v292
    %v361 = vunpack.c.l.b16 %v293
    %v362 = vunpack.c.l.b16 %v294
    %v363 = vunpack.c.l.b16 %v295
    %v364 = vunpack.c.l.b16 %v296
    %v365 = vunpack.c.l.b16 %v297
    %v366 = vunpack.c.l.b16 %v298
    %v367 = vunpack.c.l.b16 %v299
    %v368 = vunpack.c.l.b16 %v300
    %v369 = vunpack.c.l.b16 %v301
    %v370 = vpack.c.b16 %v339, %v338
    %v371 = vpack.c.b16 %v341, %v340
    %v372 = vpack.c.b16 %v343, %v342
    %v373 = vpack.c.b16 %v345, %v344
    %v374 = vpack.c.b16 %v347, %v346
    %v375 = vpack.c.b16 %v349, %v348
    %v376 = vpack.c.b16 %v351, %v350
    %v377 = vpack.c.b16 %v353, %v352
    %v378 = vpack.c.b16 %v355, %v354
    %v379 = vpack.c.b16 %v357, %v356
    %v380 = vpack.c.b16 %v359, %v358
    %v381 = vpack.c.b16 %v361, %v360
    %v382 = vpack.c.b16 %v363, %v362
    %v383 = vpack.c.b16 %v365, %v364
    %v384 = vpack.c.b16 %v367, %v366
    %v385 = vpack.c.b16 %v369, %v368
    %402 = vmatpush.bf16.msra.mxu0 %v377
    %403 = vmatpush.bf16.msra.mxu0 %v376
    %404 = vmatpush.bf16.msra.mxu0 %v375
    %405 = vmatpush.bf16.msra.mxu0 %v374
    %406 = vmatpush.bf16.msra.mxu0 %v373
    %407 = vmatpush.bf16.msra.mxu0 %v372
    %408 = vmatpush.bf16.msra.mxu0 %v371
    %409 = vmatpush.bf16.msra.mxu0 %v370
    %410 = vmatmul.bf16.gmra.mxu0 %v262
    %v411 = vpop.f32.mrf.mxu0
    %v412 = vadd.f32 %v304, %v411
    %v413 = vpop.f32.mrf.mxu0
    %v414 = vadd.f32 %v304, %v413
    %415 = vmatmul.bf16.gmra.mxu0 %v264
    %v416 = vpop.f32.mrf.mxu0
    %v417 = vadd.f32 %v304, %v416
    %v418 = vpop.f32.mrf.mxu0
    %v419 = vadd.f32 %v304, %v418
    %420 = vmatmul.bf16.gmra.mxu0 %v266
    %v421 = vpop.f32.mrf.mxu0
    %v422 = vadd.f32 %v304, %v421
    %v423 = vpop.f32.mrf.mxu0
    %v424 = vadd.f32 %v304, %v423
    %425 = vmatmul.bf16.gmra.mxu0 %v268
    %v426 = vpop.f32.mrf.mxu0
    %v427 = vadd.f32 %v304, %v426
    %v428 = vpop.f32.mrf.mxu0
    %v429 = vadd.f32 %v304, %v428
    %430 = vdwg.mxu0
    %431 = vmatpush.bf16.msra.mxu0 %v385
    %432 = vmatpush.bf16.msra.mxu0 %v384
    %433 = vmatpush.bf16.msra.mxu0 %v383
    %434 = vmatpush.bf16.msra.mxu0 %v382
    %435 = vmatpush.bf16.msra.mxu0 %v381
    %436 = vmatpush.bf16.msra.mxu0 %v380
    %437 = vmatpush.bf16.msra.mxu0 %v379
    %438 = vmatpush.bf16.msra.mxu0 %v378
    %439 = vmatmul.bf16.gmra.mxu0 %v263
    %v440 = vpop.f32.mrf.mxu0
    %v441 = vadd.f32 %v412, %v440
    %v442 = vpop.f32.mrf.mxu0
    %v443 = vadd.f32 %v414, %v442
    %444 = vmatmul.bf16.gmra.mxu0 %v265
    %v445 = vpop.f32.mrf.mxu0
    %v446 = vadd.f32 %v417, %v445
    %v447 = vpop.f32.mrf.mxu0
    %v448 = vadd.f32 %v419, %v447
    %449 = vmatmul.bf16.gmra.mxu0 %v267
    %v450 = vpop.f32.mrf.mxu0
    %v451 = vadd.f32 %v422, %v450
    %v452 = vpop.f32.mrf.mxu0
    %v453 = vadd.f32 %v424, %v452
    %454 = vmatmul.bf16.gmra.mxu0 %v269
    %v455 = vpop.f32.mrf.mxu0
    %v456 = vadd.f32 %v427, %v455
    %v457 = vpop.f32.mrf.mxu0
    %v458 = vadd.f32 %v429, %v457
    %459 = vdwg.mxu0
    %v460 = vmax.f32 %v441, 0.0
    %v461 = vmax.f32 %v443, 0.0
    %v462 = vmax.f32 %v446, 0.0
    %v463 = vmax.f32 %v448, 0.0
    %v464 = vmax.f32 %v451, 0.0
    %v465 = vmax.f32 %v453, 0.0
    %v466 = vmax.f32 %v456, 0.0
    %v467 = vmax.f32 %v458, 0.0
    %v468 = vpack.c.bf16 %v461, %v460
    %v469 = vpack.c.bf16 %v463, %v462
    %v470 = vpack.c.bf16 %v465, %v464
    %v471 = vpack.c.bf16 %v467, %v466
    %v472 = vld [vmem:[%s5] sm:$0xf]
    %v473 = vld [vmem:[%s5 + $0x4] sm:$0xf]
    %v474 = vld [vmem:[%s5 + $0x8] sm:$0xf]
    %v475 = vld [vmem:[%s5 + $0xc] sm:$0xf]
    %v476 = vld [vmem:[%s5 + $0x10] sm:$0xf]
    %v477 = vld [vmem:[%s5 + $0x14] sm:$0xf]
    %v478 = vld [vmem:[%s5 + $0x18] sm:$0xf]
    %v479 = vld [vmem:[%s5 + $0x1c] sm:$0xf]
    %v480 = vld [vmem:[%s5 + $0x20] sm:$0xf]
    %v481 = vld [vmem:[%s5 + $0x24] sm:$0xf]
    %v482 = vld [vmem:[%s5 + $0x28] sm:$0xf]
    %v483 = vld [vmem:[%s5 + $0x2c] sm:$0xf]
    %v484 = vld [vmem:[%s5 + $0x30] sm:$0xf]
    %v485 = vld [vmem:[%s5 + $0x34] sm:$0xf]
    %v486 = vld [vmem:[%s5 + $0x38] sm:$0xf]
    %v487 = vld [vmem:[%s5 + $0x3c] sm:$0xf]
    %v488 = vld [vmem:[%s6] sm:$0x1]
    %v490 = vperm.slane %v488, 0
    %v508 = vunpack.c.l.b16 %v472
    %v509 = vunpack.c.l.b16 %v473
    %v510 = vunpack.c.l.b16 %v474
    %v511 = vunpack.c.l.b16 %v475
    %v512 = vunpack.c.l.b16 %v476
    %v513 = vunpack.c.l.b16 %v477
    %v514 = vunpack.c.l.b16 %v478
    %v515 = vunpack.c.l.b16 %v479
    %v516 = vunpack.c.l.b16 %v480
    %v517 = vunpack.c.l.b16 %v481
    %v518 = vunpack.c.l.b16 %v482
    %v519 = vunpack.c.l.b16 %v483
    %v520 = vunpack.c.l.b16 %v484
    %v521 = vunpack.c.l.b16 %v485
    %v522 = vunpack.c.l.b16 %v486
    %v523 = vunpack.c.l.b16 %v487
    %v524 = vpack.c.b16 %v509, %v508
    %v525 = vpack.c.b16 %v511, %v510
    %v526 = vpack.c.b16 %v513, %v512
    %v527 = vpack.c.b16 %v515, %v514
    %v528 = vpack.c.b16 %v517, %v516
    %v529 = vpack.c.b16 %v519, %v518
    %v530 = vpack.c.b16 %v521, %v520
    %v531 = vpack.c.b16 %v523, %v522
    %540 = vmatpush.bf16.msra.mxu0 %v531
    %541 = vmatpush.bf16.msra.mxu0 %v530
    %542 = vmatpush.bf16.msra.mxu0 %v529
    %543 = vmatpush.bf16.msra.mxu0 %v528
    %544 = vmatpush.bf16.msra.mxu0 %v527
    %545 = vmatpush.bf16.msra.mxu0 %v526
    %546 = vmatpush.bf16.msra.mxu0 %v525
    %547 = vmatpush.bf16.msra.mxu0 %v524
    %548 = vmatmul.bf16.gmra.mxu0 %v468
    %v549 = vpop.f32.mrf.mxu0
    %v550 = vadd.f32 %v490, %v549
    %v551 = vpop.f32.mrf.mxu0
    %v552 = vadd.f32 %v490, %v551
    %553 = vmatmul.bf16.gmra.mxu0 %v469
    %v554 = vpop.f32.mrf.mxu0
    %v555 = vadd.f32 %v490, %v554
    %v556 = vpop.f32.mrf.mxu0
    %v557 = vadd.f32 %v490, %v556
    %558 = vmatmul.bf16.gmra.mxu0 %v470
    %v559 = vpop.f32.mrf.mxu0
    %v560 = vadd.f32 %v490, %v559
    %v561 = vpop.f32.mrf.mxu0
    %v562 = vadd.f32 %v490, %v561
    %563 = vmatmul.bf16.gmra.mxu0 %v471
    %v564 = vpop.f32.mrf.mxu0
    %v565 = vadd.f32 %v490, %v564
    %v566 = vpop.f32.mrf.mxu0
    %v567 = vadd.f32 %v490, %v566
    %568 = vdwg.mxu0
    %v569 = vmax.f32 %v550, 0.0
    %v570 = vmax.f32 %v552, 0.0
    %v571 = vmax.f32 %v555, 0.0
    %v572 = vmax.f32 %v557, 0.0
    %v573 = vmax.f32 %v560, 0.0
    %v574 = vmax.f32 %v562, 0.0
    %v575 = vmax.f32 %v565, 0.0
    %v576 = vmax.f32 %v567, 0.0
    %v577 = vpack.c.bf16 %v570, %v569
    %v578 = vpack.c.bf16 %v572, %v571
    %v579 = vpack.c.bf16 %v574, %v573
    %v580 = vpack.c.bf16 %v576, %v575
    %v581 = vld [vmem:[#allocation8] sm:$0xff]
    %v582 = vld [vmem:[#allocation8 + $0x8] sm:$0xff]
    %v583 = vld [vmem:[#allocation8 + $0x10] sm:$0xff]
    %v584 = vld [vmem:[#allocation8 + $0x18] sm:$0xff]
    %v585 = vld [vmem:[#allocation8 + $0x20] sm:$0xff]
    %v586 = vld [vmem:[#allocation8 + $0x28] sm:$0xff]
    %v587 = vld [vmem:[#allocation8 + $0x30] sm:$0xff]
    %v588 = vld [vmem:[#allocation8 + $0x38] sm:$0xff]
    %v589 = vld [vmem:[#allocation8 + $0x40] sm:$0xff]
    %v590 = vld [vmem:[#allocation8 + $0x48] sm:$0xff]
    %v591 = vld [vmem:[#allocation8 + $0x50] sm:$0xff]
    %v592 = vld [vmem:[#allocation8 + $0x58] sm:$0xff]
    %v593 = vld [vmem:[#allocation8 + $0x60] sm:$0xff]
    %v594 = vld [vmem:[#allocation8 + $0x68] sm:$0xff]
    %v595 = vld [vmem:[#allocation8 + $0x70] sm:$0xff]
    %v596 = vld [vmem:[#allocation8 + $0x78] sm:$0xff]
    %v597 = vld [vmem:[#allocation8 + $0x80] sm:$0xff]
    %v598 = vld [vmem:[#allocation8 + $0x88] sm:$0xff]
    %v599 = vld [vmem:[#allocation8 + $0x90] sm:$0xff]
    %v600 = vld [vmem:[#allocation8 + $0x98] sm:$0xff]
    %v601 = vld [vmem:[#allocation8 + $0xa0] sm:$0xff]
    %v602 = vld [vmem:[#allocation8 + $0xa8] sm:$0xff]
    %v603 = vld [vmem:[#allocation8 + $0xb0] sm:$0xff]
    %v604 = vld [vmem:[#allocation8 + $0xb8] sm:$0xff]
    %v605 = vld [vmem:[#allocation8 + $0xc0] sm:$0xff]
    %v606 = vld [vmem:[#allocation8 + $0xc8] sm:$0xff]
    %v607 = vld [vmem:[#allocation8 + $0xd0] sm:$0xff]
    %v608 = vld [vmem:[#allocation8 + $0xd8] sm:$0xff]
    %v609 = vld [vmem:[#allocation8 + $0xe0] sm:$0xff]
    %v610 = vld [vmem:[#allocation8 + $0xe8] sm:$0xff]
    %v611 = vld [vmem:[#allocation8 + $0xf0] sm:$0xff]
    %v612 = vld [vmem:[#allocation8 + $0xf8] sm:$0xff]
    %v613 = vld [vmem:[%s9] sm:$0xff]
    %v615 = vperm.slane %v613, 0
    %v616 = vperm.slane %v613, 1
    %v617 = vperm.slane %v613, 2
    %v618 = vperm.slane %v613, 3
    %v619 = vperm.slane %v613, 4
    %v620 = vperm.slane %v613, 5
    %v621 = vperm.slane %v613, 6
    %v622 = vperm.slane %v613, 7
    %v663 = vunpack.c.l.b16 %v581
    %v664 = vunpack.c.h.b16 %v581
    %v665 = vunpack.c.l.b16 %v582
    %v666 = vunpack.c.h.b16 %v582
    %v667 = vunpack.c.l.b16 %v583
    %v668 = vunpack.c.h.b16 %v583
    %v669 = vunpack.c.l.b16 %v584
    %v670 = vunpack.c.h.b16 %v584
    %v671 = vunpack.c.l.b16 %v585
    %v672 = vunpack.c.h.b16 %v585
    %v673 = vunpack.c.l.b16 %v586
    %v674 = vunpack.c.h.b16 %v586
    %v675 = vunpack.c.l.b16 %v587
    %v676 = vunpack.c.h.b16 %v587
    %v677 = vunpack.c.l.b16 %v588
    %v678 = vunpack.c.h.b16 %v588
    %v679 = vunpack.c.l.b16 %v589
    %v680 = vunpack.c.h.b16 %v589
    %v681 = vunpack.c.l.b16 %v590
    %v682 = vunpack.c.h.b16 %v590
    %v683 = vunpack.c.l.b16 %v591
    %v684 = vunpack.c.h.b16 %v591
    %v685 = vunpack.c.l.b16 %v592
    %v686 = vunpack.c.h.b16 %v592
    %v687 = vunpack.c.l.b16 %v593
    %v688 = vunpack.c.h.b16 %v593
    %v689 = vunpack.c.l.b16 %v594
    %v690 = vunpack.c.h.b16 %v594
    %v691 = vunpack.c.l.b16 %v595
    %v692 = vunpack.c.h.b16 %v595
    %v693 = vunpack.c.l.b16 %v596
    %v694 = vunpack.c.h.b16 %v596
    %v695 = vunpack.c.l.b16 %v597
    %v696 = vunpack.c.h.b16 %v597
    %v697 = vunpack.c.l.b16 %v598
    %v698 = vunpack.c.h.b16 %v598
    %v699 = vunpack.c.l.b16 %v599
    %v700 = vunpack.c.h.b16 %v599
    %v701 = vunpack.c.l.b16 %v600
    %v702 = vunpack.c.h.b16 %v600
    %v703 = vunpack.c.l.b16 %v601
    %v704 = vunpack.c.h.b16 %v601
    %v705 = vunpack.c.l.b16 %v602
    %v706 = vunpack.c.h.b16 %v602
    %v707 = vunpack.c.l.b16 %v603
    %v708 = vunpack.c.h.b16 %v603
    %v709 = vunpack.c.l.b16 %v604
    %v710 = vunpack.c.h.b16 %v604
    %v711 = vunpack.c.l.b16 %v605
    %v712 = vunpack.c.h.b16 %v605
    %v713 = vunpack.c.l.b16 %v606
    %v714 = vunpack.c.h.b16 %v606
    %v715 = vunpack.c.l.b16 %v607
    %v716 = vunpack.c.h.b16 %v607
    %v717 = vunpack.c.l.b16 %v608
    %v718 = vunpack.c.h.b16 %v608
    %v719 = vunpack.c.l.b16 %v609
    %v720 = vunpack.c.h.b16 %v609
    %v721 = vunpack.c.l.b16 %v610
    %v722 = vunpack.c.h.b16 %v610
    %v723 = vunpack.c.l.b16 %v611
    %v724 = vunpack.c.h.b16 %v611
    %v725 = vunpack.c.l.b16 %v612
    %v726 = vunpack.c.h.b16 %v612
    %v727 = vpack.c.b16 %v671, %v663
    %v728 = vpack.c.b16 %v672, %v664
    %v729 = vpack.c.b16 %v673, %v665
    %v730 = vpack.c.b16 %v674, %v666
    %v731 = vpack.c.b16 %v675, %v667
    %v732 = vpack.c.b16 %v676, %v668
    %v733 = vpack.c.b16 %v677, %v669
    %v734 = vpack.c.b16 %v678, %v670
    %v735 = vpack.c.b16 %v687, %v679
    %v736 = vpack.c.b16 %v688, %v680
    %v737 = vpack.c.b16 %v689, %v681
    %v738 = vpack.c.b16 %v690, %v682
    %v739 = vpack.c.b16 %v691, %v683
    %v740 = vpack.c.b16 %v692, %v684
    %v741 = vpack.c.b16 %v693, %v685
    %v742 = vpack.c.b16 %v694, %v686
    %v743 = vpack.c.b16 %v703, %v695
    %v744 = vpack.c.b16 %v704, %v696
    %v745 = vpack.c.b16 %v705, %v697
    %v746 = vpack.c.b16 %v706, %v698
    %v747 = vpack.c.b16 %v707, %v699
    %v748 = vpack.c.b16 %v708, %v700
    %v749 = vpack.c.b16 %v709, %v701
    %v750 = vpack.c.b16 %v710, %v702
    %v751 = vpack.c.b16 %v719, %v711
    %v752 = vpack.c.b16 %v720, %v712
    %v753 = vpack.c.b16 %v721, %v713
    %v754 = vpack.c.b16 %v722, %v714
    %v755 = vpack.c.b16 %v723, %v715
    %v756 = vpack.c.b16 %v724, %v716
    %v757 = vpack.c.b16 %v725, %v717
    %v758 = vpack.c.b16 %v726, %v718
    %vm791 = vcmask 523264
    %v793 = vsel %vm791, %v577, 0
    %v796 = vsel %vm791, %v578, 0
    %v799 = vsel %vm791, %v579, 0
    %v802 = vsel %vm791, %v580, 0
    %804 = vmatpush.bf16.msra.mxu0 0
    %805 = vmatpush.bf16.msra.mxu0 0
    %806 = vmatpush.bf16.msra.mxu0 0
    %807 = vmatpush.bf16.msra.mxu0 0
    %808 = vmatpush.bf16.msra.mxu0 %v751
    %809 = vmatpush.bf16.msra.mxu0 %v743
    %810 = vmatpush.bf16.msra.mxu0 %v735
    %811 = vmatpush.bf16.msra.mxu0 %v727
    %812 = vmatmul.bf16.gmra.mxu0 %v793
    %v813 = vpop.f32.mrf.mxu0
    %v814 = vadd.f32 %v615, %v813
    %v815 = vpop.f32.mrf.mxu0
    %v816 = vadd.f32 %v615, %v815
    %817 = vmatmul.bf16.gmra.mxu0 %v796
    %v818 = vpop.f32.mrf.mxu0
    %v819 = vadd.f32 %v615, %v818
    %v820 = vpop.f32.mrf.mxu0
    %v821 = vadd.f32 %v615, %v820
    %822 = vmatmul.bf16.gmra.mxu0 %v799
    %v823 = vpop.f32.mrf.mxu0
    %v824 = vadd.f32 %v615, %v823
    %v825 = vpop.f32.mrf.mxu0
    %v826 = vadd.f32 %v615, %v825
    %827 = vmatmul.bf16.gmra.mxu0 %v802
    %v828 = vpop.f32.mrf.mxu0
    %v829 = vadd.f32 %v615, %v828
    %v830 = vpop.f32.mrf.mxu0
    %v831 = vadd.f32 %v615, %v830
    %832 = vdwg.mxu0
    %833 = vmatpush.bf16.msra.mxu0 0
    %834 = vmatpush.bf16.msra.mxu0 0
    %835 = vmatpush.bf16.msra.mxu0 0
    %836 = vmatpush.bf16.msra.mxu0 0
    %837 = vmatpush.bf16.msra.mxu0 %v752
    %838 = vmatpush.bf16.msra.mxu0 %v744
    %839 = vmatpush.bf16.msra.mxu0 %v736
    %840 = vmatpush.bf16.msra.mxu0 %v728
    %841 = vmatmul.bf16.gmra.mxu0 %v793
    %v842 = vpop.f32.mrf.mxu0
    %v843 = vadd.f32 %v616, %v842
    %v844 = vpop.f32.mrf.mxu0
    %v845 = vadd.f32 %v616, %v844
    %846 = vmatmul.bf16.gmra.mxu0 %v796
    %v847 = vpop.f32.mrf.mxu0
    %v848 = vadd.f32 %v616, %v847
    %v849 = vpop.f32.mrf.mxu0
    %v850 = vadd.f32 %v616, %v849
    %851 = vmatmul.bf16.gmra.mxu0 %v799
    %v852 = vpop.f32.mrf.mxu0
    %v853 = vadd.f32 %v616, %v852
    %v854 = vpop.f32.mrf.mxu0
    %v855 = vadd.f32 %v616, %v854
    %856 = vmatmul.bf16.gmra.mxu0 %v802
    %v857 = vpop.f32.mrf.mxu0
    %v858 = vadd.f32 %v616, %v857
    %v859 = vpop.f32.mrf.mxu0
    %v860 = vadd.f32 %v616, %v859
    %861 = vdwg.mxu0
    %862 = vmatpush.bf16.msra.mxu0 0
    %863 = vmatpush.bf16.msra.mxu0 0
    %864 = vmatpush.bf16.msra.mxu0 0
    %865 = vmatpush.bf16.msra.mxu0 0
    %866 = vmatpush.bf16.msra.mxu0 %v753
    %867 = vmatpush.bf16.msra.mxu0 %v745
    %868 = vmatpush.bf16.msra.mxu0 %v737
    %869 = vmatpush.bf16.msra.mxu0 %v729
    %870 = vmatmul.bf16.gmra.mxu0 %v793
    %v871 = vpop.f32.mrf.mxu0
    %v872 = vadd.f32 %v617, %v871
    %v873 = vpop.f32.mrf.mxu0
    %v874 = vadd.f32 %v617, %v873
    %875 = vmatmul.bf16.gmra.mxu0 %v796
    %v876 = vpop.f32.mrf.mxu0
    %v877 = vadd.f32 %v617, %v876
    %v878 = vpop.f32.mrf.mxu0
    %v879 = vadd.f32 %v617, %v878
    %880 = vmatmul.bf16.gmra.mxu0 %v799
    %v881 = vpop.f32.mrf.mxu0
    %v882 = vadd.f32 %v617, %v881
    %v883 = vpop.f32.mrf.mxu0
    %v884 = vadd.f32 %v617, %v883
    %885 = vmatmul.bf16.gmra.mxu0 %v802
    %v886 = vpop.f32.mrf.mxu0
    %v887 = vadd.f32 %v617, %v886
    %v888 = vpop.f32.mrf.mxu0
    %v889 = vadd.f32 %v617, %v888
    %890 = vdwg.mxu0
    %891 = vmatpush.bf16.msra.mxu0 0
    %892 = vmatpush.bf16.msra.mxu0 0
    %893 = vmatpush.bf16.msra.mxu0 0
    %894 = vmatpush.bf16.msra.mxu0 0
    %895 = vmatpush.bf16.msra.mxu0 %v754
    %896 = vmatpush.bf16.msra.mxu0 %v746
    %897 = vmatpush.bf16.msra.mxu0 %v738
    %898 = vmatpush.bf16.msra.mxu0 %v730
    %899 = vmatmul.bf16.gmra.mxu0 %v793
    %v900 = vpop.f32.mrf.mxu0
    %v901 = vadd.f32 %v618, %v900
    %v902 = vpop.f32.mrf.mxu0
    %v903 = vadd.f32 %v618, %v902
    %904 = vmatmul.bf16.gmra.mxu0 %v796
    %v905 = vpop.f32.mrf.mxu0
    %v906 = vadd.f32 %v618, %v905
    %v907 = vpop.f32.mrf.mxu0
    %v908 = vadd.f32 %v618, %v907
    %909 = vmatmul.bf16.gmra.mxu0 %v799
    %v910 = vpop.f32.mrf.mxu0
    %v911 = vadd.f32 %v618, %v910
    %v912 = vpop.f32.mrf.mxu0
    %v913 = vadd.f32 %v618, %v912
    %914 = vmatmul.bf16.gmra.mxu0 %v802
    %v915 = vpop.f32.mrf.mxu0
    %v916 = vadd.f32 %v618, %v915
    %v917 = vpop.f32.mrf.mxu0
    %v918 = vadd.f32 %v618, %v917
    %919 = vdwg.mxu0
    %920 = vmatpush.bf16.msra.mxu0 0
    %921 = vmatpush.bf16.msra.mxu0 0
    %922 = vmatpush.bf16.msra.mxu0 0
    %923 = vmatpush.bf16.msra.mxu0 0
    %924 = vmatpush.bf16.msra.mxu0 %v755
    %925 = vmatpush.bf16.msra.mxu0 %v747
    %926 = vmatpush.bf16.msra.mxu0 %v739
    %927 = vmatpush.bf16.msra.mxu0 %v731
    %928 = vmatmul.bf16.gmra.mxu0 %v793
    %v929 = vpop.f32.mrf.mxu0
    %v930 = vadd.f32 %v619, %v929
    %v931 = vpop.f32.mrf.mxu0
    %v932 = vadd.f32 %v619, %v931
    %933 = vmatmul.bf16.gmra.mxu0 %v796
    %v934 = vpop.f32.mrf.mxu0
    %v935 = vadd.f32 %v619, %v934
    %v936 = vpop.f32.mrf.mxu0
    %v937 = vadd.f32 %v619, %v936
    %938 = vmatmul.bf16.gmra.mxu0 %v799
    %v939 = vpop.f32.mrf.mxu0
    %v940 = vadd.f32 %v619, %v939
    %v941 = vpop.f32.mrf.mxu0
    %v942 = vadd.f32 %v619, %v941
    %943 = vmatmul.bf16.gmra.mxu0 %v802
    %v944 = vpop.f32.mrf.mxu0
    %v945 = vadd.f32 %v619, %v944
    %v946 = vpop.f32.mrf.mxu0
    %v947 = vadd.f32 %v619, %v946
    %948 = vdwg.mxu0
    %949 = vmatpush.bf16.msra.mxu0 0
    %950 = vmatpush.bf16.msra.mxu0 0
    %951 = vmatpush.bf16.msra.mxu0 0
    %952 = vmatpush.bf16.msra.mxu0 0
    %953 = vmatpush.bf16.msra.mxu0 %v756
    %954 = vmatpush.bf16.msra.mxu0 %v748
    %955 = vmatpush.bf16.msra.mxu0 %v740
    %956 = vmatpush.bf16.msra.mxu0 %v732
    %957 = vmatmul.bf16.gmra.mxu0 %v793
    %v958 = vpop.f32.mrf.mxu0
    %v959 = vadd.f32 %v620, %v958
    %v960 = vpop.f32.mrf.mxu0
    %v961 = vadd.f32 %v620, %v960
    %962 = vmatmul.bf16.gmra.mxu0 %v796
    %v963 = vpop.f32.mrf.mxu0
    %v964 = vadd.f32 %v620, %v963
    %v965 = vpop.f32.mrf.mxu0
    %v966 = vadd.f32 %v620, %v965
    %967 = vmatmul.bf16.gmra.mxu0 %v799
    %v968 = vpop.f32.mrf.mxu0
    %v969 = vadd.f32 %v620, %v968
    %v970 = vpop.f32.mrf.mxu0
    %v971 = vadd.f32 %v620, %v970
    %972 = vmatmul.bf16.gmra.mxu0 %v802
    %v973 = vpop.f32.mrf.mxu0
    %v974 = vadd.f32 %v620, %v973
    %v975 = vpop.f32.mrf.mxu0
    %v976 = vadd.f32 %v620, %v975
    %977 = vdwg.mxu0
    %978 = vmatpush.bf16.msra.mxu0 0
    %979 = vmatpush.bf16.msra.mxu0 0
    %980 = vmatpush.bf16.msra.mxu0 0
    %981 = vmatpush.bf16.msra.mxu0 0
    %982 = vmatpush.bf16.msra.mxu0 %v757
    %983 = vmatpush.bf16.msra.mxu0 %v749
    %984 = vmatpush.bf16.msra.mxu0 %v741
    %985 = vmatpush.bf16.msra.mxu0 %v733
    %986 = vmatmul.bf16.gmra.mxu0 %v793
    %v987 = vpop.f32.mrf.mxu0
    %v988 = vadd.f32 %v621, %v987
    %v989 = vpop.f32.mrf.mxu0
    %v990 = vadd.f32 %v621, %v989
    %991 = vmatmul.bf16.gmra.mxu0 %v796
    %v992 = vpop.f32.mrf.mxu0
    %v993 = vadd.f32 %v621, %v992
    %v994 = vpop.f32.mrf.mxu0
    %v995 = vadd.f32 %v621, %v994
    %996 = vmatmul.bf16.gmra.mxu0 %v799
    %v997 = vpop.f32.mrf.mxu0
    %v998 = vadd.f32 %v621, %v997
    %v999 = vpop.f32.mrf.mxu0
    %v1000 = vadd.f32 %v621, %v999
    %1001 = vmatmul.bf16.gmra.mxu0 %v802
    %v1002 = vpop.f32.mrf.mxu0
    %v1003 = vadd.f32 %v621, %v1002
    %v1004 = vpop.f32.mrf.mxu0
    %v1005 = vadd.f32 %v621, %v1004
    %1006 = vdwg.mxu0
    %1007 = vmatpush.bf16.msra.mxu0 0
    %1008 = vmatpush.bf16.msra.mxu0 0
    %1009 = vmatpush.bf16.msra.mxu0 0
    %1010 = vmatpush.bf16.msra.mxu0 0
    %1011 = vmatpush.bf16.msra.mxu0 %v758
    %1012 = vmatpush.bf16.msra.mxu0 %v750
    %1013 = vmatpush.bf16.msra.mxu0 %v742
    %1014 = vmatpush.bf16.msra.mxu0 %v734
    %1015 = vmatmul.bf16.gmra.mxu0 %v793
    %v1016 = vpop.f32.mrf.mxu0
    %v1017 = vadd.f32 %v622, %v1016
    %v1018 = vpop.f32.mrf.mxu0
    %v1019 = vadd.f32 %v622, %v1018
    %1020 = vmatmul.bf16.gmra.mxu0 %v796
    %v1021 = vpop.f32.mrf.mxu0
    %v1022 = vadd.f32 %v622, %v1021
    %v1023 = vpop.f32.mrf.mxu0
    %v1024 = vadd.f32 %v622, %v1023
    %1025 = vmatmul.bf16.gmra.mxu0 %v799
    %v1026 = vpop.f32.mrf.mxu0
    %v1027 = vadd.f32 %v622, %v1026
    %v1028 = vpop.f32.mrf.mxu0
    %v1029 = vadd.f32 %v622, %v1028
    %1030 = vmatmul.bf16.gmra.mxu0 %v802
    %v1031 = vpop.f32.mrf.mxu0
    %v1032 = vadd.f32 %v622, %v1031
    %v1033 = vpop.f32.mrf.mxu0
    %v1034 = vadd.f32 %v622, %v1033
    %1035 = vdwg.mxu0
    %v1036 = vld [vmem:[%s10] sm:$0xff]
    %v1037 = vld [vmem:[%s10 + $0x8] sm:$0xff]
    %v1038 = vld [vmem:[%s11] sm:$0xff]
    %v1039 = vld [vmem:[%s11 + $0x8] sm:$0xff]
    %v1040 = vpack.c.bf16 %v1036, %v1036
    %v1041 = vpack.c.bf16 %v1037, %v1037
    %v1042 = vld [vmem:[#allocation10] sm:$0xff]
    %v1043 = vld [vmem:[#allocation10 + $0x8] sm:$0xff]
    %v1044 = vld [vmem:[#allocation10 + $0x10] sm:$0xff]
    %v1045 = vld [vmem:[#allocation10 + $0x18] sm:$0xff]
    %v1046 = vld [vmem:[#allocation10 + $0x20] sm:$0xff]
    %v1047 = vld [vmem:[#allocation10 + $0x28] sm:$0xff]
    %v1048 = vld [vmem:[#allocation10 + $0x30] sm:$0xff]
    %v1049 = vld [vmem:[#allocation10 + $0x38] sm:$0xff]
    %v1050 = vld [vmem:[#allocation10 + $0x40] sm:$0xff]
    %v1051 = vld [vmem:[#allocation10 + $0x48] sm:$0xff]
    %v1052 = vld [vmem:[#allocation10 + $0x50] sm:$0xff]
    %v1053 = vld [vmem:[#allocation10 + $0x58] sm:$0xff]
    %v1054 = vld [vmem:[#allocation10 + $0x60] sm:$0xff]
    %v1055 = vld [vmem:[#allocation10 + $0x68] sm:$0xff]
    %v1056 = vld [vmem:[#allocation10 + $0x70] sm:$0xff]
    %v1057 = vld [vmem:[#allocation10 + $0x78] sm:$0xff]
    %v1058 = vld [vmem:[#allocation10 + $0x80] sm:$0xff]
    %v1059 = vld [vmem:[#allocation10 + $0x88] sm:$0xff]
    %v1060 = vld [vmem:[#allocation10 + $0x90] sm:$0xff]
    %v1061 = vld [vmem:[#allocation10 + $0x98] sm:$0xff]
    %v1062 = vld [vmem:[#allocation10 + $0xa0] sm:$0xff]
    %v1063 = vld [vmem:[#allocation10 + $0xa8] sm:$0xff]
    %v1064 = vld [vmem:[#allocation10 + $0xb0] sm:$0xff]
    %v1065 = vld [vmem:[#allocation10 + $0xb8] sm:$0xff]
    %v1066 = vld [vmem:[#allocation10 + $0xc0] sm:$0xff]
    %v1067 = vld [vmem:[#allocation10 + $0xc8] sm:$0xff]
    %v1068 = vld [vmem:[#allocation10 + $0xd0] sm:$0xff]
    %v1069 = vld [vmem:[#allocation10 + $0xd8] sm:$0xff]
    %v1070 = vld [vmem:[#allocation10 + $0xe0] sm:$0xff]
    %v1071 = vld [vmem:[#allocation10 + $0xe8] sm:$0xff]
    %v1072 = vld [vmem:[#allocation10 + $0xf0] sm:$0xff]
    %v1073 = vld [vmem:[#allocation10 + $0xf8] sm:$0xff]
    %v1074 = vld [vmem:[#allocation10 + $0x100] sm:$0xff]
    %v1075 = vld [vmem:[#allocation10 + $0x108] sm:$0xff]
    %v1076 = vld [vmem:[#allocation10 + $0x110] sm:$0xff]
    %v1077 = vld [vmem:[#allocation10 + $0x118] sm:$0xff]
    %v1078 = vld [vmem:[#allocation10 + $0x120] sm:$0xff]
    %v1079 = vld [vmem:[#allocation10 + $0x128] sm:$0xff]
    %v1080 = vld [vmem:[#allocation10 + $0x130] sm:$0xff]
    %v1081 = vld [vmem:[#allocation10 + $0x138] sm:$0xff]
    %v1082 = vld [vmem:[#allocation10 + $0x140] sm:$0xff]
    %v1083 = vld [vmem:[#allocation10 + $0x148] sm:$0xff]
    %v1084 = vld [vmem:[#allocation10 + $0x150] sm:$0xff]
    %v1085 = vld [vmem:[#allocation10 + $0x158] sm:$0xff]
    %v1086 = vld [vmem:[#allocation10 + $0x160] sm:$0xff]
    %v1087 = vld [vmem:[#allocation10 + $0x168] sm:$0xff]
    %v1088 = vld [vmem:[#allocation10 + $0x170] sm:$0xff]
    %v1089 = vld [vmem:[#allocation10 + $0x178] sm:$0xff]
    %v1090 = vld [vmem:[#allocation10 + $0x180] sm:$0xff]
    %v1091 = vld [vmem:[#allocation10 + $0x188] sm:$0xff]
    %v1092 = vld [vmem:[#allocation10 + $0x190] sm:$0xff]
    %v1093 = vld [vmem:[#allocation10 + $0x198] sm:$0xff]
    %v1094 = vld [vmem:[#allocation10 + $0x1a0] sm:$0xff]
    %v1095 = vld [vmem:[#allocation10 + $0x1a8] sm:$0xff]
    %v1096 = vld [vmem:[#allocation10 + $0x1b0] sm:$0xff]
    %v1097 = vld [vmem:[#allocation10 + $0x1b8] sm:$0xff]
    %v1098 = vld [vmem:[#allocation10 + $0x1c0] sm:$0xff]
    %v1099 = vld [vmem:[#allocation10 + $0x1c8] sm:$0xff]
    %v1100 = vld [vmem:[#allocation10 + $0x1d0] sm:$0xff]
    %v1101 = vld [vmem:[#allocation10 + $0x1d8] sm:$0xff]
    %v1102 = vld [vmem:[#allocation10 + $0x1e0] sm:$0xff]
    %v1103 = vld [vmem:[#allocation10 + $0x1e8] sm:$0xff]
    %v1104 = vld [vmem:[#allocation10 + $0x1f0] sm:$0xff]
    %v1105 = vld [vmem:[#allocation10 + $0x1f8] sm:$0xff]
    %v1106 = vld [vmem:[#allocation10 + $0x200] sm:$0xff]
    %v1107 = vld [vmem:[#allocation10 + $0x208] sm:$0xff]
    %v1108 = vld [vmem:[#allocation10 + $0x210] sm:$0xff]
    %v1109 = vld [vmem:[#allocation10 + $0x218] sm:$0xff]
    %v1110 = vld [vmem:[#allocation10 + $0x220] sm:$0xff]
    %v1111 = vld [vmem:[#allocation10 + $0x228] sm:$0xff]
    %v1112 = vld [vmem:[#allocation10 + $0x230] sm:$0xff]
    %v1113 = vld [vmem:[#allocation10 + $0x238] sm:$0xff]
    %v1114 = vld [vmem:[#allocation10 + $0x240] sm:$0xff]
    %v1115 = vld [vmem:[#allocation10 + $0x248] sm:$0xff]
    %v1116 = vld [vmem:[#allocation10 + $0x250] sm:$0xff]
    %v1117 = vld [vmem:[#allocation10 + $0x258] sm:$0xff]
    %v1118 = vld [vmem:[#allocation10 + $0x260] sm:$0xff]
    %v1119 = vld [vmem:[#allocation10 + $0x268] sm:$0xff]
    %v1120 = vld [vmem:[#allocation10 + $0x270] sm:$0xff]
    %v1121 = vld [vmem:[#allocation10 + $0x278] sm:$0xff]
    %v1122 = vld [vmem:[#allocation10 + $0x280] sm:$0xff]
    %v1123 = vld [vmem:[#allocation10 + $0x288] sm:$0xff]
    %v1124 = vld [vmem:[#allocation10 + $0x290] sm:$0xff]
    %v1125 = vld [vmem:[#allocation10 + $0x298] sm:$0xff]
    %v1126 = vld [vmem:[#allocation10 + $0x2a0] sm:$0xff]
    %v1127 = vld [vmem:[#allocation10 + $0x2a8] sm:$0xff]
    %v1128 = vld [vmem:[#allocation10 + $0x2b0] sm:$0xff]
    %v1129 = vld [vmem:[#allocation10 + $0x2b8] sm:$0xff]
    %v1130 = vld [vmem:[#allocation10 + $0x2c0] sm:$0xff]
    %v1131 = vld [vmem:[#allocation10 + $0x2c8] sm:$0xff]
    %v1132 = vld [vmem:[#allocation10 + $0x2d0] sm:$0xff]
    %v1133 = vld [vmem:[#allocation10 + $0x2d8] sm:$0xff]
    %v1134 = vld [vmem:[#allocation10 + $0x2e0] sm:$0xff]
    %v1135 = vld [vmem:[#allocation10 + $0x2e8] sm:$0xff]
    %v1136 = vld [vmem:[#allocation10 + $0x2f0] sm:$0xff]
    %v1137 = vld [vmem:[#allocation10 + $0x2f8] sm:$0xff]
    %v1138 = vld [vmem:[#allocation10 + $0x300] sm:$0xff]
    %v1139 = vld [vmem:[#allocation10 + $0x308] sm:$0xff]
    %v1140 = vld [vmem:[#allocation10 + $0x310] sm:$0xff]
    %v1141 = vld [vmem:[#allocation10 + $0x318] sm:$0xff]
    %v1142 = vld [vmem:[#allocation10 + $0x320] sm:$0xff]
    %v1143 = vld [vmem:[#allocation10 + $0x328] sm:$0xff]
    %v1144 = vld [vmem:[#allocation10 + $0x330] sm:$0xff]
    %v1145 = vld [vmem:[#allocation10 + $0x338] sm:$0xff]
    %v1146 = vld [vmem:[#allocation10 + $0x340] sm:$0xff]
    %v1147 = vld [vmem:[#allocation10 + $0x348] sm:$0xff]
    %v1148 = vld [vmem:[#allocation10 + $0x350] sm:$0xff]
    %v1149 = vld [vmem:[#allocation10 + $0x358] sm:$0xff]
    %v1150 = vld [vmem:[#allocation10 + $0x360] sm:$0xff]
    %v1151 = vld [vmem:[#allocation10 + $0x368] sm:$0xff]
    %v1152 = vld [vmem:[#allocation10 + $0x370] sm:$0xff]
    %v1153 = vld [vmem:[#allocation10 + $0x378] sm:$0xff]
    %v1154 = vld [vmem:[#allocation10 + $0x380] sm:$0xff]
    %v1155 = vld [vmem:[#allocation10 + $0x388] sm:$0xff]
    %v1156 = vld [vmem:[#allocation10 + $0x390] sm:$0xff]
    %v1157 = vld [vmem:[#allocation10 + $0x398] sm:$0xff]
    %v1158 = vld [vmem:[#allocation10 + $0x3a0] sm:$0xff]
    %v1159 = vld [vmem:[#allocation10 + $0x3a8] sm:$0xff]
    %v1160 = vld [vmem:[#allocation10 + $0x3b0] sm:$0xff]
    %v1161 = vld [vmem:[#allocation10 + $0x3b8] sm:$0xff]
    %v1162 = vld [vmem:[#allocation10 + $0x3c0] sm:$0xff]
    %v1163 = vld [vmem:[#allocation10 + $0x3c8] sm:$0xff]
    %v1164 = vld [vmem:[#allocation10 + $0x3d0] sm:$0xff]
    %v1165 = vld [vmem:[#allocation10 + $0x3d8] sm:$0xff]
    %v1166 = vld [vmem:[#allocation10 + $0x3e0] sm:$0xff]
    %v1167 = vld [vmem:[#allocation10 + $0x3e8] sm:$0xff]
    %v1168 = vld [vmem:[#allocation10 + $0x3f0] sm:$0xff]
    %v1169 = vld [vmem:[#allocation10 + $0x3f8] sm:$0xff]
    %v1298 = vunpack.c.l.b16 %v1042
    %v1299 = vunpack.c.h.b16 %v1042
    %v1300 = vunpack.c.l.b16 %v1043
    %v1301 = vunpack.c.h.b16 %v1043
    %v1302 = vunpack.c.l.b16 %v1044
    %v1303 = vunpack.c.h.b16 %v1044
    %v1304 = vunpack.c.l.b16 %v1045
    %v1305 = vunpack.c.h.b16 %v1045
    %v1306 = vunpack.c.l.b16 %v1046
    %v1307 = vunpack.c.h.b16 %v1046
    %v1308 = vunpack.c.l.b16 %v1047
    %v1309 = vunpack.c.h.b16 %v1047
    %v1310 = vunpack.c.l.b16 %v1048
    %v1311 = vunpack.c.h.b16 %v1048
    %v1312 = vunpack.c.l.b16 %v1049
    %v1313 = vunpack.c.h.b16 %v1049
    %v1314 = vunpack.c.l.b16 %v1050
    %v1315 = vunpack.c.h.b16 %v1050
    %v1316 = vunpack.c.l.b16 %v1051
    %v1317 = vunpack.c.h.b16 %v1051
    %v1318 = vunpack.c.l.b16 %v1052
    %v1319 = vunpack.c.h.b16 %v1052
    %v1320 = vunpack.c.l.b16 %v1053
    %v1321 = vunpack.c.h.b16 %v1053
    %v1322 = vunpack.c.l.b16 %v1054
    %v1323 = vunpack.c.h.b16 %v1054
    %v1324 = vunpack.c.l.b16 %v1055
    %v1325 = vunpack.c.h.b16 %v1055
    %v1326 = vunpack.c.l.b16 %v1056
    %v1327 = vunpack.c.h.b16 %v1056
    %v1328 = vunpack.c.l.b16 %v1057
    %v1329 = vunpack.c.h.b16 %v1057
    %v1330 = vunpack.c.l.b16 %v1058
    %v1331 = vunpack.c.h.b16 %v1058
    %v1332 = vunpack.c.l.b16 %v1059
    %v1333 = vunpack.c.h.b16 %v1059
    %v1334 = vunpack.c.l.b16 %v1060
    %v1335 = vunpack.c.h.b16 %v1060
    %v1336 = vunpack.c.l.b16 %v1061
    %v1337 = vunpack.c.h.b16 %v1061
    %v1338 = vunpack.c.l.b16 %v1062
    %v1339 = vunpack.c.h.b16 %v1062
    %v1340 = vunpack.c.l.b16 %v1063
    %v1341 = vunpack.c.h.b16 %v1063
    %v1342 = vunpack.c.l.b16 %v1064
    %v1343 = vunpack.c.h.b16 %v1064
    %v1344 = vunpack.c.l.b16 %v1065
    %v1345 = vunpack.c.h.b16 %v1065
    %v1346 = vunpack.c.l.b16 %v1066
    %v1347 = vunpack.c.h.b16 %v1066
    %v1348 = vunpack.c.l.b16 %v1067
    %v1349 = vunpack.c.h.b16 %v1067
    %v1350 = vunpack.c.l.b16 %v1068
    %v1351 = vunpack.c.h.b16 %v1068
    %v1352 = vunpack.c.l.b16 %v1069
    %v1353 = vunpack.c.h.b16 %v1069
    %v1354 = vunpack.c.l.b16 %v1070
    %v1355 = vunpack.c.h.b16 %v1070
    %v1356 = vunpack.c.l.b16 %v1071
    %v1357 = vunpack.c.h.b16 %v1071
    %v1358 = vunpack.c.l.b16 %v1072
    %v1359 = vunpack.c.h.b16 %v1072
    %v1360 = vunpack.c.l.b16 %v1073
    %v1361 = vunpack.c.h.b16 %v1073
    %v1362 = vunpack.c.l.b16 %v1074
    %v1363 = vunpack.c.h.b16 %v1074
    %v1364 = vunpack.c.l.b16 %v1075
    %v1365 = vunpack.c.h.b16 %v1075
    %v1366 = vunpack.c.l.b16 %v1076
    %v1367 = vunpack.c.h.b16 %v1076
    %v1368 = vunpack.c.l.b16 %v1077
    %v1369 = vunpack.c.h.b16 %v1077
    %v1370 = vunpack.c.l.b16 %v1078
    %v1371 = vunpack.c.h.b16 %v1078
    %v1372 = vunpack.c.l.b16 %v1079
    %v1373 = vunpack.c.h.b16 %v1079
    %v1374 = vunpack.c.l.b16 %v1080
    %v1375 = vunpack.c.h.b16 %v1080
    %v1376 = vunpack.c.l.b16 %v1081
    %v1377 = vunpack.c.h.b16 %v1081
    %v1378 = vunpack.c.l.b16 %v1082
    %v1379 = vunpack.c.h.b16 %v1082
    %v1380 = vunpack.c.l.b16 %v1083
    %v1381 = vunpack.c.h.b16 %v1083
    %v1382 = vunpack.c.l.b16 %v1084
    %v1383 = vunpack.c.h.b16 %v1084
    %v1384 = vunpack.c.l.b16 %v1085
    %v1385 = vunpack.c.h.b16 %v1085
    %v1386 = vunpack.c.l.b16 %v1086
    %v1387 = vunpack.c.h.b16 %v1086
    %v1388 = vunpack.c.l.b16 %v1087
    %v1389 = vunpack.c.h.b16 %v1087
    %v1390 = vunpack.c.l.b16 %v1088
    %v1391 = vunpack.c.h.b16 %v1088
    %v1392 = vunpack.c.l.b16 %v1089
    %v1393 = vunpack.c.h.b16 %v1089
    %v1394 = vunpack.c.l.b16 %v1090
    %v1395 = vunpack.c.h.b16 %v1090
    %v1396 = vunpack.c.l.b16 %v1091
    %v1397 = vunpack.c.h.b16 %v1091
    %v1398 = vunpack.c.l.b16 %v1092
    %v1399 = vunpack.c.h.b16 %v1092
    %v1400 = vunpack.c.l.b16 %v1093
    %v1401 = vunpack.c.h.b16 %v1093
    %v1402 = vunpack.c.l.b16 %v1094
    %v1403 = vunpack.c.h.b16 %v1094
    %v1404 = vunpack.c.l.b16 %v1095
    %v1405 = vunpack.c.h.b16 %v1095
    %v1406 = vunpack.c.l.b16 %v1096
    %v1407 = vunpack.c.h.b16 %v1096
    %v1408 = vunpack.c.l.b16 %v1097
    %v1409 = vunpack.c.h.b16 %v1097
    %v1410 = vunpack.c.l.b16 %v1098
    %v1411 = vunpack.c.h.b16 %v1098
    %v1412 = vunpack.c.l.b16 %v1099
    %v1413 = vunpack.c.h.b16 %v1099
    %v1414 = vunpack.c.l.b16 %v1100
    %v1415 = vunpack.c.h.b16 %v1100
    %v1416 = vunpack.c.l.b16 %v1101
    %v1417 = vunpack.c.h.b16 %v1101
    %v1418 = vunpack.c.l.b16 %v1102
    %v1419 = vunpack.c.h.b16 %v1102
    %v1420 = vunpack.c.l.b16 %v1103
    %v1421 = vunpack.c.h.b16 %v1103
    %v1422 = vunpack.c.l.b16 %v1104
    %v1423 = vunpack.c.h.b16 %v1104
    %v1424 = vunpack.c.l.b16 %v1105
    %v1425 = vunpack.c.h.b16 %v1105
    %v1426 = vunpack.c.l.b16 %v1106
    %v1427 = vunpack.c.h.b16 %v1106
    %v1428 = vunpack.c.l.b16 %v1107
    %v1429 = vunpack.c.h.b16 %v1107
    %v1430 = vunpack.c.l.b16 %v1108
    %v1431 = vunpack.c.h.b16 %v1108
    %v1432 = vunpack.c.l.b16 %v1109
    %v1433 = vunpack.c.h.b16 %v1109
    %v1434 = vunpack.c.l.b16 %v1110
    %v1435 = vunpack.c.h.b16 %v1110
    %v1436 = vunpack.c.l.b16 %v1111
    %v1437 = vunpack.c.h.b16 %v1111
    %v1438 = vunpack.c.l.b16 %v1112
    %v1439 = vunpack.c.h.b16 %v1112
    %v1440 = vunpack.c.l.b16 %v1113
    %v1441 = vunpack.c.h.b16 %v1113
    %v1442 = vunpack.c.l.b16 %v1114
    %v1443 = vunpack.c.h.b16 %v1114
    %v1444 = vunpack.c.l.b16 %v1115
    %v1445 = vunpack.c.h.b16 %v1115
    %v1446 = vunpack.c.l.b16 %v1116
    %v1447 = vunpack.c.h.b16 %v1116
    %v1448 = vunpack.c.l.b16 %v1117
    %v1449 = vunpack.c.h.b16 %v1117
    %v1450 = vunpack.c.l.b16 %v1118
    %v1451 = vunpack.c.h.b16 %v1118
    %v1452 = vunpack.c.l.b16 %v1119
    %v1453 = vunpack.c.h.b16 %v1119
    %v1454 = vunpack.c.l.b16 %v1120
    %v1455 = vunpack.c.h.b16 %v1120
    %v1456 = vunpack.c.l.b16 %v1121
    %v1457 = vunpack.c.h.b16 %v1121
    %v1458 = vunpack.c.l.b16 %v1122
    %v1459 = vunpack.c.h.b16 %v1122
    %v1460 = vunpack.c.l.b16 %v1123
    %v1461 = vunpack.c.h.b16 %v1123
    %v1462 = vunpack.c.l.b16 %v1124
    %v1463 = vunpack.c.h.b16 %v1124
    %v1464 = vunpack.c.l.b16 %v1125
    %v1465 = vunpack.c.h.b16 %v1125
    %v1466 = vunpack.c.l.b16 %v1126
    %v1467 = vunpack.c.h.b16 %v1126
    %v1468 = vunpack.c.l.b16 %v1127
    %v1469 = vunpack.c.h.b16 %v1127
    %v1470 = vunpack.c.l.b16 %v1128
    %v1471 = vunpack.c.h.b16 %v1128
    %v1472 = vunpack.c.l.b16 %v1129
    %v1473 = vunpack.c.h.b16 %v1129
    %v1474 = vunpack.c.l.b16 %v1130
    %v1475 = vunpack.c.h.b16 %v1130
    %v1476 = vunpack.c.l.b16 %v1131
    %v1477 = vunpack.c.h.b16 %v1131
    %v1478 = vunpack.c.l.b16 %v1132
    %v1479 = vunpack.c.h.b16 %v1132
    %v1480 = vunpack.c.l.b16 %v1133
    %v1481 = vunpack.c.h.b16 %v1133
    %v1482 = vunpack.c.l.b16 %v1134
    %v1483 = vunpack.c.h.b16 %v1134
    %v1484 = vunpack.c.l.b16 %v1135
    %v1485 = vunpack.c.h.b16 %v1135
    %v1486 = vunpack.c.l.b16 %v1136
    %v1487 = vunpack.c.h.b16 %v1136
    %v1488 = vunpack.c.l.b16 %v1137
    %v1489 = vunpack.c.h.b16 %v1137
    %v1490 = vunpack.c.l.b16 %v1138
    %v1491 = vunpack.c.h.b16 %v1138
    %v1492 = vunpack.c.l.b16 %v1139
    %v1493 = vunpack.c.h.b16 %v1139
    %v1494 = vunpack.c.l.b16 %v1140
    %v1495 = vunpack.c.h.b16 %v1140
    %v1496 = vunpack.c.l.b16 %v1141
    %v1497 = vunpack.c.h.b16 %v1141
    %v1498 = vunpack.c.l.b16 %v1142
    %v1499 = vunpack.c.h.b16 %v1142
    %v1500 = vunpack.c.l.b16 %v1143
    %v1501 = vunpack.c.h.b16 %v1143
    %v1502 = vunpack.c.l.b16 %v1144
    %v1503 = vunpack.c.h.b16 %v1144
    %v1504 = vunpack.c.l.b16 %v1145
    %v1505 = vunpack.c.h.b16 %v1145
    %v1506 = vunpack.c.l.b16 %v1146
    %v1507 = vunpack.c.h.b16 %v1146
    %v1508 = vunpack.c.l.b16 %v1147
    %v1509 = vunpack.c.h.b16 %v1147
    %v1510 = vunpack.c.l.b16 %v1148
    %v1511 = vunpack.c.h.b16 %v1148
    %v1512 = vunpack.c.l.b16 %v1149
    %v1513 = vunpack.c.h.b16 %v1149
    %v1514 = vunpack.c.l.b16 %v1150
    %v1515 = vunpack.c.h.b16 %v1150
    %v1516 = vunpack.c.l.b16 %v1151
    %v1517 = vunpack.c.h.b16 %v1151
    %v1518 = vunpack.c.l.b16 %v1152
    %v1519 = vunpack.c.h.b16 %v1152
    %v1520 = vunpack.c.l.b16 %v1153
    %v1521 = vunpack.c.h.b16 %v1153
    %v1522 = vunpack.c.l.b16 %v1154
    %v1523 = vunpack.c.h.b16 %v1154
    %v1524 = vunpack.c.l.b16 %v1155
    %v1525 = vunpack.c.h.b16 %v1155
    %v1526 = vunpack.c.l.b16 %v1156
    %v1527 = vunpack.c.h.b16 %v1156
    %v1528 = vunpack.c.l.b16 %v1157
    %v1529 = vunpack.c.h.b16 %v1157
    %v1530 = vunpack.c.l.b16 %v1158
    %v1531 = vunpack.c.h.b16 %v1158
    %v1532 = vunpack.c.l.b16 %v1159
    %v1533 = vunpack.c.h.b16 %v1159
    %v1534 = vunpack.c.l.b16 %v1160
    %v1535 = vunpack.c.h.b16 %v1160
    %v1536 = vunpack.c.l.b16 %v1161
    %v1537 = vunpack.c.h.b16 %v1161
    %v1538 = vunpack.c.l.b16 %v1162
    %v1539 = vunpack.c.h.b16 %v1162
    %v1540 = vunpack.c.l.b16 %v1163
    %v1541 = vunpack.c.h.b16 %v1163
    %v1542 = vunpack.c.l.b16 %v1164
    %v1543 = vunpack.c.h.b16 %v1164
    %v1544 = vunpack.c.l.b16 %v1165
    %v1545 = vunpack.c.h.b16 %v1165
    %v1546 = vunpack.c.l.b16 %v1166
    %v1547 = vunpack.c.h.b16 %v1166
    %v1548 = vunpack.c.l.b16 %v1167
    %v1549 = vunpack.c.h.b16 %v1167
    %v1550 = vunpack.c.l.b16 %v1168
    %v1551 = vunpack.c.h.b16 %v1168
    %v1552 = vunpack.c.l.b16 %v1169
    %v1553 = vunpack.c.h.b16 %v1169
    %v1554 = vpack.c.b16 %v1306, %v1298
    %v1555 = vpack.c.b16 %v1307, %v1299
    %v1556 = vpack.c.b16 %v1308, %v1300
    %v1557 = vpack.c.b16 %v1309, %v1301
    %v1558 = vpack.c.b16 %v1310, %v1302
    %v1559 = vpack.c.b16 %v1311, %v1303
    %v1560 = vpack.c.b16 %v1312, %v1304
    %v1561 = vpack.c.b16 %v1313, %v1305
    %v1562 = vpack.c.b16 %v1322, %v1314
    %v1563 = vpack.c.b16 %v1323, %v1315
    %v1564 = vpack.c.b16 %v1324, %v1316
    %v1565 = vpack.c.b16 %v1325, %v1317
    %v1566 = vpack.c.b16 %v1326, %v1318
    %v1567 = vpack.c.b16 %v1327, %v1319
    %v1568 = vpack.c.b16 %v1328, %v1320
    %v1569 = vpack.c.b16 %v1329, %v1321
    %v1570 = vpack.c.b16 %v1338, %v1330
    %v1571 = vpack.c.b16 %v1339, %v1331
    %v1572 = vpack.c.b16 %v1340, %v1332
    %v1573 = vpack.c.b16 %v1341, %v1333
    %v1574 = vpack.c.b16 %v1342, %v1334
    %v1575 = vpack.c.b16 %v1343, %v1335
    %v1576 = vpack.c.b16 %v1344, %v1336
    %v1577 = vpack.c.b16 %v1345, %v1337
    %v1578 = vpack.c.b16 %v1354, %v1346
    %v1579 = vpack.c.b16 %v1355, %v1347
    %v1580 = vpack.c.b16 %v1356, %v1348
    %v1581 = vpack.c.b16 %v1357, %v1349
    %v1582 = vpack.c.b16 %v1358, %v1350
    %v1583 = vpack.c.b16 %v1359, %v1351
    %v1584 = vpack.c.b16 %v1360, %v1352
    %v1585 = vpack.c.b16 %v1361, %v1353
    %v1586 = vpack.c.b16 %v1370, %v1362
    %v1587 = vpack.c.b16 %v1371, %v1363
    %v1588 = vpack.c.b16 %v1372, %v1364
    %v1589 = vpack.c.b16 %v1373, %v1365
    %v1590 = vpack.c.b16 %v1374, %v1366
    %v1591 = vpack.c.b16 %v1375, %v1367
    %v1592 = vpack.c.b16 %v1376, %v1368
    %v1593 = vpack.c.b16 %v1377, %v1369
    %v1594 = vpack.c.b16 %v1386, %v1378
    %v1595 = vpack.c.b16 %v1387, %v1379
    %v1596 = vpack.c.b16 %v1388, %v1380
    %v1597 = vpack.c.b16 %v1389, %v1381
    %v1598 = vpack.c.b16 %v1390, %v1382
    %v1599 = vpack.c.b16 %v1391, %v1383
    %v1600 = vpack.c.b16 %v1392, %v1384
    %v1601 = vpack.c.b16 %v1393, %v1385
    %v1602 = vpack.c.b16 %v1402, %v1394
    %v1603 = vpack.c.b16 %v1403, %v1395
    %v1604 = vpack.c.b16 %v1404, %v1396
    %v1605 = vpack.c.b16 %v1405, %v1397
    %v1606 = vpack.c.b16 %v1406, %v1398
    %v1607 = vpack.c.b16 %v1407, %v1399
    %v1608 = vpack.c.b16 %v1408, %v1400
    %v1609 = vpack.c.b16 %v1409, %v1401
    %v1610 = vpack.c.b16 %v1418, %v1410
    %v1611 = vpack.c.b16 %v1419, %v1411
    %v1612 = vpack.c.b16 %v1420, %v1412
    %v1613 = vpack.c.b16 %v1421, %v1413
    %v1614 = vpack.c.b16 %v1422, %v1414
    %v1615 = vpack.c.b16 %v1423, %v1415
    %v1616 = vpack.c.b16 %v1424, %v1416
    %v1617 = vpack.c.b16 %v1425, %v1417
    %v1618 = vpack.c.b16 %v1434, %v1426
    %v1619 = vpack.c.b16 %v1435, %v1427
    %v1620 = vpack.c.b16 %v1436, %v1428
    %v1621 = vpack.c.b16 %v1437, %v1429
    %v1622 = vpack.c.b16 %v1438, %v1430
    %v1623 = vpack.c.b16 %v1439, %v1431
    %v1624 = vpack.c.b16 %v1440, %v1432
    %v1625 = vpack.c.b16 %v1441, %v1433
    %v1626 = vpack.c.b16 %v1450, %v1442
    %v1627 = vpack.c.b16 %v1451, %v1443
    %v1628 = vpack.c.b16 %v1452, %v1444
    %v1629 = vpack.c.b16 %v1453, %v1445
    %v1630 = vpack.c.b16 %v1454, %v1446
    %v1631 = vpack.c.b16 %v1455, %v1447
    %v1632 = vpack.c.b16 %v1456, %v1448
    %v1633 = vpack.c.b16 %v1457, %v1449
    %v1634 = vpack.c.b16 %v1466, %v1458
    %v1635 = vpack.c.b16 %v1467, %v1459
    %v1636 = vpack.c.b16 %v1468, %v1460
    %v1637 = vpack.c.b16 %v1469, %v1461
    %v1638 = vpack.c.b16 %v1470, %v1462
    %v1639 = vpack.c.b16 %v1471, %v1463
    %v1640 = vpack.c.b16 %v1472, %v1464
    %v1641 = vpack.c.b16 %v1473, %v1465
    %v1642 = vpack.c.b16 %v1482, %v1474
    %v1643 = vpack.c.b16 %v1483, %v1475
    %v1644 = vpack.c.b16 %v1484, %v1476
    %v1645 = vpack.c.b16 %v1485, %v1477
    %v1646 = vpack.c.b16 %v1486, %v1478
    %v1647 = vpack.c.b16 %v1487, %v1479
    %v1648 = vpack.c.b16 %v1488, %v1480
    %v1649 = vpack.c.b16 %v1489, %v1481
    %v1650 = vpack.c.b16 %v1498, %v1490
    %v1651 = vpack.c.b16 %v1499, %v1491
    %v1652 = vpack.c.b16 %v1500, %v1492
    %v1653 = vpack.c.b16 %v1501, %v1493
    %v1654 = vpack.c.b16 %v1502, %v1494
    %v1655 = vpack.c.b16 %v1503, %v1495
    %v1656 = vpack.c.b16 %v1504, %v1496
    %v1657 = vpack.c.b16 %v1505, %v1497
    %v1658 = vpack.c.b16 %v1514, %v1506
    %v1659 = vpack.c.b16 %v1515, %v1507
    %v1660 = vpack.c.b16 %v1516, %v1508
    %v1661 = vpack.c.b16 %v1517, %v1509
    %v1662 = vpack.c.b16 %v1518, %v1510
    %v1663 = vpack.c.b16 %v1519, %v1511
    %v1664 = vpack.c.b16 %v1520, %v1512
    %v1665 = vpack.c.b16 %v1521, %v1513
    %v1666 = vpack.c.b16 %v1530, %v1522
    %v1667 = vpack.c.b16 %v1531, %v1523
    %v1668 = vpack.c.b16 %v1532, %v1524
    %v1669 = vpack.c.b16 %v1533, %v1525
    %v1670 = vpack.c.b16 %v1534, %v1526
    %v1671 = vpack.c.b16 %v1535, %v1527
    %v1672 = vpack.c.b16 %v1536, %v1528
    %v1673 = vpack.c.b16 %v1537, %v1529
    %v1674 = vpack.c.b16 %v1546, %v1538
    %v1675 = vpack.c.b16 %v1547, %v1539
    %v1676 = vpack.c.b16 %v1548, %v1540
    %v1677 = vpack.c.b16 %v1549, %v1541
    %v1678 = vpack.c.b16 %v1550, %v1542
    %v1679 = vpack.c.b16 %v1551, %v1543
    %v1680 = vpack.c.b16 %v1552, %v1544
    %v1681 = vpack.c.b16 %v1553, %v1545
    %1810 = vmatpush.bf16.msra.mxu0 %v1610
    %1811 = vmatpush.bf16.msra.mxu0 %v1602
    %1812 = vmatpush.bf16.msra.mxu0 %v1594
    %1813 = vmatpush.bf16.msra.mxu0 %v1586
    %1814 = vmatpush.bf16.msra.mxu0 %v1578
    %1815 = vmatpush.bf16.msra.mxu0 %v1570
    %1816 = vmatpush.bf16.msra.mxu0 %v1562
    %1817 = vmatpush.bf16.msra.mxu0 %v1554
    %1818 = vmatmul.bf16.gmra.mxu0 %v1040
    %v1819 = vpop.f32.mrf.mxu0
    %v1820 = vadd.f32 0.0, %v1819
    %v1821 = vpop.f32.mrf.mxu0
    %1822 = vdwg.mxu0
    %1823 = vmatpush.bf16.msra.mxu0 %v1674
    %1824 = vmatpush.bf16.msra.mxu0 %v1666
    %1825 = vmatpush.bf16.msra.mxu0 %v1658
    %1826 = vmatpush.bf16.msra.mxu0 %v1650
    %1827 = vmatpush.bf16.msra.mxu0 %v1642
    %1828 = vmatpush.bf16.msra.mxu0 %v1634
    %1829 = vmatpush.bf16.msra.mxu0 %v1626
    %1830 = vmatpush.bf16.msra.mxu0 %v1618
    %1831 = vmatmul.bf16.gmra.mxu0 %v1041
    %v1832 = vpop.f32.mrf.mxu0
    %v1833 = vadd.f32 %v1820, %v1832
    %v1834 = vpop.f32.mrf.mxu0
    %1835 = vdwg.mxu0
    %1836 = vmatpush.bf16.msra.mxu0 %v1611
    %1837 = vmatpush.bf16.msra.mxu0 %v1603
    %1838 = vmatpush.bf16.msra.mxu0 %v1595
    %1839 = vmatpush.bf16.msra.mxu0 %v1587
    %1840 = vmatpush.bf16.msra.mxu0 %v1579
    %1841 = vmatpush.bf16.msra.mxu0 %v1571
    %1842 = vmatpush.bf16.msra.mxu0 %v1563
    %1843 = vmatpush.bf16.msra.mxu0 %v1555
    %1844 = vmatmul.bf16.gmra.mxu0 %v1040
    %v1845 = vpop.f32.mrf.mxu0
    %v1846 = vadd.f32 0.0, %v1845
    %v1847 = vpop.f32.mrf.mxu0
    %1848 = vdwg.mxu0
    %1849 = vmatpush.bf16.msra.mxu0 %v1675
    %1850 = vmatpush.bf16.msra.mxu0 %v1667
    %1851 = vmatpush.bf16.msra.mxu0 %v1659
    %1852 = vmatpush.bf16.msra.mxu0 %v1651
    %1853 = vmatpush.bf16.msra.mxu0 %v1643
    %1854 = vmatpush.bf16.msra.mxu0 %v1635
    %1855 = vmatpush.bf16.msra.mxu0 %v1627
    %1856 = vmatpush.bf16.msra.mxu0 %v1619
    %1857 = vmatmul.bf16.gmra.mxu0 %v1041
    %v1858 = vpop.f32.mrf.mxu0
    %v1859 = vadd.f32 %v1846, %v1858
    %v1860 = vpop.f32.mrf.mxu0
    %1861 = vdwg.mxu0
    %1862 = vmatpush.bf16.msra.mxu0 %v1612
    %1863 = vmatpush.bf16.msra.mxu0 %v1604
    %1864 = vmatpush.bf16.msra.mxu0 %v1596
    %1865 = vmatpush.bf16.msra.mxu0 %v1588
    %1866 = vmatpush.bf16.msra.mxu0 %v1580
    %1867 = vmatpush.bf16.msra.mxu0 %v1572
    %1868 = vmatpush.bf16.msra.mxu0 %v1564
    %1869 = vmatpush.bf16.msra.mxu0 %v1556
    %1870 = vmatmul.bf16.gmra.mxu0 %v1040
    %v1871 = vpop.f32.mrf.mxu0
    %v1872 = vadd.f32 0.0, %v1871
    %v1873 = vpop.f32.mrf.mxu0
    %1874 = vdwg.mxu0
    %1875 = vmatpush.bf16.msra.mxu0 %v1676
    %1876 = vmatpush.bf16.msra.mxu0 %v1668
    %1877 = vmatpush.bf16.msra.mxu0 %v1660
    %1878 = vmatpush.bf16.msra.mxu0 %v1652
    %1879 = vmatpush.bf16.msra.mxu0 %v1644
    %1880 = vmatpush.bf16.msra.mxu0 %v1636
    %1881 = vmatpush.bf16.msra.mxu0 %v1628
    %1882 = vmatpush.bf16.msra.mxu0 %v1620
    %1883 = vmatmul.bf16.gmra.mxu0 %v1041
    %v1884 = vpop.f32.mrf.mxu0
    %v1885 = vadd.f32 %v1872, %v1884
    %v1886 = vpop.f32.mrf.mxu0
    %1887 = vdwg.mxu0
    %1888 = vmatpush.bf16.msra.mxu0 %v1613
    %1889 = vmatpush.bf16.msra.mxu0 %v1605
    %1890 = vmatpush.bf16.msra.mxu0 %v1597
    %1891 = vmatpush.bf16.msra.mxu0 %v1589
    %1892 = vmatpush.bf16.msra.mxu0 %v1581
    %1893 = vmatpush.bf16.msra.mxu0 %v1573
    %1894 = vmatpush.bf16.msra.mxu0 %v1565
    %1895 = vmatpush.bf16.msra.mxu0 %v1557
    %1896 = vmatmul.bf16.gmra.mxu0 %v1040
    %v1897 = vpop.f32.mrf.mxu0
    %v1898 = vadd.f32 0.0, %v1897
    %v1899 = vpop.f32.mrf.mxu0
    %1900 = vdwg.mxu0
    %1901 = vmatpush.bf16.msra.mxu0 %v1677
    %1902 = vmatpush.bf16.msra.mxu0 %v1669
    %1903 = vmatpush.bf16.msra.mxu0 %v1661
    %1904 = vmatpush.bf16.msra.mxu0 %v1653
    %1905 = vmatpush.bf16.msra.mxu0 %v1645
    %1906 = vmatpush.bf16.msra.mxu0 %v1637
    %1907 = vmatpush.bf16.msra.mxu0 %v1629
    %1908 = vmatpush.bf16.msra.mxu0 %v1621
    %1909 = vmatmul.bf16.gmra.mxu0 %v1041
    %v1910 = vpop.f32.mrf.mxu0
    %v1911 = vadd.f32 %v1898, %v1910
    %v1912 = vpop.f32.mrf.mxu0
    %1913 = vdwg.mxu0
    %1914 = vmatpush.bf16.msra.mxu0 %v1614
    %1915 = vmatpush.bf16.msra.mxu0 %v1606
    %1916 = vmatpush.bf16.msra.mxu0 %v1598
    %1917 = vmatpush.bf16.msra.mxu0 %v1590
    %1918 = vmatpush.bf16.msra.mxu0 %v1582
    %1919 = vmatpush.bf16.msra.mxu0 %v1574
    %1920 = vmatpush.bf16.msra.mxu0 %v1566
    %1921 = vmatpush.bf16.msra.mxu0 %v1558
    %1922 = vmatmul.bf16.gmra.mxu0 %v1040
    %v1923 = vpop.f32.mrf.mxu0
    %v1924 = vadd.f32 0.0, %v1923
    %v1925 = vpop.f32.mrf.mxu0
    %1926 = vdwg.mxu0
    %1927 = vmatpush.bf16.msra.mxu0 %v1678
    %1928 = vmatpush.bf16.msra.mxu0 %v1670
    %1929 = vmatpush.bf16.msra.mxu0 %v1662
    %1930 = vmatpush.bf16.msra.mxu0 %v1654
    %1931 = vmatpush.bf16.msra.mxu0 %v1646
    %1932 = vmatpush.bf16.msra.mxu0 %v1638
    %1933 = vmatpush.bf16.msra.mxu0 %v1630
    %1934 = vmatpush.bf16.msra.mxu0 %v1622
    %1935 = vmatmul.bf16.gmra.mxu0 %v1041
    %v1936 = vpop.f32.mrf.mxu0
    %v1937 = vadd.f32 %v1924, %v1936
    %v1938 = vpop.f32.mrf.mxu0
    %1939 = vdwg.mxu0
    %1940 = vmatpush.bf16.msra.mxu0 %v1615
    %1941 = vmatpush.bf16.msra.mxu0 %v1607
    %1942 = vmatpush.bf16.msra.mxu0 %v1599
    %1943 = vmatpush.bf16.msra.mxu0 %v1591
    %1944 = vmatpush.bf16.msra.mxu0 %v1583
    %1945 = vmatpush.bf16.msra.mxu0 %v1575
    %1946 = vmatpush.bf16.msra.mxu0 %v1567
    %1947 = vmatpush.bf16.msra.mxu0 %v1559
    %1948 = vmatmul.bf16.gmra.mxu0 %v1040
    %v1949 = vpop.f32.mrf.mxu0
    %v1950 = vadd.f32 0.0, %v1949
    %v1951 = vpop.f32.mrf.mxu0
    %1952 = vdwg.mxu0
    %1953 = vmatpush.bf16.msra.mxu0 %v1679
    %1954 = vmatpush.bf16.msra.mxu0 %v1671
    %1955 = vmatpush.bf16.msra.mxu0 %v1663
    %1956 = vmatpush.bf16.msra.mxu0 %v1655
    %1957 = vmatpush.bf16.msra.mxu0 %v1647
    %1958 = vmatpush.bf16.msra.mxu0 %v1639
    %1959 = vmatpush.bf16.msra.mxu0 %v1631
    %1960 = vmatpush.bf16.msra.mxu0 %v1623
    %1961 = vmatmul.bf16.gmra.mxu0 %v1041
    %v1962 = vpop.f32.mrf.mxu0
    %v1963 = vadd.f32 %v1950, %v1962
    %v1964 = vpop.f32.mrf.mxu0
    %1965 = vdwg.mxu0
    %1966 = vmatpush.bf16.msra.mxu0 %v1616
    %1967 = vmatpush.bf16.msra.mxu0 %v1608
    %1968 = vmatpush.bf16.msra.mxu0 %v1600
    %1969 = vmatpush.bf16.msra.mxu0 %v1592
    %1970 = vmatpush.bf16.msra.mxu0 %v1584
    %1971 = vmatpush.bf16.msra.mxu0 %v1576
    %1972 = vmatpush.bf16.msra.mxu0 %v1568
    %1973 = vmatpush.bf16.msra.mxu0 %v1560
    %1974 = vmatmul.bf16.gmra.mxu0 %v1040
    %v1975 = vpop.f32.mrf.mxu0
    %v1976 = vadd.f32 0.0, %v1975
    %v1977 = vpop.f32.mrf.mxu0
    %1978 = vdwg.mxu0
    %1979 = vmatpush.bf16.msra.mxu0 %v1680
    %1980 = vmatpush.bf16.msra.mxu0 %v1672
    %1981 = vmatpush.bf16.msra.mxu0 %v1664
    %1982 = vmatpush.bf16.msra.mxu0 %v1656
    %1983 = vmatpush.bf16.msra.mxu0 %v1648
    %1984 = vmatpush.bf16.msra.mxu0 %v1640
    %1985 = vmatpush.bf16.msra.mxu0 %v1632
    %1986 = vmatpush.bf16.msra.mxu0 %v1624
    %1987 = vmatmul.bf16.gmra.mxu0 %v1041
    %v1988 = vpop.f32.mrf.mxu0
    %v1989 = vadd.f32 %v1976, %v1988
    %v1990 = vpop.f32.mrf.mxu0
    %1991 = vdwg.mxu0
    %1992 = vmatpush.bf16.msra.mxu0 %v1617
    %1993 = vmatpush.bf16.msra.mxu0 %v1609
    %1994 = vmatpush.bf16.msra.mxu0 %v1601
    %1995 = vmatpush.bf16.msra.mxu0 %v1593
    %1996 = vmatpush.bf16.msra.mxu0 %v1585
    %1997 = vmatpush.bf16.msra.mxu0 %v1577
    %1998 = vmatpush.bf16.msra.mxu0 %v1569
    %1999 = vmatpush.bf16.msra.mxu0 %v1561
    %2000 = vmatmul.bf16.gmra.mxu0 %v1040
    %v2001 = vpop.f32.mrf.mxu0
    %v2002 = vadd.f32 0.0, %v2001
    %v2003 = vpop.f32.mrf.mxu0
    %2004 = vdwg.mxu0
    %2005 = vmatpush.bf16.msra.mxu0 %v1681
    %2006 = vmatpush.bf16.msra.mxu0 %v1673
    %2007 = vmatpush.bf16.msra.mxu0 %v1665
    %2008 = vmatpush.bf16.msra.mxu0 %v1657
    %2009 = vmatpush.bf16.msra.mxu0 %v1649
    %2010 = vmatpush.bf16.msra.mxu0 %v1641
    %2011 = vmatpush.bf16.msra.mxu0 %v1633
    %2012 = vmatpush.bf16.msra.mxu0 %v1625
    %2013 = vmatmul.bf16.gmra.mxu0 %v1041
    %v2014 = vpop.f32.mrf.mxu0
    %v2015 = vadd.f32 %v2002, %v2014
    %v2016 = vpop.f32.mrf.mxu0
    %2017 = vdwg.mxu0
    %v2018 = vadd.f32 %v814, %v1833
    %v2019 = vadd.f32 %v843, %v1859
    %v2020 = vadd.f32 %v872, %v1885
    %v2021 = vadd.f32 %v901, %v1911
    %v2022 = vadd.f32 %v930, %v1937
    %v2023 = vadd.f32 %v959, %v1963
    %v2024 = vadd.f32 %v988, %v1989
    %v2025 = vadd.f32 %v1017, %v2015
    %v2026 = vxor.u32 %v2018, 2147483648
    %v2027 = vxor.u32 %v2019, 2147483648
    %v2028 = vmul.f32 %v2026, 1.442695
    %v2029 = vpow.pop %v2028
    %v2030 = vmul.f32 %v2027, 1.442695
    %v2031 = vpow.pop %v2030
    %v2032 = vadd.f32 %v2029, 1.0
    %v2033 = vadd.f32 %v2031, 1.0
    %v2034 = vrcp.pop %v2032
    %v2035 = vmul.f32 %v2032, %v2034
    %v2036 = vsub.f32 1.0, %v2035
    %v2037 = vmul.f32 %v2034, %v2036
    %v2038 = vadd.f32 %v2034, %v2037
    %vm2039 = vweird.f32 %v2032
    %vm2040 = vweird.f32 %v2034
    %vm2041 = vmor %vm2039, %vm2040
    %v2042 = vsel %vm2041, %v2034, %v2038
    %v2043 = vand.u32 2147483647, %v2032
    %vm2044 = vcmp.eq.f32.partialorder %v2043, 8.507059e+37
    %v2045 = vand.u32 %v2032, 2147483648
    %v2046 = vor.u32 1.1754944e-38, %v2045
    %v2047 = vsel %vm2044, %v2046, %v2042
    %v2048 = vmul.f32 1.0, %v2047
    %v2049 = vrcp.pop %v2033
    %v2050 = vmul.f32 %v2033, %v2049
    %v2051 = vsub.f32 1.0, %v2050
    %v2052 = vmul.f32 %v2049, %v2051
    %v2053 = vadd.f32 %v2049, %v2052
    %vm2054 = vweird.f32 %v2033
    %vm2055 = vweird.f32 %v2049
    %vm2056 = vmor %vm2054, %vm2055
    %v2057 = vsel %vm2056, %v2049, %v2053
    %v2058 = vand.u32 2147483647, %v2033
    %vm2059 = vcmp.eq.f32.partialorder %v2058, 8.507059e+37
    %v2060 = vand.u32 %v2033, 2147483648
    %v2061 = vor.u32 1.1754944e-38, %v2060
    %v2062 = vsel %vm2059, %v2061, %v2057
    %v2063 = vmul.f32 1.0, %v2062
    %v2064 = vxor.u32 %v2020, 2147483648
    %v2065 = vxor.u32 %v2021, 2147483648
    %v2066 = vmul.f32 %v2064, 1.442695
    %v2067 = vpow.pop %v2066
    %v2068 = vmul.f32 %v2065, 1.442695
    %v2069 = vpow.pop %v2068
    %v2070 = vadd.f32 %v2067, 1.0
    %v2071 = vadd.f32 %v2069, 1.0
    %v2072 = vrcp.pop %v2070
    %v2073 = vmul.f32 %v2070, %v2072
    %v2074 = vsub.f32 1.0, %v2073
    %v2075 = vmul.f32 %v2072, %v2074
    %v2076 = vadd.f32 %v2072, %v2075
    %vm2077 = vweird.f32 %v2070
    %vm2078 = vweird.f32 %v2072
    %vm2079 = vmor %vm2077, %vm2078
    %v2080 = vsel %vm2079, %v2072, %v2076
    %v2081 = vand.u32 2147483647, %v2070
    %vm2082 = vcmp.eq.f32.partialorder %v2081, 8.507059e+37
    %v2083 = vand.u32 %v2070, 2147483648
    %v2084 = vor.u32 1.1754944e-38, %v2083
    %v2085 = vsel %vm2082, %v2084, %v2080
    %v2086 = vmul.f32 1.0, %v2085
    %v2087 = vrcp.pop %v2071
    %v2088 = vmul.f32 %v2071, %v2087
    %v2089 = vsub.f32 1.0, %v2088
    %v2090 = vmul.f32 %v2087, %v2089
    %v2091 = vadd.f32 %v2087, %v2090
    %vm2092 = vweird.f32 %v2071
    %vm2093 = vweird.f32 %v2087
    %vm2094 = vmor %vm2092, %vm2093
    %v2095 = vsel %vm2094, %v2087, %v2091
    %v2096 = vand.u32 2147483647, %v2071
    %vm2097 = vcmp.eq.f32.partialorder %v2096, 8.507059e+37
    %v2098 = vand.u32 %v2071, 2147483648
    %v2099 = vor.u32 1.1754944e-38, %v2098
    %v2100 = vsel %vm2097, %v2099, %v2095
    %v2101 = vmul.f32 1.0, %v2100
    %v2102 = vtanh.pop %v2022
    %v2103 = vtanh.pop %v2023
    %v2104 = vxor.u32 %v2024, 2147483648
    %v2105 = vxor.u32 %v2025, 2147483648
    %v2106 = vmul.f32 %v2104, 1.442695
    %v2107 = vpow.pop %v2106
    %v2108 = vmul.f32 %v2105, 1.442695
    %v2109 = vpow.pop %v2108
    %v2110 = vadd.f32 %v2107, 1.0
    %v2111 = vadd.f32 %v2109, 1.0
    %v2112 = vrcp.pop %v2110
    %v2113 = vmul.f32 %v2110, %v2112
    %v2114 = vsub.f32 1.0, %v2113
    %v2115 = vmul.f32 %v2112, %v2114
    %v2116 = vadd.f32 %v2112, %v2115
    %vm2117 = vweird.f32 %v2110
    %vm2118 = vweird.f32 %v2112
    %vm2119 = vmor %vm2117, %vm2118
    %v2120 = vsel %vm2119, %v2112, %v2116
    %v2121 = vand.u32 2147483647, %v2110
    %vm2122 = vcmp.eq.f32.partialorder %v2121, 8.507059e+37
    %v2123 = vand.u32 %v2110, 2147483648
    %v2124 = vor.u32 1.1754944e-38, %v2123
    %v2125 = vsel %vm2122, %v2124, %v2120
    %v2126 = vmul.f32 1.0, %v2125
    %v2127 = vrcp.pop %v2111
    %v2128 = vmul.f32 %v2111, %v2127
    %v2129 = vsub.f32 1.0, %v2128
    %v2130 = vmul.f32 %v2127, %v2129
    %v2131 = vadd.f32 %v2127, %v2130
    %vm2132 = vweird.f32 %v2111
    %vm2133 = vweird.f32 %v2127
    %vm2134 = vmor %vm2132, %vm2133
    %v2135 = vsel %vm2134, %v2127, %v2131
    %v2136 = vand.u32 2147483647, %v2111
    %vm2137 = vcmp.eq.f32.partialorder %v2136, 8.507059e+37
    %v2138 = vand.u32 %v2111, 2147483648
    %v2139 = vor.u32 1.1754944e-38, %v2138
    %v2140 = vsel %vm2137, %v2139, %v2135
    %v2141 = vmul.f32 1.0, %v2140
    %v2142 = vmul.f32 %v2086, %v1038
    %v2143 = vmul.f32 %v2101, %v1039
    %v2144 = vmul.f32 %v2048, %v2102
    %v2145 = vmul.f32 %v2063, %v2103
    %v2146 = vadd.f32 %v2142, %v2144
    %v2147 = vadd.f32 %v2143, %v2145
    %v2148 = vtanh.pop %v2146
    %v2149 = vtanh.pop %v2147
    %v2150 = vmul.f32 %v2126, %v2148
    %v2151 = vmul.f32 %v2141, %v2149
    %2152 = vst [vmem:[#allocation2] sm:$0xff] %v2150
    %2153 = vst [vmem:[#allocation2 + $0x8] sm:$0xff] %v2151
    %v2154 = vpack.c.bf16 %v2150, %v2150
    %v2155 = vpack.c.bf16 %v2151, %v2151
    %v2156 = vld [vmem:[#allocation10] sm:$0xff]
    %v2157 = vld [vmem:[#allocation10 + $0x8] sm:$0xff]
    %v2158 = vld [vmem:[#allocation10 + $0x10] sm:$0xff]
    %v2159 = vld [vmem:[#allocation10 + $0x18] sm:$0xff]
    %v2160 = vld [vmem:[#allocation10 + $0x20] sm:$0xff]
    %v2161 = vld [vmem:[#allocation10 + $0x28] sm:$0xff]
    %v2162 = vld [vmem:[#allocation10 + $0x30] sm:$0xff]
    %v2163 = vld [vmem:[#allocation10 + $0x38] sm:$0xff]
    %v2164 = vld [vmem:[#allocation10 + $0x40] sm:$0xff]
    %v2165 = vld [vmem:[#allocation10 + $0x48] sm:$0xff]
    %v2166 = vld [vmem:[#allocation10 + $0x50] sm:$0xff]
    %v2167 = vld [vmem:[#allocation10 + $0x58] sm:$0xff]
    %v2168 = vld [vmem:[#allocation10 + $0x60] sm:$0xff]
    %v2169 = vld [vmem:[#allocation10 + $0x68] sm:$0xff]
    %v2170 = vld [vmem:[#allocation10 + $0x70] sm:$0xff]
    %v2171 = vld [vmem:[#allocation10 + $0x78] sm:$0xff]
    %v2172 = vld [vmem:[#allocation10 + $0x80] sm:$0xff]
    %v2173 = vld [vmem:[#allocation10 + $0x88] sm:$0xff]
    %v2174 = vld [vmem:[#allocation10 + $0x90] sm:$0xff]
    %v2175 = vld [vmem:[#allocation10 + $0x98] sm:$0xff]
    %v2176 = vld [vmem:[#allocation10 + $0xa0] sm:$0xff]
    %v2177 = vld [vmem:[#allocation10 + $0xa8] sm:$0xff]
    %v2178 = vld [vmem:[#allocation10 + $0xb0] sm:$0xff]
    %v2179 = vld [vmem:[#allocation10 + $0xb8] sm:$0xff]
    %v2180 = vld [vmem:[#allocation10 + $0xc0] sm:$0xff]
    %v2181 = vld [vmem:[#allocation10 + $0xc8] sm:$0xff]
    %v2182 = vld [vmem:[#allocation10 + $0xd0] sm:$0xff]
    %v2183 = vld [vmem:[#allocation10 + $0xd8] sm:$0xff]
    %v2184 = vld [vmem:[#allocation10 + $0xe0] sm:$0xff]
    %v2185 = vld [vmem:[#allocation10 + $0xe8] sm:$0xff]
    %v2186 = vld [vmem:[#allocation10 + $0xf0] sm:$0xff]
    %v2187 = vld [vmem:[#allocation10 + $0xf8] sm:$0xff]
    %v2188 = vld [vmem:[#allocation10 + $0x100] sm:$0xff]
    %v2189 = vld [vmem:[#allocation10 + $0x108] sm:$0xff]
    %v2190 = vld [vmem:[#allocation10 + $0x110] sm:$0xff]
    %v2191 = vld [vmem:[#allocation10 + $0x118] sm:$0xff]
    %v2192 = vld [vmem:[#allocation10 + $0x120] sm:$0xff]
    %v2193 = vld [vmem:[#allocation10 + $0x128] sm:$0xff]
    %v2194 = vld [vmem:[#allocation10 + $0x130] sm:$0xff]
    %v2195 = vld [vmem:[#allocation10 + $0x138] sm:$0xff]
    %v2196 = vld [vmem:[#allocation10 + $0x140] sm:$0xff]
    %v2197 = vld [vmem:[#allocation10 + $0x148] sm:$0xff]
    %v2198 = vld [vmem:[#allocation10 + $0x150] sm:$0xff]
    %v2199 = vld [vmem:[#allocation10 + $0x158] sm:$0xff]
    %v2200 = vld [vmem:[#allocation10 + $0x160] sm:$0xff]
    %v2201 = vld [vmem:[#allocation10 + $0x168] sm:$0xff]
    %v2202 = vld [vmem:[#allocation10 + $0x170] sm:$0xff]
    %v2203 = vld [vmem:[#allocation10 + $0x178] sm:$0xff]
    %v2204 = vld [vmem:[#allocation10 + $0x180] sm:$0xff]
    %v2205 = vld [vmem:[#allocation10 + $0x188] sm:$0xff]
    %v2206 = vld [vmem:[#allocation10 + $0x190] sm:$0xff]
    %v2207 = vld [vmem:[#allocation10 + $0x198] sm:$0xff]
    %v2208 = vld [vmem:[#allocation10 + $0x1a0] sm:$0xff]
    %v2209 = vld [vmem:[#allocation10 + $0x1a8] sm:$0xff]
    %v2210 = vld [vmem:[#allocation10 + $0x1b0] sm:$0xff]
    %v2211 = vld [vmem:[#allocation10 + $0x1b8] sm:$0xff]
    %v2212 = vld [vmem:[#allocation10 + $0x1c0] sm:$0xff]
    %v2213 = vld [vmem:[#allocation10 + $0x1c8] sm:$0xff]
    %v2214 = vld [vmem:[#allocation10 + $0x1d0] sm:$0xff]
    %v2215 = vld [vmem:[#allocation10 + $0x1d8] sm:$0xff]
    %v2216 = vld [vmem:[#allocation10 + $0x1e0] sm:$0xff]
    %v2217 = vld [vmem:[#allocation10 + $0x1e8] sm:$0xff]
    %v2218 = vld [vmem:[#allocation10 + $0x1f0] sm:$0xff]
    %v2219 = vld [vmem:[#allocation10 + $0x1f8] sm:$0xff]
    %v2220 = vld [vmem:[#allocation10 + $0x200] sm:$0xff]
    %v2221 = vld [vmem:[#allocation10 + $0x208] sm:$0xff]
    %v2222 = vld [vmem:[#allocation10 + $0x210] sm:$0xff]
    %v2223 = vld [vmem:[#allocation10 + $0x218] sm:$0xff]
    %v2224 = vld [vmem:[#allocation10 + $0x220] sm:$0xff]
    %v2225 = vld [vmem:[#allocation10 + $0x228] sm:$0xff]
    %v2226 = vld [vmem:[#allocation10 + $0x230] sm:$0xff]
    %v2227 = vld [vmem:[#allocation10 + $0x238] sm:$0xff]
    %v2228 = vld [vmem:[#allocation10 + $0x240] sm:$0xff]
    %v2229 = vld [vmem:[#allocation10 + $0x248] sm:$0xff]
    %v2230 = vld [vmem:[#allocation10 + $0x250] sm:$0xff]
    %v2231 = vld [vmem:[#allocation10 + $0x258] sm:$0xff]
    %v2232 = vld [vmem:[#allocation10 + $0x260] sm:$0xff]
    %v2233 = vld [vmem:[#allocation10 + $0x268] sm:$0xff]
    %v2234 = vld [vmem:[#allocation10 + $0x270] sm:$0xff]
    %v2235 = vld [vmem:[#allocation10 + $0x278] sm:$0xff]
    %v2236 = vld [vmem:[#allocation10 + $0x280] sm:$0xff]
    %v2237 = vld [vmem:[#allocation10 + $0x288] sm:$0xff]
    %v2238 = vld [vmem:[#allocation10 + $0x290] sm:$0xff]
    %v2239 = vld [vmem:[#allocation10 + $0x298] sm:$0xff]
    %v2240 = vld [vmem:[#allocation10 + $0x2a0] sm:$0xff]
    %v2241 = vld [vmem:[#allocation10 + $0x2a8] sm:$0xff]
    %v2242 = vld [vmem:[#allocation10 + $0x2b0] sm:$0xff]
    %v2243 = vld [vmem:[#allocation10 + $0x2b8] sm:$0xff]
    %v2244 = vld [vmem:[#allocation10 + $0x2c0] sm:$0xff]
    %v2245 = vld [vmem:[#allocation10 + $0x2c8] sm:$0xff]
    %v2246 = vld [vmem:[#allocation10 + $0x2d0] sm:$0xff]
    %v2247 = vld [vmem:[#allocation10 + $0x2d8] sm:$0xff]
    %v2248 = vld [vmem:[#allocation10 + $0x2e0] sm:$0xff]
    %v2249 = vld [vmem:[#allocation10 + $0x2e8] sm:$0xff]
    %v2250 = vld [vmem:[#allocation10 + $0x2f0] sm:$0xff]
    %v2251 = vld [vmem:[#allocation10 + $0x2f8] sm:$0xff]
    %v2252 = vld [vmem:[#allocation10 + $0x300] sm:$0xff]
    %v2253 = vld [vmem:[#allocation10 + $0x308] sm:$0xff]
    %v2254 = vld [vmem:[#allocation10 + $0x310] sm:$0xff]
    %v2255 = vld [vmem:[#allocation10 + $0x318] sm:$0xff]
    %v2256 = vld [vmem:[#allocation10 + $0x320] sm:$0xff]
    %v2257 = vld [vmem:[#allocation10 + $0x328] sm:$0xff]
    %v2258 = vld [vmem:[#allocation10 + $0x330] sm:$0xff]
    %v2259 = vld [vmem:[#allocation10 + $0x338] sm:$0xff]
    %v2260 = vld [vmem:[#allocation10 + $0x340] sm:$0xff]
    %v2261 = vld [vmem:[#allocation10 + $0x348] sm:$0xff]
    %v2262 = vld [vmem:[#allocation10 + $0x350] sm:$0xff]
    %v2263 = vld [vmem:[#allocation10 + $0x358] sm:$0xff]
    %v2264 = vld [vmem:[#allocation10 + $0x360] sm:$0xff]
    %v2265 = vld [vmem:[#allocation10 + $0x368] sm:$0xff]
    %v2266 = vld [vmem:[#allocation10 + $0x370] sm:$0xff]
    %v2267 = vld [vmem:[#allocation10 + $0x378] sm:$0xff]
    %v2268 = vld [vmem:[#allocation10 + $0x380] sm:$0xff]
    %v2269 = vld [vmem:[#allocation10 + $0x388] sm:$0xff]
    %v2270 = vld [vmem:[#allocation10 + $0x390] sm:$0xff]
    %v2271 = vld [vmem:[#allocation10 + $0x398] sm:$0xff]
    %v2272 = vld [vmem:[#allocation10 + $0x3a0] sm:$0xff]
    %v2273 = vld [vmem:[#allocation10 + $0x3a8] sm:$0xff]
    %v2274 = vld [vmem:[#allocation10 + $0x3b0] sm:$0xff]
    %v2275 = vld [vmem:[#allocation10 + $0x3b8] sm:$0xff]
    %v2276 = vld [vmem:[#allocation10 + $0x3c0] sm:$0xff]
    %v2277 = vld [vmem:[#allocation10 + $0x3c8] sm:$0xff]
    %v2278 = vld [vmem:[#allocation10 + $0x3d0] sm:$0xff]
    %v2279 = vld [vmem:[#allocation10 + $0x3d8] sm:$0xff]
    %v2280 = vld [vmem:[#allocation10 + $0x3e0] sm:$0xff]
    %v2281 = vld [vmem:[#allocation10 + $0x3e8] sm:$0xff]
    %v2282 = vld [vmem:[#allocation10 + $0x3f0] sm:$0xff]
    %v2283 = vld [vmem:[#allocation10 + $0x3f8] sm:$0xff]
    %v2412 = vunpack.c.l.b16 %v2156
    %v2413 = vunpack.c.h.b16 %v2156
    %v2414 = vunpack.c.l.b16 %v2157
    %v2415 = vunpack.c.h.b16 %v2157
    %v2416 = vunpack.c.l.b16 %v2158
    %v2417 = vunpack.c.h.b16 %v2158
    %v2418 = vunpack.c.l.b16 %v2159
    %v2419 = vunpack.c.h.b16 %v2159
    %v2420 = vunpack.c.l.b16 %v2160
    %v2421 = vunpack.c.h.b16 %v2160
    %v2422 = vunpack.c.l.b16 %v2161
    %v2423 = vunpack.c.h.b16 %v2161
    %v2424 = vunpack.c.l.b16 %v2162
    %v2425 = vunpack.c.h.b16 %v2162
    %v2426 = vunpack.c.l.b16 %v2163
    %v2427 = vunpack.c.h.b16 %v2163
    %v2428 = vunpack.c.l.b16 %v2164
    %v2429 = vunpack.c.h.b16 %v2164
    %v2430 = vunpack.c.l.b16 %v2165
    %v2431 = vunpack.c.h.b16 %v2165
    %v2432 = vunpack.c.l.b16 %v2166
    %v2433 = vunpack.c.h.b16 %v2166
    %v2434 = vunpack.c.l.b16 %v2167
    %v2435 = vunpack.c.h.b16 %v2167
    %v2436 = vunpack.c.l.b16 %v2168
    %v2437 = vunpack.c.h.b16 %v2168
    %v2438 = vunpack.c.l.b16 %v2169
    %v2439 = vunpack.c.h.b16 %v2169
    %v2440 = vunpack.c.l.b16 %v2170
    %v2441 = vunpack.c.h.b16 %v2170
    %v2442 = vunpack.c.l.b16 %v2171
    %v2443 = vunpack.c.h.b16 %v2171
    %v2444 = vunpack.c.l.b16 %v2172
    %v2445 = vunpack.c.h.b16 %v2172
    %v2446 = vunpack.c.l.b16 %v2173
    %v2447 = vunpack.c.h.b16 %v2173
    %v2448 = vunpack.c.l.b16 %v2174
    %v2449 = vunpack.c.h.b16 %v2174
    %v2450 = vunpack.c.l.b16 %v2175
    %v2451 = vunpack.c.h.b16 %v2175
    %v2452 = vunpack.c.l.b16 %v2176
    %v2453 = vunpack.c.h.b16 %v2176
    %v2454 = vunpack.c.l.b16 %v2177
    %v2455 = vunpack.c.h.b16 %v2177
    %v2456 = vunpack.c.l.b16 %v2178
    %v2457 = vunpack.c.h.b16 %v2178
    %v2458 = vunpack.c.l.b16 %v2179
    %v2459 = vunpack.c.h.b16 %v2179
    %v2460 = vunpack.c.l.b16 %v2180
    %v2461 = vunpack.c.h.b16 %v2180
    %v2462 = vunpack.c.l.b16 %v2181
    %v2463 = vunpack.c.h.b16 %v2181
    %v2464 = vunpack.c.l.b16 %v2182
    %v2465 = vunpack.c.h.b16 %v2182
    %v2466 = vunpack.c.l.b16 %v2183
    %v2467 = vunpack.c.h.b16 %v2183
    %v2468 = vunpack.c.l.b16 %v2184
    %v2469 = vunpack.c.h.b16 %v2184
    %v2470 = vunpack.c.l.b16 %v2185
    %v2471 = vunpack.c.h.b16 %v2185
    %v2472 = vunpack.c.l.b16 %v2186
    %v2473 = vunpack.c.h.b16 %v2186
    %v2474 = vunpack.c.l.b16 %v2187
    %v2475 = vunpack.c.h.b16 %v2187
    %v2476 = vunpack.c.l.b16 %v2188
    %v2477 = vunpack.c.h.b16 %v2188
    %v2478 = vunpack.c.l.b16 %v2189
    %v2479 = vunpack.c.h.b16 %v2189
    %v2480 = vunpack.c.l.b16 %v2190
    %v2481 = vunpack.c.h.b16 %v2190
    %v2482 = vunpack.c.l.b16 %v2191
    %v2483 = vunpack.c.h.b16 %v2191
    %v2484 = vunpack.c.l.b16 %v2192
    %v2485 = vunpack.c.h.b16 %v2192
    %v2486 = vunpack.c.l.b16 %v2193
    %v2487 = vunpack.c.h.b16 %v2193
    %v2488 = vunpack.c.l.b16 %v2194
    %v2489 = vunpack.c.h.b16 %v2194
    %v2490 = vunpack.c.l.b16 %v2195
    %v2491 = vunpack.c.h.b16 %v2195
    %v2492 = vunpack.c.l.b16 %v2196
    %v2493 = vunpack.c.h.b16 %v2196
    %v2494 = vunpack.c.l.b16 %v2197
    %v2495 = vunpack.c.h.b16 %v2197
    %v2496 = vunpack.c.l.b16 %v2198
    %v2497 = vunpack.c.h.b16 %v2198
    %v2498 = vunpack.c.l.b16 %v2199
    %v2499 = vunpack.c.h.b16 %v2199
    %v2500 = vunpack.c.l.b16 %v2200
    %v2501 = vunpack.c.h.b16 %v2200
    %v2502 = vunpack.c.l.b16 %v2201
    %v2503 = vunpack.c.h.b16 %v2201
    %v2504 = vunpack.c.l.b16 %v2202
    %v2505 = vunpack.c.h.b16 %v2202
    %v2506 = vunpack.c.l.b16 %v2203
    %v2507 = vunpack.c.h.b16 %v2203
    %v2508 = vunpack.c.l.b16 %v2204
    %v2509 = vunpack.c.h.b16 %v2204
    %v2510 = vunpack.c.l.b16 %v2205
    %v2511 = vunpack.c.h.b16 %v2205
    %v2512 = vunpack.c.l.b16 %v2206
    %v2513 = vunpack.c.h.b16 %v2206
    %v2514 = vunpack.c.l.b16 %v2207
    %v2515 = vunpack.c.h.b16 %v2207
    %v2516 = vunpack.c.l.b16 %v2208
    %v2517 = vunpack.c.h.b16 %v2208
    %v2518 = vunpack.c.l.b16 %v2209
    %v2519 = vunpack.c.h.b16 %v2209
    %v2520 = vunpack.c.l.b16 %v2210
    %v2521 = vunpack.c.h.b16 %v2210
    %v2522 = vunpack.c.l.b16 %v2211
    %v2523 = vunpack.c.h.b16 %v2211
    %v2524 = vunpack.c.l.b16 %v2212
    %v2525 = vunpack.c.h.b16 %v2212
    %v2526 = vunpack.c.l.b16 %v2213
    %v2527 = vunpack.c.h.b16 %v2213
    %v2528 = vunpack.c.l.b16 %v2214
    %v2529 = vunpack.c.h.b16 %v2214
    %v2530 = vunpack.c.l.b16 %v2215
    %v2531 = vunpack.c.h.b16 %v2215
    %v2532 = vunpack.c.l.b16 %v2216
    %v2533 = vunpack.c.h.b16 %v2216
    %v2534 = vunpack.c.l.b16 %v2217
    %v2535 = vunpack.c.h.b16 %v2217
    %v2536 = vunpack.c.l.b16 %v2218
    %v2537 = vunpack.c.h.b16 %v2218
    %v2538 = vunpack.c.l.b16 %v2219
    %v2539 = vunpack.c.h.b16 %v2219
    %v2540 = vunpack.c.l.b16 %v2220
    %v2541 = vunpack.c.h.b16 %v2220
    %v2542 = vunpack.c.l.b16 %v2221
    %v2543 = vunpack.c.h.b16 %v2221
    %v2544 = vunpack.c.l.b16 %v2222
    %v2545 = vunpack.c.h.b16 %v2222
    %v2546 = vunpack.c.l.b16 %v2223
    %v2547 = vunpack.c.h.b16 %v2223
    %v2548 = vunpack.c.l.b16 %v2224
    %v2549 = vunpack.c.h.b16 %v2224
    %v2550 = vunpack.c.l.b16 %v2225
    %v2551 = vunpack.c.h.b16 %v2225
    %v2552 = vunpack.c.l.b16 %v2226
    %v2553 = vunpack.c.h.b16 %v2226
    %v2554 = vunpack.c.l.b16 %v2227
    %v2555 = vunpack.c.h.b16 %v2227
    %v2556 = vunpack.c.l.b16 %v2228
    %v2557 = vunpack.c.h.b16 %v2228
    %v2558 = vunpack.c.l.b16 %v2229
    %v2559 = vunpack.c.h.b16 %v2229
    %v2560 = vunpack.c.l.b16 %v2230
    %v2561 = vunpack.c.h.b16 %v2230
    %v2562 = vunpack.c.l.b16 %v2231
    %v2563 = vunpack.c.h.b16 %v2231
    %v2564 = vunpack.c.l.b16 %v2232
    %v2565 = vunpack.c.h.b16 %v2232
    %v2566 = vunpack.c.l.b16 %v2233
    %v2567 = vunpack.c.h.b16 %v2233
    %v2568 = vunpack.c.l.b16 %v2234
    %v2569 = vunpack.c.h.b16 %v2234
    %v2570 = vunpack.c.l.b16 %v2235
    %v2571 = vunpack.c.h.b16 %v2235
    %v2572 = vunpack.c.l.b16 %v2236
    %v2573 = vunpack.c.h.b16 %v2236
    %v2574 = vunpack.c.l.b16 %v2237
    %v2575 = vunpack.c.h.b16 %v2237
    %v2576 = vunpack.c.l.b16 %v2238
    %v2577 = vunpack.c.h.b16 %v2238
    %v2578 = vunpack.c.l.b16 %v2239
    %v2579 = vunpack.c.h.b16 %v2239
    %v2580 = vunpack.c.l.b16 %v2240
    %v2581 = vunpack.c.h.b16 %v2240
    %v2582 = vunpack.c.l.b16 %v2241
    %v2583 = vunpack.c.h.b16 %v2241
    %v2584 = vunpack.c.l.b16 %v2242
    %v2585 = vunpack.c.h.b16 %v2242
    %v2586 = vunpack.c.l.b16 %v2243
    %v2587 = vunpack.c.h.b16 %v2243
    %v2588 = vunpack.c.l.b16 %v2244
    %v2589 = vunpack.c.h.b16 %v2244
    %v2590 = vunpack.c.l.b16 %v2245
    %v2591 = vunpack.c.h.b16 %v2245
    %v2592 = vunpack.c.l.b16 %v2246
    %v2593 = vunpack.c.h.b16 %v2246
    %v2594 = vunpack.c.l.b16 %v2247
    %v2595 = vunpack.c.h.b16 %v2247
    %v2596 = vunpack.c.l.b16 %v2248
    %v2597 = vunpack.c.h.b16 %v2248
    %v2598 = vunpack.c.l.b16 %v2249
    %v2599 = vunpack.c.h.b16 %v2249
    %v2600 = vunpack.c.l.b16 %v2250
    %v2601 = vunpack.c.h.b16 %v2250
    %v2602 = vunpack.c.l.b16 %v2251
    %v2603 = vunpack.c.h.b16 %v2251
    %v2604 = vunpack.c.l.b16 %v2252
    %v2605 = vunpack.c.h.b16 %v2252
    %v2606 = vunpack.c.l.b16 %v2253
    %v2607 = vunpack.c.h.b16 %v2253
    %v2608 = vunpack.c.l.b16 %v2254
    %v2609 = vunpack.c.h.b16 %v2254
    %v2610 = vunpack.c.l.b16 %v2255
    %v2611 = vunpack.c.h.b16 %v2255
    %v2612 = vunpack.c.l.b16 %v2256
    %v2613 = vunpack.c.h.b16 %v2256
    %v2614 = vunpack.c.l.b16 %v2257
    %v2615 = vunpack.c.h.b16 %v2257
    %v2616 = vunpack.c.l.b16 %v2258
    %v2617 = vunpack.c.h.b16 %v2258
    %v2618 = vunpack.c.l.b16 %v2259
    %v2619 = vunpack.c.h.b16 %v2259
    %v2620 = vunpack.c.l.b16 %v2260
    %v2621 = vunpack.c.h.b16 %v2260
    %v2622 = vunpack.c.l.b16 %v2261
    %v2623 = vunpack.c.h.b16 %v2261
    %v2624 = vunpack.c.l.b16 %v2262
    %v2625 = vunpack.c.h.b16 %v2262
    %v2626 = vunpack.c.l.b16 %v2263
    %v2627 = vunpack.c.h.b16 %v2263
    %v2628 = vunpack.c.l.b16 %v2264
    %v2629 = vunpack.c.h.b16 %v2264
    %v2630 = vunpack.c.l.b16 %v2265
    %v2631 = vunpack.c.h.b16 %v2265
    %v2632 = vunpack.c.l.b16 %v2266
    %v2633 = vunpack.c.h.b16 %v2266
    %v2634 = vunpack.c.l.b16 %v2267
    %v2635 = vunpack.c.h.b16 %v2267
    %v2636 = vunpack.c.l.b16 %v2268
    %v2637 = vunpack.c.h.b16 %v2268
    %v2638 = vunpack.c.l.b16 %v2269
    %v2639 = vunpack.c.h.b16 %v2269
    %v2640 = vunpack.c.l.b16 %v2270
    %v2641 = vunpack.c.h.b16 %v2270
    %v2642 = vunpack.c.l.b16 %v2271
    %v2643 = vunpack.c.h.b16 %v2271
    %v2644 = vunpack.c.l.b16 %v2272
    %v2645 = vunpack.c.h.b16 %v2272
    %v2646 = vunpack.c.l.b16 %v2273
    %v2647 = vunpack.c.h.b16 %v2273
    %v2648 = vunpack.c.l.b16 %v2274
    %v2649 = vunpack.c.h.b16 %v2274
    %v2650 = vunpack.c.l.b16 %v2275
    %v2651 = vunpack.c.h.b16 %v2275
    %v2652 = vunpack.c.l.b16 %v2276
    %v2653 = vunpack.c.h.b16 %v2276
    %v2654 = vunpack.c.l.b16 %v2277
    %v2655 = vunpack.c.h.b16 %v2277
    %v2656 = vunpack.c.l.b16 %v2278
    %v2657 = vunpack.c.h.b16 %v2278
    %v2658 = vunpack.c.l.b16 %v2279
    %v2659 = vunpack.c.h.b16 %v2279
    %v2660 = vunpack.c.l.b16 %v2280
    %v2661 = vunpack.c.h.b16 %v2280
    %v2662 = vunpack.c.l.b16 %v2281
    %v2663 = vunpack.c.h.b16 %v2281
    %v2664 = vunpack.c.l.b16 %v2282
    %v2665 = vunpack.c.h.b16 %v2282
    %v2666 = vunpack.c.l.b16 %v2283
    %v2667 = vunpack.c.h.b16 %v2283
    %v2668 = vpack.c.b16 %v2420, %v2412
    %v2669 = vpack.c.b16 %v2421, %v2413
    %v2670 = vpack.c.b16 %v2422, %v2414
    %v2671 = vpack.c.b16 %v2423, %v2415
    %v2672 = vpack.c.b16 %v2424, %v2416
    %v2673 = vpack.c.b16 %v2425, %v2417
    %v2674 = vpack.c.b16 %v2426, %v2418
    %v2675 = vpack.c.b16 %v2427, %v2419
    %v2676 = vpack.c.b16 %v2436, %v2428
    %v2677 = vpack.c.b16 %v2437, %v2429
    %v2678 = vpack.c.b16 %v2438, %v2430
    %v2679 = vpack.c.b16 %v2439, %v2431
    %v2680 = vpack.c.b16 %v2440, %v2432
    %v2681 = vpack.c.b16 %v2441, %v2433
    %v2682 = vpack.c.b16 %v2442, %v2434
    %v2683 = vpack.c.b16 %v2443, %v2435
    %v2684 = vpack.c.b16 %v2452, %v2444
    %v2685 = vpack.c.b16 %v2453, %v2445
    %v2686 = vpack.c.b16 %v2454, %v2446
    %v2687 = vpack.c.b16 %v2455, %v2447
    %v2688 = vpack.c.b16 %v2456, %v2448
    %v2689 = vpack.c.b16 %v2457, %v2449
    %v2690 = vpack.c.b16 %v2458, %v2450
    %v2691 = vpack.c.b16 %v2459, %v2451
    %v2692 = vpack.c.b16 %v2468, %v2460
    %v2693 = vpack.c.b16 %v2469, %v2461
    %v2694 = vpack.c.b16 %v2470, %v2462
    %v2695 = vpack.c.b16 %v2471, %v2463
    %v2696 = vpack.c.b16 %v2472, %v2464
    %v2697 = vpack.c.b16 %v2473, %v2465
    %v2698 = vpack.c.b16 %v2474, %v2466
    %v2699 = vpack.c.b16 %v2475, %v2467
    %v2700 = vpack.c.b16 %v2484, %v2476
    %v2701 = vpack.c.b16 %v2485, %v2477
    %v2702 = vpack.c.b16 %v2486, %v2478
    %v2703 = vpack.c.b16 %v2487, %v2479
    %v2704 = vpack.c.b16 %v2488, %v2480
    %v2705 = vpack.c.b16 %v2489, %v2481
    %v2706 = vpack.c.b16 %v2490, %v2482
    %v2707 = vpack.c.b16 %v2491, %v2483
    %v2708 = vpack.c.b16 %v2500, %v2492
    %v2709 = vpack.c.b16 %v2501, %v2493
    %v2710 = vpack.c.b16 %v2502, %v2494
    %v2711 = vpack.c.b16 %v2503, %v2495
    %v2712 = vpack.c.b16 %v2504, %v2496
    %v2713 = vpack.c.b16 %v2505, %v2497
    %v2714 = vpack.c.b16 %v2506, %v2498
    %v2715 = vpack.c.b16 %v2507, %v2499
    %v2716 = vpack.c.b16 %v2516, %v2508
    %v2717 = vpack.c.b16 %v2517, %v2509
    %v2718 = vpack.c.b16 %v2518, %v2510
    %v2719 = vpack.c.b16 %v2519, %v2511
    %v2720 = vpack.c.b16 %v2520, %v2512
    %v2721 = vpack.c.b16 %v2521, %v2513
    %v2722 = vpack.c.b16 %v2522, %v2514
    %v2723 = vpack.c.b16 %v2523, %v2515
    %v2724 = vpack.c.b16 %v2532, %v2524
    %v2725 = vpack.c.b16 %v2533, %v2525
    %v2726 = vpack.c.b16 %v2534, %v2526
    %v2727 = vpack.c.b16 %v2535, %v2527
    %v2728 = vpack.c.b16 %v2536, %v2528
    %v2729 = vpack.c.b16 %v2537, %v2529
    %v2730 = vpack.c.b16 %v2538, %v2530
    %v2731 = vpack.c.b16 %v2539, %v2531
    %v2732 = vpack.c.b16 %v2548, %v2540
    %v2733 = vpack.c.b16 %v2549, %v2541
    %v2734 = vpack.c.b16 %v2550, %v2542
    %v2735 = vpack.c.b16 %v2551, %v2543
    %v2736 = vpack.c.b16 %v2552, %v2544
    %v2737 = vpack.c.b16 %v2553, %v2545
    %v2738 = vpack.c.b16 %v2554, %v2546
    %v2739 = vpack.c.b16 %v2555, %v2547
    %v2740 = vpack.c.b16 %v2564, %v2556
    %v2741 = vpack.c.b16 %v2565, %v2557
    %v2742 = vpack.c.b16 %v2566, %v2558
    %v2743 = vpack.c.b16 %v2567, %v2559
    %v2744 = vpack.c.b16 %v2568, %v2560
    %v2745 = vpack.c.b16 %v2569, %v2561
    %v2746 = vpack.c.b16 %v2570, %v2562
    %v2747 = vpack.c.b16 %v2571, %v2563
    %v2748 = vpack.c.b16 %v2580, %v2572
    %v2749 = vpack.c.b16 %v2581, %v2573
    %v2750 = vpack.c.b16 %v2582, %v2574
    %v2751 = vpack.c.b16 %v2583, %v2575
    %v2752 = vpack.c.b16 %v2584, %v2576
    %v2753 = vpack.c.b16 %v2585, %v2577
    %v2754 = vpack.c.b16 %v2586, %v2578
    %v2755 = vpack.c.b16 %v2587, %v2579
    %v2756 = vpack.c.b16 %v2596, %v2588
    %v2757 = vpack.c.b16 %v2597, %v2589
    %v2758 = vpack.c.b16 %v2598, %v2590
    %v2759 = vpack.c.b16 %v2599, %v2591
    %v2760 = vpack.c.b16 %v2600, %v2592
    %v2761 = vpack.c.b16 %v2601, %v2593
    %v2762 = vpack.c.b16 %v2602, %v2594
    %v2763 = vpack.c.b16 %v2603, %v2595
    %v2764 = vpack.c.b16 %v2612, %v2604
    %v2765 = vpack.c.b16 %v2613, %v2605
    %v2766 = vpack.c.b16 %v2614, %v2606
    %v2767 = vpack.c.b16 %v2615, %v2607
    %v2768 = vpack.c.b16 %v2616, %v2608
    %v2769 = vpack.c.b16 %v2617, %v2609
    %v2770 = vpack.c.b16 %v2618, %v2610
    %v2771 = vpack.c.b16 %v2619, %v2611
    %v2772 = vpack.c.b16 %v2628, %v2620
    %v2773 = vpack.c.b16 %v2629, %v2621
    %v2774 = vpack.c.b16 %v2630, %v2622
    %v2775 = vpack.c.b16 %v2631, %v2623
    %v2776 = vpack.c.b16 %v2632, %v2624
    %v2777 = vpack.c.b16 %v2633, %v2625
    %v2778 = vpack.c.b16 %v2634, %v2626
    %v2779 = vpack.c.b16 %v2635, %v2627
    %v2780 = vpack.c.b16 %v2644, %v2636
    %v2781 = vpack.c.b16 %v2645, %v2637
    %v2782 = vpack.c.b16 %v2646, %v2638
    %v2783 = vpack.c.b16 %v2647, %v2639
    %v2784 = vpack.c.b16 %v2648, %v2640
    %v2785 = vpack.c.b16 %v2649, %v2641
    %v2786 = vpack.c.b16 %v2650, %v2642
    %v2787 = vpack.c.b16 %v2651, %v2643
    %v2788 = vpack.c.b16 %v2660, %v2652
    %v2789 = vpack.c.b16 %v2661, %v2653
    %v2790 = vpack.c.b16 %v2662, %v2654
    %v2791 = vpack.c.b16 %v2663, %v2655
    %v2792 = vpack.c.b16 %v2664, %v2656
    %v2793 = vpack.c.b16 %v2665, %v2657
    %v2794 = vpack.c.b16 %v2666, %v2658
    %v2795 = vpack.c.b16 %v2667, %v2659
    %2924 = vmatpush.bf16.msra.mxu0 %v2724
    %2925 = vmatpush.bf16.msra.mxu0 %v2716
    %2926 = vmatpush.bf16.msra.mxu0 %v2708
    %2927 = vmatpush.bf16.msra.mxu0 %v2700
    %2928 = vmatpush.bf16.msra.mxu0 %v2692
    %2929 = vmatpush.bf16.msra.mxu0 %v2684
    %2930 = vmatpush.bf16.msra.mxu0 %v2676
    %2931 = vmatpush.bf16.msra.mxu0 %v2668
    %2932 = vmatmul.bf16.gmra.mxu0 %v2154
    %v2933 = vpop.f32.mrf.mxu0
    %v2934 = vadd.f32 0.0, %v2933
    %v2935 = vpop.f32.mrf.mxu0
    %2936 = vdwg.mxu0
    %2937 = vmatpush.bf16.msra.mxu0 %v2788
    %2938 = vmatpush.bf16.msra.mxu0 %v2780
    %2939 = vmatpush.bf16.msra.mxu0 %v2772
    %2940 = vmatpush.bf16.msra.mxu0 %v2764
    %2941 = vmatpush.bf16.msra.mxu0 %v2756
    %2942 = vmatpush.bf16.msra.mxu0 %v2748
    %2943 = vmatpush.bf16.msra.mxu0 %v2740
    %2944 = vmatpush.bf16.msra.mxu0 %v2732
    %2945 = vmatmul.bf16.gmra.mxu0 %v2155
    %v2946 = vpop.f32.mrf.mxu0
    %v2947 = vadd.f32 %v2934, %v2946
    %v2948 = vpop.f32.mrf.mxu0
    %2949 = vdwg.mxu0
    %2950 = vmatpush.bf16.msra.mxu0 %v2725
    %2951 = vmatpush.bf16.msra.mxu0 %v2717
    %2952 = vmatpush.bf16.msra.mxu0 %v2709
    %2953 = vmatpush.bf16.msra.mxu0 %v2701
    %2954 = vmatpush.bf16.msra.mxu0 %v2693
    %2955 = vmatpush.bf16.msra.mxu0 %v2685
    %2956 = vmatpush.bf16.msra.mxu0 %v2677
    %2957 = vmatpush.bf16.msra.mxu0 %v2669
    %2958 = vmatmul.bf16.gmra.mxu0 %v2154
    %v2959 = vpop.f32.mrf.mxu0
    %v2960 = vadd.f32 0.0, %v2959
    %v2961 = vpop.f32.mrf.mxu0
    %2962 = vdwg.mxu0
    %2963 = vmatpush.bf16.msra.mxu0 %v2789
    %2964 = vmatpush.bf16.msra.mxu0 %v2781
    %2965 = vmatpush.bf16.msra.mxu0 %v2773
    %2966 = vmatpush.bf16.msra.mxu0 %v2765
    %2967 = vmatpush.bf16.msra.mxu0 %v2757
    %2968 = vmatpush.bf16.msra.mxu0 %v2749
    %2969 = vmatpush.bf16.msra.mxu0 %v2741
    %2970 = vmatpush.bf16.msra.mxu0 %v2733
    %2971 = vmatmul.bf16.gmra.mxu0 %v2155
    %v2972 = vpop.f32.mrf.mxu0
    %v2973 = vadd.f32 %v2960, %v2972
    %v2974 = vpop.f32.mrf.mxu0
    %2975 = vdwg.mxu0
    %2976 = vmatpush.bf16.msra.mxu0 %v2726
    %2977 = vmatpush.bf16.msra.mxu0 %v2718
    %2978 = vmatpush.bf16.msra.mxu0 %v2710
    %2979 = vmatpush.bf16.msra.mxu0 %v2702
    %2980 = vmatpush.bf16.msra.mxu0 %v2694
    %2981 = vmatpush.bf16.msra.mxu0 %v2686
    %2982 = vmatpush.bf16.msra.mxu0 %v2678
    %2983 = vmatpush.bf16.msra.mxu0 %v2670
    %2984 = vmatmul.bf16.gmra.mxu0 %v2154
    %v2985 = vpop.f32.mrf.mxu0
    %v2986 = vadd.f32 0.0, %v2985
    %v2987 = vpop.f32.mrf.mxu0
    %2988 = vdwg.mxu0
    %2989 = vmatpush.bf16.msra.mxu0 %v2790
    %2990 = vmatpush.bf16.msra.mxu0 %v2782
    %2991 = vmatpush.bf16.msra.mxu0 %v2774
    %2992 = vmatpush.bf16.msra.mxu0 %v2766
    %2993 = vmatpush.bf16.msra.mxu0 %v2758
    %2994 = vmatpush.bf16.msra.mxu0 %v2750
    %2995 = vmatpush.bf16.msra.mxu0 %v2742
    %2996 = vmatpush.bf16.msra.mxu0 %v2734
    %2997 = vmatmul.bf16.gmra.mxu0 %v2155
    %v2998 = vpop.f32.mrf.mxu0
    %v2999 = vadd.f32 %v2986, %v2998
    %v3000 = vpop.f32.mrf.mxu0
    %3001 = vdwg.mxu0
    %3002 = vmatpush.bf16.msra.mxu0 %v2727
    %3003 = vmatpush.bf16.msra.mxu0 %v2719
    %3004 = vmatpush.bf16.msra.mxu0 %v2711
    %3005 = vmatpush.bf16.msra.mxu0 %v2703
    %3006 = vmatpush.bf16.msra.mxu0 %v2695
    %3007 = vmatpush.bf16.msra.mxu0 %v2687
    %3008 = vmatpush.bf16.msra.mxu0 %v2679
    %3009 = vmatpush.bf16.msra.mxu0 %v2671
    %3010 = vmatmul.bf16.gmra.mxu0 %v2154
    %v3011 = vpop.f32.mrf.mxu0
    %v3012 = vadd.f32 0.0, %v3011
    %v3013 = vpop.f32.mrf.mxu0
    %3014 = vdwg.mxu0
    %3015 = vmatpush.bf16.msra.mxu0 %v2791
    %3016 = vmatpush.bf16.msra.mxu0 %v2783
    %3017 = vmatpush.bf16.msra.mxu0 %v2775
    %3018 = vmatpush.bf16.msra.mxu0 %v2767
    %3019 = vmatpush.bf16.msra.mxu0 %v2759
    %3020 = vmatpush.bf16.msra.mxu0 %v2751
    %3021 = vmatpush.bf16.msra.mxu0 %v2743
    %3022 = vmatpush.bf16.msra.mxu0 %v2735
    %3023 = vmatmul.bf16.gmra.mxu0 %v2155
    %v3024 = vpop.f32.mrf.mxu0
    %v3025 = vadd.f32 %v3012, %v3024
    %v3026 = vpop.f32.mrf.mxu0
    %3027 = vdwg.mxu0
    %3028 = vmatpush.bf16.msra.mxu0 %v2728
    %3029 = vmatpush.bf16.msra.mxu0 %v2720
    %3030 = vmatpush.bf16.msra.mxu0 %v2712
    %3031 = vmatpush.bf16.msra.mxu0 %v2704
    %3032 = vmatpush.bf16.msra.mxu0 %v2696
    %3033 = vmatpush.bf16.msra.mxu0 %v2688
    %3034 = vmatpush.bf16.msra.mxu0 %v2680
    %3035 = vmatpush.bf16.msra.mxu0 %v2672
    %3036 = vmatmul.bf16.gmra.mxu0 %v2154
    %v3037 = vpop.f32.mrf.mxu0
    %v3038 = vadd.f32 0.0, %v3037
    %v3039 = vpop.f32.mrf.mxu0
    %3040 = vdwg.mxu0
    %3041 = vmatpush.bf16.msra.mxu0 %v2792
    %3042 = vmatpush.bf16.msra.mxu0 %v2784
    %3043 = vmatpush.bf16.msra.mxu0 %v2776
    %3044 = vmatpush.bf16.msra.mxu0 %v2768
    %3045 = vmatpush.bf16.msra.mxu0 %v2760
    %3046 = vmatpush.bf16.msra.mxu0 %v2752
    %3047 = vmatpush.bf16.msra.mxu0 %v2744
    %3048 = vmatpush.bf16.msra.mxu0 %v2736
    %3049 = vmatmul.bf16.gmra.mxu0 %v2155
    %v3050 = vpop.f32.mrf.mxu0
    %v3051 = vadd.f32 %v3038, %v3050
    %v3052 = vpop.f32.mrf.mxu0
    %3053 = vdwg.mxu0
    %3054 = vmatpush.bf16.msra.mxu0 %v2729
    %3055 = vmatpush.bf16.msra.mxu0 %v2721
    %3056 = vmatpush.bf16.msra.mxu0 %v2713
    %3057 = vmatpush.bf16.msra.mxu0 %v2705
    %3058 = vmatpush.bf16.msra.mxu0 %v2697
    %3059 = vmatpush.bf16.msra.mxu0 %v2689
    %3060 = vmatpush.bf16.msra.mxu0 %v2681
    %3061 = vmatpush.bf16.msra.mxu0 %v2673
    %3062 = vmatmul.bf16.gmra.mxu0 %v2154
    %v3063 = vpop.f32.mrf.mxu0
    %v3064 = vadd.f32 0.0, %v3063
    %v3065 = vpop.f32.mrf.mxu0
    %3066 = vdwg.mxu0
    %3067 = vmatpush.bf16.msra.mxu0 %v2793
    %3068 = vmatpush.bf16.msra.mxu0 %v2785
    %3069 = vmatpush.bf16.msra.mxu0 %v2777
    %3070 = vmatpush.bf16.msra.mxu0 %v2769
    %3071 = vmatpush.bf16.msra.mxu0 %v2761
    %3072 = vmatpush.bf16.msra.mxu0 %v2753
    %3073 = vmatpush.bf16.msra.mxu0 %v2745
    %3074 = vmatpush.bf16.msra.mxu0 %v2737
    %3075 = vmatmul.bf16.gmra.mxu0 %v2155
    %v3076 = vpop.f32.mrf.mxu0
    %v3077 = vadd.f32 %v3064, %v3076
    %v3078 = vpop.f32.mrf.mxu0
    %3079 = vdwg.mxu0
    %3080 = vmatpush.bf16.msra.mxu0 %v2730
    %3081 = vmatpush.bf16.msra.mxu0 %v2722
    %3082 = vmatpush.bf16.msra.mxu0 %v2714
    %3083 = vmatpush.bf16.msra.mxu0 %v2706
    %3084 = vmatpush.bf16.msra.mxu0 %v2698
    %3085 = vmatpush.bf16.msra.mxu0 %v2690
    %3086 = vmatpush.bf16.msra.mxu0 %v2682
    %3087 = vmatpush.bf16.msra.mxu0 %v2674
    %3088 = vmatmul.bf16.gmra.mxu0 %v2154
    %v3089 = vpop.f32.mrf.mxu0
    %v3090 = vadd.f32 0.0, %v3089
    %v3091 = vpop.f32.mrf.mxu0
    %3092 = vdwg.mxu0
    %3093 = vmatpush.bf16.msra.mxu0 %v2794
    %3094 = vmatpush.bf16.msra.mxu0 %v2786
    %3095 = vmatpush.bf16.msra.mxu0 %v2778
    %3096 = vmatpush.bf16.msra.mxu0 %v2770
    %3097 = vmatpush.bf16.msra.mxu0 %v2762
    %3098 = vmatpush.bf16.msra.mxu0 %v2754
    %3099 = vmatpush.bf16.msra.mxu0 %v2746
    %3100 = vmatpush.bf16.msra.mxu0 %v2738
    %3101 = vmatmul.bf16.gmra.mxu0 %v2155
    %v3102 = vpop.f32.mrf.mxu0
    %v3103 = vadd.f32 %v3090, %v3102
    %v3104 = vpop.f32.mrf.mxu0
    %3105 = vdwg.mxu0
    %3106 = vmatpush.bf16.msra.mxu0 %v2731
    %3107 = vmatpush.bf16.msra.mxu0 %v2723
    %3108 = vmatpush.bf16.msra.mxu0 %v2715
    %3109 = vmatpush.bf16.msra.mxu0 %v2707
    %3110 = vmatpush.bf16.msra.mxu0 %v2699
    %3111 = vmatpush.bf16.msra.mxu0 %v2691
    %3112 = vmatpush.bf16.msra.mxu0 %v2683
    %3113 = vmatpush.bf16.msra.mxu0 %v2675
    %3114 = vmatmul.bf16.gmra.mxu0 %v2154
    %v3115 = vpop.f32.mrf.mxu0
    %v3116 = vadd.f32 0.0, %v3115
    %v3117 = vpop.f32.mrf.mxu0
    %3118 = vdwg.mxu0
    %3119 = vmatpush.bf16.msra.mxu0 %v2795
    %3120 = vmatpush.bf16.msra.mxu0 %v2787
    %3121 = vmatpush.bf16.msra.mxu0 %v2779
    %3122 = vmatpush.bf16.msra.mxu0 %v2771
    %3123 = vmatpush.bf16.msra.mxu0 %v2763
    %3124 = vmatpush.bf16.msra.mxu0 %v2755
    %3125 = vmatpush.bf16.msra.mxu0 %v2747
    %3126 = vmatpush.bf16.msra.mxu0 %v2739
    %3127 = vmatmul.bf16.gmra.mxu0 %v2155
    %v3128 = vpop.f32.mrf.mxu0
    %v3129 = vadd.f32 %v3116, %v3128
    %v3130 = vpop.f32.mrf.mxu0
    %3131 = vdwg.mxu0
    %v3132 = vadd.f32 %v816, %v2947
    %v3133 = vadd.f32 %v845, %v2973
    %v3134 = vadd.f32 %v874, %v2999
    %v3135 = vadd.f32 %v903, %v3025
    %v3136 = vadd.f32 %v932, %v3051
    %v3137 = vadd.f32 %v961, %v3077
    %v3138 = vadd.f32 %v990, %v3103
    %v3139 = vadd.f32 %v1019, %v3129
    %v3140 = vxor.u32 %v3132, 2147483648
    %v3141 = vxor.u32 %v3133, 2147483648
    %v3142 = vmul.f32 %v3140, 1.442695
    %v3143 = vpow.pop %v3142
    %v3144 = vmul.f32 %v3141, 1.442695
    %v3145 = vpow.pop %v3144
    %v3146 = vadd.f32 %v3143, 1.0
    %v3147 = vadd.f32 %v3145, 1.0
    %v3148 = vrcp.pop %v3146
    %v3149 = vmul.f32 %v3146, %v3148
    %v3150 = vsub.f32 1.0, %v3149
    %v3151 = vmul.f32 %v3148, %v3150
    %v3152 = vadd.f32 %v3148, %v3151
    %vm3153 = vweird.f32 %v3146
    %vm3154 = vweird.f32 %v3148
    %vm3155 = vmor %vm3153, %vm3154
    %v3156 = vsel %vm3155, %v3148, %v3152
    %v3157 = vand.u32 2147483647, %v3146
    %vm3158 = vcmp.eq.f32.partialorder %v3157, 8.507059e+37
    %v3159 = vand.u32 %v3146, 2147483648
    %v3160 = vor.u32 1.1754944e-38, %v3159
    %v3161 = vsel %vm3158, %v3160, %v3156
    %v3162 = vmul.f32 1.0, %v3161
    %v3163 = vrcp.pop %v3147
    %v3164 = vmul.f32 %v3147, %v3163
    %v3165 = vsub.f32 1.0, %v3164
    %v3166 = vmul.f32 %v3163, %v3165
    %v3167 = vadd.f32 %v3163, %v3166
    %vm3168 = vweird.f32 %v3147
    %vm3169 = vweird.f32 %v3163
    %vm3170 = vmor %vm3168, %vm3169
    %v3171 = vsel %vm3170, %v3163, %v3167
    %v3172 = vand.u32 2147483647, %v3147
    %vm3173 = vcmp.eq.f32.partialorder %v3172, 8.507059e+37
    %v3174 = vand.u32 %v3147, 2147483648
    %v3175 = vor.u32 1.1754944e-38, %v3174
    %v3176 = vsel %vm3173, %v3175, %v3171
    %v3177 = vmul.f32 1.0, %v3176
    %v3178 = vxor.u32 %v3134, 2147483648
    %v3179 = vxor.u32 %v3135, 2147483648
    %v3180 = vmul.f32 %v3178, 1.442695
    %v3181 = vpow.pop %v3180
    %v3182 = vmul.f32 %v3179, 1.442695
    %v3183 = vpow.pop %v3182
    %v3184 = vadd.f32 %v3181, 1.0
    %v3185 = vadd.f32 %v3183, 1.0
    %v3186 = vrcp.pop %v3184
    %v3187 = vmul.f32 %v3184, %v3186
    %v3188 = vsub.f32 1.0, %v3187
    %v3189 = vmul.f32 %v3186, %v3188
    %v3190 = vadd.f32 %v3186, %v3189
    %vm3191 = vweird.f32 %v3184
    %vm3192 = vweird.f32 %v3186
    %vm3193 = vmor %vm3191, %vm3192
    %v3194 = vsel %vm3193, %v3186, %v3190
    %v3195 = vand.u32 2147483647, %v3184
    %vm3196 = vcmp.eq.f32.partialorder %v3195, 8.507059e+37
    %v3197 = vand.u32 %v3184, 2147483648
    %v3198 = vor.u32 1.1754944e-38, %v3197
    %v3199 = vsel %vm3196, %v3198, %v3194
    %v3200 = vmul.f32 1.0, %v3199
    %v3201 = vrcp.pop %v3185
    %v3202 = vmul.f32 %v3185, %v3201
    %v3203 = vsub.f32 1.0, %v3202
    %v3204 = vmul.f32 %v3201, %v3203
    %v3205 = vadd.f32 %v3201, %v3204
    %vm3206 = vweird.f32 %v3185
    %vm3207 = vweird.f32 %v3201
    %vm3208 = vmor %vm3206, %vm3207
    %v3209 = vsel %vm3208, %v3201, %v3205
    %v3210 = vand.u32 2147483647, %v3185
    %vm3211 = vcmp.eq.f32.partialorder %v3210, 8.507059e+37
    %v3212 = vand.u32 %v3185, 2147483648
    %v3213 = vor.u32 1.1754944e-38, %v3212
    %v3214 = vsel %vm3211, %v3213, %v3209
    %v3215 = vmul.f32 1.0, %v3214
    %v3216 = vtanh.pop %v3136
    %v3217 = vtanh.pop %v3137
    %v3218 = vxor.u32 %v3138, 2147483648
    %v3219 = vxor.u32 %v3139, 2147483648
    %v3220 = vmul.f32 %v3218, 1.442695
    %v3221 = vpow.pop %v3220
    %v3222 = vmul.f32 %v3219, 1.442695
    %v3223 = vpow.pop %v3222
    %v3224 = vadd.f32 %v3221, 1.0
    %v3225 = vadd.f32 %v3223, 1.0
    %v3226 = vrcp.pop %v3224
    %v3227 = vmul.f32 %v3224, %v3226
    %v3228 = vsub.f32 1.0, %v3227
    %v3229 = vmul.f32 %v3226, %v3228
    %v3230 = vadd.f32 %v3226, %v3229
    %vm3231 = vweird.f32 %v3224
    %vm3232 = vweird.f32 %v3226
    %vm3233 = vmor %vm3231, %vm3232
    %v3234 = vsel %vm3233, %v3226, %v3230
    %v3235 = vand.u32 2147483647, %v3224
    %vm3236 = vcmp.eq.f32.partialorder %v3235, 8.507059e+37
    %v3237 = vand.u32 %v3224, 2147483648
    %v3238 = vor.u32 1.1754944e-38, %v3237
    %v3239 = vsel %vm3236, %v3238, %v3234
    %v3240 = vmul.f32 1.0, %v3239
    %v3241 = vrcp.pop %v3225
    %v3242 = vmul.f32 %v3225, %v3241
    %v3243 = vsub.f32 1.0, %v3242
    %v3244 = vmul.f32 %v3241, %v3243
    %v3245 = vadd.f32 %v3241, %v3244
    %vm3246 = vweird.f32 %v3225
    %vm3247 = vweird.f32 %v3241
    %vm3248 = vmor %vm3246, %vm3247
    %v3249 = vsel %vm3248, %v3241, %v3245
    %v3250 = vand.u32 2147483647, %v3225
    %vm3251 = vcmp.eq.f32.partialorder %v3250, 8.507059e+37
    %v3252 = vand.u32 %v3225, 2147483648
    %v3253 = vor.u32 1.1754944e-38, %v3252
    %v3254 = vsel %vm3251, %v3253, %v3249
    %v3255 = vmul.f32 1.0, %v3254
    %v3256 = vmul.f32 %v3200, %v2146
    %v3257 = vmul.f32 %v3215, %v2147
    %v3258 = vmul.f32 %v3162, %v3216
    %v3259 = vmul.f32 %v3177, %v3217
    %v3260 = vadd.f32 %v3256, %v3258
    %v3261 = vadd.f32 %v3257, %v3259
    %v3262 = vtanh.pop %v3260
    %v3263 = vtanh.pop %v3261
    %v3264 = vmul.f32 %v3240, %v3262
    %v3265 = vmul.f32 %v3255, %v3263
    %3266 = vst [vmem:[#allocation2 + $0x10] sm:$0xff] %v3264
    %3267 = vst [vmem:[#allocation2 + $0x18] sm:$0xff] %v3265
    %v3268 = vpack.c.bf16 %v3264, %v3264
    %v3269 = vpack.c.bf16 %v3265, %v3265
    %v3270 = vld [vmem:[#allocation10] sm:$0xff]
    %v3271 = vld [vmem:[#allocation10 + $0x8] sm:$0xff]
    %v3272 = vld [vmem:[#allocation10 + $0x10] sm:$0xff]
    %v3273 = vld [vmem:[#allocation10 + $0x18] sm:$0xff]
    %v3274 = vld [vmem:[#allocation10 + $0x20] sm:$0xff]
    %v3275 = vld [vmem:[#allocation10 + $0x28] sm:$0xff]
    %v3276 = vld [vmem:[#allocation10 + $0x30] sm:$0xff]
    %v3277 = vld [vmem:[#allocation10 + $0x38] sm:$0xff]
    %v3278 = vld [vmem:[#allocation10 + $0x40] sm:$0xff]
    %v3279 = vld [vmem:[#allocation10 + $0x48] sm:$0xff]
    %v3280 = vld [vmem:[#allocation10 + $0x50] sm:$0xff]
    %v3281 = vld [vmem:[#allocation10 + $0x58] sm:$0xff]
    %v3282 = vld [vmem:[#allocation10 + $0x60] sm:$0xff]
    %v3283 = vld [vmem:[#allocation10 + $0x68] sm:$0xff]
    %v3284 = vld [vmem:[#allocation10 + $0x70] sm:$0xff]
    %v3285 = vld [vmem:[#allocation10 + $0x78] sm:$0xff]
    %v3286 = vld [vmem:[#allocation10 + $0x80] sm:$0xff]
    %v3287 = vld [vmem:[#allocation10 + $0x88] sm:$0xff]
    %v3288 = vld [vmem:[#allocation10 + $0x90] sm:$0xff]
    %v3289 = vld [vmem:[#allocation10 + $0x98] sm:$0xff]
    %v3290 = vld [vmem:[#allocation10 + $0xa0] sm:$0xff]
    %v3291 = vld [vmem:[#allocation10 + $0xa8] sm:$0xff]
    %v3292 = vld [vmem:[#allocation10 + $0xb0] sm:$0xff]
    %v3293 = vld [vmem:[#allocation10 + $0xb8] sm:$0xff]
    %v3294 = vld [vmem:[#allocation10 + $0xc0] sm:$0xff]
    %v3295 = vld [vmem:[#allocation10 + $0xc8] sm:$0xff]
    %v3296 = vld [vmem:[#allocation10 + $0xd0] sm:$0xff]
    %v3297 = vld [vmem:[#allocation10 + $0xd8] sm:$0xff]
    %v3298 = vld [vmem:[#allocation10 + $0xe0] sm:$0xff]
    %v3299 = vld [vmem:[#allocation10 + $0xe8] sm:$0xff]
    %v3300 = vld [vmem:[#allocation10 + $0xf0] sm:$0xff]
    %v3301 = vld [vmem:[#allocation10 + $0xf8] sm:$0xff]
    %v3302 = vld [vmem:[#allocation10 + $0x100] sm:$0xff]
    %v3303 = vld [vmem:[#allocation10 + $0x108] sm:$0xff]
    %v3304 = vld [vmem:[#allocation10 + $0x110] sm:$0xff]
    %v3305 = vld [vmem:[#allocation10 + $0x118] sm:$0xff]
    %v3306 = vld [vmem:[#allocation10 + $0x120] sm:$0xff]
    %v3307 = vld [vmem:[#allocation10 + $0x128] sm:$0xff]
    %v3308 = vld [vmem:[#allocation10 + $0x130] sm:$0xff]
    %v3309 = vld [vmem:[#allocation10 + $0x138] sm:$0xff]
    %v3310 = vld [vmem:[#allocation10 + $0x140] sm:$0xff]
    %v3311 = vld [vmem:[#allocation10 + $0x148] sm:$0xff]
    %v3312 = vld [vmem:[#allocation10 + $0x150] sm:$0xff]
    %v3313 = vld [vmem:[#allocation10 + $0x158] sm:$0xff]
    %v3314 = vld [vmem:[#allocation10 + $0x160] sm:$0xff]
    %v3315 = vld [vmem:[#allocation10 + $0x168] sm:$0xff]
    %v3316 = vld [vmem:[#allocation10 + $0x170] sm:$0xff]
    %v3317 = vld [vmem:[#allocation10 + $0x178] sm:$0xff]
    %v3318 = vld [vmem:[#allocation10 + $0x180] sm:$0xff]
    %v3319 = vld [vmem:[#allocation10 + $0x188] sm:$0xff]
    %v3320 = vld [vmem:[#allocation10 + $0x190] sm:$0xff]
    %v3321 = vld [vmem:[#allocation10 + $0x198] sm:$0xff]
    %v3322 = vld [vmem:[#allocation10 + $0x1a0] sm:$0xff]
    %v3323 = vld [vmem:[#allocation10 + $0x1a8] sm:$0xff]
    %v3324 = vld [vmem:[#allocation10 + $0x1b0] sm:$0xff]
    %v3325 = vld [vmem:[#allocation10 + $0x1b8] sm:$0xff]
    %v3326 = vld [vmem:[#allocation10 + $0x1c0] sm:$0xff]
    %v3327 = vld [vmem:[#allocation10 + $0x1c8] sm:$0xff]
    %v3328 = vld [vmem:[#allocation10 + $0x1d0] sm:$0xff]
    %v3329 = vld [vmem:[#allocation10 + $0x1d8] sm:$0xff]
    %v3330 = vld [vmem:[#allocation10 + $0x1e0] sm:$0xff]
    %v3331 = vld [vmem:[#allocation10 + $0x1e8] sm:$0xff]
    %v3332 = vld [vmem:[#allocation10 + $0x1f0] sm:$0xff]
    %v3333 = vld [vmem:[#allocation10 + $0x1f8] sm:$0xff]
    %v3334 = vld [vmem:[#allocation10 + $0x200] sm:$0xff]
    %v3335 = vld [vmem:[#allocation10 + $0x208] sm:$0xff]
    %v3336 = vld [vmem:[#allocation10 + $0x210] sm:$0xff]
    %v3337 = vld [vmem:[#allocation10 + $0x218] sm:$0xff]
    %v3338 = vld [vmem:[#allocation10 + $0x220] sm:$0xff]
    %v3339 = vld [vmem:[#allocation10 + $0x228] sm:$0xff]
    %v3340 = vld [vmem:[#allocation10 + $0x230] sm:$0xff]
    %v3341 = vld [vmem:[#allocation10 + $0x238] sm:$0xff]
    %v3342 = vld [vmem:[#allocation10 + $0x240] sm:$0xff]
    %v3343 = vld [vmem:[#allocation10 + $0x248] sm:$0xff]
    %v3344 = vld [vmem:[#allocation10 + $0x250] sm:$0xff]
    %v3345 = vld [vmem:[#allocation10 + $0x258] sm:$0xff]
    %v3346 = vld [vmem:[#allocation10 + $0x260] sm:$0xff]
    %v3347 = vld [vmem:[#allocation10 + $0x268] sm:$0xff]
    %v3348 = vld [vmem:[#allocation10 + $0x270] sm:$0xff]
    %v3349 = vld [vmem:[#allocation10 + $0x278] sm:$0xff]
    %v3350 = vld [vmem:[#allocation10 + $0x280] sm:$0xff]
    %v3351 = vld [vmem:[#allocation10 + $0x288] sm:$0xff]
    %v3352 = vld [vmem:[#allocation10 + $0x290] sm:$0xff]
    %v3353 = vld [vmem:[#allocation10 + $0x298] sm:$0xff]
    %v3354 = vld [vmem:[#allocation10 + $0x2a0] sm:$0xff]
    %v3355 = vld [vmem:[#allocation10 + $0x2a8] sm:$0xff]
    %v3356 = vld [vmem:[#allocation10 + $0x2b0] sm:$0xff]
    %v3357 = vld [vmem:[#allocation10 + $0x2b8] sm:$0xff]
    %v3358 = vld [vmem:[#allocation10 + $0x2c0] sm:$0xff]
    %v3359 = vld [vmem:[#allocation10 + $0x2c8] sm:$0xff]
    %v3360 = vld [vmem:[#allocation10 + $0x2d0] sm:$0xff]
    %v3361 = vld [vmem:[#allocation10 + $0x2d8] sm:$0xff]
    %v3362 = vld [vmem:[#allocation10 + $0x2e0] sm:$0xff]
    %v3363 = vld [vmem:[#allocation10 + $0x2e8] sm:$0xff]
    %v3364 = vld [vmem:[#allocation10 + $0x2f0] sm:$0xff]
    %v3365 = vld [vmem:[#allocation10 + $0x2f8] sm:$0xff]
    %v3366 = vld [vmem:[#allocation10 + $0x300] sm:$0xff]
    %v3367 = vld [vmem:[#allocation10 + $0x308] sm:$0xff]
    %v3368 = vld [vmem:[#allocation10 + $0x310] sm:$0xff]
    %v3369 = vld [vmem:[#allocation10 + $0x318] sm:$0xff]
    %v3370 = vld [vmem:[#allocation10 + $0x320] sm:$0xff]
    %v3371 = vld [vmem:[#allocation10 + $0x328] sm:$0xff]
    %v3372 = vld [vmem:[#allocation10 + $0x330] sm:$0xff]
    %v3373 = vld [vmem:[#allocation10 + $0x338] sm:$0xff]
    %v3374 = vld [vmem:[#allocation10 + $0x340] sm:$0xff]
    %v3375 = vld [vmem:[#allocation10 + $0x348] sm:$0xff]
    %v3376 = vld [vmem:[#allocation10 + $0x350] sm:$0xff]
    %v3377 = vld [vmem:[#allocation10 + $0x358] sm:$0xff]
    %v3378 = vld [vmem:[#allocation10 + $0x360] sm:$0xff]
    %v3379 = vld [vmem:[#allocation10 + $0x368] sm:$0xff]
    %v3380 = vld [vmem:[#allocation10 + $0x370] sm:$0xff]
    %v3381 = vld [vmem:[#allocation10 + $0x378] sm:$0xff]
    %v3382 = vld [vmem:[#allocation10 + $0x380] sm:$0xff]
    %v3383 = vld [vmem:[#allocation10 + $0x388] sm:$0xff]
    %v3384 = vld [vmem:[#allocation10 + $0x390] sm:$0xff]
    %v3385 = vld [vmem:[#allocation10 + $0x398] sm:$0xff]
    %v3386 = vld [vmem:[#allocation10 + $0x3a0] sm:$0xff]
    %v3387 = vld [vmem:[#allocation10 + $0x3a8] sm:$0xff]
    %v3388 = vld [vmem:[#allocation10 + $0x3b0] sm:$0xff]
    %v3389 = vld [vmem:[#allocation10 + $0x3b8] sm:$0xff]
    %v3390 = vld [vmem:[#allocation10 + $0x3c0] sm:$0xff]
    %v3391 = vld [vmem:[#allocation10 + $0x3c8] sm:$0xff]
    %v3392 = vld [vmem:[#allocation10 + $0x3d0] sm:$0xff]
    %v3393 = vld [vmem:[#allocation10 + $0x3d8] sm:$0xff]
    %v3394 = vld [vmem:[#allocation10 + $0x3e0] sm:$0xff]
    %v3395 = vld [vmem:[#allocation10 + $0x3e8] sm:$0xff]
    %v3396 = vld [vmem:[#allocation10 + $0x3f0] sm:$0xff]
    %v3397 = vld [vmem:[#allocation10 + $0x3f8] sm:$0xff]
    %v3526 = vunpack.c.l.b16 %v3270
    %v3527 = vunpack.c.h.b16 %v3270
    %v3528 = vunpack.c.l.b16 %v3271
    %v3529 = vunpack.c.h.b16 %v3271
    %v3530 = vunpack.c.l.b16 %v3272
    %v3531 = vunpack.c.h.b16 %v3272
    %v3532 = vunpack.c.l.b16 %v3273
    %v3533 = vunpack.c.h.b16 %v3273
    %v3534 = vunpack.c.l.b16 %v3274
    %v3535 = vunpack.c.h.b16 %v3274
    %v3536 = vunpack.c.l.b16 %v3275
    %v3537 = vunpack.c.h.b16 %v3275
    %v3538 = vunpack.c.l.b16 %v3276
    %v3539 = vunpack.c.h.b16 %v3276
    %v3540 = vunpack.c.l.b16 %v3277
    %v3541 = vunpack.c.h.b16 %v3277
    %v3542 = vunpack.c.l.b16 %v3278
    %v3543 = vunpack.c.h.b16 %v3278
    %v3544 = vunpack.c.l.b16 %v3279
    %v3545 = vunpack.c.h.b16 %v3279
    %v3546 = vunpack.c.l.b16 %v3280
    %v3547 = vunpack.c.h.b16 %v3280
    %v3548 = vunpack.c.l.b16 %v3281
    %v3549 = vunpack.c.h.b16 %v3281
    %v3550 = vunpack.c.l.b16 %v3282
    %v3551 = vunpack.c.h.b16 %v3282
    %v3552 = vunpack.c.l.b16 %v3283
    %v3553 = vunpack.c.h.b16 %v3283
    %v3554 = vunpack.c.l.b16 %v3284
    %v3555 = vunpack.c.h.b16 %v3284
    %v3556 = vunpack.c.l.b16 %v3285
    %v3557 = vunpack.c.h.b16 %v3285
    %v3558 = vunpack.c.l.b16 %v3286
    %v3559 = vunpack.c.h.b16 %v3286
    %v3560 = vunpack.c.l.b16 %v3287
    %v3561 = vunpack.c.h.b16 %v3287
    %v3562 = vunpack.c.l.b16 %v3288
    %v3563 = vunpack.c.h.b16 %v3288
    %v3564 = vunpack.c.l.b16 %v3289
    %v3565 = vunpack.c.h.b16 %v3289
    %v3566 = vunpack.c.l.b16 %v3290
    %v3567 = vunpack.c.h.b16 %v3290
    %v3568 = vunpack.c.l.b16 %v3291
    %v3569 = vunpack.c.h.b16 %v3291
    %v3570 = vunpack.c.l.b16 %v3292
    %v3571 = vunpack.c.h.b16 %v3292
    %v3572 = vunpack.c.l.b16 %v3293
    %v3573 = vunpack.c.h.b16 %v3293
    %v3574 = vunpack.c.l.b16 %v3294
    %v3575 = vunpack.c.h.b16 %v3294
    %v3576 = vunpack.c.l.b16 %v3295
    %v3577 = vunpack.c.h.b16 %v3295
    %v3578 = vunpack.c.l.b16 %v3296
    %v3579 = vunpack.c.h.b16 %v3296
    %v3580 = vunpack.c.l.b16 %v3297
    %v3581 = vunpack.c.h.b16 %v3297
    %v3582 = vunpack.c.l.b16 %v3298
    %v3583 = vunpack.c.h.b16 %v3298
    %v3584 = vunpack.c.l.b16 %v3299
    %v3585 = vunpack.c.h.b16 %v3299
    %v3586 = vunpack.c.l.b16 %v3300
    %v3587 = vunpack.c.h.b16 %v3300
    %v3588 = vunpack.c.l.b16 %v3301
    %v3589 = vunpack.c.h.b16 %v3301
    %v3590 = vunpack.c.l.b16 %v3302
    %v3591 = vunpack.c.h.b16 %v3302
    %v3592 = vunpack.c.l.b16 %v3303
    %v3593 = vunpack.c.h.b16 %v3303
    %v3594 = vunpack.c.l.b16 %v3304
    %v3595 = vunpack.c.h.b16 %v3304
    %v3596 = vunpack.c.l.b16 %v3305
    %v3597 = vunpack.c.h.b16 %v3305
    %v3598 = vunpack.c.l.b16 %v3306
    %v3599 = vunpack.c.h.b16 %v3306
    %v3600 = vunpack.c.l.b16 %v3307
    %v3601 = vunpack.c.h.b16 %v3307
    %v3602 = vunpack.c.l.b16 %v3308
    %v3603 = vunpack.c.h.b16 %v3308
    %v3604 = vunpack.c.l.b16 %v3309
    %v3605 = vunpack.c.h.b16 %v3309
    %v3606 = vunpack.c.l.b16 %v3310
    %v3607 = vunpack.c.h.b16 %v3310
    %v3608 = vunpack.c.l.b16 %v3311
    %v3609 = vunpack.c.h.b16 %v3311
    %v3610 = vunpack.c.l.b16 %v3312
    %v3611 = vunpack.c.h.b16 %v3312
    %v3612 = vunpack.c.l.b16 %v3313
    %v3613 = vunpack.c.h.b16 %v3313
    %v3614 = vunpack.c.l.b16 %v3314
    %v3615 = vunpack.c.h.b16 %v3314
    %v3616 = vunpack.c.l.b16 %v3315
    %v3617 = vunpack.c.h.b16 %v3315
    %v3618 = vunpack.c.l.b16 %v3316
    %v3619 = vunpack.c.h.b16 %v3316
    %v3620 = vunpack.c.l.b16 %v3317
    %v3621 = vunpack.c.h.b16 %v3317
    %v3622 = vunpack.c.l.b16 %v3318
    %v3623 = vunpack.c.h.b16 %v3318
    %v3624 = vunpack.c.l.b16 %v3319
    %v3625 = vunpack.c.h.b16 %v3319
    %v3626 = vunpack.c.l.b16 %v3320
    %v3627 = vunpack.c.h.b16 %v3320
    %v3628 = vunpack.c.l.b16 %v3321
    %v3629 = vunpack.c.h.b16 %v3321
    %v3630 = vunpack.c.l.b16 %v3322
    %v3631 = vunpack.c.h.b16 %v3322
    %v3632 = vunpack.c.l.b16 %v3323
    %v3633 = vunpack.c.h.b16 %v3323
    %v3634 = vunpack.c.l.b16 %v3324
    %v3635 = vunpack.c.h.b16 %v3324
    %v3636 = vunpack.c.l.b16 %v3325
    %v3637 = vunpack.c.h.b16 %v3325
    %v3638 = vunpack.c.l.b16 %v3326
    %v3639 = vunpack.c.h.b16 %v3326
    %v3640 = vunpack.c.l.b16 %v3327
    %v3641 = vunpack.c.h.b16 %v3327
    %v3642 = vunpack.c.l.b16 %v3328
    %v3643 = vunpack.c.h.b16 %v3328
    %v3644 = vunpack.c.l.b16 %v3329
    %v3645 = vunpack.c.h.b16 %v3329
    %v3646 = vunpack.c.l.b16 %v3330
    %v3647 = vunpack.c.h.b16 %v3330
    %v3648 = vunpack.c.l.b16 %v3331
    %v3649 = vunpack.c.h.b16 %v3331
    %v3650 = vunpack.c.l.b16 %v3332
    %v3651 = vunpack.c.h.b16 %v3332
    %v3652 = vunpack.c.l.b16 %v3333
    %v3653 = vunpack.c.h.b16 %v3333
    %v3654 = vunpack.c.l.b16 %v3334
    %v3655 = vunpack.c.h.b16 %v3334
    %v3656 = vunpack.c.l.b16 %v3335
    %v3657 = vunpack.c.h.b16 %v3335
    %v3658 = vunpack.c.l.b16 %v3336
    %v3659 = vunpack.c.h.b16 %v3336
    %v3660 = vunpack.c.l.b16 %v3337
    %v3661 = vunpack.c.h.b16 %v3337
    %v3662 = vunpack.c.l.b16 %v3338
    %v3663 = vunpack.c.h.b16 %v3338
    %v3664 = vunpack.c.l.b16 %v3339
    %v3665 = vunpack.c.h.b16 %v3339
    %v3666 = vunpack.c.l.b16 %v3340
    %v3667 = vunpack.c.h.b16 %v3340
    %v3668 = vunpack.c.l.b16 %v3341
    %v3669 = vunpack.c.h.b16 %v3341
    %v3670 = vunpack.c.l.b16 %v3342
    %v3671 = vunpack.c.h.b16 %v3342
    %v3672 = vunpack.c.l.b16 %v3343
    %v3673 = vunpack.c.h.b16 %v3343
    %v3674 = vunpack.c.l.b16 %v3344
    %v3675 = vunpack.c.h.b16 %v3344
    %v3676 = vunpack.c.l.b16 %v3345
    %v3677 = vunpack.c.h.b16 %v3345
    %v3678 = vunpack.c.l.b16 %v3346
    %v3679 = vunpack.c.h.b16 %v3346
    %v3680 = vunpack.c.l.b16 %v3347
    %v3681 = vunpack.c.h.b16 %v3347
    %v3682 = vunpack.c.l.b16 %v3348
    %v3683 = vunpack.c.h.b16 %v3348
    %v3684 = vunpack.c.l.b16 %v3349
    %v3685 = vunpack.c.h.b16 %v3349
    %v3686 = vunpack.c.l.b16 %v3350
    %v3687 = vunpack.c.h.b16 %v3350
    %v3688 = vunpack.c.l.b16 %v3351
    %v3689 = vunpack.c.h.b16 %v3351
    %v3690 = vunpack.c.l.b16 %v3352
    %v3691 = vunpack.c.h.b16 %v3352
    %v3692 = vunpack.c.l.b16 %v3353
    %v3693 = vunpack.c.h.b16 %v3353
    %v3694 = vunpack.c.l.b16 %v3354
    %v3695 = vunpack.c.h.b16 %v3354
    %v3696 = vunpack.c.l.b16 %v3355
    %v3697 = vunpack.c.h.b16 %v3355
    %v3698 = vunpack.c.l.b16 %v3356
    %v3699 = vunpack.c.h.b16 %v3356
    %v3700 = vunpack.c.l.b16 %v3357
    %v3701 = vunpack.c.h.b16 %v3357
    %v3702 = vunpack.c.l.b16 %v3358
    %v3703 = vunpack.c.h.b16 %v3358
    %v3704 = vunpack.c.l.b16 %v3359
    %v3705 = vunpack.c.h.b16 %v3359
    %v3706 = vunpack.c.l.b16 %v3360
    %v3707 = vunpack.c.h.b16 %v3360
    %v3708 = vunpack.c.l.b16 %v3361
    %v3709 = vunpack.c.h.b16 %v3361
    %v3710 = vunpack.c.l.b16 %v3362
    %v3711 = vunpack.c.h.b16 %v3362
    %v3712 = vunpack.c.l.b16 %v3363
    %v3713 = vunpack.c.h.b16 %v3363
    %v3714 = vunpack.c.l.b16 %v3364
    %v3715 = vunpack.c.h.b16 %v3364
    %v3716 = vunpack.c.l.b16 %v3365
    %v3717 = vunpack.c.h.b16 %v3365
    %v3718 = vunpack.c.l.b16 %v3366
    %v3719 = vunpack.c.h.b16 %v3366
    %v3720 = vunpack.c.l.b16 %v3367
    %v3721 = vunpack.c.h.b16 %v3367
    %v3722 = vunpack.c.l.b16 %v3368
    %v3723 = vunpack.c.h.b16 %v3368
    %v3724 = vunpack.c.l.b16 %v3369
    %v3725 = vunpack.c.h.b16 %v3369
    %v3726 = vunpack.c.l.b16 %v3370
    %v3727 = vunpack.c.h.b16 %v3370
    %v3728 = vunpack.c.l.b16 %v3371
    %v3729 = vunpack.c.h.b16 %v3371
    %v3730 = vunpack.c.l.b16 %v3372
    %v3731 = vunpack.c.h.b16 %v3372
    %v3732 = vunpack.c.l.b16 %v3373
    %v3733 = vunpack.c.h.b16 %v3373
    %v3734 = vunpack.c.l.b16 %v3374
    %v3735 = vunpack.c.h.b16 %v3374
    %v3736 = vunpack.c.l.b16 %v3375
    %v3737 = vunpack.c.h.b16 %v3375
    %v3738 = vunpack.c.l.b16 %v3376
    %v3739 = vunpack.c.h.b16 %v3376
    %v3740 = vunpack.c.l.b16 %v3377
    %v3741 = vunpack.c.h.b16 %v3377
    %v3742 = vunpack.c.l.b16 %v3378
    %v3743 = vunpack.c.h.b16 %v3378
    %v3744 = vunpack.c.l.b16 %v3379
    %v3745 = vunpack.c.h.b16 %v3379
    %v3746 = vunpack.c.l.b16 %v3380
    %v3747 = vunpack.c.h.b16 %v3380
    %v3748 = vunpack.c.l.b16 %v3381
    %v3749 = vunpack.c.h.b16 %v3381
    %v3750 = vunpack.c.l.b16 %v3382
    %v3751 = vunpack.c.h.b16 %v3382
    %v3752 = vunpack.c.l.b16 %v3383
    %v3753 = vunpack.c.h.b16 %v3383
    %v3754 = vunpack.c.l.b16 %v3384
    %v3755 = vunpack.c.h.b16 %v3384
    %v3756 = vunpack.c.l.b16 %v3385
    %v3757 = vunpack.c.h.b16 %v3385
    %v3758 = vunpack.c.l.b16 %v3386
    %v3759 = vunpack.c.h.b16 %v3386
    %v3760 = vunpack.c.l.b16 %v3387
    %v3761 = vunpack.c.h.b16 %v3387
    %v3762 = vunpack.c.l.b16 %v3388
    %v3763 = vunpack.c.h.b16 %v3388
    %v3764 = vunpack.c.l.b16 %v3389
    %v3765 = vunpack.c.h.b16 %v3389
    %v3766 = vunpack.c.l.b16 %v3390
    %v3767 = vunpack.c.h.b16 %v3390
    %v3768 = vunpack.c.l.b16 %v3391
    %v3769 = vunpack.c.h.b16 %v3391
    %v3770 = vunpack.c.l.b16 %v3392
    %v3771 = vunpack.c.h.b16 %v3392
    %v3772 = vunpack.c.l.b16 %v3393
    %v3773 = vunpack.c.h.b16 %v3393
    %v3774 = vunpack.c.l.b16 %v3394
    %v3775 = vunpack.c.h.b16 %v3394
    %v3776 = vunpack.c.l.b16 %v3395
    %v3777 = vunpack.c.h.b16 %v3395
    %v3778 = vunpack.c.l.b16 %v3396
    %v3779 = vunpack.c.h.b16 %v3396
    %v3780 = vunpack.c.l.b16 %v3397
    %v3781 = vunpack.c.h.b16 %v3397
    %v3782 = vpack.c.b16 %v3534, %v3526
    %v3783 = vpack.c.b16 %v3535, %v3527
    %v3784 = vpack.c.b16 %v3536, %v3528
    %v3785 = vpack.c.b16 %v3537, %v3529
    %v3786 = vpack.c.b16 %v3538, %v3530
    %v3787 = vpack.c.b16 %v3539, %v3531
    %v3788 = vpack.c.b16 %v3540, %v3532
    %v3789 = vpack.c.b16 %v3541, %v3533
    %v3790 = vpack.c.b16 %v3550, %v3542
    %v3791 = vpack.c.b16 %v3551, %v3543
    %v3792 = vpack.c.b16 %v3552, %v3544
    %v3793 = vpack.c.b16 %v3553, %v3545
    %v3794 = vpack.c.b16 %v3554, %v3546
    %v3795 = vpack.c.b16 %v3555, %v3547
    %v3796 = vpack.c.b16 %v3556, %v3548
    %v3797 = vpack.c.b16 %v3557, %v3549
    %v3798 = vpack.c.b16 %v3566, %v3558
    %v3799 = vpack.c.b16 %v3567, %v3559
    %v3800 = vpack.c.b16 %v3568, %v3560
    %v3801 = vpack.c.b16 %v3569, %v3561
    %v3802 = vpack.c.b16 %v3570, %v3562
    %v3803 = vpack.c.b16 %v3571, %v3563
    %v3804 = vpack.c.b16 %v3572, %v3564
    %v3805 = vpack.c.b16 %v3573, %v3565
    %v3806 = vpack.c.b16 %v3582, %v3574
    %v3807 = vpack.c.b16 %v3583, %v3575
    %v3808 = vpack.c.b16 %v3584, %v3576
    %v3809 = vpack.c.b16 %v3585, %v3577
    %v3810 = vpack.c.b16 %v3586, %v3578
    %v3811 = vpack.c.b16 %v3587, %v3579
    %v3812 = vpack.c.b16 %v3588, %v3580
    %v3813 = vpack.c.b16 %v3589, %v3581
    %v3814 = vpack.c.b16 %v3598, %v3590
    %v3815 = vpack.c.b16 %v3599, %v3591
    %v3816 = vpack.c.b16 %v3600, %v3592
    %v3817 = vpack.c.b16 %v3601, %v3593
    %v3818 = vpack.c.b16 %v3602, %v3594
    %v3819 = vpack.c.b16 %v3603, %v3595
    %v3820 = vpack.c.b16 %v3604, %v3596
    %v3821 = vpack.c.b16 %v3605, %v3597
    %v3822 = vpack.c.b16 %v3614, %v3606
    %v3823 = vpack.c.b16 %v3615, %v3607
    %v3824 = vpack.c.b16 %v3616, %v3608
    %v3825 = vpack.c.b16 %v3617, %v3609
    %v3826 = vpack.c.b16 %v3618, %v3610
    %v3827 = vpack.c.b16 %v3619, %v3611
    %v3828 = vpack.c.b16 %v3620, %v3612
    %v3829 = vpack.c.b16 %v3621, %v3613
    %v3830 = vpack.c.b16 %v3630, %v3622
    %v3831 = vpack.c.b16 %v3631, %v3623
    %v3832 = vpack.c.b16 %v3632, %v3624
    %v3833 = vpack.c.b16 %v3633, %v3625
    %v3834 = vpack.c.b16 %v3634, %v3626
    %v3835 = vpack.c.b16 %v3635, %v3627
    %v3836 = vpack.c.b16 %v3636, %v3628
    %v3837 = vpack.c.b16 %v3637, %v3629
    %v3838 = vpack.c.b16 %v3646, %v3638
    %v3839 = vpack.c.b16 %v3647, %v3639
    %v3840 = vpack.c.b16 %v3648, %v3640
    %v3841 = vpack.c.b16 %v3649, %v3641
    %v3842 = vpack.c.b16 %v3650, %v3642
    %v3843 = vpack.c.b16 %v3651, %v3643
    %v3844 = vpack.c.b16 %v3652, %v3644
    %v3845 = vpack.c.b16 %v3653, %v3645
    %v3846 = vpack.c.b16 %v3662, %v3654
    %v3847 = vpack.c.b16 %v3663, %v3655
    %v3848 = vpack.c.b16 %v3664, %v3656
    %v3849 = vpack.c.b16 %v3665, %v3657
    %v3850 = vpack.c.b16 %v3666, %v3658
    %v3851 = vpack.c.b16 %v3667, %v3659
    %v3852 = vpack.c.b16 %v3668, %v3660
    %v3853 = vpack.c.b16 %v3669, %v3661
    %v3854 = vpack.c.b16 %v3678, %v3670
    %v3855 = vpack.c.b16 %v3679, %v3671
    %v3856 = vpack.c.b16 %v3680, %v3672
    %v3857 = vpack.c.b16 %v3681, %v3673
    %v3858 = vpack.c.b16 %v3682, %v3674
    %v3859 = vpack.c.b16 %v3683, %v3675
    %v3860 = vpack.c.b16 %v3684, %v3676
    %v3861 = vpack.c.b16 %v3685, %v3677
    %v3862 = vpack.c.b16 %v3694, %v3686
    %v3863 = vpack.c.b16 %v3695, %v3687
    %v3864 = vpack.c.b16 %v3696, %v3688
    %v3865 = vpack.c.b16 %v3697, %v3689
    %v3866 = vpack.c.b16 %v3698, %v3690
    %v3867 = vpack.c.b16 %v3699, %v3691
    %v3868 = vpack.c.b16 %v3700, %v3692
    %v3869 = vpack.c.b16 %v3701, %v3693
    %v3870 = vpack.c.b16 %v3710, %v3702
    %v3871 = vpack.c.b16 %v3711, %v3703
    %v3872 = vpack.c.b16 %v3712, %v3704
    %v3873 = vpack.c.b16 %v3713, %v3705
    %v3874 = vpack.c.b16 %v3714, %v3706
    %v3875 = vpack.c.b16 %v3715, %v3707
    %v3876 = vpack.c.b16 %v3716, %v3708
    %v3877 = vpack.c.b16 %v3717, %v3709
    %v3878 = vpack.c.b16 %v3726, %v3718
    %v3879 = vpack.c.b16 %v3727, %v3719
    %v3880 = vpack.c.b16 %v3728, %v3720
    %v3881 = vpack.c.b16 %v3729, %v3721
    %v3882 = vpack.c.b16 %v3730, %v3722
    %v3883 = vpack.c.b16 %v3731, %v3723
    %v3884 = vpack.c.b16 %v3732, %v3724
    %v3885 = vpack.c.b16 %v3733, %v3725
    %v3886 = vpack.c.b16 %v3742, %v3734
    %v3887 = vpack.c.b16 %v3743, %v3735
    %v3888 = vpack.c.b16 %v3744, %v3736
    %v3889 = vpack.c.b16 %v3745, %v3737
    %v3890 = vpack.c.b16 %v3746, %v3738
    %v3891 = vpack.c.b16 %v3747, %v3739
    %v3892 = vpack.c.b16 %v3748, %v3740
    %v3893 = vpack.c.b16 %v3749, %v3741
    %v3894 = vpack.c.b16 %v3758, %v3750
    %v3895 = vpack.c.b16 %v3759, %v3751
    %v3896 = vpack.c.b16 %v3760, %v3752
    %v3897 = vpack.c.b16 %v3761, %v3753
    %v3898 = vpack.c.b16 %v3762, %v3754
    %v3899 = vpack.c.b16 %v3763, %v3755
    %v3900 = vpack.c.b16 %v3764, %v3756
    %v3901 = vpack.c.b16 %v3765, %v3757
    %v3902 = vpack.c.b16 %v3774, %v3766
    %v3903 = vpack.c.b16 %v3775, %v3767
    %v3904 = vpack.c.b16 %v3776, %v3768
    %v3905 = vpack.c.b16 %v3777, %v3769
    %v3906 = vpack.c.b16 %v3778, %v3770
    %v3907 = vpack.c.b16 %v3779, %v3771
    %v3908 = vpack.c.b16 %v3780, %v3772
    %v3909 = vpack.c.b16 %v3781, %v3773
    %4038 = vmatpush.bf16.msra.mxu0 %v3838
    %4039 = vmatpush.bf16.msra.mxu0 %v3830
    %4040 = vmatpush.bf16.msra.mxu0 %v3822
    %4041 = vmatpush.bf16.msra.mxu0 %v3814
    %4042 = vmatpush.bf16.msra.mxu0 %v3806
    %4043 = vmatpush.bf16.msra.mxu0 %v3798
    %4044 = vmatpush.bf16.msra.mxu0 %v3790
    %4045 = vmatpush.bf16.msra.mxu0 %v3782
    %4046 = vmatmul.bf16.gmra.mxu0 %v3268
    %v4047 = vpop.f32.mrf.mxu0
    %v4048 = vadd.f32 0.0, %v4047
    %v4049 = vpop.f32.mrf.mxu0
    %4050 = vdwg.mxu0
    %4051 = vmatpush.bf16.msra.mxu0 %v3902
    %4052 = vmatpush.bf16.msra.mxu0 %v3894
    %4053 = vmatpush.bf16.msra.mxu0 %v3886
    %4054 = vmatpush.bf16.msra.mxu0 %v3878
    %4055 = vmatpush.bf16.msra.mxu0 %v3870
    %4056 = vmatpush.bf16.msra.mxu0 %v3862
    %4057 = vmatpush.bf16.msra.mxu0 %v3854
    %4058 = vmatpush.bf16.msra.mxu0 %v3846
    %4059 = vmatmul.bf16.gmra.mxu0 %v3269
    %v4060 = vpop.f32.mrf.mxu0
    %v4061 = vadd.f32 %v4048, %v4060
    %v4062 = vpop.f32.mrf.mxu0
    %4063 = vdwg.mxu0
    %4064 = vmatpush.bf16.msra.mxu0 %v3839
    %4065 = vmatpush.bf16.msra.mxu0 %v3831
    %4066 = vmatpush.bf16.msra.mxu0 %v3823
    %4067 = vmatpush.bf16.msra.mxu0 %v3815
    %4068 = vmatpush.bf16.msra.mxu0 %v3807
    %4069 = vmatpush.bf16.msra.mxu0 %v3799
    %4070 = vmatpush.bf16.msra.mxu0 %v3791
    %4071 = vmatpush.bf16.msra.mxu0 %v3783
    %4072 = vmatmul.bf16.gmra.mxu0 %v3268
    %v4073 = vpop.f32.mrf.mxu0
    %v4074 = vadd.f32 0.0, %v4073
    %v4075 = vpop.f32.mrf.mxu0
    %4076 = vdwg.mxu0
    %4077 = vmatpush.bf16.msra.mxu0 %v3903
    %4078 = vmatpush.bf16.msra.mxu0 %v3895
    %4079 = vmatpush.bf16.msra.mxu0 %v3887
    %4080 = vmatpush.bf16.msra.mxu0 %v3879
    %4081 = vmatpush.bf16.msra.mxu0 %v3871
    %4082 = vmatpush.bf16.msra.mxu0 %v3863
    %4083 = vmatpush.bf16.msra.mxu0 %v3855
    %4084 = vmatpush.bf16.msra.mxu0 %v3847
    %4085 = vmatmul.bf16.gmra.mxu0 %v3269
    %v4086 = vpop.f32.mrf.mxu0
    %v4087 = vadd.f32 %v4074, %v4086
    %v4088 = vpop.f32.mrf.mxu0
    %4089 = vdwg.mxu0
    %4090 = vmatpush.bf16.msra.mxu0 %v3840
    %4091 = vmatpush.bf16.msra.mxu0 %v3832
    %4092 = vmatpush.bf16.msra.mxu0 %v3824
    %4093 = vmatpush.bf16.msra.mxu0 %v3816
    %4094 = vmatpush.bf16.msra.mxu0 %v3808
    %4095 = vmatpush.bf16.msra.mxu0 %v3800
    %4096 = vmatpush.bf16.msra.mxu0 %v3792
    %4097 = vmatpush.bf16.msra.mxu0 %v3784
    %4098 = vmatmul.bf16.gmra.mxu0 %v3268
    %v4099 = vpop.f32.mrf.mxu0
    %v4100 = vadd.f32 0.0, %v4099
    %v4101 = vpop.f32.mrf.mxu0
    %4102 = vdwg.mxu0
    %4103 = vmatpush.bf16.msra.mxu0 %v3904
    %4104 = vmatpush.bf16.msra.mxu0 %v3896
    %4105 = vmatpush.bf16.msra.mxu0 %v3888
    %4106 = vmatpush.bf16.msra.mxu0 %v3880
    %4107 = vmatpush.bf16.msra.mxu0 %v3872
    %4108 = vmatpush.bf16.msra.mxu0 %v3864
    %4109 = vmatpush.bf16.msra.mxu0 %v3856
    %4110 = vmatpush.bf16.msra.mxu0 %v3848
    %4111 = vmatmul.bf16.gmra.mxu0 %v3269
    %v4112 = vpop.f32.mrf.mxu0
    %v4113 = vadd.f32 %v4100, %v4112
    %v4114 = vpop.f32.mrf.mxu0
    %4115 = vdwg.mxu0
    %4116 = vmatpush.bf16.msra.mxu0 %v3841
    %4117 = vmatpush.bf16.msra.mxu0 %v3833
    %4118 = vmatpush.bf16.msra.mxu0 %v3825
    %4119 = vmatpush.bf16.msra.mxu0 %v3817
    %4120 = vmatpush.bf16.msra.mxu0 %v3809
    %4121 = vmatpush.bf16.msra.mxu0 %v3801
    %4122 = vmatpush.bf16.msra.mxu0 %v3793
    %4123 = vmatpush.bf16.msra.mxu0 %v3785
    %4124 = vmatmul.bf16.gmra.mxu0 %v3268
    %v4125 = vpop.f32.mrf.mxu0
    %v4126 = vadd.f32 0.0, %v4125
    %v4127 = vpop.f32.mrf.mxu0
    %4128 = vdwg.mxu0
    %4129 = vmatpush.bf16.msra.mxu0 %v3905
    %4130 = vmatpush.bf16.msra.mxu0 %v3897
    %4131 = vmatpush.bf16.msra.mxu0 %v3889
    %4132 = vmatpush.bf16.msra.mxu0 %v3881
    %4133 = vmatpush.bf16.msra.mxu0 %v3873
    %4134 = vmatpush.bf16.msra.mxu0 %v3865
    %4135 = vmatpush.bf16.msra.mxu0 %v3857
    %4136 = vmatpush.bf16.msra.mxu0 %v3849
    %4137 = vmatmul.bf16.gmra.mxu0 %v3269
    %v4138 = vpop.f32.mrf.mxu0
    %v4139 = vadd.f32 %v4126, %v4138
    %v4140 = vpop.f32.mrf.mxu0
    %4141 = vdwg.mxu0
    %4142 = vmatpush.bf16.msra.mxu0 %v3842
    %4143 = vmatpush.bf16.msra.mxu0 %v3834
    %4144 = vmatpush.bf16.msra.mxu0 %v3826
    %4145 = vmatpush.bf16.msra.mxu0 %v3818
    %4146 = vmatpush.bf16.msra.mxu0 %v3810
    %4147 = vmatpush.bf16.msra.mxu0 %v3802
    %4148 = vmatpush.bf16.msra.mxu0 %v3794
    %4149 = vmatpush.bf16.msra.mxu0 %v3786
    %4150 = vmatmul.bf16.gmra.mxu0 %v3268
    %v4151 = vpop.f32.mrf.mxu0
    %v4152 = vadd.f32 0.0, %v4151
    %v4153 = vpop.f32.mrf.mxu0
    %4154 = vdwg.mxu0
    %4155 = vmatpush.bf16.msra.mxu0 %v3906
    %4156 = vmatpush.bf16.msra.mxu0 %v3898
    %4157 = vmatpush.bf16.msra.mxu0 %v3890
    %4158 = vmatpush.bf16.msra.mxu0 %v3882
    %4159 = vmatpush.bf16.msra.mxu0 %v3874
    %4160 = vmatpush.bf16.msra.mxu0 %v3866
    %4161 = vmatpush.bf16.msra.mxu0 %v3858
    %4162 = vmatpush.bf16.msra.mxu0 %v3850
    %4163 = vmatmul.bf16.gmra.mxu0 %v3269
    %v4164 = vpop.f32.mrf.mxu0
    %v4165 = vadd.f32 %v4152, %v4164
    %v4166 = vpop.f32.mrf.mxu0
    %4167 = vdwg.mxu0
    %4168 = vmatpush.bf16.msra.mxu0 %v3843
    %4169 = vmatpush.bf16.msra.mxu0 %v3835
    %4170 = vmatpush.bf16.msra.mxu0 %v3827
    %4171 = vmatpush.bf16.msra.mxu0 %v3819
    %4172 = vmatpush.bf16.msra.mxu0 %v3811
    %4173 = vmatpush.bf16.msra.mxu0 %v3803
    %4174 = vmatpush.bf16.msra.mxu0 %v3795
    %4175 = vmatpush.bf16.msra.mxu0 %v3787
    %4176 = vmatmul.bf16.gmra.mxu0 %v3268
    %v4177 = vpop.f32.mrf.mxu0
    %v4178 = vadd.f32 0.0, %v4177
    %v4179 = vpop.f32.mrf.mxu0
    %4180 = vdwg.mxu0
    %4181 = vmatpush.bf16.msra.mxu0 %v3907
    %4182 = vmatpush.bf16.msra.mxu0 %v3899
    %4183 = vmatpush.bf16.msra.mxu0 %v3891
    %4184 = vmatpush.bf16.msra.mxu0 %v3883
    %4185 = vmatpush.bf16.msra.mxu0 %v3875
    %4186 = vmatpush.bf16.msra.mxu0 %v3867
    %4187 = vmatpush.bf16.msra.mxu0 %v3859
    %4188 = vmatpush.bf16.msra.mxu0 %v3851
    %4189 = vmatmul.bf16.gmra.mxu0 %v3269
    %v4190 = vpop.f32.mrf.mxu0
    %v4191 = vadd.f32 %v4178, %v4190
    %v4192 = vpop.f32.mrf.mxu0
    %4193 = vdwg.mxu0
    %4194 = vmatpush.bf16.msra.mxu0 %v3844
    %4195 = vmatpush.bf16.msra.mxu0 %v3836
    %4196 = vmatpush.bf16.msra.mxu0 %v3828
    %4197 = vmatpush.bf16.msra.mxu0 %v3820
    %4198 = vmatpush.bf16.msra.mxu0 %v3812
    %4199 = vmatpush.bf16.msra.mxu0 %v3804
    %4200 = vmatpush.bf16.msra.mxu0 %v3796
    %4201 = vmatpush.bf16.msra.mxu0 %v3788
    %4202 = vmatmul.bf16.gmra.mxu0 %v3268
    %v4203 = vpop.f32.mrf.mxu0
    %v4204 = vadd.f32 0.0, %v4203
    %v4205 = vpop.f32.mrf.mxu0
    %4206 = vdwg.mxu0
    %4207 = vmatpush.bf16.msra.mxu0 %v3908
    %4208 = vmatpush.bf16.msra.mxu0 %v3900
    %4209 = vmatpush.bf16.msra.mxu0 %v3892
    %4210 = vmatpush.bf16.msra.mxu0 %v3884
    %4211 = vmatpush.bf16.msra.mxu0 %v3876
    %4212 = vmatpush.bf16.msra.mxu0 %v3868
    %4213 = vmatpush.bf16.msra.mxu0 %v3860
    %4214 = vmatpush.bf16.msra.mxu0 %v3852
    %4215 = vmatmul.bf16.gmra.mxu0 %v3269
    %v4216 = vpop.f32.mrf.mxu0
    %v4217 = vadd.f32 %v4204, %v4216
    %v4218 = vpop.f32.mrf.mxu0
    %4219 = vdwg.mxu0
    %4220 = vmatpush.bf16.msra.mxu0 %v3845
    %4221 = vmatpush.bf16.msra.mxu0 %v3837
    %4222 = vmatpush.bf16.msra.mxu0 %v3829
    %4223 = vmatpush.bf16.msra.mxu0 %v3821
    %4224 = vmatpush.bf16.msra.mxu0 %v3813
    %4225 = vmatpush.bf16.msra.mxu0 %v3805
    %4226 = vmatpush.bf16.msra.mxu0 %v3797
    %4227 = vmatpush.bf16.msra.mxu0 %v3789
    %4228 = vmatmul.bf16.gmra.mxu0 %v3268
    %v4229 = vpop.f32.mrf.mxu0
    %v4230 = vadd.f32 0.0, %v4229
    %v4231 = vpop.f32.mrf.mxu0
    %4232 = vdwg.mxu0
    %4233 = vmatpush.bf16.msra.mxu0 %v3909
    %4234 = vmatpush.bf16.msra.mxu0 %v3901
    %4235 = vmatpush.bf16.msra.mxu0 %v3893
    %4236 = vmatpush.bf16.msra.mxu0 %v3885
    %4237 = vmatpush.bf16.msra.mxu0 %v3877
    %4238 = vmatpush.bf16.msra.mxu0 %v3869
    %4239 = vmatpush.bf16.msra.mxu0 %v3861
    %4240 = vmatpush.bf16.msra.mxu0 %v3853
    %4241 = vmatmul.bf16.gmra.mxu0 %v3269
    %v4242 = vpop.f32.mrf.mxu0
    %v4243 = vadd.f32 %v4230, %v4242
    %v4244 = vpop.f32.mrf.mxu0
    %4245 = vdwg.mxu0
    %v4246 = vadd.f32 %v819, %v4061
    %v4247 = vadd.f32 %v848, %v4087
    %v4248 = vadd.f32 %v877, %v4113
    %v4249 = vadd.f32 %v906, %v4139
    %v4250 = vadd.f32 %v935, %v4165
    %v4251 = vadd.f32 %v964, %v4191
    %v4252 = vadd.f32 %v993, %v4217
    %v4253 = vadd.f32 %v1022, %v4243
    %v4254 = vxor.u32 %v4246, 2147483648
    %v4255 = vxor.u32 %v4247, 2147483648
    %v4256 = vmul.f32 %v4254, 1.442695
    %v4257 = vpow.pop %v4256
    %v4258 = vmul.f32 %v4255, 1.442695
    %v4259 = vpow.pop %v4258
    %v4260 = vadd.f32 %v4257, 1.0
    %v4261 = vadd.f32 %v4259, 1.0
    %v4262 = vrcp.pop %v4260
    %v4263 = vmul.f32 %v4260, %v4262
    %v4264 = vsub.f32 1.0, %v4263
    %v4265 = vmul.f32 %v4262, %v4264
    %v4266 = vadd.f32 %v4262, %v4265
    %vm4267 = vweird.f32 %v4260
    %vm4268 = vweird.f32 %v4262
    %vm4269 = vmor %vm4267, %vm4268
    %v4270 = vsel %vm4269, %v4262, %v4266
    %v4271 = vand.u32 2147483647, %v4260
    %vm4272 = vcmp.eq.f32.partialorder %v4271, 8.507059e+37
    %v4273 = vand.u32 %v4260, 2147483648
    %v4274 = vor.u32 1.1754944e-38, %v4273
    %v4275 = vsel %vm4272, %v4274, %v4270
    %v4276 = vmul.f32 1.0, %v4275
    %v4277 = vrcp.pop %v4261
    %v4278 = vmul.f32 %v4261, %v4277
    %v4279 = vsub.f32 1.0, %v4278
    %v4280 = vmul.f32 %v4277, %v4279
    %v4281 = vadd.f32 %v4277, %v4280
    %vm4282 = vweird.f32 %v4261
    %vm4283 = vweird.f32 %v4277
    %vm4284 = vmor %vm4282, %vm4283
    %v4285 = vsel %vm4284, %v4277, %v4281
    %v4286 = vand.u32 2147483647, %v4261
    %vm4287 = vcmp.eq.f32.partialorder %v4286, 8.507059e+37
    %v4288 = vand.u32 %v4261, 2147483648
    %v4289 = vor.u32 1.1754944e-38, %v4288
    %v4290 = vsel %vm4287, %v4289, %v4285
    %v4291 = vmul.f32 1.0, %v4290
    %v4292 = vxor.u32 %v4248, 2147483648
    %v4293 = vxor.u32 %v4249, 2147483648
    %v4294 = vmul.f32 %v4292, 1.442695
    %v4295 = vpow.pop %v4294
    %v4296 = vmul.f32 %v4293, 1.442695
    %v4297 = vpow.pop %v4296
    %v4298 = vadd.f32 %v4295, 1.0
    %v4299 = vadd.f32 %v4297, 1.0
    %v4300 = vrcp.pop %v4298
    %v4301 = vmul.f32 %v4298, %v4300
    %v4302 = vsub.f32 1.0, %v4301
    %v4303 = vmul.f32 %v4300, %v4302
    %v4304 = vadd.f32 %v4300, %v4303
    %vm4305 = vweird.f32 %v4298
    %vm4306 = vweird.f32 %v4300
    %vm4307 = vmor %vm4305, %vm4306
    %v4308 = vsel %vm4307, %v4300, %v4304
    %v4309 = vand.u32 2147483647, %v4298
    %vm4310 = vcmp.eq.f32.partialorder %v4309, 8.507059e+37
    %v4311 = vand.u32 %v4298, 2147483648
    %v4312 = vor.u32 1.1754944e-38, %v4311
    %v4313 = vsel %vm4310, %v4312, %v4308
    %v4314 = vmul.f32 1.0, %v4313
    %v4315 = vrcp.pop %v4299
    %v4316 = vmul.f32 %v4299, %v4315
    %v4317 = vsub.f32 1.0, %v4316
    %v4318 = vmul.f32 %v4315, %v4317
    %v4319 = vadd.f32 %v4315, %v4318
    %vm4320 = vweird.f32 %v4299
    %vm4321 = vweird.f32 %v4315
    %vm4322 = vmor %vm4320, %vm4321
    %v4323 = vsel %vm4322, %v4315, %v4319
    %v4324 = vand.u32 2147483647, %v4299
    %vm4325 = vcmp.eq.f32.partialorder %v4324, 8.507059e+37
    %v4326 = vand.u32 %v4299, 2147483648
    %v4327 = vor.u32 1.1754944e-38, %v4326
    %v4328 = vsel %vm4325, %v4327, %v4323
    %v4329 = vmul.f32 1.0, %v4328
    %v4330 = vtanh.pop %v4250
    %v4331 = vtanh.pop %v4251
    %v4332 = vxor.u32 %v4252, 2147483648
    %v4333 = vxor.u32 %v4253, 2147483648
    %v4334 = vmul.f32 %v4332, 1.442695
    %v4335 = vpow.pop %v4334
    %v4336 = vmul.f32 %v4333, 1.442695
    %v4337 = vpow.pop %v4336
    %v4338 = vadd.f32 %v4335, 1.0
    %v4339 = vadd.f32 %v4337, 1.0
    %v4340 = vrcp.pop %v4338
    %v4341 = vmul.f32 %v4338, %v4340
    %v4342 = vsub.f32 1.0, %v4341
    %v4343 = vmul.f32 %v4340, %v4342
    %v4344 = vadd.f32 %v4340, %v4343
    %vm4345 = vweird.f32 %v4338
    %vm4346 = vweird.f32 %v4340
    %vm4347 = vmor %vm4345, %vm4346
    %v4348 = vsel %vm4347, %v4340, %v4344
    %v4349 = vand.u32 2147483647, %v4338
    %vm4350 = vcmp.eq.f32.partialorder %v4349, 8.507059e+37
    %v4351 = vand.u32 %v4338, 2147483648
    %v4352 = vor.u32 1.1754944e-38, %v4351
    %v4353 = vsel %vm4350, %v4352, %v4348
    %v4354 = vmul.f32 1.0, %v4353
    %v4355 = vrcp.pop %v4339
    %v4356 = vmul.f32 %v4339, %v4355
    %v4357 = vsub.f32 1.0, %v4356
    %v4358 = vmul.f32 %v4355, %v4357
    %v4359 = vadd.f32 %v4355, %v4358
    %vm4360 = vweird.f32 %v4339
    %vm4361 = vweird.f32 %v4355
    %vm4362 = vmor %vm4360, %vm4361
    %v4363 = vsel %vm4362, %v4355, %v4359
    %v4364 = vand.u32 2147483647, %v4339
    %vm4365 = vcmp.eq.f32.partialorder %v4364, 8.507059e+37
    %v4366 = vand.u32 %v4339, 2147483648
    %v4367 = vor.u32 1.1754944e-38, %v4366
    %v4368 = vsel %vm4365, %v4367, %v4363
    %v4369 = vmul.f32 1.0, %v4368
    %v4370 = vmul.f32 %v4314, %v3260
    %v4371 = vmul.f32 %v4329, %v3261
    %v4372 = vmul.f32 %v4276, %v4330
    %v4373 = vmul.f32 %v4291, %v4331
    %v4374 = vadd.f32 %v4370, %v4372
    %v4375 = vadd.f32 %v4371, %v4373
    %v4376 = vtanh.pop %v4374
    %v4377 = vtanh.pop %v4375
    %v4378 = vmul.f32 %v4354, %v4376
    %v4379 = vmul.f32 %v4369, %v4377
    %4380 = vst [vmem:[#allocation2 + $0x20] sm:$0xff] %v4378
    %4381 = vst [vmem:[#allocation2 + $0x28] sm:$0xff] %v4379
    %v4382 = vpack.c.bf16 %v4378, %v4378
    %v4383 = vpack.c.bf16 %v4379, %v4379
    %v4384 = vld [vmem:[#allocation10] sm:$0xff]
    %v4385 = vld [vmem:[#allocation10 + $0x8] sm:$0xff]
    %v4386 = vld [vmem:[#allocation10 + $0x10] sm:$0xff]
    %v4387 = vld [vmem:[#allocation10 + $0x18] sm:$0xff]
    %v4388 = vld [vmem:[#allocation10 + $0x20] sm:$0xff]
    %v4389 = vld [vmem:[#allocation10 + $0x28] sm:$0xff]
    %v4390 = vld [vmem:[#allocation10 + $0x30] sm:$0xff]
    %v4391 = vld [vmem:[#allocation10 + $0x38] sm:$0xff]
    %v4392 = vld [vmem:[#allocation10 + $0x40] sm:$0xff]
    %v4393 = vld [vmem:[#allocation10 + $0x48] sm:$0xff]
    %v4394 = vld [vmem:[#allocation10 + $0x50] sm:$0xff]
    %v4395 = vld [vmem:[#allocation10 + $0x58] sm:$0xff]
    %v4396 = vld [vmem:[#allocation10 + $0x60] sm:$0xff]
    %v4397 = vld [vmem:[#allocation10 + $0x68] sm:$0xff]
    %v4398 = vld [vmem:[#allocation10 + $0x70] sm:$0xff]
    %v4399 = vld [vmem:[#allocation10 + $0x78] sm:$0xff]
    %v4400 = vld [vmem:[#allocation10 + $0x80] sm:$0xff]
    %v4401 = vld [vmem:[#allocation10 + $0x88] sm:$0xff]
    %v4402 = vld [vmem:[#allocation10 + $0x90] sm:$0xff]
    %v4403 = vld [vmem:[#allocation10 + $0x98] sm:$0xff]
    %v4404 = vld [vmem:[#allocation10 + $0xa0] sm:$0xff]
    %v4405 = vld [vmem:[#allocation10 + $0xa8] sm:$0xff]
    %v4406 = vld [vmem:[#allocation10 + $0xb0] sm:$0xff]
    %v4407 = vld [vmem:[#allocation10 + $0xb8] sm:$0xff]
    %v4408 = vld [vmem:[#allocation10 + $0xc0] sm:$0xff]
    %v4409 = vld [vmem:[#allocation10 + $0xc8] sm:$0xff]
    %v4410 = vld [vmem:[#allocation10 + $0xd0] sm:$0xff]
    %v4411 = vld [vmem:[#allocation10 + $0xd8] sm:$0xff]
    %v4412 = vld [vmem:[#allocation10 + $0xe0] sm:$0xff]
    %v4413 = vld [vmem:[#allocation10 + $0xe8] sm:$0xff]
    %v4414 = vld [vmem:[#allocation10 + $0xf0] sm:$0xff]
    %v4415 = vld [vmem:[#allocation10 + $0xf8] sm:$0xff]
    %v4416 = vld [vmem:[#allocation10 + $0x100] sm:$0xff]
    %v4417 = vld [vmem:[#allocation10 + $0x108] sm:$0xff]
    %v4418 = vld [vmem:[#allocation10 + $0x110] sm:$0xff]
    %v4419 = vld [vmem:[#allocation10 + $0x118] sm:$0xff]
    %v4420 = vld [vmem:[#allocation10 + $0x120] sm:$0xff]
    %v4421 = vld [vmem:[#allocation10 + $0x128] sm:$0xff]
    %v4422 = vld [vmem:[#allocation10 + $0x130] sm:$0xff]
    %v4423 = vld [vmem:[#allocation10 + $0x138] sm:$0xff]
    %v4424 = vld [vmem:[#allocation10 + $0x140] sm:$0xff]
    %v4425 = vld [vmem:[#allocation10 + $0x148] sm:$0xff]
    %v4426 = vld [vmem:[#allocation10 + $0x150] sm:$0xff]
    %v4427 = vld [vmem:[#allocation10 + $0x158] sm:$0xff]
    %v4428 = vld [vmem:[#allocation10 + $0x160] sm:$0xff]
    %v4429 = vld [vmem:[#allocation10 + $0x168] sm:$0xff]
    %v4430 = vld [vmem:[#allocation10 + $0x170] sm:$0xff]
    %v4431 = vld [vmem:[#allocation10 + $0x178] sm:$0xff]
    %v4432 = vld [vmem:[#allocation10 + $0x180] sm:$0xff]
    %v4433 = vld [vmem:[#allocation10 + $0x188] sm:$0xff]
    %v4434 = vld [vmem:[#allocation10 + $0x190] sm:$0xff]
    %v4435 = vld [vmem:[#allocation10 + $0x198] sm:$0xff]
    %v4436 = vld [vmem:[#allocation10 + $0x1a0] sm:$0xff]
    %v4437 = vld [vmem:[#allocation10 + $0x1a8] sm:$0xff]
    %v4438 = vld [vmem:[#allocation10 + $0x1b0] sm:$0xff]
    %v4439 = vld [vmem:[#allocation10 + $0x1b8] sm:$0xff]
    %v4440 = vld [vmem:[#allocation10 + $0x1c0] sm:$0xff]
    %v4441 = vld [vmem:[#allocation10 + $0x1c8] sm:$0xff]
    %v4442 = vld [vmem:[#allocation10 + $0x1d0] sm:$0xff]
    %v4443 = vld [vmem:[#allocation10 + $0x1d8] sm:$0xff]
    %v4444 = vld [vmem:[#allocation10 + $0x1e0] sm:$0xff]
    %v4445 = vld [vmem:[#allocation10 + $0x1e8] sm:$0xff]
    %v4446 = vld [vmem:[#allocation10 + $0x1f0] sm:$0xff]
    %v4447 = vld [vmem:[#allocation10 + $0x1f8] sm:$0xff]
    %v4448 = vld [vmem:[#allocation10 + $0x200] sm:$0xff]
    %v4449 = vld [vmem:[#allocation10 + $0x208] sm:$0xff]
    %v4450 = vld [vmem:[#allocation10 + $0x210] sm:$0xff]
    %v4451 = vld [vmem:[#allocation10 + $0x218] sm:$0xff]
    %v4452 = vld [vmem:[#allocation10 + $0x220] sm:$0xff]
    %v4453 = vld [vmem:[#allocation10 + $0x228] sm:$0xff]
    %v4454 = vld [vmem:[#allocation10 + $0x230] sm:$0xff]
    %v4455 = vld [vmem:[#allocation10 + $0x238] sm:$0xff]
    %v4456 = vld [vmem:[#allocation10 + $0x240] sm:$0xff]
    %v4457 = vld [vmem:[#allocation10 + $0x248] sm:$0xff]
    %v4458 = vld [vmem:[#allocation10 + $0x250] sm:$0xff]
    %v4459 = vld [vmem:[#allocation10 + $0x258] sm:$0xff]
    %v4460 = vld [vmem:[#allocation10 + $0x260] sm:$0xff]
    %v4461 = vld [vmem:[#allocation10 + $0x268] sm:$0xff]
    %v4462 = vld [vmem:[#allocation10 + $0x270] sm:$0xff]
    %v4463 = vld [vmem:[#allocation10 + $0x278] sm:$0xff]
    %v4464 = vld [vmem:[#allocation10 + $0x280] sm:$0xff]
    %v4465 = vld [vmem:[#allocation10 + $0x288] sm:$0xff]
    %v4466 = vld [vmem:[#allocation10 + $0x290] sm:$0xff]
    %v4467 = vld [vmem:[#allocation10 + $0x298] sm:$0xff]
    %v4468 = vld [vmem:[#allocation10 + $0x2a0] sm:$0xff]
    %v4469 = vld [vmem:[#allocation10 + $0x2a8] sm:$0xff]
    %v4470 = vld [vmem:[#allocation10 + $0x2b0] sm:$0xff]
    %v4471 = vld [vmem:[#allocation10 + $0x2b8] sm:$0xff]
    %v4472 = vld [vmem:[#allocation10 + $0x2c0] sm:$0xff]
    %v4473 = vld [vmem:[#allocation10 + $0x2c8] sm:$0xff]
    %v4474 = vld [vmem:[#allocation10 + $0x2d0] sm:$0xff]
    %v4475 = vld [vmem:[#allocation10 + $0x2d8] sm:$0xff]
    %v4476 = vld [vmem:[#allocation10 + $0x2e0] sm:$0xff]
    %v4477 = vld [vmem:[#allocation10 + $0x2e8] sm:$0xff]
    %v4478 = vld [vmem:[#allocation10 + $0x2f0] sm:$0xff]
    %v4479 = vld [vmem:[#allocation10 + $0x2f8] sm:$0xff]
    %v4480 = vld [vmem:[#allocation10 + $0x300] sm:$0xff]
    %v4481 = vld [vmem:[#allocation10 + $0x308] sm:$0xff]
    %v4482 = vld [vmem:[#allocation10 + $0x310] sm:$0xff]
    %v4483 = vld [vmem:[#allocation10 + $0x318] sm:$0xff]
    %v4484 = vld [vmem:[#allocation10 + $0x320] sm:$0xff]
    %v4485 = vld [vmem:[#allocation10 + $0x328] sm:$0xff]
    %v4486 = vld [vmem:[#allocation10 + $0x330] sm:$0xff]
    %v4487 = vld [vmem:[#allocation10 + $0x338] sm:$0xff]
    %v4488 = vld [vmem:[#allocation10 + $0x340] sm:$0xff]
    %v4489 = vld [vmem:[#allocation10 + $0x348] sm:$0xff]
    %v4490 = vld [vmem:[#allocation10 + $0x350] sm:$0xff]
    %v4491 = vld [vmem:[#allocation10 + $0x358] sm:$0xff]
    %v4492 = vld [vmem:[#allocation10 + $0x360] sm:$0xff]
    %v4493 = vld [vmem:[#allocation10 + $0x368] sm:$0xff]
    %v4494 = vld [vmem:[#allocation10 + $0x370] sm:$0xff]
    %v4495 = vld [vmem:[#allocation10 + $0x378] sm:$0xff]
    %v4496 = vld [vmem:[#allocation10 + $0x380] sm:$0xff]
    %v4497 = vld [vmem:[#allocation10 + $0x388] sm:$0xff]
    %v4498 = vld [vmem:[#allocation10 + $0x390] sm:$0xff]
    %v4499 = vld [vmem:[#allocation10 + $0x398] sm:$0xff]
    %v4500 = vld [vmem:[#allocation10 + $0x3a0] sm:$0xff]
    %v4501 = vld [vmem:[#allocation10 + $0x3a8] sm:$0xff]
    %v4502 = vld [vmem:[#allocation10 + $0x3b0] sm:$0xff]
    %v4503 = vld [vmem:[#allocation10 + $0x3b8] sm:$0xff]
    %v4504 = vld [vmem:[#allocation10 + $0x3c0] sm:$0xff]
    %v4505 = vld [vmem:[#allocation10 + $0x3c8] sm:$0xff]
    %v4506 = vld [vmem:[#allocation10 + $0x3d0] sm:$0xff]
    %v4507 = vld [vmem:[#allocation10 + $0x3d8] sm:$0xff]
    %v4508 = vld [vmem:[#allocation10 + $0x3e0] sm:$0xff]
    %v4509 = vld [vmem:[#allocation10 + $0x3e8] sm:$0xff]
    %v4510 = vld [vmem:[#allocation10 + $0x3f0] sm:$0xff]
    %v4511 = vld [vmem:[#allocation10 + $0x3f8] sm:$0xff]
    %v4640 = vunpack.c.l.b16 %v4384
    %v4641 = vunpack.c.h.b16 %v4384
    %v4642 = vunpack.c.l.b16 %v4385
    %v4643 = vunpack.c.h.b16 %v4385
    %v4644 = vunpack.c.l.b16 %v4386
    %v4645 = vunpack.c.h.b16 %v4386
    %v4646 = vunpack.c.l.b16 %v4387
    %v4647 = vunpack.c.h.b16 %v4387
    %v4648 = vunpack.c.l.b16 %v4388
    %v4649 = vunpack.c.h.b16 %v4388
    %v4650 = vunpack.c.l.b16 %v4389
    %v4651 = vunpack.c.h.b16 %v4389
    %v4652 = vunpack.c.l.b16 %v4390
    %v4653 = vunpack.c.h.b16 %v4390
    %v4654 = vunpack.c.l.b16 %v4391
    %v4655 = vunpack.c.h.b16 %v4391
    %v4656 = vunpack.c.l.b16 %v4392
    %v4657 = vunpack.c.h.b16 %v4392
    %v4658 = vunpack.c.l.b16 %v4393
    %v4659 = vunpack.c.h.b16 %v4393
    %v4660 = vunpack.c.l.b16 %v4394
    %v4661 = vunpack.c.h.b16 %v4394
    %v4662 = vunpack.c.l.b16 %v4395
    %v4663 = vunpack.c.h.b16 %v4395
    %v4664 = vunpack.c.l.b16 %v4396
    %v4665 = vunpack.c.h.b16 %v4396
    %v4666 = vunpack.c.l.b16 %v4397
    %v4667 = vunpack.c.h.b16 %v4397
    %v4668 = vunpack.c.l.b16 %v4398
    %v4669 = vunpack.c.h.b16 %v4398
    %v4670 = vunpack.c.l.b16 %v4399
    %v4671 = vunpack.c.h.b16 %v4399
    %v4672 = vunpack.c.l.b16 %v4400
    %v4673 = vunpack.c.h.b16 %v4400
    %v4674 = vunpack.c.l.b16 %v4401
    %v4675 = vunpack.c.h.b16 %v4401
    %v4676 = vunpack.c.l.b16 %v4402
    %v4677 = vunpack.c.h.b16 %v4402
    %v4678 = vunpack.c.l.b16 %v4403
    %v4679 = vunpack.c.h.b16 %v4403
    %v4680 = vunpack.c.l.b16 %v4404
    %v4681 = vunpack.c.h.b16 %v4404
    %v4682 = vunpack.c.l.b16 %v4405
    %v4683 = vunpack.c.h.b16 %v4405
    %v4684 = vunpack.c.l.b16 %v4406
    %v4685 = vunpack.c.h.b16 %v4406
    %v4686 = vunpack.c.l.b16 %v4407
    %v4687 = vunpack.c.h.b16 %v4407
    %v4688 = vunpack.c.l.b16 %v4408
    %v4689 = vunpack.c.h.b16 %v4408
    %v4690 = vunpack.c.l.b16 %v4409
    %v4691 = vunpack.c.h.b16 %v4409
    %v4692 = vunpack.c.l.b16 %v4410
    %v4693 = vunpack.c.h.b16 %v4410
    %v4694 = vunpack.c.l.b16 %v4411
    %v4695 = vunpack.c.h.b16 %v4411
    %v4696 = vunpack.c.l.b16 %v4412
    %v4697 = vunpack.c.h.b16 %v4412
    %v4698 = vunpack.c.l.b16 %v4413
    %v4699 = vunpack.c.h.b16 %v4413
    %v4700 = vunpack.c.l.b16 %v4414
    %v4701 = vunpack.c.h.b16 %v4414
    %v4702 = vunpack.c.l.b16 %v4415
    %v4703 = vunpack.c.h.b16 %v4415
    %v4704 = vunpack.c.l.b16 %v4416
    %v4705 = vunpack.c.h.b16 %v4416
    %v4706 = vunpack.c.l.b16 %v4417
    %v4707 = vunpack.c.h.b16 %v4417
    %v4708 = vunpack.c.l.b16 %v4418
    %v4709 = vunpack.c.h.b16 %v4418
    %v4710 = vunpack.c.l.b16 %v4419
    %v4711 = vunpack.c.h.b16 %v4419
    %v4712 = vunpack.c.l.b16 %v4420
    %v4713 = vunpack.c.h.b16 %v4420
    %v4714 = vunpack.c.l.b16 %v4421
    %v4715 = vunpack.c.h.b16 %v4421
    %v4716 = vunpack.c.l.b16 %v4422
    %v4717 = vunpack.c.h.b16 %v4422
    %v4718 = vunpack.c.l.b16 %v4423
    %v4719 = vunpack.c.h.b16 %v4423
    %v4720 = vunpack.c.l.b16 %v4424
    %v4721 = vunpack.c.h.b16 %v4424
    %v4722 = vunpack.c.l.b16 %v4425
    %v4723 = vunpack.c.h.b16 %v4425
    %v4724 = vunpack.c.l.b16 %v4426
    %v4725 = vunpack.c.h.b16 %v4426
    %v4726 = vunpack.c.l.b16 %v4427
    %v4727 = vunpack.c.h.b16 %v4427
    %v4728 = vunpack.c.l.b16 %v4428
    %v4729 = vunpack.c.h.b16 %v4428
    %v4730 = vunpack.c.l.b16 %v4429
    %v4731 = vunpack.c.h.b16 %v4429
    %v4732 = vunpack.c.l.b16 %v4430
    %v4733 = vunpack.c.h.b16 %v4430
    %v4734 = vunpack.c.l.b16 %v4431
    %v4735 = vunpack.c.h.b16 %v4431
    %v4736 = vunpack.c.l.b16 %v4432
    %v4737 = vunpack.c.h.b16 %v4432
    %v4738 = vunpack.c.l.b16 %v4433
    %v4739 = vunpack.c.h.b16 %v4433
    %v4740 = vunpack.c.l.b16 %v4434
    %v4741 = vunpack.c.h.b16 %v4434
    %v4742 = vunpack.c.l.b16 %v4435
    %v4743 = vunpack.c.h.b16 %v4435
    %v4744 = vunpack.c.l.b16 %v4436
    %v4745 = vunpack.c.h.b16 %v4436
    %v4746 = vunpack.c.l.b16 %v4437
    %v4747 = vunpack.c.h.b16 %v4437
    %v4748 = vunpack.c.l.b16 %v4438
    %v4749 = vunpack.c.h.b16 %v4438
    %v4750 = vunpack.c.l.b16 %v4439
    %v4751 = vunpack.c.h.b16 %v4439
    %v4752 = vunpack.c.l.b16 %v4440
    %v4753 = vunpack.c.h.b16 %v4440
    %v4754 = vunpack.c.l.b16 %v4441
    %v4755 = vunpack.c.h.b16 %v4441
    %v4756 = vunpack.c.l.b16 %v4442
    %v4757 = vunpack.c.h.b16 %v4442
    %v4758 = vunpack.c.l.b16 %v4443
    %v4759 = vunpack.c.h.b16 %v4443
    %v4760 = vunpack.c.l.b16 %v4444
    %v4761 = vunpack.c.h.b16 %v4444
    %v4762 = vunpack.c.l.b16 %v4445
    %v4763 = vunpack.c.h.b16 %v4445
    %v4764 = vunpack.c.l.b16 %v4446
    %v4765 = vunpack.c.h.b16 %v4446
    %v4766 = vunpack.c.l.b16 %v4447
    %v4767 = vunpack.c.h.b16 %v4447
    %v4768 = vunpack.c.l.b16 %v4448
    %v4769 = vunpack.c.h.b16 %v4448
    %v4770 = vunpack.c.l.b16 %v4449
    %v4771 = vunpack.c.h.b16 %v4449
    %v4772 = vunpack.c.l.b16 %v4450
    %v4773 = vunpack.c.h.b16 %v4450
    %v4774 = vunpack.c.l.b16 %v4451
    %v4775 = vunpack.c.h.b16 %v4451
    %v4776 = vunpack.c.l.b16 %v4452
    %v4777 = vunpack.c.h.b16 %v4452
    %v4778 = vunpack.c.l.b16 %v4453
    %v4779 = vunpack.c.h.b16 %v4453
    %v4780 = vunpack.c.l.b16 %v4454
    %v4781 = vunpack.c.h.b16 %v4454
    %v4782 = vunpack.c.l.b16 %v4455
    %v4783 = vunpack.c.h.b16 %v4455
    %v4784 = vunpack.c.l.b16 %v4456
    %v4785 = vunpack.c.h.b16 %v4456
    %v4786 = vunpack.c.l.b16 %v4457
    %v4787 = vunpack.c.h.b16 %v4457
    %v4788 = vunpack.c.l.b16 %v4458
    %v4789 = vunpack.c.h.b16 %v4458
    %v4790 = vunpack.c.l.b16 %v4459
    %v4791 = vunpack.c.h.b16 %v4459
    %v4792 = vunpack.c.l.b16 %v4460
    %v4793 = vunpack.c.h.b16 %v4460
    %v4794 = vunpack.c.l.b16 %v4461
    %v4795 = vunpack.c.h.b16 %v4461
    %v4796 = vunpack.c.l.b16 %v4462
    %v4797 = vunpack.c.h.b16 %v4462
    %v4798 = vunpack.c.l.b16 %v4463
    %v4799 = vunpack.c.h.b16 %v4463
    %v4800 = vunpack.c.l.b16 %v4464
    %v4801 = vunpack.c.h.b16 %v4464
    %v4802 = vunpack.c.l.b16 %v4465
    %v4803 = vunpack.c.h.b16 %v4465
    %v4804 = vunpack.c.l.b16 %v4466
    %v4805 = vunpack.c.h.b16 %v4466
    %v4806 = vunpack.c.l.b16 %v4467
    %v4807 = vunpack.c.h.b16 %v4467
    %v4808 = vunpack.c.l.b16 %v4468
    %v4809 = vunpack.c.h.b16 %v4468
    %v4810 = vunpack.c.l.b16 %v4469
    %v4811 = vunpack.c.h.b16 %v4469
    %v4812 = vunpack.c.l.b16 %v4470
    %v4813 = vunpack.c.h.b16 %v4470
    %v4814 = vunpack.c.l.b16 %v4471
    %v4815 = vunpack.c.h.b16 %v4471
    %v4816 = vunpack.c.l.b16 %v4472
    %v4817 = vunpack.c.h.b16 %v4472
    %v4818 = vunpack.c.l.b16 %v4473
    %v4819 = vunpack.c.h.b16 %v4473
    %v4820 = vunpack.c.l.b16 %v4474
    %v4821 = vunpack.c.h.b16 %v4474
    %v4822 = vunpack.c.l.b16 %v4475
    %v4823 = vunpack.c.h.b16 %v4475
    %v4824 = vunpack.c.l.b16 %v4476
    %v4825 = vunpack.c.h.b16 %v4476
    %v4826 = vunpack.c.l.b16 %v4477
    %v4827 = vunpack.c.h.b16 %v4477
    %v4828 = vunpack.c.l.b16 %v4478
    %v4829 = vunpack.c.h.b16 %v4478
    %v4830 = vunpack.c.l.b16 %v4479
    %v4831 = vunpack.c.h.b16 %v4479
    %v4832 = vunpack.c.l.b16 %v4480
    %v4833 = vunpack.c.h.b16 %v4480
    %v4834 = vunpack.c.l.b16 %v4481
    %v4835 = vunpack.c.h.b16 %v4481
    %v4836 = vunpack.c.l.b16 %v4482
    %v4837 = vunpack.c.h.b16 %v4482
    %v4838 = vunpack.c.l.b16 %v4483
    %v4839 = vunpack.c.h.b16 %v4483
    %v4840 = vunpack.c.l.b16 %v4484
    %v4841 = vunpack.c.h.b16 %v4484
    %v4842 = vunpack.c.l.b16 %v4485
    %v4843 = vunpack.c.h.b16 %v4485
    %v4844 = vunpack.c.l.b16 %v4486
    %v4845 = vunpack.c.h.b16 %v4486
    %v4846 = vunpack.c.l.b16 %v4487
    %v4847 = vunpack.c.h.b16 %v4487
    %v4848 = vunpack.c.l.b16 %v4488
    %v4849 = vunpack.c.h.b16 %v4488
    %v4850 = vunpack.c.l.b16 %v4489
    %v4851 = vunpack.c.h.b16 %v4489
    %v4852 = vunpack.c.l.b16 %v4490
    %v4853 = vunpack.c.h.b16 %v4490
    %v4854 = vunpack.c.l.b16 %v4491
    %v4855 = vunpack.c.h.b16 %v4491
    %v4856 = vunpack.c.l.b16 %v4492
    %v4857 = vunpack.c.h.b16 %v4492
    %v4858 = vunpack.c.l.b16 %v4493
    %v4859 = vunpack.c.h.b16 %v4493
    %v4860 = vunpack.c.l.b16 %v4494
    %v4861 = vunpack.c.h.b16 %v4494
    %v4862 = vunpack.c.l.b16 %v4495
    %v4863 = vunpack.c.h.b16 %v4495
    %v4864 = vunpack.c.l.b16 %v4496
    %v4865 = vunpack.c.h.b16 %v4496
    %v4866 = vunpack.c.l.b16 %v4497
    %v4867 = vunpack.c.h.b16 %v4497
    %v4868 = vunpack.c.l.b16 %v4498
    %v4869 = vunpack.c.h.b16 %v4498
    %v4870 = vunpack.c.l.b16 %v4499
    %v4871 = vunpack.c.h.b16 %v4499
    %v4872 = vunpack.c.l.b16 %v4500
    %v4873 = vunpack.c.h.b16 %v4500
    %v4874 = vunpack.c.l.b16 %v4501
    %v4875 = vunpack.c.h.b16 %v4501
    %v4876 = vunpack.c.l.b16 %v4502
    %v4877 = vunpack.c.h.b16 %v4502
    %v4878 = vunpack.c.l.b16 %v4503
    %v4879 = vunpack.c.h.b16 %v4503
    %v4880 = vunpack.c.l.b16 %v4504
    %v4881 = vunpack.c.h.b16 %v4504
    %v4882 = vunpack.c.l.b16 %v4505
    %v4883 = vunpack.c.h.b16 %v4505
    %v4884 = vunpack.c.l.b16 %v4506
    %v4885 = vunpack.c.h.b16 %v4506
    %v4886 = vunpack.c.l.b16 %v4507
    %v4887 = vunpack.c.h.b16 %v4507
    %v4888 = vunpack.c.l.b16 %v4508
    %v4889 = vunpack.c.h.b16 %v4508
    %v4890 = vunpack.c.l.b16 %v4509
    %v4891 = vunpack.c.h.b16 %v4509
    %v4892 = vunpack.c.l.b16 %v4510
    %v4893 = vunpack.c.h.b16 %v4510
    %v4894 = vunpack.c.l.b16 %v4511
    %v4895 = vunpack.c.h.b16 %v4511
    %v4896 = vpack.c.b16 %v4648, %v4640
    %v4897 = vpack.c.b16 %v4649, %v4641
    %v4898 = vpack.c.b16 %v4650, %v4642
    %v4899 = vpack.c.b16 %v4651, %v4643
    %v4900 = vpack.c.b16 %v4652, %v4644
    %v4901 = vpack.c.b16 %v4653, %v4645
    %v4902 = vpack.c.b16 %v4654, %v4646
    %v4903 = vpack.c.b16 %v4655, %v4647
    %v4904 = vpack.c.b16 %v4664, %v4656
    %v4905 = vpack.c.b16 %v4665, %v4657
    %v4906 = vpack.c.b16 %v4666, %v4658
    %v4907 = vpack.c.b16 %v4667, %v4659
    %v4908 = vpack.c.b16 %v4668, %v4660
    %v4909 = vpack.c.b16 %v4669, %v4661
    %v4910 = vpack.c.b16 %v4670, %v4662
    %v4911 = vpack.c.b16 %v4671, %v4663
    %v4912 = vpack.c.b16 %v4680, %v4672
    %v4913 = vpack.c.b16 %v4681, %v4673
    %v4914 = vpack.c.b16 %v4682, %v4674
    %v4915 = vpack.c.b16 %v4683, %v4675
    %v4916 = vpack.c.b16 %v4684, %v4676
    %v4917 = vpack.c.b16 %v4685, %v4677
    %v4918 = vpack.c.b16 %v4686, %v4678
    %v4919 = vpack.c.b16 %v4687, %v4679
    %v4920 = vpack.c.b16 %v4696, %v4688
    %v4921 = vpack.c.b16 %v4697, %v4689
    %v4922 = vpack.c.b16 %v4698, %v4690
    %v4923 = vpack.c.b16 %v4699, %v4691
    %v4924 = vpack.c.b16 %v4700, %v4692
    %v4925 = vpack.c.b16 %v4701, %v4693
    %v4926 = vpack.c.b16 %v4702, %v4694
    %v4927 = vpack.c.b16 %v4703, %v4695
    %v4928 = vpack.c.b16 %v4712, %v4704
    %v4929 = vpack.c.b16 %v4713, %v4705
    %v4930 = vpack.c.b16 %v4714, %v4706
    %v4931 = vpack.c.b16 %v4715, %v4707
    %v4932 = vpack.c.b16 %v4716, %v4708
    %v4933 = vpack.c.b16 %v4717, %v4709
    %v4934 = vpack.c.b16 %v4718, %v4710
    %v4935 = vpack.c.b16 %v4719, %v4711
    %v4936 = vpack.c.b16 %v4728, %v4720
    %v4937 = vpack.c.b16 %v4729, %v4721
    %v4938 = vpack.c.b16 %v4730, %v4722
    %v4939 = vpack.c.b16 %v4731, %v4723
    %v4940 = vpack.c.b16 %v4732, %v4724
    %v4941 = vpack.c.b16 %v4733, %v4725
    %v4942 = vpack.c.b16 %v4734, %v4726
    %v4943 = vpack.c.b16 %v4735, %v4727
    %v4944 = vpack.c.b16 %v4744, %v4736
    %v4945 = vpack.c.b16 %v4745, %v4737
    %v4946 = vpack.c.b16 %v4746, %v4738
    %v4947 = vpack.c.b16 %v4747, %v4739
    %v4948 = vpack.c.b16 %v4748, %v4740
    %v4949 = vpack.c.b16 %v4749, %v4741
    %v4950 = vpack.c.b16 %v4750, %v4742
    %v4951 = vpack.c.b16 %v4751, %v4743
    %v4952 = vpack.c.b16 %v4760, %v4752
    %v4953 = vpack.c.b16 %v4761, %v4753
    %v4954 = vpack.c.b16 %v4762, %v4754
    %v4955 = vpack.c.b16 %v4763, %v4755
    %v4956 = vpack.c.b16 %v4764, %v4756
    %v4957 = vpack.c.b16 %v4765, %v4757
    %v4958 = vpack.c.b16 %v4766, %v4758
    %v4959 = vpack.c.b16 %v4767, %v4759
    %v4960 = vpack.c.b16 %v4776, %v4768
    %v4961 = vpack.c.b16 %v4777, %v4769
    %v4962 = vpack.c.b16 %v4778, %v4770
    %v4963 = vpack.c.b16 %v4779, %v4771
    %v4964 = vpack.c.b16 %v4780, %v4772
    %v4965 = vpack.c.b16 %v4781, %v4773
    %v4966 = vpack.c.b16 %v4782, %v4774
    %v4967 = vpack.c.b16 %v4783, %v4775
    %v4968 = vpack.c.b16 %v4792, %v4784
    %v4969 = vpack.c.b16 %v4793, %v4785
    %v4970 = vpack.c.b16 %v4794, %v4786
    %v4971 = vpack.c.b16 %v4795, %v4787
    %v4972 = vpack.c.b16 %v4796, %v4788
    %v4973 = vpack.c.b16 %v4797, %v4789
    %v4974 = vpack.c.b16 %v4798, %v4790
    %v4975 = vpack.c.b16 %v4799, %v4791
    %v4976 = vpack.c.b16 %v4808, %v4800
    %v4977 = vpack.c.b16 %v4809, %v4801
    %v4978 = vpack.c.b16 %v4810, %v4802
    %v4979 = vpack.c.b16 %v4811, %v4803
    %v4980 = vpack.c.b16 %v4812, %v4804
    %v4981 = vpack.c.b16 %v4813, %v4805
    %v4982 = vpack.c.b16 %v4814, %v4806
    %v4983 = vpack.c.b16 %v4815, %v4807
    %v4984 = vpack.c.b16 %v4824, %v4816
    %v4985 = vpack.c.b16 %v4825, %v4817
    %v4986 = vpack.c.b16 %v4826, %v4818
    %v4987 = vpack.c.b16 %v4827, %v4819
    %v4988 = vpack.c.b16 %v4828, %v4820
    %v4989 = vpack.c.b16 %v4829, %v4821
    %v4990 = vpack.c.b16 %v4830, %v4822
    %v4991 = vpack.c.b16 %v4831, %v4823
    %v4992 = vpack.c.b16 %v4840, %v4832
    %v4993 = vpack.c.b16 %v4841, %v4833
    %v4994 = vpack.c.b16 %v4842, %v4834
    %v4995 = vpack.c.b16 %v4843, %v4835
    %v4996 = vpack.c.b16 %v4844, %v4836
    %v4997 = vpack.c.b16 %v4845, %v4837
    %v4998 = vpack.c.b16 %v4846, %v4838
    %v4999 = vpack.c.b16 %v4847, %v4839
    %v5000 = vpack.c.b16 %v4856, %v4848
    %v5001 = vpack.c.b16 %v4857, %v4849
    %v5002 = vpack.c.b16 %v4858, %v4850
    %v5003 = vpack.c.b16 %v4859, %v4851
    %v5004 = vpack.c.b16 %v4860, %v4852
    %v5005 = vpack.c.b16 %v4861, %v4853
    %v5006 = vpack.c.b16 %v4862, %v4854
    %v5007 = vpack.c.b16 %v4863, %v4855
    %v5008 = vpack.c.b16 %v4872, %v4864
    %v5009 = vpack.c.b16 %v4873, %v4865
    %v5010 = vpack.c.b16 %v4874, %v4866
    %v5011 = vpack.c.b16 %v4875, %v4867
    %v5012 = vpack.c.b16 %v4876, %v4868
    %v5013 = vpack.c.b16 %v4877, %v4869
    %v5014 = vpack.c.b16 %v4878, %v4870
    %v5015 = vpack.c.b16 %v4879, %v4871
    %v5016 = vpack.c.b16 %v4888, %v4880
    %v5017 = vpack.c.b16 %v4889, %v4881
    %v5018 = vpack.c.b16 %v4890, %v4882
    %v5019 = vpack.c.b16 %v4891, %v4883
    %v5020 = vpack.c.b16 %v4892, %v4884
    %v5021 = vpack.c.b16 %v4893, %v4885
    %v5022 = vpack.c.b16 %v4894, %v4886
    %v5023 = vpack.c.b16 %v4895, %v4887
    %5152 = vmatpush.bf16.msra.mxu0 %v4952
    %5153 = vmatpush.bf16.msra.mxu0 %v4944
    %5154 = vmatpush.bf16.msra.mxu0 %v4936
    %5155 = vmatpush.bf16.msra.mxu0 %v4928
    %5156 = vmatpush.bf16.msra.mxu0 %v4920
    %5157 = vmatpush.bf16.msra.mxu0 %v4912
    %5158 = vmatpush.bf16.msra.mxu0 %v4904
    %5159 = vmatpush.bf16.msra.mxu0 %v4896
    %5160 = vmatmul.bf16.gmra.mxu0 %v4382
    %v5161 = vpop.f32.mrf.mxu0
    %v5162 = vadd.f32 0.0, %v5161
    %v5163 = vpop.f32.mrf.mxu0
    %5164 = vdwg.mxu0
    %5165 = vmatpush.bf16.msra.mxu0 %v5016
    %5166 = vmatpush.bf16.msra.mxu0 %v5008
    %5167 = vmatpush.bf16.msra.mxu0 %v5000
    %5168 = vmatpush.bf16.msra.mxu0 %v4992
    %5169 = vmatpush.bf16.msra.mxu0 %v4984
    %5170 = vmatpush.bf16.msra.mxu0 %v4976
    %5171 = vmatpush.bf16.msra.mxu0 %v4968
    %5172 = vmatpush.bf16.msra.mxu0 %v4960
    %5173 = vmatmul.bf16.gmra.mxu0 %v4383
    %v5174 = vpop.f32.mrf.mxu0
    %v5175 = vadd.f32 %v5162, %v5174
    %v5176 = vpop.f32.mrf.mxu0
    %5177 = vdwg.mxu0
    %5178 = vmatpush.bf16.msra.mxu0 %v4953
    %5179 = vmatpush.bf16.msra.mxu0 %v4945
    %5180 = vmatpush.bf16.msra.mxu0 %v4937
    %5181 = vmatpush.bf16.msra.mxu0 %v4929
    %5182 = vmatpush.bf16.msra.mxu0 %v4921
    %5183 = vmatpush.bf16.msra.mxu0 %v4913
    %5184 = vmatpush.bf16.msra.mxu0 %v4905
    %5185 = vmatpush.bf16.msra.mxu0 %v4897
    %5186 = vmatmul.bf16.gmra.mxu0 %v4382
    %v5187 = vpop.f32.mrf.mxu0
    %v5188 = vadd.f32 0.0, %v5187
    %v5189 = vpop.f32.mrf.mxu0
    %5190 = vdwg.mxu0
    %5191 = vmatpush.bf16.msra.mxu0 %v5017
    %5192 = vmatpush.bf16.msra.mxu0 %v5009
    %5193 = vmatpush.bf16.msra.mxu0 %v5001
    %5194 = vmatpush.bf16.msra.mxu0 %v4993
    %5195 = vmatpush.bf16.msra.mxu0 %v4985
    %5196 = vmatpush.bf16.msra.mxu0 %v4977
    %5197 = vmatpush.bf16.msra.mxu0 %v4969
    %5198 = vmatpush.bf16.msra.mxu0 %v4961
    %5199 = vmatmul.bf16.gmra.mxu0 %v4383
    %v5200 = vpop.f32.mrf.mxu0
    %v5201 = vadd.f32 %v5188, %v5200
    %v5202 = vpop.f32.mrf.mxu0
    %5203 = vdwg.mxu0
    %5204 = vmatpush.bf16.msra.mxu0 %v4954
    %5205 = vmatpush.bf16.msra.mxu0 %v4946
    %5206 = vmatpush.bf16.msra.mxu0 %v4938
    %5207 = vmatpush.bf16.msra.mxu0 %v4930
    %5208 = vmatpush.bf16.msra.mxu0 %v4922
    %5209 = vmatpush.bf16.msra.mxu0 %v4914
    %5210 = vmatpush.bf16.msra.mxu0 %v4906
    %5211 = vmatpush.bf16.msra.mxu0 %v4898
    %5212 = vmatmul.bf16.gmra.mxu0 %v4382
    %v5213 = vpop.f32.mrf.mxu0
    %v5214 = vadd.f32 0.0, %v5213
    %v5215 = vpop.f32.mrf.mxu0
    %5216 = vdwg.mxu0
    %5217 = vmatpush.bf16.msra.mxu0 %v5018
    %5218 = vmatpush.bf16.msra.mxu0 %v5010
    %5219 = vmatpush.bf16.msra.mxu0 %v5002
    %5220 = vmatpush.bf16.msra.mxu0 %v4994
    %5221 = vmatpush.bf16.msra.mxu0 %v4986
    %5222 = vmatpush.bf16.msra.mxu0 %v4978
    %5223 = vmatpush.bf16.msra.mxu0 %v4970
    %5224 = vmatpush.bf16.msra.mxu0 %v4962
    %5225 = vmatmul.bf16.gmra.mxu0 %v4383
    %v5226 = vpop.f32.mrf.mxu0
    %v5227 = vadd.f32 %v5214, %v5226
    %v5228 = vpop.f32.mrf.mxu0
    %5229 = vdwg.mxu0
    %5230 = vmatpush.bf16.msra.mxu0 %v4955
    %5231 = vmatpush.bf16.msra.mxu0 %v4947
    %5232 = vmatpush.bf16.msra.mxu0 %v4939
    %5233 = vmatpush.bf16.msra.mxu0 %v4931
    %5234 = vmatpush.bf16.msra.mxu0 %v4923
    %5235 = vmatpush.bf16.msra.mxu0 %v4915
    %5236 = vmatpush.bf16.msra.mxu0 %v4907
    %5237 = vmatpush.bf16.msra.mxu0 %v4899
    %5238 = vmatmul.bf16.gmra.mxu0 %v4382
    %v5239 = vpop.f32.mrf.mxu0
    %v5240 = vadd.f32 0.0, %v5239
    %v5241 = vpop.f32.mrf.mxu0
    %5242 = vdwg.mxu0
    %5243 = vmatpush.bf16.msra.mxu0 %v5019
    %5244 = vmatpush.bf16.msra.mxu0 %v5011
    %5245 = vmatpush.bf16.msra.mxu0 %v5003
    %5246 = vmatpush.bf16.msra.mxu0 %v4995
    %5247 = vmatpush.bf16.msra.mxu0 %v4987
    %5248 = vmatpush.bf16.msra.mxu0 %v4979
    %5249 = vmatpush.bf16.msra.mxu0 %v4971
    %5250 = vmatpush.bf16.msra.mxu0 %v4963
    %5251 = vmatmul.bf16.gmra.mxu0 %v4383
    %v5252 = vpop.f32.mrf.mxu0
    %v5253 = vadd.f32 %v5240, %v5252
    %v5254 = vpop.f32.mrf.mxu0
    %5255 = vdwg.mxu0
    %5256 = vmatpush.bf16.msra.mxu0 %v4956
    %5257 = vmatpush.bf16.msra.mxu0 %v4948
    %5258 = vmatpush.bf16.msra.mxu0 %v4940
    %5259 = vmatpush.bf16.msra.mxu0 %v4932
    %5260 = vmatpush.bf16.msra.mxu0 %v4924
    %5261 = vmatpush.bf16.msra.mxu0 %v4916
    %5262 = vmatpush.bf16.msra.mxu0 %v4908
    %5263 = vmatpush.bf16.msra.mxu0 %v4900
    %5264 = vmatmul.bf16.gmra.mxu0 %v4382
    %v5265 = vpop.f32.mrf.mxu0
    %v5266 = vadd.f32 0.0, %v5265
    %v5267 = vpop.f32.mrf.mxu0
    %5268 = vdwg.mxu0
    %5269 = vmatpush.bf16.msra.mxu0 %v5020
    %5270 = vmatpush.bf16.msra.mxu0 %v5012
    %5271 = vmatpush.bf16.msra.mxu0 %v5004
    %5272 = vmatpush.bf16.msra.mxu0 %v4996
    %5273 = vmatpush.bf16.msra.mxu0 %v4988
    %5274 = vmatpush.bf16.msra.mxu0 %v4980
    %5275 = vmatpush.bf16.msra.mxu0 %v4972
    %5276 = vmatpush.bf16.msra.mxu0 %v4964
    %5277 = vmatmul.bf16.gmra.mxu0 %v4383
    %v5278 = vpop.f32.mrf.mxu0
    %v5279 = vadd.f32 %v5266, %v5278
    %v5280 = vpop.f32.mrf.mxu0
    %5281 = vdwg.mxu0
    %5282 = vmatpush.bf16.msra.mxu0 %v4957
    %5283 = vmatpush.bf16.msra.mxu0 %v4949
    %5284 = vmatpush.bf16.msra.mxu0 %v4941
    %5285 = vmatpush.bf16.msra.mxu0 %v4933
    %5286 = vmatpush.bf16.msra.mxu0 %v4925
    %5287 = vmatpush.bf16.msra.mxu0 %v4917
    %5288 = vmatpush.bf16.msra.mxu0 %v4909
    %5289 = vmatpush.bf16.msra.mxu0 %v4901
    %5290 = vmatmul.bf16.gmra.mxu0 %v4382
    %v5291 = vpop.f32.mrf.mxu0
    %v5292 = vadd.f32 0.0, %v5291
    %v5293 = vpop.f32.mrf.mxu0
    %5294 = vdwg.mxu0
    %5295 = vmatpush.bf16.msra.mxu0 %v5021
    %5296 = vmatpush.bf16.msra.mxu0 %v5013
    %5297 = vmatpush.bf16.msra.mxu0 %v5005
    %5298 = vmatpush.bf16.msra.mxu0 %v4997
    %5299 = vmatpush.bf16.msra.mxu0 %v4989
    %5300 = vmatpush.bf16.msra.mxu0 %v4981
    %5301 = vmatpush.bf16.msra.mxu0 %v4973
    %5302 = vmatpush.bf16.msra.mxu0 %v4965
    %5303 = vmatmul.bf16.gmra.mxu0 %v4383
    %v5304 = vpop.f32.mrf.mxu0
    %v5305 = vadd.f32 %v5292, %v5304
    %v5306 = vpop.f32.mrf.mxu0
    %5307 = vdwg.mxu0
    %5308 = vmatpush.bf16.msra.mxu0 %v4958
    %5309 = vmatpush.bf16.msra.mxu0 %v4950
    %5310 = vmatpush.bf16.msra.mxu0 %v4942
    %5311 = vmatpush.bf16.msra.mxu0 %v4934
    %5312 = vmatpush.bf16.msra.mxu0 %v4926
    %5313 = vmatpush.bf16.msra.mxu0 %v4918
    %5314 = vmatpush.bf16.msra.mxu0 %v4910
    %5315 = vmatpush.bf16.msra.mxu0 %v4902
    %5316 = vmatmul.bf16.gmra.mxu0 %v4382
    %v5317 = vpop.f32.mrf.mxu0
    %v5318 = vadd.f32 0.0, %v5317
    %v5319 = vpop.f32.mrf.mxu0
    %5320 = vdwg.mxu0
    %5321 = vmatpush.bf16.msra.mxu0 %v5022
    %5322 = vmatpush.bf16.msra.mxu0 %v5014
    %5323 = vmatpush.bf16.msra.mxu0 %v5006
    %5324 = vmatpush.bf16.msra.mxu0 %v4998
    %5325 = vmatpush.bf16.msra.mxu0 %v4990
    %5326 = vmatpush.bf16.msra.mxu0 %v4982
    %5327 = vmatpush.bf16.msra.mxu0 %v4974
    %5328 = vmatpush.bf16.msra.mxu0 %v4966
    %5329 = vmatmul.bf16.gmra.mxu0 %v4383
    %v5330 = vpop.f32.mrf.mxu0
    %v5331 = vadd.f32 %v5318, %v5330
    %v5332 = vpop.f32.mrf.mxu0
    %5333 = vdwg.mxu0
    %5334 = vmatpush.bf16.msra.mxu0 %v4959
    %5335 = vmatpush.bf16.msra.mxu0 %v4951
    %5336 = vmatpush.bf16.msra.mxu0 %v4943
    %5337 = vmatpush.bf16.msra.mxu0 %v4935
    %5338 = vmatpush.bf16.msra.mxu0 %v4927
    %5339 = vmatpush.bf16.msra.mxu0 %v4919
    %5340 = vmatpush.bf16.msra.mxu0 %v4911
    %5341 = vmatpush.bf16.msra.mxu0 %v4903
    %5342 = vmatmul.bf16.gmra.mxu0 %v4382
    %v5343 = vpop.f32.mrf.mxu0
    %v5344 = vadd.f32 0.0, %v5343
    %v5345 = vpop.f32.mrf.mxu0
    %5346 = vdwg.mxu0
    %5347 = vmatpush.bf16.msra.mxu0 %v5023
    %5348 = vmatpush.bf16.msra.mxu0 %v5015
    %5349 = vmatpush.bf16.msra.mxu0 %v5007
    %5350 = vmatpush.bf16.msra.mxu0 %v4999
    %5351 = vmatpush.bf16.msra.mxu0 %v4991
    %5352 = vmatpush.bf16.msra.mxu0 %v4983
    %5353 = vmatpush.bf16.msra.mxu0 %v4975
    %5354 = vmatpush.bf16.msra.mxu0 %v4967
    %5355 = vmatmul.bf16.gmra.mxu0 %v4383
    %v5356 = vpop.f32.mrf.mxu0
    %v5357 = vadd.f32 %v5344, %v5356
    %v5358 = vpop.f32.mrf.mxu0
    %5359 = vdwg.mxu0
    %v5360 = vadd.f32 %v821, %v5175
    %v5361 = vadd.f32 %v850, %v5201
    %v5362 = vadd.f32 %v879, %v5227
    %v5363 = vadd.f32 %v908, %v5253
    %v5364 = vadd.f32 %v937, %v5279
    %v5365 = vadd.f32 %v966, %v5305
    %v5366 = vadd.f32 %v995, %v5331
    %v5367 = vadd.f32 %v1024, %v5357
    %v5368 = vxor.u32 %v5360, 2147483648
    %v5369 = vxor.u32 %v5361, 2147483648
    %v5370 = vmul.f32 %v5368, 1.442695
    %v5371 = vpow.pop %v5370
    %v5372 = vmul.f32 %v5369, 1.442695
    %v5373 = vpow.pop %v5372
    %v5374 = vadd.f32 %v5371, 1.0
    %v5375 = vadd.f32 %v5373, 1.0
    %v5376 = vrcp.pop %v5374
    %v5377 = vmul.f32 %v5374, %v5376
    %v5378 = vsub.f32 1.0, %v5377
    %v5379 = vmul.f32 %v5376, %v5378
    %v5380 = vadd.f32 %v5376, %v5379
    %vm5381 = vweird.f32 %v5374
    %vm5382 = vweird.f32 %v5376
    %vm5383 = vmor %vm5381, %vm5382
    %v5384 = vsel %vm5383, %v5376, %v5380
    %v5385 = vand.u32 2147483647, %v5374
    %vm5386 = vcmp.eq.f32.partialorder %v5385, 8.507059e+37
    %v5387 = vand.u32 %v5374, 2147483648
    %v5388 = vor.u32 1.1754944e-38, %v5387
    %v5389 = vsel %vm5386, %v5388, %v5384
    %v5390 = vmul.f32 1.0, %v5389
    %v5391 = vrcp.pop %v5375
    %v5392 = vmul.f32 %v5375, %v5391
    %v5393 = vsub.f32 1.0, %v5392
    %v5394 = vmul.f32 %v5391, %v5393
    %v5395 = vadd.f32 %v5391, %v5394
    %vm5396 = vweird.f32 %v5375
    %vm5397 = vweird.f32 %v5391
    %vm5398 = vmor %vm5396, %vm5397
    %v5399 = vsel %vm5398, %v5391, %v5395
    %v5400 = vand.u32 2147483647, %v5375
    %vm5401 = vcmp.eq.f32.partialorder %v5400, 8.507059e+37
    %v5402 = vand.u32 %v5375, 2147483648
    %v5403 = vor.u32 1.1754944e-38, %v5402
    %v5404 = vsel %vm5401, %v5403, %v5399
    %v5405 = vmul.f32 1.0, %v5404
    %v5406 = vxor.u32 %v5362, 2147483648
    %v5407 = vxor.u32 %v5363, 2147483648
    %v5408 = vmul.f32 %v5406, 1.442695
    %v5409 = vpow.pop %v5408
    %v5410 = vmul.f32 %v5407, 1.442695
    %v5411 = vpow.pop %v5410
    %v5412 = vadd.f32 %v5409, 1.0
    %v5413 = vadd.f32 %v5411, 1.0
    %v5414 = vrcp.pop %v5412
    %v5415 = vmul.f32 %v5412, %v5414
    %v5416 = vsub.f32 1.0, %v5415
    %v5417 = vmul.f32 %v5414, %v5416
    %v5418 = vadd.f32 %v5414, %v5417
    %vm5419 = vweird.f32 %v5412
    %vm5420 = vweird.f32 %v5414
    %vm5421 = vmor %vm5419, %vm5420
    %v5422 = vsel %vm5421, %v5414, %v5418
    %v5423 = vand.u32 2147483647, %v5412
    %vm5424 = vcmp.eq.f32.partialorder %v5423, 8.507059e+37
    %v5425 = vand.u32 %v5412, 2147483648
    %v5426 = vor.u32 1.1754944e-38, %v5425
    %v5427 = vsel %vm5424, %v5426, %v5422
    %v5428 = vmul.f32 1.0, %v5427
    %v5429 = vrcp.pop %v5413
    %v5430 = vmul.f32 %v5413, %v5429
    %v5431 = vsub.f32 1.0, %v5430
    %v5432 = vmul.f32 %v5429, %v5431
    %v5433 = vadd.f32 %v5429, %v5432
    %vm5434 = vweird.f32 %v5413
    %vm5435 = vweird.f32 %v5429
    %vm5436 = vmor %vm5434, %vm5435
    %v5437 = vsel %vm5436, %v5429, %v5433
    %v5438 = vand.u32 2147483647, %v5413
    %vm5439 = vcmp.eq.f32.partialorder %v5438, 8.507059e+37
    %v5440 = vand.u32 %v5413, 2147483648
    %v5441 = vor.u32 1.1754944e-38, %v5440
    %v5442 = vsel %vm5439, %v5441, %v5437
    %v5443 = vmul.f32 1.0, %v5442
    %v5444 = vtanh.pop %v5364
    %v5445 = vtanh.pop %v5365
    %v5446 = vxor.u32 %v5366, 2147483648
    %v5447 = vxor.u32 %v5367, 2147483648
    %v5448 = vmul.f32 %v5446, 1.442695
    %v5449 = vpow.pop %v5448
    %v5450 = vmul.f32 %v5447, 1.442695
    %v5451 = vpow.pop %v5450
    %v5452 = vadd.f32 %v5449, 1.0
    %v5453 = vadd.f32 %v5451, 1.0
    %v5454 = vrcp.pop %v5452
    %v5455 = vmul.f32 %v5452, %v5454
    %v5456 = vsub.f32 1.0, %v5455
    %v5457 = vmul.f32 %v5454, %v5456
    %v5458 = vadd.f32 %v5454, %v5457
    %vm5459 = vweird.f32 %v5452
    %vm5460 = vweird.f32 %v5454
    %vm5461 = vmor %vm5459, %vm5460
    %v5462 = vsel %vm5461, %v5454, %v5458
    %v5463 = vand.u32 2147483647, %v5452
    %vm5464 = vcmp.eq.f32.partialorder %v5463, 8.507059e+37
    %v5465 = vand.u32 %v5452, 2147483648
    %v5466 = vor.u32 1.1754944e-38, %v5465
    %v5467 = vsel %vm5464, %v5466, %v5462
    %v5468 = vmul.f32 1.0, %v5467
    %v5469 = vrcp.pop %v5453
    %v5470 = vmul.f32 %v5453, %v5469
    %v5471 = vsub.f32 1.0, %v5470
    %v5472 = vmul.f32 %v5469, %v5471
    %v5473 = vadd.f32 %v5469, %v5472
    %vm5474 = vweird.f32 %v5453
    %vm5475 = vweird.f32 %v5469
    %vm5476 = vmor %vm5474, %vm5475
    %v5477 = vsel %vm5476, %v5469, %v5473
    %v5478 = vand.u32 2147483647, %v5453
    %vm5479 = vcmp.eq.f32.partialorder %v5478, 8.507059e+37
    %v5480 = vand.u32 %v5453, 2147483648
    %v5481 = vor.u32 1.1754944e-38, %v5480
    %v5482 = vsel %vm5479, %v5481, %v5477
    %v5483 = vmul.f32 1.0, %v5482
    %v5484 = vmul.f32 %v5428, %v4374
    %v5485 = vmul.f32 %v5443, %v4375
    %v5486 = vmul.f32 %v5390, %v5444
    %v5487 = vmul.f32 %v5405, %v5445
    %v5488 = vadd.f32 %v5484, %v5486
    %v5489 = vadd.f32 %v5485, %v5487
    %v5490 = vtanh.pop %v5488
    %v5491 = vtanh.pop %v5489
    %v5492 = vmul.f32 %v5468, %v5490
    %v5493 = vmul.f32 %v5483, %v5491
    %5494 = vst [vmem:[#allocation2 + $0x30] sm:$0xff] %v5492
    %5495 = vst [vmem:[#allocation2 + $0x38] sm:$0xff] %v5493
    %v5496 = vpack.c.bf16 %v5492, %v5492
    %v5497 = vpack.c.bf16 %v5493, %v5493
    %v5498 = vld [vmem:[#allocation10] sm:$0xff]
    %v5499 = vld [vmem:[#allocation10 + $0x8] sm:$0xff]
    %v5500 = vld [vmem:[#allocation10 + $0x10] sm:$0xff]
    %v5501 = vld [vmem:[#allocation10 + $0x18] sm:$0xff]
    %v5502 = vld [vmem:[#allocation10 + $0x20] sm:$0xff]
    %v5503 = vld [vmem:[#allocation10 + $0x28] sm:$0xff]
    %v5504 = vld [vmem:[#allocation10 + $0x30] sm:$0xff]
    %v5505 = vld [vmem:[#allocation10 + $0x38] sm:$0xff]
    %v5506 = vld [vmem:[#allocation10 + $0x40] sm:$0xff]
    %v5507 = vld [vmem:[#allocation10 + $0x48] sm:$0xff]
    %v5508 = vld [vmem:[#allocation10 + $0x50] sm:$0xff]
    %v5509 = vld [vmem:[#allocation10 + $0x58] sm:$0xff]
    %v5510 = vld [vmem:[#allocation10 + $0x60] sm:$0xff]
    %v5511 = vld [vmem:[#allocation10 + $0x68] sm:$0xff]
    %v5512 = vld [vmem:[#allocation10 + $0x70] sm:$0xff]
    %v5513 = vld [vmem:[#allocation10 + $0x78] sm:$0xff]
    %v5514 = vld [vmem:[#allocation10 + $0x80] sm:$0xff]
    %v5515 = vld [vmem:[#allocation10 + $0x88] sm:$0xff]
    %v5516 = vld [vmem:[#allocation10 + $0x90] sm:$0xff]
    %v5517 = vld [vmem:[#allocation10 + $0x98] sm:$0xff]
    %v5518 = vld [vmem:[#allocation10 + $0xa0] sm:$0xff]
    %v5519 = vld [vmem:[#allocation10 + $0xa8] sm:$0xff]
    %v5520 = vld [vmem:[#allocation10 + $0xb0] sm:$0xff]
    %v5521 = vld [vmem:[#allocation10 + $0xb8] sm:$0xff]
    %v5522 = vld [vmem:[#allocation10 + $0xc0] sm:$0xff]
    %v5523 = vld [vmem:[#allocation10 + $0xc8] sm:$0xff]
    %v5524 = vld [vmem:[#allocation10 + $0xd0] sm:$0xff]
    %v5525 = vld [vmem:[#allocation10 + $0xd8] sm:$0xff]
    %v5526 = vld [vmem:[#allocation10 + $0xe0] sm:$0xff]
    %v5527 = vld [vmem:[#allocation10 + $0xe8] sm:$0xff]
    %v5528 = vld [vmem:[#allocation10 + $0xf0] sm:$0xff]
    %v5529 = vld [vmem:[#allocation10 + $0xf8] sm:$0xff]
    %v5530 = vld [vmem:[#allocation10 + $0x100] sm:$0xff]
    %v5531 = vld [vmem:[#allocation10 + $0x108] sm:$0xff]
    %v5532 = vld [vmem:[#allocation10 + $0x110] sm:$0xff]
    %v5533 = vld [vmem:[#allocation10 + $0x118] sm:$0xff]
    %v5534 = vld [vmem:[#allocation10 + $0x120] sm:$0xff]
    %v5535 = vld [vmem:[#allocation10 + $0x128] sm:$0xff]
    %v5536 = vld [vmem:[#allocation10 + $0x130] sm:$0xff]
    %v5537 = vld [vmem:[#allocation10 + $0x138] sm:$0xff]
    %v5538 = vld [vmem:[#allocation10 + $0x140] sm:$0xff]
    %v5539 = vld [vmem:[#allocation10 + $0x148] sm:$0xff]
    %v5540 = vld [vmem:[#allocation10 + $0x150] sm:$0xff]
    %v5541 = vld [vmem:[#allocation10 + $0x158] sm:$0xff]
    %v5542 = vld [vmem:[#allocation10 + $0x160] sm:$0xff]
    %v5543 = vld [vmem:[#allocation10 + $0x168] sm:$0xff]
    %v5544 = vld [vmem:[#allocation10 + $0x170] sm:$0xff]
    %v5545 = vld [vmem:[#allocation10 + $0x178] sm:$0xff]
    %v5546 = vld [vmem:[#allocation10 + $0x180] sm:$0xff]
    %v5547 = vld [vmem:[#allocation10 + $0x188] sm:$0xff]
    %v5548 = vld [vmem:[#allocation10 + $0x190] sm:$0xff]
    %v5549 = vld [vmem:[#allocation10 + $0x198] sm:$0xff]
    %v5550 = vld [vmem:[#allocation10 + $0x1a0] sm:$0xff]
    %v5551 = vld [vmem:[#allocation10 + $0x1a8] sm:$0xff]
    %v5552 = vld [vmem:[#allocation10 + $0x1b0] sm:$0xff]
    %v5553 = vld [vmem:[#allocation10 + $0x1b8] sm:$0xff]
    %v5554 = vld [vmem:[#allocation10 + $0x1c0] sm:$0xff]
    %v5555 = vld [vmem:[#allocation10 + $0x1c8] sm:$0xff]
    %v5556 = vld [vmem:[#allocation10 + $0x1d0] sm:$0xff]
    %v5557 = vld [vmem:[#allocation10 + $0x1d8] sm:$0xff]
    %v5558 = vld [vmem:[#allocation10 + $0x1e0] sm:$0xff]
    %v5559 = vld [vmem:[#allocation10 + $0x1e8] sm:$0xff]
    %v5560 = vld [vmem:[#allocation10 + $0x1f0] sm:$0xff]
    %v5561 = vld [vmem:[#allocation10 + $0x1f8] sm:$0xff]
    %v5562 = vld [vmem:[#allocation10 + $0x200] sm:$0xff]
    %v5563 = vld [vmem:[#allocation10 + $0x208] sm:$0xff]
    %v5564 = vld [vmem:[#allocation10 + $0x210] sm:$0xff]
    %v5565 = vld [vmem:[#allocation10 + $0x218] sm:$0xff]
    %v5566 = vld [vmem:[#allocation10 + $0x220] sm:$0xff]
    %v5567 = vld [vmem:[#allocation10 + $0x228] sm:$0xff]
    %v5568 = vld [vmem:[#allocation10 + $0x230] sm:$0xff]
    %v5569 = vld [vmem:[#allocation10 + $0x238] sm:$0xff]
    %v5570 = vld [vmem:[#allocation10 + $0x240] sm:$0xff]
    %v5571 = vld [vmem:[#allocation10 + $0x248] sm:$0xff]
    %v5572 = vld [vmem:[#allocation10 + $0x250] sm:$0xff]
    %v5573 = vld [vmem:[#allocation10 + $0x258] sm:$0xff]
    %v5574 = vld [vmem:[#allocation10 + $0x260] sm:$0xff]
    %v5575 = vld [vmem:[#allocation10 + $0x268] sm:$0xff]
    %v5576 = vld [vmem:[#allocation10 + $0x270] sm:$0xff]
    %v5577 = vld [vmem:[#allocation10 + $0x278] sm:$0xff]
    %v5578 = vld [vmem:[#allocation10 + $0x280] sm:$0xff]
    %v5579 = vld [vmem:[#allocation10 + $0x288] sm:$0xff]
    %v5580 = vld [vmem:[#allocation10 + $0x290] sm:$0xff]
    %v5581 = vld [vmem:[#allocation10 + $0x298] sm:$0xff]
    %v5582 = vld [vmem:[#allocation10 + $0x2a0] sm:$0xff]
    %v5583 = vld [vmem:[#allocation10 + $0x2a8] sm:$0xff]
    %v5584 = vld [vmem:[#allocation10 + $0x2b0] sm:$0xff]
    %v5585 = vld [vmem:[#allocation10 + $0x2b8] sm:$0xff]
    %v5586 = vld [vmem:[#allocation10 + $0x2c0] sm:$0xff]
    %v5587 = vld [vmem:[#allocation10 + $0x2c8] sm:$0xff]
    %v5588 = vld [vmem:[#allocation10 + $0x2d0] sm:$0xff]
    %v5589 = vld [vmem:[#allocation10 + $0x2d8] sm:$0xff]
    %v5590 = vld [vmem:[#allocation10 + $0x2e0] sm:$0xff]
    %v5591 = vld [vmem:[#allocation10 + $0x2e8] sm:$0xff]
    %v5592 = vld [vmem:[#allocation10 + $0x2f0] sm:$0xff]
    %v5593 = vld [vmem:[#allocation10 + $0x2f8] sm:$0xff]
    %v5594 = vld [vmem:[#allocation10 + $0x300] sm:$0xff]
    %v5595 = vld [vmem:[#allocation10 + $0x308] sm:$0xff]
    %v5596 = vld [vmem:[#allocation10 + $0x310] sm:$0xff]
    %v5597 = vld [vmem:[#allocation10 + $0x318] sm:$0xff]
    %v5598 = vld [vmem:[#allocation10 + $0x320] sm:$0xff]
    %v5599 = vld [vmem:[#allocation10 + $0x328] sm:$0xff]
    %v5600 = vld [vmem:[#allocation10 + $0x330] sm:$0xff]
    %v5601 = vld [vmem:[#allocation10 + $0x338] sm:$0xff]
    %v5602 = vld [vmem:[#allocation10 + $0x340] sm:$0xff]
    %v5603 = vld [vmem:[#allocation10 + $0x348] sm:$0xff]
    %v5604 = vld [vmem:[#allocation10 + $0x350] sm:$0xff]
    %v5605 = vld [vmem:[#allocation10 + $0x358] sm:$0xff]
    %v5606 = vld [vmem:[#allocation10 + $0x360] sm:$0xff]
    %v5607 = vld [vmem:[#allocation10 + $0x368] sm:$0xff]
    %v5608 = vld [vmem:[#allocation10 + $0x370] sm:$0xff]
    %v5609 = vld [vmem:[#allocation10 + $0x378] sm:$0xff]
    %v5610 = vld [vmem:[#allocation10 + $0x380] sm:$0xff]
    %v5611 = vld [vmem:[#allocation10 + $0x388] sm:$0xff]
    %v5612 = vld [vmem:[#allocation10 + $0x390] sm:$0xff]
    %v5613 = vld [vmem:[#allocation10 + $0x398] sm:$0xff]
    %v5614 = vld [vmem:[#allocation10 + $0x3a0] sm:$0xff]
    %v5615 = vld [vmem:[#allocation10 + $0x3a8] sm:$0xff]
    %v5616 = vld [vmem:[#allocation10 + $0x3b0] sm:$0xff]
    %v5617 = vld [vmem:[#allocation10 + $0x3b8] sm:$0xff]
    %v5618 = vld [vmem:[#allocation10 + $0x3c0] sm:$0xff]
    %v5619 = vld [vmem:[#allocation10 + $0x3c8] sm:$0xff]
    %v5620 = vld [vmem:[#allocation10 + $0x3d0] sm:$0xff]
    %v5621 = vld [vmem:[#allocation10 + $0x3d8] sm:$0xff]
    %v5622 = vld [vmem:[#allocation10 + $0x3e0] sm:$0xff]
    %v5623 = vld [vmem:[#allocation10 + $0x3e8] sm:$0xff]
    %v5624 = vld [vmem:[#allocation10 + $0x3f0] sm:$0xff]
    %v5625 = vld [vmem:[#allocation10 + $0x3f8] sm:$0xff]
    %v5754 = vunpack.c.l.b16 %v5498
    %v5755 = vunpack.c.h.b16 %v5498
    %v5756 = vunpack.c.l.b16 %v5499
    %v5757 = vunpack.c.h.b16 %v5499
    %v5758 = vunpack.c.l.b16 %v5500
    %v5759 = vunpack.c.h.b16 %v5500
    %v5760 = vunpack.c.l.b16 %v5501
    %v5761 = vunpack.c.h.b16 %v5501
    %v5762 = vunpack.c.l.b16 %v5502
    %v5763 = vunpack.c.h.b16 %v5502
    %v5764 = vunpack.c.l.b16 %v5503
    %v5765 = vunpack.c.h.b16 %v5503
    %v5766 = vunpack.c.l.b16 %v5504
    %v5767 = vunpack.c.h.b16 %v5504
    %v5768 = vunpack.c.l.b16 %v5505
    %v5769 = vunpack.c.h.b16 %v5505
    %v5770 = vunpack.c.l.b16 %v5506
    %v5771 = vunpack.c.h.b16 %v5506
    %v5772 = vunpack.c.l.b16 %v5507
    %v5773 = vunpack.c.h.b16 %v5507
    %v5774 = vunpack.c.l.b16 %v5508
    %v5775 = vunpack.c.h.b16 %v5508
    %v5776 = vunpack.c.l.b16 %v5509
    %v5777 = vunpack.c.h.b16 %v5509
    %v5778 = vunpack.c.l.b16 %v5510
    %v5779 = vunpack.c.h.b16 %v5510
    %v5780 = vunpack.c.l.b16 %v5511
    %v5781 = vunpack.c.h.b16 %v5511
    %v5782 = vunpack.c.l.b16 %v5512
    %v5783 = vunpack.c.h.b16 %v5512
    %v5784 = vunpack.c.l.b16 %v5513
    %v5785 = vunpack.c.h.b16 %v5513
    %v5786 = vunpack.c.l.b16 %v5514
    %v5787 = vunpack.c.h.b16 %v5514
    %v5788 = vunpack.c.l.b16 %v5515
    %v5789 = vunpack.c.h.b16 %v5515
    %v5790 = vunpack.c.l.b16 %v5516
    %v5791 = vunpack.c.h.b16 %v5516
    %v5792 = vunpack.c.l.b16 %v5517
    %v5793 = vunpack.c.h.b16 %v5517
    %v5794 = vunpack.c.l.b16 %v5518
    %v5795 = vunpack.c.h.b16 %v5518
    %v5796 = vunpack.c.l.b16 %v5519
    %v5797 = vunpack.c.h.b16 %v5519
    %v5798 = vunpack.c.l.b16 %v5520
    %v5799 = vunpack.c.h.b16 %v5520
    %v5800 = vunpack.c.l.b16 %v5521
    %v5801 = vunpack.c.h.b16 %v5521
    %v5802 = vunpack.c.l.b16 %v5522
    %v5803 = vunpack.c.h.b16 %v5522
    %v5804 = vunpack.c.l.b16 %v5523
    %v5805 = vunpack.c.h.b16 %v5523
    %v5806 = vunpack.c.l.b16 %v5524
    %v5807 = vunpack.c.h.b16 %v5524
    %v5808 = vunpack.c.l.b16 %v5525
    %v5809 = vunpack.c.h.b16 %v5525
    %v5810 = vunpack.c.l.b16 %v5526
    %v5811 = vunpack.c.h.b16 %v5526
    %v5812 = vunpack.c.l.b16 %v5527
    %v5813 = vunpack.c.h.b16 %v5527
    %v5814 = vunpack.c.l.b16 %v5528
    %v5815 = vunpack.c.h.b16 %v5528
    %v5816 = vunpack.c.l.b16 %v5529
    %v5817 = vunpack.c.h.b16 %v5529
    %v5818 = vunpack.c.l.b16 %v5530
    %v5819 = vunpack.c.h.b16 %v5530
    %v5820 = vunpack.c.l.b16 %v5531
    %v5821 = vunpack.c.h.b16 %v5531
    %v5822 = vunpack.c.l.b16 %v5532
    %v5823 = vunpack.c.h.b16 %v5532
    %v5824 = vunpack.c.l.b16 %v5533
    %v5825 = vunpack.c.h.b16 %v5533
    %v5826 = vunpack.c.l.b16 %v5534
    %v5827 = vunpack.c.h.b16 %v5534
    %v5828 = vunpack.c.l.b16 %v5535
    %v5829 = vunpack.c.h.b16 %v5535
    %v5830 = vunpack.c.l.b16 %v5536
    %v5831 = vunpack.c.h.b16 %v5536
    %v5832 = vunpack.c.l.b16 %v5537
    %v5833 = vunpack.c.h.b16 %v5537
    %v5834 = vunpack.c.l.b16 %v5538
    %v5835 = vunpack.c.h.b16 %v5538
    %v5836 = vunpack.c.l.b16 %v5539
    %v5837 = vunpack.c.h.b16 %v5539
    %v5838 = vunpack.c.l.b16 %v5540
    %v5839 = vunpack.c.h.b16 %v5540
    %v5840 = vunpack.c.l.b16 %v5541
    %v5841 = vunpack.c.h.b16 %v5541
    %v5842 = vunpack.c.l.b16 %v5542
    %v5843 = vunpack.c.h.b16 %v5542
    %v5844 = vunpack.c.l.b16 %v5543
    %v5845 = vunpack.c.h.b16 %v5543
    %v5846 = vunpack.c.l.b16 %v5544
    %v5847 = vunpack.c.h.b16 %v5544
    %v5848 = vunpack.c.l.b16 %v5545
    %v5849 = vunpack.c.h.b16 %v5545
    %v5850 = vunpack.c.l.b16 %v5546
    %v5851 = vunpack.c.h.b16 %v5546
    %v5852 = vunpack.c.l.b16 %v5547
    %v5853 = vunpack.c.h.b16 %v5547
    %v5854 = vunpack.c.l.b16 %v5548
    %v5855 = vunpack.c.h.b16 %v5548
    %v5856 = vunpack.c.l.b16 %v5549
    %v5857 = vunpack.c.h.b16 %v5549
    %v5858 = vunpack.c.l.b16 %v5550
    %v5859 = vunpack.c.h.b16 %v5550
    %v5860 = vunpack.c.l.b16 %v5551
    %v5861 = vunpack.c.h.b16 %v5551
    %v5862 = vunpack.c.l.b16 %v5552
    %v5863 = vunpack.c.h.b16 %v5552
    %v5864 = vunpack.c.l.b16 %v5553
    %v5865 = vunpack.c.h.b16 %v5553
    %v5866 = vunpack.c.l.b16 %v5554
    %v5867 = vunpack.c.h.b16 %v5554
    %v5868 = vunpack.c.l.b16 %v5555
    %v5869 = vunpack.c.h.b16 %v5555
    %v5870 = vunpack.c.l.b16 %v5556
    %v5871 = vunpack.c.h.b16 %v5556
    %v5872 = vunpack.c.l.b16 %v5557
    %v5873 = vunpack.c.h.b16 %v5557
    %v5874 = vunpack.c.l.b16 %v5558
    %v5875 = vunpack.c.h.b16 %v5558
    %v5876 = vunpack.c.l.b16 %v5559
    %v5877 = vunpack.c.h.b16 %v5559
    %v5878 = vunpack.c.l.b16 %v5560
    %v5879 = vunpack.c.h.b16 %v5560
    %v5880 = vunpack.c.l.b16 %v5561
    %v5881 = vunpack.c.h.b16 %v5561
    %v5882 = vunpack.c.l.b16 %v5562
    %v5883 = vunpack.c.h.b16 %v5562
    %v5884 = vunpack.c.l.b16 %v5563
    %v5885 = vunpack.c.h.b16 %v5563
    %v5886 = vunpack.c.l.b16 %v5564
    %v5887 = vunpack.c.h.b16 %v5564
    %v5888 = vunpack.c.l.b16 %v5565
    %v5889 = vunpack.c.h.b16 %v5565
    %v5890 = vunpack.c.l.b16 %v5566
    %v5891 = vunpack.c.h.b16 %v5566
    %v5892 = vunpack.c.l.b16 %v5567
    %v5893 = vunpack.c.h.b16 %v5567
    %v5894 = vunpack.c.l.b16 %v5568
    %v5895 = vunpack.c.h.b16 %v5568
    %v5896 = vunpack.c.l.b16 %v5569
    %v5897 = vunpack.c.h.b16 %v5569
    %v5898 = vunpack.c.l.b16 %v5570
    %v5899 = vunpack.c.h.b16 %v5570
    %v5900 = vunpack.c.l.b16 %v5571
    %v5901 = vunpack.c.h.b16 %v5571
    %v5902 = vunpack.c.l.b16 %v5572
    %v5903 = vunpack.c.h.b16 %v5572
    %v5904 = vunpack.c.l.b16 %v5573
    %v5905 = vunpack.c.h.b16 %v5573
    %v5906 = vunpack.c.l.b16 %v5574
    %v5907 = vunpack.c.h.b16 %v5574
    %v5908 = vunpack.c.l.b16 %v5575
    %v5909 = vunpack.c.h.b16 %v5575
    %v5910 = vunpack.c.l.b16 %v5576
    %v5911 = vunpack.c.h.b16 %v5576
    %v5912 = vunpack.c.l.b16 %v5577
    %v5913 = vunpack.c.h.b16 %v5577
    %v5914 = vunpack.c.l.b16 %v5578
    %v5915 = vunpack.c.h.b16 %v5578
    %v5916 = vunpack.c.l.b16 %v5579
    %v5917 = vunpack.c.h.b16 %v5579
    %v5918 = vunpack.c.l.b16 %v5580
    %v5919 = vunpack.c.h.b16 %v5580
    %v5920 = vunpack.c.l.b16 %v5581
    %v5921 = vunpack.c.h.b16 %v5581
    %v5922 = vunpack.c.l.b16 %v5582
    %v5923 = vunpack.c.h.b16 %v5582
    %v5924 = vunpack.c.l.b16 %v5583
    %v5925 = vunpack.c.h.b16 %v5583
    %v5926 = vunpack.c.l.b16 %v5584
    %v5927 = vunpack.c.h.b16 %v5584
    %v5928 = vunpack.c.l.b16 %v5585
    %v5929 = vunpack.c.h.b16 %v5585
    %v5930 = vunpack.c.l.b16 %v5586
    %v5931 = vunpack.c.h.b16 %v5586
    %v5932 = vunpack.c.l.b16 %v5587
    %v5933 = vunpack.c.h.b16 %v5587
    %v5934 = vunpack.c.l.b16 %v5588
    %v5935 = vunpack.c.h.b16 %v5588
    %v5936 = vunpack.c.l.b16 %v5589
    %v5937 = vunpack.c.h.b16 %v5589
    %v5938 = vunpack.c.l.b16 %v5590
    %v5939 = vunpack.c.h.b16 %v5590
    %v5940 = vunpack.c.l.b16 %v5591
    %v5941 = vunpack.c.h.b16 %v5591
    %v5942 = vunpack.c.l.b16 %v5592
    %v5943 = vunpack.c.h.b16 %v5592
    %v5944 = vunpack.c.l.b16 %v5593
    %v5945 = vunpack.c.h.b16 %v5593
    %v5946 = vunpack.c.l.b16 %v5594
    %v5947 = vunpack.c.h.b16 %v5594
    %v5948 = vunpack.c.l.b16 %v5595
    %v5949 = vunpack.c.h.b16 %v5595
    %v5950 = vunpack.c.l.b16 %v5596
    %v5951 = vunpack.c.h.b16 %v5596
    %v5952 = vunpack.c.l.b16 %v5597
    %v5953 = vunpack.c.h.b16 %v5597
    %v5954 = vunpack.c.l.b16 %v5598
    %v5955 = vunpack.c.h.b16 %v5598
    %v5956 = vunpack.c.l.b16 %v5599
    %v5957 = vunpack.c.h.b16 %v5599
    %v5958 = vunpack.c.l.b16 %v5600
    %v5959 = vunpack.c.h.b16 %v5600
    %v5960 = vunpack.c.l.b16 %v5601
    %v5961 = vunpack.c.h.b16 %v5601
    %v5962 = vunpack.c.l.b16 %v5602
    %v5963 = vunpack.c.h.b16 %v5602
    %v5964 = vunpack.c.l.b16 %v5603
    %v5965 = vunpack.c.h.b16 %v5603
    %v5966 = vunpack.c.l.b16 %v5604
    %v5967 = vunpack.c.h.b16 %v5604
    %v5968 = vunpack.c.l.b16 %v5605
    %v5969 = vunpack.c.h.b16 %v5605
    %v5970 = vunpack.c.l.b16 %v5606
    %v5971 = vunpack.c.h.b16 %v5606
    %v5972 = vunpack.c.l.b16 %v5607
    %v5973 = vunpack.c.h.b16 %v5607
    %v5974 = vunpack.c.l.b16 %v5608
    %v5975 = vunpack.c.h.b16 %v5608
    %v5976 = vunpack.c.l.b16 %v5609
    %v5977 = vunpack.c.h.b16 %v5609
    %v5978 = vunpack.c.l.b16 %v5610
    %v5979 = vunpack.c.h.b16 %v5610
    %v5980 = vunpack.c.l.b16 %v5611
    %v5981 = vunpack.c.h.b16 %v5611
    %v5982 = vunpack.c.l.b16 %v5612
    %v5983 = vunpack.c.h.b16 %v5612
    %v5984 = vunpack.c.l.b16 %v5613
    %v5985 = vunpack.c.h.b16 %v5613
    %v5986 = vunpack.c.l.b16 %v5614
    %v5987 = vunpack.c.h.b16 %v5614
    %v5988 = vunpack.c.l.b16 %v5615
    %v5989 = vunpack.c.h.b16 %v5615
    %v5990 = vunpack.c.l.b16 %v5616
    %v5991 = vunpack.c.h.b16 %v5616
    %v5992 = vunpack.c.l.b16 %v5617
    %v5993 = vunpack.c.h.b16 %v5617
    %v5994 = vunpack.c.l.b16 %v5618
    %v5995 = vunpack.c.h.b16 %v5618
    %v5996 = vunpack.c.l.b16 %v5619
    %v5997 = vunpack.c.h.b16 %v5619
    %v5998 = vunpack.c.l.b16 %v5620
    %v5999 = vunpack.c.h.b16 %v5620
    %v6000 = vunpack.c.l.b16 %v5621
    %v6001 = vunpack.c.h.b16 %v5621
    %v6002 = vunpack.c.l.b16 %v5622
    %v6003 = vunpack.c.h.b16 %v5622
    %v6004 = vunpack.c.l.b16 %v5623
    %v6005 = vunpack.c.h.b16 %v5623
    %v6006 = vunpack.c.l.b16 %v5624
    %v6007 = vunpack.c.h.b16 %v5624
    %v6008 = vunpack.c.l.b16 %v5625
    %v6009 = vunpack.c.h.b16 %v5625
    %v6010 = vpack.c.b16 %v5762, %v5754
    %v6011 = vpack.c.b16 %v5763, %v5755
    %v6012 = vpack.c.b16 %v5764, %v5756
    %v6013 = vpack.c.b16 %v5765, %v5757
    %v6014 = vpack.c.b16 %v5766, %v5758
    %v6015 = vpack.c.b16 %v5767, %v5759
    %v6016 = vpack.c.b16 %v5768, %v5760
    %v6017 = vpack.c.b16 %v5769, %v5761
    %v6018 = vpack.c.b16 %v5778, %v5770
    %v6019 = vpack.c.b16 %v5779, %v5771
    %v6020 = vpack.c.b16 %v5780, %v5772
    %v6021 = vpack.c.b16 %v5781, %v5773
    %v6022 = vpack.c.b16 %v5782, %v5774
    %v6023 = vpack.c.b16 %v5783, %v5775
    %v6024 = vpack.c.b16 %v5784, %v5776
    %v6025 = vpack.c.b16 %v5785, %v5777
    %v6026 = vpack.c.b16 %v5794, %v5786
    %v6027 = vpack.c.b16 %v5795, %v5787
    %v6028 = vpack.c.b16 %v5796, %v5788
    %v6029 = vpack.c.b16 %v5797, %v5789
    %v6030 = vpack.c.b16 %v5798, %v5790
    %v6031 = vpack.c.b16 %v5799, %v5791
    %v6032 = vpack.c.b16 %v5800, %v5792
    %v6033 = vpack.c.b16 %v5801, %v5793
    %v6034 = vpack.c.b16 %v5810, %v5802
    %v6035 = vpack.c.b16 %v5811, %v5803
    %v6036 = vpack.c.b16 %v5812, %v5804
    %v6037 = vpack.c.b16 %v5813, %v5805
    %v6038 = vpack.c.b16 %v5814, %v5806
    %v6039 = vpack.c.b16 %v5815, %v5807
    %v6040 = vpack.c.b16 %v5816, %v5808
    %v6041 = vpack.c.b16 %v5817, %v5809
    %v6042 = vpack.c.b16 %v5826, %v5818
    %v6043 = vpack.c.b16 %v5827, %v5819
    %v6044 = vpack.c.b16 %v5828, %v5820
    %v6045 = vpack.c.b16 %v5829, %v5821
    %v6046 = vpack.c.b16 %v5830, %v5822
    %v6047 = vpack.c.b16 %v5831, %v5823
    %v6048 = vpack.c.b16 %v5832, %v5824
    %v6049 = vpack.c.b16 %v5833, %v5825
    %v6050 = vpack.c.b16 %v5842, %v5834
    %v6051 = vpack.c.b16 %v5843, %v5835
    %v6052 = vpack.c.b16 %v5844, %v5836
    %v6053 = vpack.c.b16 %v5845, %v5837
    %v6054 = vpack.c.b16 %v5846, %v5838
    %v6055 = vpack.c.b16 %v5847, %v5839
    %v6056 = vpack.c.b16 %v5848, %v5840
    %v6057 = vpack.c.b16 %v5849, %v5841
    %v6058 = vpack.c.b16 %v5858, %v5850
    %v6059 = vpack.c.b16 %v5859, %v5851
    %v6060 = vpack.c.b16 %v5860, %v5852
    %v6061 = vpack.c.b16 %v5861, %v5853
    %v6062 = vpack.c.b16 %v5862, %v5854
    %v6063 = vpack.c.b16 %v5863, %v5855
    %v6064 = vpack.c.b16 %v5864, %v5856
    %v6065 = vpack.c.b16 %v5865, %v5857
    %v6066 = vpack.c.b16 %v5874, %v5866
    %v6067 = vpack.c.b16 %v5875, %v5867
    %v6068 = vpack.c.b16 %v5876, %v5868
    %v6069 = vpack.c.b16 %v5877, %v5869
    %v6070 = vpack.c.b16 %v5878, %v5870
    %v6071 = vpack.c.b16 %v5879, %v5871
    %v6072 = vpack.c.b16 %v5880, %v5872
    %v6073 = vpack.c.b16 %v5881, %v5873
    %v6074 = vpack.c.b16 %v5890, %v5882
    %v6075 = vpack.c.b16 %v5891, %v5883
    %v6076 = vpack.c.b16 %v5892, %v5884
    %v6077 = vpack.c.b16 %v5893, %v5885
    %v6078 = vpack.c.b16 %v5894, %v5886
    %v6079 = vpack.c.b16 %v5895, %v5887
    %v6080 = vpack.c.b16 %v5896, %v5888
    %v6081 = vpack.c.b16 %v5897, %v5889
    %v6082 = vpack.c.b16 %v5906, %v5898
    %v6083 = vpack.c.b16 %v5907, %v5899
    %v6084 = vpack.c.b16 %v5908, %v5900
    %v6085 = vpack.c.b16 %v5909, %v5901
    %v6086 = vpack.c.b16 %v5910, %v5902
    %v6087 = vpack.c.b16 %v5911, %v5903
    %v6088 = vpack.c.b16 %v5912, %v5904
    %v6089 = vpack.c.b16 %v5913, %v5905
    %v6090 = vpack.c.b16 %v5922, %v5914
    %v6091 = vpack.c.b16 %v5923, %v5915
    %v6092 = vpack.c.b16 %v5924, %v5916
    %v6093 = vpack.c.b16 %v5925, %v5917
    %v6094 = vpack.c.b16 %v5926, %v5918
    %v6095 = vpack.c.b16 %v5927, %v5919
    %v6096 = vpack.c.b16 %v5928, %v5920
    %v6097 = vpack.c.b16 %v5929, %v5921
    %v6098 = vpack.c.b16 %v5938, %v5930
    %v6099 = vpack.c.b16 %v5939, %v5931
    %v6100 = vpack.c.b16 %v5940, %v5932
    %v6101 = vpack.c.b16 %v5941, %v5933
    %v6102 = vpack.c.b16 %v5942, %v5934
    %v6103 = vpack.c.b16 %v5943, %v5935
    %v6104 = vpack.c.b16 %v5944, %v5936
    %v6105 = vpack.c.b16 %v5945, %v5937
    %v6106 = vpack.c.b16 %v5954, %v5946
    %v6107 = vpack.c.b16 %v5955, %v5947
    %v6108 = vpack.c.b16 %v5956, %v5948
    %v6109 = vpack.c.b16 %v5957, %v5949
    %v6110 = vpack.c.b16 %v5958, %v5950
    %v6111 = vpack.c.b16 %v5959, %v5951
    %v6112 = vpack.c.b16 %v5960, %v5952
    %v6113 = vpack.c.b16 %v5961, %v5953
    %v6114 = vpack.c.b16 %v5970, %v5962
    %v6115 = vpack.c.b16 %v5971, %v5963
    %v6116 = vpack.c.b16 %v5972, %v5964
    %v6117 = vpack.c.b16 %v5973, %v5965
    %v6118 = vpack.c.b16 %v5974, %v5966
    %v6119 = vpack.c.b16 %v5975, %v5967
    %v6120 = vpack.c.b16 %v5976, %v5968
    %v6121 = vpack.c.b16 %v5977, %v5969
    %v6122 = vpack.c.b16 %v5986, %v5978
    %v6123 = vpack.c.b16 %v5987, %v5979
    %v6124 = vpack.c.b16 %v5988, %v5980
    %v6125 = vpack.c.b16 %v5989, %v5981
    %v6126 = vpack.c.b16 %v5990, %v5982
    %v6127 = vpack.c.b16 %v5991, %v5983
    %v6128 = vpack.c.b16 %v5992, %v5984
    %v6129 = vpack.c.b16 %v5993, %v5985
    %v6130 = vpack.c.b16 %v6002, %v5994
    %v6131 = vpack.c.b16 %v6003, %v5995
    %v6132 = vpack.c.b16 %v6004, %v5996
    %v6133 = vpack.c.b16 %v6005, %v5997
    %v6134 = vpack.c.b16 %v6006, %v5998
    %v6135 = vpack.c.b16 %v6007, %v5999
    %v6136 = vpack.c.b16 %v6008, %v6000
    %v6137 = vpack.c.b16 %v6009, %v6001
    %6266 = vmatpush.bf16.msra.mxu0 %v6066
    %6267 = vmatpush.bf16.msra.mxu0 %v6058
    %6268 = vmatpush.bf16.msra.mxu0 %v6050
    %6269 = vmatpush.bf16.msra.mxu0 %v6042
    %6270 = vmatpush.bf16.msra.mxu0 %v6034
    %6271 = vmatpush.bf16.msra.mxu0 %v6026
    %6272 = vmatpush.bf16.msra.mxu0 %v6018
    %6273 = vmatpush.bf16.msra.mxu0 %v6010
    %6274 = vmatmul.bf16.gmra.mxu0 %v5496
    %v6275 = vpop.f32.mrf.mxu0
    %v6276 = vadd.f32 0.0, %v6275
    %v6277 = vpop.f32.mrf.mxu0
    %6278 = vdwg.mxu0
    %6279 = vmatpush.bf16.msra.mxu0 %v6130
    %6280 = vmatpush.bf16.msra.mxu0 %v6122
    %6281 = vmatpush.bf16.msra.mxu0 %v6114
    %6282 = vmatpush.bf16.msra.mxu0 %v6106
    %6283 = vmatpush.bf16.msra.mxu0 %v6098
    %6284 = vmatpush.bf16.msra.mxu0 %v6090
    %6285 = vmatpush.bf16.msra.mxu0 %v6082
    %6286 = vmatpush.bf16.msra.mxu0 %v6074
    %6287 = vmatmul.bf16.gmra.mxu0 %v5497
    %v6288 = vpop.f32.mrf.mxu0
    %v6289 = vadd.f32 %v6276, %v6288
    %v6290 = vpop.f32.mrf.mxu0
    %6291 = vdwg.mxu0
    %6292 = vmatpush.bf16.msra.mxu0 %v6067
    %6293 = vmatpush.bf16.msra.mxu0 %v6059
    %6294 = vmatpush.bf16.msra.mxu0 %v6051
    %6295 = vmatpush.bf16.msra.mxu0 %v6043
    %6296 = vmatpush.bf16.msra.mxu0 %v6035
    %6297 = vmatpush.bf16.msra.mxu0 %v6027
    %6298 = vmatpush.bf16.msra.mxu0 %v6019
    %6299 = vmatpush.bf16.msra.mxu0 %v6011
    %6300 = vmatmul.bf16.gmra.mxu0 %v5496
    %v6301 = vpop.f32.mrf.mxu0
    %v6302 = vadd.f32 0.0, %v6301
    %v6303 = vpop.f32.mrf.mxu0
    %6304 = vdwg.mxu0
    %6305 = vmatpush.bf16.msra.mxu0 %v6131
    %6306 = vmatpush.bf16.msra.mxu0 %v6123
    %6307 = vmatpush.bf16.msra.mxu0 %v6115
    %6308 = vmatpush.bf16.msra.mxu0 %v6107
    %6309 = vmatpush.bf16.msra.mxu0 %v6099
    %6310 = vmatpush.bf16.msra.mxu0 %v6091
    %6311 = vmatpush.bf16.msra.mxu0 %v6083
    %6312 = vmatpush.bf16.msra.mxu0 %v6075
    %6313 = vmatmul.bf16.gmra.mxu0 %v5497
    %v6314 = vpop.f32.mrf.mxu0
    %v6315 = vadd.f32 %v6302, %v6314
    %v6316 = vpop.f32.mrf.mxu0
    %6317 = vdwg.mxu0
    %6318 = vmatpush.bf16.msra.mxu0 %v6068
    %6319 = vmatpush.bf16.msra.mxu0 %v6060
    %6320 = vmatpush.bf16.msra.mxu0 %v6052
    %6321 = vmatpush.bf16.msra.mxu0 %v6044
    %6322 = vmatpush.bf16.msra.mxu0 %v6036
    %6323 = vmatpush.bf16.msra.mxu0 %v6028
    %6324 = vmatpush.bf16.msra.mxu0 %v6020
    %6325 = vmatpush.bf16.msra.mxu0 %v6012
    %6326 = vmatmul.bf16.gmra.mxu0 %v5496
    %v6327 = vpop.f32.mrf.mxu0
    %v6328 = vadd.f32 0.0, %v6327
    %v6329 = vpop.f32.mrf.mxu0
    %6330 = vdwg.mxu0
    %6331 = vmatpush.bf16.msra.mxu0 %v6132
    %6332 = vmatpush.bf16.msra.mxu0 %v6124
    %6333 = vmatpush.bf16.msra.mxu0 %v6116
    %6334 = vmatpush.bf16.msra.mxu0 %v6108
    %6335 = vmatpush.bf16.msra.mxu0 %v6100
    %6336 = vmatpush.bf16.msra.mxu0 %v6092
    %6337 = vmatpush.bf16.msra.mxu0 %v6084
    %6338 = vmatpush.bf16.msra.mxu0 %v6076
    %6339 = vmatmul.bf16.gmra.mxu0 %v5497
    %v6340 = vpop.f32.mrf.mxu0
    %v6341 = vadd.f32 %v6328, %v6340
    %v6342 = vpop.f32.mrf.mxu0
    %6343 = vdwg.mxu0
    %6344 = vmatpush.bf16.msra.mxu0 %v6069
    %6345 = vmatpush.bf16.msra.mxu0 %v6061
    %6346 = vmatpush.bf16.msra.mxu0 %v6053
    %6347 = vmatpush.bf16.msra.mxu0 %v6045
    %6348 = vmatpush.bf16.msra.mxu0 %v6037
    %6349 = vmatpush.bf16.msra.mxu0 %v6029
    %6350 = vmatpush.bf16.msra.mxu0 %v6021
    %6351 = vmatpush.bf16.msra.mxu0 %v6013
    %6352 = vmatmul.bf16.gmra.mxu0 %v5496
    %v6353 = vpop.f32.mrf.mxu0
    %v6354 = vadd.f32 0.0, %v6353
    %v6355 = vpop.f32.mrf.mxu0
    %6356 = vdwg.mxu0
    %6357 = vmatpush.bf16.msra.mxu0 %v6133
    %6358 = vmatpush.bf16.msra.mxu0 %v6125
    %6359 = vmatpush.bf16.msra.mxu0 %v6117
    %6360 = vmatpush.bf16.msra.mxu0 %v6109
    %6361 = vmatpush.bf16.msra.mxu0 %v6101
    %6362 = vmatpush.bf16.msra.mxu0 %v6093
    %6363 = vmatpush.bf16.msra.mxu0 %v6085
    %6364 = vmatpush.bf16.msra.mxu0 %v6077
    %6365 = vmatmul.bf16.gmra.mxu0 %v5497
    %v6366 = vpop.f32.mrf.mxu0
    %v6367 = vadd.f32 %v6354, %v6366
    %v6368 = vpop.f32.mrf.mxu0
    %6369 = vdwg.mxu0
    %6370 = vmatpush.bf16.msra.mxu0 %v6070
    %6371 = vmatpush.bf16.msra.mxu0 %v6062
    %6372 = vmatpush.bf16.msra.mxu0 %v6054
    %6373 = vmatpush.bf16.msra.mxu0 %v6046
    %6374 = vmatpush.bf16.msra.mxu0 %v6038
    %6375 = vmatpush.bf16.msra.mxu0 %v6030
    %6376 = vmatpush.bf16.msra.mxu0 %v6022
    %6377 = vmatpush.bf16.msra.mxu0 %v6014
    %6378 = vmatmul.bf16.gmra.mxu0 %v5496
    %v6379 = vpop.f32.mrf.mxu0
    %v6380 = vadd.f32 0.0, %v6379
    %v6381 = vpop.f32.mrf.mxu0
    %6382 = vdwg.mxu0
    %6383 = vmatpush.bf16.msra.mxu0 %v6134
    %6384 = vmatpush.bf16.msra.mxu0 %v6126
    %6385 = vmatpush.bf16.msra.mxu0 %v6118
    %6386 = vmatpush.bf16.msra.mxu0 %v6110
    %6387 = vmatpush.bf16.msra.mxu0 %v6102
    %6388 = vmatpush.bf16.msra.mxu0 %v6094
    %6389 = vmatpush.bf16.msra.mxu0 %v6086
    %6390 = vmatpush.bf16.msra.mxu0 %v6078
    %6391 = vmatmul.bf16.gmra.mxu0 %v5497
    %v6392 = vpop.f32.mrf.mxu0
    %v6393 = vadd.f32 %v6380, %v6392
    %v6394 = vpop.f32.mrf.mxu0
    %6395 = vdwg.mxu0
    %6396 = vmatpush.bf16.msra.mxu0 %v6071
    %6397 = vmatpush.bf16.msra.mxu0 %v6063
    %6398 = vmatpush.bf16.msra.mxu0 %v6055
    %6399 = vmatpush.bf16.msra.mxu0 %v6047
    %6400 = vmatpush.bf16.msra.mxu0 %v6039
    %6401 = vmatpush.bf16.msra.mxu0 %v6031
    %6402 = vmatpush.bf16.msra.mxu0 %v6023
    %6403 = vmatpush.bf16.msra.mxu0 %v6015
    %6404 = vmatmul.bf16.gmra.mxu0 %v5496
    %v6405 = vpop.f32.mrf.mxu0
    %v6406 = vadd.f32 0.0, %v6405
    %v6407 = vpop.f32.mrf.mxu0
    %6408 = vdwg.mxu0
    %6409 = vmatpush.bf16.msra.mxu0 %v6135
    %6410 = vmatpush.bf16.msra.mxu0 %v6127
    %6411 = vmatpush.bf16.msra.mxu0 %v6119
    %6412 = vmatpush.bf16.msra.mxu0 %v6111
    %6413 = vmatpush.bf16.msra.mxu0 %v6103
    %6414 = vmatpush.bf16.msra.mxu0 %v6095
    %6415 = vmatpush.bf16.msra.mxu0 %v6087
    %6416 = vmatpush.bf16.msra.mxu0 %v6079
    %6417 = vmatmul.bf16.gmra.mxu0 %v5497
    %v6418 = vpop.f32.mrf.mxu0
    %v6419 = vadd.f32 %v6406, %v6418
    %v6420 = vpop.f32.mrf.mxu0
    %6421 = vdwg.mxu0
    %6422 = vmatpush.bf16.msra.mxu0 %v6072
    %6423 = vmatpush.bf16.msra.mxu0 %v6064
    %6424 = vmatpush.bf16.msra.mxu0 %v6056
    %6425 = vmatpush.bf16.msra.mxu0 %v6048
    %6426 = vmatpush.bf16.msra.mxu0 %v6040
    %6427 = vmatpush.bf16.msra.mxu0 %v6032
    %6428 = vmatpush.bf16.msra.mxu0 %v6024
    %6429 = vmatpush.bf16.msra.mxu0 %v6016
    %6430 = vmatmul.bf16.gmra.mxu0 %v5496
    %v6431 = vpop.f32.mrf.mxu0
    %v6432 = vadd.f32 0.0, %v6431
    %v6433 = vpop.f32.mrf.mxu0
    %6434 = vdwg.mxu0
    %6435 = vmatpush.bf16.msra.mxu0 %v6136
    %6436 = vmatpush.bf16.msra.mxu0 %v6128
    %6437 = vmatpush.bf16.msra.mxu0 %v6120
    %6438 = vmatpush.bf16.msra.mxu0 %v6112
    %6439 = vmatpush.bf16.msra.mxu0 %v6104
    %6440 = vmatpush.bf16.msra.mxu0 %v6096
    %6441 = vmatpush.bf16.msra.mxu0 %v6088
    %6442 = vmatpush.bf16.msra.mxu0 %v6080
    %6443 = vmatmul.bf16.gmra.mxu0 %v5497
    %v6444 = vpop.f32.mrf.mxu0
    %v6445 = vadd.f32 %v6432, %v6444
    %v6446 = vpop.f32.mrf.mxu0
    %6447 = vdwg.mxu0
    %6448 = vmatpush.bf16.msra.mxu0 %v6073
    %6449 = vmatpush.bf16.msra.mxu0 %v6065
    %6450 = vmatpush.bf16.msra.mxu0 %v6057
    %6451 = vmatpush.bf16.msra.mxu0 %v6049
    %6452 = vmatpush.bf16.msra.mxu0 %v6041
    %6453 = vmatpush.bf16.msra.mxu0 %v6033
    %6454 = vmatpush.bf16.msra.mxu0 %v6025
    %6455 = vmatpush.bf16.msra.mxu0 %v6017
    %6456 = vmatmul.bf16.gmra.mxu0 %v5496
    %v6457 = vpop.f32.mrf.mxu0
    %v6458 = vadd.f32 0.0, %v6457
    %v6459 = vpop.f32.mrf.mxu0
    %6460 = vdwg.mxu0
    %6461 = vmatpush.bf16.msra.mxu0 %v6137
    %6462 = vmatpush.bf16.msra.mxu0 %v6129
    %6463 = vmatpush.bf16.msra.mxu0 %v6121
    %6464 = vmatpush.bf16.msra.mxu0 %v6113
    %6465 = vmatpush.bf16.msra.mxu0 %v6105
    %6466 = vmatpush.bf16.msra.mxu0 %v6097
    %6467 = vmatpush.bf16.msra.mxu0 %v6089
    %6468 = vmatpush.bf16.msra.mxu0 %v6081
    %6469 = vmatmul.bf16.gmra.mxu0 %v5497
    %v6470 = vpop.f32.mrf.mxu0
    %v6471 = vadd.f32 %v6458, %v6470
    %v6472 = vpop.f32.mrf.mxu0
    %6473 = vdwg.mxu0
    %v6474 = vadd.f32 %v824, %v6289
    %v6475 = vadd.f32 %v853, %v6315
    %v6476 = vadd.f32 %v882, %v6341
    %v6477 = vadd.f32 %v911, %v6367
    %v6478 = vadd.f32 %v940, %v6393
    %v6479 = vadd.f32 %v969, %v6419
    %v6480 = vadd.f32 %v998, %v6445
    %v6481 = vadd.f32 %v1027, %v6471
    %v6482 = vxor.u32 %v6474, 2147483648
    %v6483 = vxor.u32 %v6475, 2147483648
    %v6484 = vmul.f32 %v6482, 1.442695
    %v6485 = vpow.pop %v6484
    %v6486 = vmul.f32 %v6483, 1.442695
    %v6487 = vpow.pop %v6486
    %v6488 = vadd.f32 %v6485, 1.0
    %v6489 = vadd.f32 %v6487, 1.0
    %v6490 = vrcp.pop %v6488
    %v6491 = vmul.f32 %v6488, %v6490
    %v6492 = vsub.f32 1.0, %v6491
    %v6493 = vmul.f32 %v6490, %v6492
    %v6494 = vadd.f32 %v6490, %v6493
    %vm6495 = vweird.f32 %v6488
    %vm6496 = vweird.f32 %v6490
    %vm6497 = vmor %vm6495, %vm6496
    %v6498 = vsel %vm6497, %v6490, %v6494
    %v6499 = vand.u32 2147483647, %v6488
    %vm6500 = vcmp.eq.f32.partialorder %v6499, 8.507059e+37
    %v6501 = vand.u32 %v6488, 2147483648
    %v6502 = vor.u32 1.1754944e-38, %v6501
    %v6503 = vsel %vm6500, %v6502, %v6498
    %v6504 = vmul.f32 1.0, %v6503
    %v6505 = vrcp.pop %v6489
    %v6506 = vmul.f32 %v6489, %v6505
    %v6507 = vsub.f32 1.0, %v6506
    %v6508 = vmul.f32 %v6505, %v6507
    %v6509 = vadd.f32 %v6505, %v6508
    %vm6510 = vweird.f32 %v6489
    %vm6511 = vweird.f32 %v6505
    %vm6512 = vmor %vm6510, %vm6511
    %v6513 = vsel %vm6512, %v6505, %v6509
    %v6514 = vand.u32 2147483647, %v6489
    %vm6515 = vcmp.eq.f32.partialorder %v6514, 8.507059e+37
    %v6516 = vand.u32 %v6489, 2147483648
    %v6517 = vor.u32 1.1754944e-38, %v6516
    %v6518 = vsel %vm6515, %v6517, %v6513
    %v6519 = vmul.f32 1.0, %v6518
    %v6520 = vxor.u32 %v6476, 2147483648
    %v6521 = vxor.u32 %v6477, 2147483648
    %v6522 = vmul.f32 %v6520, 1.442695
    %v6523 = vpow.pop %v6522
    %v6524 = vmul.f32 %v6521, 1.442695
    %v6525 = vpow.pop %v6524
    %v6526 = vadd.f32 %v6523, 1.0
    %v6527 = vadd.f32 %v6525, 1.0
    %v6528 = vrcp.pop %v6526
    %v6529 = vmul.f32 %v6526, %v6528
    %v6530 = vsub.f32 1.0, %v6529
    %v6531 = vmul.f32 %v6528, %v6530
    %v6532 = vadd.f32 %v6528, %v6531
    %vm6533 = vweird.f32 %v6526
    %vm6534 = vweird.f32 %v6528
    %vm6535 = vmor %vm6533, %vm6534
    %v6536 = vsel %vm6535, %v6528, %v6532
    %v6537 = vand.u32 2147483647, %v6526
    %vm6538 = vcmp.eq.f32.partialorder %v6537, 8.507059e+37
    %v6539 = vand.u32 %v6526, 2147483648
    %v6540 = vor.u32 1.1754944e-38, %v6539
    %v6541 = vsel %vm6538, %v6540, %v6536
    %v6542 = vmul.f32 1.0, %v6541
    %v6543 = vrcp.pop %v6527
    %v6544 = vmul.f32 %v6527, %v6543
    %v6545 = vsub.f32 1.0, %v6544
    %v6546 = vmul.f32 %v6543, %v6545
    %v6547 = vadd.f32 %v6543, %v6546
    %vm6548 = vweird.f32 %v6527
    %vm6549 = vweird.f32 %v6543
    %vm6550 = vmor %vm6548, %vm6549
    %v6551 = vsel %vm6550, %v6543, %v6547
    %v6552 = vand.u32 2147483647, %v6527
    %vm6553 = vcmp.eq.f32.partialorder %v6552, 8.507059e+37
    %v6554 = vand.u32 %v6527, 2147483648
    %v6555 = vor.u32 1.1754944e-38, %v6554
    %v6556 = vsel %vm6553, %v6555, %v6551
    %v6557 = vmul.f32 1.0, %v6556
    %v6558 = vtanh.pop %v6478
    %v6559 = vtanh.pop %v6479
    %v6560 = vxor.u32 %v6480, 2147483648
    %v6561 = vxor.u32 %v6481, 2147483648
    %v6562 = vmul.f32 %v6560, 1.442695
    %v6563 = vpow.pop %v6562
    %v6564 = vmul.f32 %v6561, 1.442695
    %v6565 = vpow.pop %v6564
    %v6566 = vadd.f32 %v6563, 1.0
    %v6567 = vadd.f32 %v6565, 1.0
    %v6568 = vrcp.pop %v6566
    %v6569 = vmul.f32 %v6566, %v6568
    %v6570 = vsub.f32 1.0, %v6569
    %v6571 = vmul.f32 %v6568, %v6570
    %v6572 = vadd.f32 %v6568, %v6571
    %vm6573 = vweird.f32 %v6566
    %vm6574 = vweird.f32 %v6568
    %vm6575 = vmor %vm6573, %vm6574
    %v6576 = vsel %vm6575, %v6568, %v6572
    %v6577 = vand.u32 2147483647, %v6566
    %vm6578 = vcmp.eq.f32.partialorder %v6577, 8.507059e+37
    %v6579 = vand.u32 %v6566, 2147483648
    %v6580 = vor.u32 1.1754944e-38, %v6579
    %v6581 = vsel %vm6578, %v6580, %v6576
    %v6582 = vmul.f32 1.0, %v6581
    %v6583 = vrcp.pop %v6567
    %v6584 = vmul.f32 %v6567, %v6583
    %v6585 = vsub.f32 1.0, %v6584
    %v6586 = vmul.f32 %v6583, %v6585
    %v6587 = vadd.f32 %v6583, %v6586
    %vm6588 = vweird.f32 %v6567
    %vm6589 = vweird.f32 %v6583
    %vm6590 = vmor %vm6588, %vm6589
    %v6591 = vsel %vm6590, %v6583, %v6587
    %v6592 = vand.u32 2147483647, %v6567
    %vm6593 = vcmp.eq.f32.partialorder %v6592, 8.507059e+37
    %v6594 = vand.u32 %v6567, 2147483648
    %v6595 = vor.u32 1.1754944e-38, %v6594
    %v6596 = vsel %vm6593, %v6595, %v6591
    %v6597 = vmul.f32 1.0, %v6596
    %v6598 = vmul.f32 %v6542, %v5488
    %v6599 = vmul.f32 %v6557, %v5489
    %v6600 = vmul.f32 %v6504, %v6558
    %v6601 = vmul.f32 %v6519, %v6559
    %v6602 = vadd.f32 %v6598, %v6600
    %v6603 = vadd.f32 %v6599, %v6601
    %v6604 = vtanh.pop %v6602
    %v6605 = vtanh.pop %v6603
    %v6606 = vmul.f32 %v6582, %v6604
    %v6607 = vmul.f32 %v6597, %v6605
    %6608 = vst [vmem:[#allocation2 + $0x40] sm:$0xff] %v6606
    %6609 = vst [vmem:[#allocation2 + $0x48] sm:$0xff] %v6607
    %v6610 = vpack.c.bf16 %v6606, %v6606
    %v6611 = vpack.c.bf16 %v6607, %v6607
    %v6612 = vld [vmem:[#allocation10] sm:$0xff]
    %v6613 = vld [vmem:[#allocation10 + $0x8] sm:$0xff]
    %v6614 = vld [vmem:[#allocation10 + $0x10] sm:$0xff]
    %v6615 = vld [vmem:[#allocation10 + $0x18] sm:$0xff]
    %v6616 = vld [vmem:[#allocation10 + $0x20] sm:$0xff]
    %v6617 = vld [vmem:[#allocation10 + $0x28] sm:$0xff]
    %v6618 = vld [vmem:[#allocation10 + $0x30] sm:$0xff]
    %v6619 = vld [vmem:[#allocation10 + $0x38] sm:$0xff]
    %v6620 = vld [vmem:[#allocation10 + $0x40] sm:$0xff]
    %v6621 = vld [vmem:[#allocation10 + $0x48] sm:$0xff]
    %v6622 = vld [vmem:[#allocation10 + $0x50] sm:$0xff]
    %v6623 = vld [vmem:[#allocation10 + $0x58] sm:$0xff]
    %v6624 = vld [vmem:[#allocation10 + $0x60] sm:$0xff]
    %v6625 = vld [vmem:[#allocation10 + $0x68] sm:$0xff]
    %v6626 = vld [vmem:[#allocation10 + $0x70] sm:$0xff]
    %v6627 = vld [vmem:[#allocation10 + $0x78] sm:$0xff]
    %v6628 = vld [vmem:[#allocation10 + $0x80] sm:$0xff]
    %v6629 = vld [vmem:[#allocation10 + $0x88] sm:$0xff]
    %v6630 = vld [vmem:[#allocation10 + $0x90] sm:$0xff]
    %v6631 = vld [vmem:[#allocation10 + $0x98] sm:$0xff]
    %v6632 = vld [vmem:[#allocation10 + $0xa0] sm:$0xff]
    %v6633 = vld [vmem:[#allocation10 + $0xa8] sm:$0xff]
    %v6634 = vld [vmem:[#allocation10 + $0xb0] sm:$0xff]
    %v6635 = vld [vmem:[#allocation10 + $0xb8] sm:$0xff]
    %v6636 = vld [vmem:[#allocation10 + $0xc0] sm:$0xff]
    %v6637 = vld [vmem:[#allocation10 + $0xc8] sm:$0xff]
    %v6638 = vld [vmem:[#allocation10 + $0xd0] sm:$0xff]
    %v6639 = vld [vmem:[#allocation10 + $0xd8] sm:$0xff]
    %v6640 = vld [vmem:[#allocation10 + $0xe0] sm:$0xff]
    %v6641 = vld [vmem:[#allocation10 + $0xe8] sm:$0xff]
    %v6642 = vld [vmem:[#allocation10 + $0xf0] sm:$0xff]
    %v6643 = vld [vmem:[#allocation10 + $0xf8] sm:$0xff]
    %v6644 = vld [vmem:[#allocation10 + $0x100] sm:$0xff]
    %v6645 = vld [vmem:[#allocation10 + $0x108] sm:$0xff]
    %v6646 = vld [vmem:[#allocation10 + $0x110] sm:$0xff]
    %v6647 = vld [vmem:[#allocation10 + $0x118] sm:$0xff]
    %v6648 = vld [vmem:[#allocation10 + $0x120] sm:$0xff]
    %v6649 = vld [vmem:[#allocation10 + $0x128] sm:$0xff]
    %v6650 = vld [vmem:[#allocation10 + $0x130] sm:$0xff]
    %v6651 = vld [vmem:[#allocation10 + $0x138] sm:$0xff]
    %v6652 = vld [vmem:[#allocation10 + $0x140] sm:$0xff]
    %v6653 = vld [vmem:[#allocation10 + $0x148] sm:$0xff]
    %v6654 = vld [vmem:[#allocation10 + $0x150] sm:$0xff]
    %v6655 = vld [vmem:[#allocation10 + $0x158] sm:$0xff]
    %v6656 = vld [vmem:[#allocation10 + $0x160] sm:$0xff]
    %v6657 = vld [vmem:[#allocation10 + $0x168] sm:$0xff]
    %v6658 = vld [vmem:[#allocation10 + $0x170] sm:$0xff]
    %v6659 = vld [vmem:[#allocation10 + $0x178] sm:$0xff]
    %v6660 = vld [vmem:[#allocation10 + $0x180] sm:$0xff]
    %v6661 = vld [vmem:[#allocation10 + $0x188] sm:$0xff]
    %v6662 = vld [vmem:[#allocation10 + $0x190] sm:$0xff]
    %v6663 = vld [vmem:[#allocation10 + $0x198] sm:$0xff]
    %v6664 = vld [vmem:[#allocation10 + $0x1a0] sm:$0xff]
    %v6665 = vld [vmem:[#allocation10 + $0x1a8] sm:$0xff]
    %v6666 = vld [vmem:[#allocation10 + $0x1b0] sm:$0xff]
    %v6667 = vld [vmem:[#allocation10 + $0x1b8] sm:$0xff]
    %v6668 = vld [vmem:[#allocation10 + $0x1c0] sm:$0xff]
    %v6669 = vld [vmem:[#allocation10 + $0x1c8] sm:$0xff]
    %v6670 = vld [vmem:[#allocation10 + $0x1d0] sm:$0xff]
    %v6671 = vld [vmem:[#allocation10 + $0x1d8] sm:$0xff]
    %v6672 = vld [vmem:[#allocation10 + $0x1e0] sm:$0xff]
    %v6673 = vld [vmem:[#allocation10 + $0x1e8] sm:$0xff]
    %v6674 = vld [vmem:[#allocation10 + $0x1f0] sm:$0xff]
    %v6675 = vld [vmem:[#allocation10 + $0x1f8] sm:$0xff]
    %v6676 = vld [vmem:[#allocation10 + $0x200] sm:$0xff]
    %v6677 = vld [vmem:[#allocation10 + $0x208] sm:$0xff]
    %v6678 = vld [vmem:[#allocation10 + $0x210] sm:$0xff]
    %v6679 = vld [vmem:[#allocation10 + $0x218] sm:$0xff]
    %v6680 = vld [vmem:[#allocation10 + $0x220] sm:$0xff]
    %v6681 = vld [vmem:[#allocation10 + $0x228] sm:$0xff]
    %v6682 = vld [vmem:[#allocation10 + $0x230] sm:$0xff]
    %v6683 = vld [vmem:[#allocation10 + $0x238] sm:$0xff]
    %v6684 = vld [vmem:[#allocation10 + $0x240] sm:$0xff]
    %v6685 = vld [vmem:[#allocation10 + $0x248] sm:$0xff]
    %v6686 = vld [vmem:[#allocation10 + $0x250] sm:$0xff]
    %v6687 = vld [vmem:[#allocation10 + $0x258] sm:$0xff]
    %v6688 = vld [vmem:[#allocation10 + $0x260] sm:$0xff]
    %v6689 = vld [vmem:[#allocation10 + $0x268] sm:$0xff]
    %v6690 = vld [vmem:[#allocation10 + $0x270] sm:$0xff]
    %v6691 = vld [vmem:[#allocation10 + $0x278] sm:$0xff]
    %v6692 = vld [vmem:[#allocation10 + $0x280] sm:$0xff]
    %v6693 = vld [vmem:[#allocation10 + $0x288] sm:$0xff]
    %v6694 = vld [vmem:[#allocation10 + $0x290] sm:$0xff]
    %v6695 = vld [vmem:[#allocation10 + $0x298] sm:$0xff]
    %v6696 = vld [vmem:[#allocation10 + $0x2a0] sm:$0xff]
    %v6697 = vld [vmem:[#allocation10 + $0x2a8] sm:$0xff]
    %v6698 = vld [vmem:[#allocation10 + $0x2b0] sm:$0xff]
    %v6699 = vld [vmem:[#allocation10 + $0x2b8] sm:$0xff]
    %v6700 = vld [vmem:[#allocation10 + $0x2c0] sm:$0xff]
    %v6701 = vld [vmem:[#allocation10 + $0x2c8] sm:$0xff]
    %v6702 = vld [vmem:[#allocation10 + $0x2d0] sm:$0xff]
    %v6703 = vld [vmem:[#allocation10 + $0x2d8] sm:$0xff]
    %v6704 = vld [vmem:[#allocation10 + $0x2e0] sm:$0xff]
    %v6705 = vld [vmem:[#allocation10 + $0x2e8] sm:$0xff]
    %v6706 = vld [vmem:[#allocation10 + $0x2f0] sm:$0xff]
    %v6707 = vld [vmem:[#allocation10 + $0x2f8] sm:$0xff]
    %v6708 = vld [vmem:[#allocation10 + $0x300] sm:$0xff]
    %v6709 = vld [vmem:[#allocation10 + $0x308] sm:$0xff]
    %v6710 = vld [vmem:[#allocation10 + $0x310] sm:$0xff]
    %v6711 = vld [vmem:[#allocation10 + $0x318] sm:$0xff]
    %v6712 = vld [vmem:[#allocation10 + $0x320] sm:$0xff]
    %v6713 = vld [vmem:[#allocation10 + $0x328] sm:$0xff]
    %v6714 = vld [vmem:[#allocation10 + $0x330] sm:$0xff]
    %v6715 = vld [vmem:[#allocation10 + $0x338] sm:$0xff]
    %v6716 = vld [vmem:[#allocation10 + $0x340] sm:$0xff]
    %v6717 = vld [vmem:[#allocation10 + $0x348] sm:$0xff]
    %v6718 = vld [vmem:[#allocation10 + $0x350] sm:$0xff]
    %v6719 = vld [vmem:[#allocation10 + $0x358] sm:$0xff]
    %v6720 = vld [vmem:[#allocation10 + $0x360] sm:$0xff]
    %v6721 = vld [vmem:[#allocation10 + $0x368] sm:$0xff]
    %v6722 = vld [vmem:[#allocation10 + $0x370] sm:$0xff]
    %v6723 = vld [vmem:[#allocation10 + $0x378] sm:$0xff]
    %v6724 = vld [vmem:[#allocation10 + $0x380] sm:$0xff]
    %v6725 = vld [vmem:[#allocation10 + $0x388] sm:$0xff]
    %v6726 = vld [vmem:[#allocation10 + $0x390] sm:$0xff]
    %v6727 = vld [vmem:[#allocation10 + $0x398] sm:$0xff]
    %v6728 = vld [vmem:[#allocation10 + $0x3a0] sm:$0xff]
    %v6729 = vld [vmem:[#allocation10 + $0x3a8] sm:$0xff]
    %v6730 = vld [vmem:[#allocation10 + $0x3b0] sm:$0xff]
    %v6731 = vld [vmem:[#allocation10 + $0x3b8] sm:$0xff]
    %v6732 = vld [vmem:[#allocation10 + $0x3c0] sm:$0xff]
    %v6733 = vld [vmem:[#allocation10 + $0x3c8] sm:$0xff]
    %v6734 = vld [vmem:[#allocation10 + $0x3d0] sm:$0xff]
    %v6735 = vld [vmem:[#allocation10 + $0x3d8] sm:$0xff]
    %v6736 = vld [vmem:[#allocation10 + $0x3e0] sm:$0xff]
    %v6737 = vld [vmem:[#allocation10 + $0x3e8] sm:$0xff]
    %v6738 = vld [vmem:[#allocation10 + $0x3f0] sm:$0xff]
    %v6739 = vld [vmem:[#allocation10 + $0x3f8] sm:$0xff]
    %v6868 = vunpack.c.l.b16 %v6612
    %v6869 = vunpack.c.h.b16 %v6612
    %v6870 = vunpack.c.l.b16 %v6613
    %v6871 = vunpack.c.h.b16 %v6613
    %v6872 = vunpack.c.l.b16 %v6614
    %v6873 = vunpack.c.h.b16 %v6614
    %v6874 = vunpack.c.l.b16 %v6615
    %v6875 = vunpack.c.h.b16 %v6615
    %v6876 = vunpack.c.l.b16 %v6616
    %v6877 = vunpack.c.h.b16 %v6616
    %v6878 = vunpack.c.l.b16 %v6617
    %v6879 = vunpack.c.h.b16 %v6617
    %v6880 = vunpack.c.l.b16 %v6618
    %v6881 = vunpack.c.h.b16 %v6618
    %v6882 = vunpack.c.l.b16 %v6619
    %v6883 = vunpack.c.h.b16 %v6619
    %v6884 = vunpack.c.l.b16 %v6620
    %v6885 = vunpack.c.h.b16 %v6620
    %v6886 = vunpack.c.l.b16 %v6621
    %v6887 = vunpack.c.h.b16 %v6621
    %v6888 = vunpack.c.l.b16 %v6622
    %v6889 = vunpack.c.h.b16 %v6622
    %v6890 = vunpack.c.l.b16 %v6623
    %v6891 = vunpack.c.h.b16 %v6623
    %v6892 = vunpack.c.l.b16 %v6624
    %v6893 = vunpack.c.h.b16 %v6624
    %v6894 = vunpack.c.l.b16 %v6625
    %v6895 = vunpack.c.h.b16 %v6625
    %v6896 = vunpack.c.l.b16 %v6626
    %v6897 = vunpack.c.h.b16 %v6626
    %v6898 = vunpack.c.l.b16 %v6627
    %v6899 = vunpack.c.h.b16 %v6627
    %v6900 = vunpack.c.l.b16 %v6628
    %v6901 = vunpack.c.h.b16 %v6628
    %v6902 = vunpack.c.l.b16 %v6629
    %v6903 = vunpack.c.h.b16 %v6629
    %v6904 = vunpack.c.l.b16 %v6630
    %v6905 = vunpack.c.h.b16 %v6630
    %v6906 = vunpack.c.l.b16 %v6631
    %v6907 = vunpack.c.h.b16 %v6631
    %v6908 = vunpack.c.l.b16 %v6632
    %v6909 = vunpack.c.h.b16 %v6632
    %v6910 = vunpack.c.l.b16 %v6633
    %v6911 = vunpack.c.h.b16 %v6633
    %v6912 = vunpack.c.l.b16 %v6634
    %v6913 = vunpack.c.h.b16 %v6634
    %v6914 = vunpack.c.l.b16 %v6635
    %v6915 = vunpack.c.h.b16 %v6635
    %v6916 = vunpack.c.l.b16 %v6636
    %v6917 = vunpack.c.h.b16 %v6636
    %v6918 = vunpack.c.l.b16 %v6637
    %v6919 = vunpack.c.h.b16 %v6637
    %v6920 = vunpack.c.l.b16 %v6638
    %v6921 = vunpack.c.h.b16 %v6638
    %v6922 = vunpack.c.l.b16 %v6639
    %v6923 = vunpack.c.h.b16 %v6639
    %v6924 = vunpack.c.l.b16 %v6640
    %v6925 = vunpack.c.h.b16 %v6640
    %v6926 = vunpack.c.l.b16 %v6641
    %v6927 = vunpack.c.h.b16 %v6641
    %v6928 = vunpack.c.l.b16 %v6642
    %v6929 = vunpack.c.h.b16 %v6642
    %v6930 = vunpack.c.l.b16 %v6643
    %v6931 = vunpack.c.h.b16 %v6643
    %v6932 = vunpack.c.l.b16 %v6644
    %v6933 = vunpack.c.h.b16 %v6644
    %v6934 = vunpack.c.l.b16 %v6645
    %v6935 = vunpack.c.h.b16 %v6645
    %v6936 = vunpack.c.l.b16 %v6646
    %v6937 = vunpack.c.h.b16 %v6646
    %v6938 = vunpack.c.l.b16 %v6647
    %v6939 = vunpack.c.h.b16 %v6647
    %v6940 = vunpack.c.l.b16 %v6648
    %v6941 = vunpack.c.h.b16 %v6648
    %v6942 = vunpack.c.l.b16 %v6649
    %v6943 = vunpack.c.h.b16 %v6649
    %v6944 = vunpack.c.l.b16 %v6650
    %v6945 = vunpack.c.h.b16 %v6650
    %v6946 = vunpack.c.l.b16 %v6651
    %v6947 = vunpack.c.h.b16 %v6651
    %v6948 = vunpack.c.l.b16 %v6652
    %v6949 = vunpack.c.h.b16 %v6652
    %v6950 = vunpack.c.l.b16 %v6653
    %v6951 = vunpack.c.h.b16 %v6653
    %v6952 = vunpack.c.l.b16 %v6654
    %v6953 = vunpack.c.h.b16 %v6654
    %v6954 = vunpack.c.l.b16 %v6655
    %v6955 = vunpack.c.h.b16 %v6655
    %v6956 = vunpack.c.l.b16 %v6656
    %v6957 = vunpack.c.h.b16 %v6656
    %v6958 = vunpack.c.l.b16 %v6657
    %v6959 = vunpack.c.h.b16 %v6657
    %v6960 = vunpack.c.l.b16 %v6658
    %v6961 = vunpack.c.h.b16 %v6658
    %v6962 = vunpack.c.l.b16 %v6659
    %v6963 = vunpack.c.h.b16 %v6659
    %v6964 = vunpack.c.l.b16 %v6660
    %v6965 = vunpack.c.h.b16 %v6660
    %v6966 = vunpack.c.l.b16 %v6661
    %v6967 = vunpack.c.h.b16 %v6661
    %v6968 = vunpack.c.l.b16 %v6662
    %v6969 = vunpack.c.h.b16 %v6662
    %v6970 = vunpack.c.l.b16 %v6663
    %v6971 = vunpack.c.h.b16 %v6663
    %v6972 = vunpack.c.l.b16 %v6664
    %v6973 = vunpack.c.h.b16 %v6664
    %v6974 = vunpack.c.l.b16 %v6665
    %v6975 = vunpack.c.h.b16 %v6665
    %v6976 = vunpack.c.l.b16 %v6666
    %v6977 = vunpack.c.h.b16 %v6666
    %v6978 = vunpack.c.l.b16 %v6667
    %v6979 = vunpack.c.h.b16 %v6667
    %v6980 = vunpack.c.l.b16 %v6668
    %v6981 = vunpack.c.h.b16 %v6668
    %v6982 = vunpack.c.l.b16 %v6669
    %v6983 = vunpack.c.h.b16 %v6669
    %v6984 = vunpack.c.l.b16 %v6670
    %v6985 = vunpack.c.h.b16 %v6670
    %v6986 = vunpack.c.l.b16 %v6671
    %v6987 = vunpack.c.h.b16 %v6671
    %v6988 = vunpack.c.l.b16 %v6672
    %v6989 = vunpack.c.h.b16 %v6672
    %v6990 = vunpack.c.l.b16 %v6673
    %v6991 = vunpack.c.h.b16 %v6673
    %v6992 = vunpack.c.l.b16 %v6674
    %v6993 = vunpack.c.h.b16 %v6674
    %v6994 = vunpack.c.l.b16 %v6675
    %v6995 = vunpack.c.h.b16 %v6675
    %v6996 = vunpack.c.l.b16 %v6676
    %v6997 = vunpack.c.h.b16 %v6676
    %v6998 = vunpack.c.l.b16 %v6677
    %v6999 = vunpack.c.h.b16 %v6677
    %v7000 = vunpack.c.l.b16 %v6678
    %v7001 = vunpack.c.h.b16 %v6678
    %v7002 = vunpack.c.l.b16 %v6679
    %v7003 = vunpack.c.h.b16 %v6679
    %v7004 = vunpack.c.l.b16 %v6680
    %v7005 = vunpack.c.h.b16 %v6680
    %v7006 = vunpack.c.l.b16 %v6681
    %v7007 = vunpack.c.h.b16 %v6681
    %v7008 = vunpack.c.l.b16 %v6682
    %v7009 = vunpack.c.h.b16 %v6682
    %v7010 = vunpack.c.l.b16 %v6683
    %v7011 = vunpack.c.h.b16 %v6683
    %v7012 = vunpack.c.l.b16 %v6684
    %v7013 = vunpack.c.h.b16 %v6684
    %v7014 = vunpack.c.l.b16 %v6685
    %v7015 = vunpack.c.h.b16 %v6685
    %v7016 = vunpack.c.l.b16 %v6686
    %v7017 = vunpack.c.h.b16 %v6686
    %v7018 = vunpack.c.l.b16 %v6687
    %v7019 = vunpack.c.h.b16 %v6687
    %v7020 = vunpack.c.l.b16 %v6688
    %v7021 = vunpack.c.h.b16 %v6688
    %v7022 = vunpack.c.l.b16 %v6689
    %v7023 = vunpack.c.h.b16 %v6689
    %v7024 = vunpack.c.l.b16 %v6690
    %v7025 = vunpack.c.h.b16 %v6690
    %v7026 = vunpack.c.l.b16 %v6691
    %v7027 = vunpack.c.h.b16 %v6691
    %v7028 = vunpack.c.l.b16 %v6692
    %v7029 = vunpack.c.h.b16 %v6692
    %v7030 = vunpack.c.l.b16 %v6693
    %v7031 = vunpack.c.h.b16 %v6693
    %v7032 = vunpack.c.l.b16 %v6694
    %v7033 = vunpack.c.h.b16 %v6694
    %v7034 = vunpack.c.l.b16 %v6695
    %v7035 = vunpack.c.h.b16 %v6695
    %v7036 = vunpack.c.l.b16 %v6696
    %v7037 = vunpack.c.h.b16 %v6696
    %v7038 = vunpack.c.l.b16 %v6697
    %v7039 = vunpack.c.h.b16 %v6697
    %v7040 = vunpack.c.l.b16 %v6698
    %v7041 = vunpack.c.h.b16 %v6698
    %v7042 = vunpack.c.l.b16 %v6699
    %v7043 = vunpack.c.h.b16 %v6699
    %v7044 = vunpack.c.l.b16 %v6700
    %v7045 = vunpack.c.h.b16 %v6700
    %v7046 = vunpack.c.l.b16 %v6701
    %v7047 = vunpack.c.h.b16 %v6701
    %v7048 = vunpack.c.l.b16 %v6702
    %v7049 = vunpack.c.h.b16 %v6702
    %v7050 = vunpack.c.l.b16 %v6703
    %v7051 = vunpack.c.h.b16 %v6703
    %v7052 = vunpack.c.l.b16 %v6704
    %v7053 = vunpack.c.h.b16 %v6704
    %v7054 = vunpack.c.l.b16 %v6705
    %v7055 = vunpack.c.h.b16 %v6705
    %v7056 = vunpack.c.l.b16 %v6706
    %v7057 = vunpack.c.h.b16 %v6706
    %v7058 = vunpack.c.l.b16 %v6707
    %v7059 = vunpack.c.h.b16 %v6707
    %v7060 = vunpack.c.l.b16 %v6708
    %v7061 = vunpack.c.h.b16 %v6708
    %v7062 = vunpack.c.l.b16 %v6709
    %v7063 = vunpack.c.h.b16 %v6709
    %v7064 = vunpack.c.l.b16 %v6710
    %v7065 = vunpack.c.h.b16 %v6710
    %v7066 = vunpack.c.l.b16 %v6711
    %v7067 = vunpack.c.h.b16 %v6711
    %v7068 = vunpack.c.l.b16 %v6712
    %v7069 = vunpack.c.h.b16 %v6712
    %v7070 = vunpack.c.l.b16 %v6713
    %v7071 = vunpack.c.h.b16 %v6713
    %v7072 = vunpack.c.l.b16 %v6714
    %v7073 = vunpack.c.h.b16 %v6714
    %v7074 = vunpack.c.l.b16 %v6715
    %v7075 = vunpack.c.h.b16 %v6715
    %v7076 = vunpack.c.l.b16 %v6716
    %v7077 = vunpack.c.h.b16 %v6716
    %v7078 = vunpack.c.l.b16 %v6717
    %v7079 = vunpack.c.h.b16 %v6717
    %v7080 = vunpack.c.l.b16 %v6718
    %v7081 = vunpack.c.h.b16 %v6718
    %v7082 = vunpack.c.l.b16 %v6719
    %v7083 = vunpack.c.h.b16 %v6719
    %v7084 = vunpack.c.l.b16 %v6720
    %v7085 = vunpack.c.h.b16 %v6720
    %v7086 = vunpack.c.l.b16 %v6721
    %v7087 = vunpack.c.h.b16 %v6721
    %v7088 = vunpack.c.l.b16 %v6722
    %v7089 = vunpack.c.h.b16 %v6722
    %v7090 = vunpack.c.l.b16 %v6723
    %v7091 = vunpack.c.h.b16 %v6723
    %v7092 = vunpack.c.l.b16 %v6724
    %v7093 = vunpack.c.h.b16 %v6724
    %v7094 = vunpack.c.l.b16 %v6725
    %v7095 = vunpack.c.h.b16 %v6725
    %v7096 = vunpack.c.l.b16 %v6726
    %v7097 = vunpack.c.h.b16 %v6726
    %v7098 = vunpack.c.l.b16 %v6727
    %v7099 = vunpack.c.h.b16 %v6727
    %v7100 = vunpack.c.l.b16 %v6728
    %v7101 = vunpack.c.h.b16 %v6728
    %v7102 = vunpack.c.l.b16 %v6729
    %v7103 = vunpack.c.h.b16 %v6729
    %v7104 = vunpack.c.l.b16 %v6730
    %v7105 = vunpack.c.h.b16 %v6730
    %v7106 = vunpack.c.l.b16 %v6731
    %v7107 = vunpack.c.h.b16 %v6731
    %v7108 = vunpack.c.l.b16 %v6732
    %v7109 = vunpack.c.h.b16 %v6732
    %v7110 = vunpack.c.l.b16 %v6733
    %v7111 = vunpack.c.h.b16 %v6733
    %v7112 = vunpack.c.l.b16 %v6734
    %v7113 = vunpack.c.h.b16 %v6734
    %v7114 = vunpack.c.l.b16 %v6735
    %v7115 = vunpack.c.h.b16 %v6735
    %v7116 = vunpack.c.l.b16 %v6736
    %v7117 = vunpack.c.h.b16 %v6736
    %v7118 = vunpack.c.l.b16 %v6737
    %v7119 = vunpack.c.h.b16 %v6737
    %v7120 = vunpack.c.l.b16 %v6738
    %v7121 = vunpack.c.h.b16 %v6738
    %v7122 = vunpack.c.l.b16 %v6739
    %v7123 = vunpack.c.h.b16 %v6739
    %v7124 = vpack.c.b16 %v6876, %v6868
    %v7125 = vpack.c.b16 %v6877, %v6869
    %v7126 = vpack.c.b16 %v6878, %v6870
    %v7127 = vpack.c.b16 %v6879, %v6871
    %v7128 = vpack.c.b16 %v6880, %v6872
    %v7129 = vpack.c.b16 %v6881, %v6873
    %v7130 = vpack.c.b16 %v6882, %v6874
    %v7131 = vpack.c.b16 %v6883, %v6875
    %v7132 = vpack.c.b16 %v6892, %v6884
    %v7133 = vpack.c.b16 %v6893, %v6885
    %v7134 = vpack.c.b16 %v6894, %v6886
    %v7135 = vpack.c.b16 %v6895, %v6887
    %v7136 = vpack.c.b16 %v6896, %v6888
    %v7137 = vpack.c.b16 %v6897, %v6889
    %v7138 = vpack.c.b16 %v6898, %v6890
    %v7139 = vpack.c.b16 %v6899, %v6891
    %v7140 = vpack.c.b16 %v6908, %v6900
    %v7141 = vpack.c.b16 %v6909, %v6901
    %v7142 = vpack.c.b16 %v6910, %v6902
    %v7143 = vpack.c.b16 %v6911, %v6903
    %v7144 = vpack.c.b16 %v6912, %v6904
    %v7145 = vpack.c.b16 %v6913, %v6905
    %v7146 = vpack.c.b16 %v6914, %v6906
    %v7147 = vpack.c.b16 %v6915, %v6907
    %v7148 = vpack.c.b16 %v6924, %v6916
    %v7149 = vpack.c.b16 %v6925, %v6917
    %v7150 = vpack.c.b16 %v6926, %v6918
    %v7151 = vpack.c.b16 %v6927, %v6919
    %v7152 = vpack.c.b16 %v6928, %v6920
    %v7153 = vpack.c.b16 %v6929, %v6921
    %v7154 = vpack.c.b16 %v6930, %v6922
    %v7155 = vpack.c.b16 %v6931, %v6923
    %v7156 = vpack.c.b16 %v6940, %v6932
    %v7157 = vpack.c.b16 %v6941, %v6933
    %v7158 = vpack.c.b16 %v6942, %v6934
    %v7159 = vpack.c.b16 %v6943, %v6935
    %v7160 = vpack.c.b16 %v6944, %v6936
    %v7161 = vpack.c.b16 %v6945, %v6937
    %v7162 = vpack.c.b16 %v6946, %v6938
    %v7163 = vpack.c.b16 %v6947, %v6939
    %v7164 = vpack.c.b16 %v6956, %v6948
    %v7165 = vpack.c.b16 %v6957, %v6949
    %v7166 = vpack.c.b16 %v6958, %v6950
    %v7167 = vpack.c.b16 %v6959, %v6951
    %v7168 = vpack.c.b16 %v6960, %v6952
    %v7169 = vpack.c.b16 %v6961, %v6953
    %v7170 = vpack.c.b16 %v6962, %v6954
    %v7171 = vpack.c.b16 %v6963, %v6955
    %v7172 = vpack.c.b16 %v6972, %v6964
    %v7173 = vpack.c.b16 %v6973, %v6965
    %v7174 = vpack.c.b16 %v6974, %v6966
    %v7175 = vpack.c.b16 %v6975, %v6967
    %v7176 = vpack.c.b16 %v6976, %v6968
    %v7177 = vpack.c.b16 %v6977, %v6969
    %v7178 = vpack.c.b16 %v6978, %v6970
    %v7179 = vpack.c.b16 %v6979, %v6971
    %v7180 = vpack.c.b16 %v6988, %v6980
    %v7181 = vpack.c.b16 %v6989, %v6981
    %v7182 = vpack.c.b16 %v6990, %v6982
    %v7183 = vpack.c.b16 %v6991, %v6983
    %v7184 = vpack.c.b16 %v6992, %v6984
    %v7185 = vpack.c.b16 %v6993, %v6985
    %v7186 = vpack.c.b16 %v6994, %v6986
    %v7187 = vpack.c.b16 %v6995, %v6987
    %v7188 = vpack.c.b16 %v7004, %v6996
    %v7189 = vpack.c.b16 %v7005, %v6997
    %v7190 = vpack.c.b16 %v7006, %v6998
    %v7191 = vpack.c.b16 %v7007, %v6999
    %v7192 = vpack.c.b16 %v7008, %v7000
    %v7193 = vpack.c.b16 %v7009, %v7001
    %v7194 = vpack.c.b16 %v7010, %v7002
    %v7195 = vpack.c.b16 %v7011, %v7003
    %v7196 = vpack.c.b16 %v7020, %v7012
    %v7197 = vpack.c.b16 %v7021, %v7013
    %v7198 = vpack.c.b16 %v7022, %v7014
    %v7199 = vpack.c.b16 %v7023, %v7015
    %v7200 = vpack.c.b16 %v7024, %v7016
    %v7201 = vpack.c.b16 %v7025, %v7017
    %v7202 = vpack.c.b16 %v7026, %v7018
    %v7203 = vpack.c.b16 %v7027, %v7019
    %v7204 = vpack.c.b16 %v7036, %v7028
    %v7205 = vpack.c.b16 %v7037, %v7029
    %v7206 = vpack.c.b16 %v7038, %v7030
    %v7207 = vpack.c.b16 %v7039, %v7031
    %v7208 = vpack.c.b16 %v7040, %v7032
    %v7209 = vpack.c.b16 %v7041, %v7033
    %v7210 = vpack.c.b16 %v7042, %v7034
    %v7211 = vpack.c.b16 %v7043, %v7035
    %v7212 = vpack.c.b16 %v7052, %v7044
    %v7213 = vpack.c.b16 %v7053, %v7045
    %v7214 = vpack.c.b16 %v7054, %v7046
    %v7215 = vpack.c.b16 %v7055, %v7047
    %v7216 = vpack.c.b16 %v7056, %v7048
    %v7217 = vpack.c.b16 %v7057, %v7049
    %v7218 = vpack.c.b16 %v7058, %v7050
    %v7219 = vpack.c.b16 %v7059, %v7051
    %v7220 = vpack.c.b16 %v7068, %v7060
    %v7221 = vpack.c.b16 %v7069, %v7061
    %v7222 = vpack.c.b16 %v7070, %v7062
    %v7223 = vpack.c.b16 %v7071, %v7063
    %v7224 = vpack.c.b16 %v7072, %v7064
    %v7225 = vpack.c.b16 %v7073, %v7065
    %v7226 = vpack.c.b16 %v7074, %v7066
    %v7227 = vpack.c.b16 %v7075, %v7067
    %v7228 = vpack.c.b16 %v7084, %v7076
    %v7229 = vpack.c.b16 %v7085, %v7077
    %v7230 = vpack.c.b16 %v7086, %v7078
    %v7231 = vpack.c.b16 %v7087, %v7079
    %v7232 = vpack.c.b16 %v7088, %v7080
    %v7233 = vpack.c.b16 %v7089, %v7081
    %v7234 = vpack.c.b16 %v7090, %v7082
    %v7235 = vpack.c.b16 %v7091, %v7083
    %v7236 = vpack.c.b16 %v7100, %v7092
    %v7237 = vpack.c.b16 %v7101, %v7093
    %v7238 = vpack.c.b16 %v7102, %v7094
    %v7239 = vpack.c.b16 %v7103, %v7095
    %v7240 = vpack.c.b16 %v7104, %v7096
    %v7241 = vpack.c.b16 %v7105, %v7097
    %v7242 = vpack.c.b16 %v7106, %v7098
    %v7243 = vpack.c.b16 %v7107, %v7099
    %v7244 = vpack.c.b16 %v7116, %v7108
    %v7245 = vpack.c.b16 %v7117, %v7109
    %v7246 = vpack.c.b16 %v7118, %v7110
    %v7247 = vpack.c.b16 %v7119, %v7111
    %v7248 = vpack.c.b16 %v7120, %v7112
    %v7249 = vpack.c.b16 %v7121, %v7113
    %v7250 = vpack.c.b16 %v7122, %v7114
    %v7251 = vpack.c.b16 %v7123, %v7115
    %7380 = vmatpush.bf16.msra.mxu0 %v7180
    %7381 = vmatpush.bf16.msra.mxu0 %v7172
    %7382 = vmatpush.bf16.msra.mxu0 %v7164
    %7383 = vmatpush.bf16.msra.mxu0 %v7156
    %7384 = vmatpush.bf16.msra.mxu0 %v7148
    %7385 = vmatpush.bf16.msra.mxu0 %v7140
    %7386 = vmatpush.bf16.msra.mxu0 %v7132
    %7387 = vmatpush.bf16.msra.mxu0 %v7124
    %7388 = vmatmul.bf16.gmra.mxu0 %v6610
    %v7389 = vpop.f32.mrf.mxu0
    %v7390 = vadd.f32 0.0, %v7389
    %v7391 = vpop.f32.mrf.mxu0
    %7392 = vdwg.mxu0
    %7393 = vmatpush.bf16.msra.mxu0 %v7244
    %7394 = vmatpush.bf16.msra.mxu0 %v7236
    %7395 = vmatpush.bf16.msra.mxu0 %v7228
    %7396 = vmatpush.bf16.msra.mxu0 %v7220
    %7397 = vmatpush.bf16.msra.mxu0 %v7212
    %7398 = vmatpush.bf16.msra.mxu0 %v7204
    %7399 = vmatpush.bf16.msra.mxu0 %v7196
    %7400 = vmatpush.bf16.msra.mxu0 %v7188
    %7401 = vmatmul.bf16.gmra.mxu0 %v6611
    %v7402 = vpop.f32.mrf.mxu0
    %v7403 = vadd.f32 %v7390, %v7402
    %v7404 = vpop.f32.mrf.mxu0
    %7405 = vdwg.mxu0
    %7406 = vmatpush.bf16.msra.mxu0 %v7181
    %7407 = vmatpush.bf16.msra.mxu0 %v7173
    %7408 = vmatpush.bf16.msra.mxu0 %v7165
    %7409 = vmatpush.bf16.msra.mxu0 %v7157
    %7410 = vmatpush.bf16.msra.mxu0 %v7149
    %7411 = vmatpush.bf16.msra.mxu0 %v7141
    %7412 = vmatpush.bf16.msra.mxu0 %v7133
    %7413 = vmatpush.bf16.msra.mxu0 %v7125
    %7414 = vmatmul.bf16.gmra.mxu0 %v6610
    %v7415 = vpop.f32.mrf.mxu0
    %v7416 = vadd.f32 0.0, %v7415
    %v7417 = vpop.f32.mrf.mxu0
    %7418 = vdwg.mxu0
    %7419 = vmatpush.bf16.msra.mxu0 %v7245
    %7420 = vmatpush.bf16.msra.mxu0 %v7237
    %7421 = vmatpush.bf16.msra.mxu0 %v7229
    %7422 = vmatpush.bf16.msra.mxu0 %v7221
    %7423 = vmatpush.bf16.msra.mxu0 %v7213
    %7424 = vmatpush.bf16.msra.mxu0 %v7205
    %7425 = vmatpush.bf16.msra.mxu0 %v7197
    %7426 = vmatpush.bf16.msra.mxu0 %v7189
    %7427 = vmatmul.bf16.gmra.mxu0 %v6611
    %v7428 = vpop.f32.mrf.mxu0
    %v7429 = vadd.f32 %v7416, %v7428
    %v7430 = vpop.f32.mrf.mxu0
    %7431 = vdwg.mxu0
    %7432 = vmatpush.bf16.msra.mxu0 %v7182
    %7433 = vmatpush.bf16.msra.mxu0 %v7174
    %7434 = vmatpush.bf16.msra.mxu0 %v7166
    %7435 = vmatpush.bf16.msra.mxu0 %v7158
    %7436 = vmatpush.bf16.msra.mxu0 %v7150
    %7437 = vmatpush.bf16.msra.mxu0 %v7142
    %7438 = vmatpush.bf16.msra.mxu0 %v7134
    %7439 = vmatpush.bf16.msra.mxu0 %v7126
    %7440 = vmatmul.bf16.gmra.mxu0 %v6610
    %v7441 = vpop.f32.mrf.mxu0
    %v7442 = vadd.f32 0.0, %v7441
    %v7443 = vpop.f32.mrf.mxu0
    %7444 = vdwg.mxu0
    %7445 = vmatpush.bf16.msra.mxu0 %v7246
    %7446 = vmatpush.bf16.msra.mxu0 %v7238
    %7447 = vmatpush.bf16.msra.mxu0 %v7230
    %7448 = vmatpush.bf16.msra.mxu0 %v7222
    %7449 = vmatpush.bf16.msra.mxu0 %v7214
    %7450 = vmatpush.bf16.msra.mxu0 %v7206
    %7451 = vmatpush.bf16.msra.mxu0 %v7198
    %7452 = vmatpush.bf16.msra.mxu0 %v7190
    %7453 = vmatmul.bf16.gmra.mxu0 %v6611
    %v7454 = vpop.f32.mrf.mxu0
    %v7455 = vadd.f32 %v7442, %v7454
    %v7456 = vpop.f32.mrf.mxu0
    %7457 = vdwg.mxu0
    %7458 = vmatpush.bf16.msra.mxu0 %v7183
    %7459 = vmatpush.bf16.msra.mxu0 %v7175
    %7460 = vmatpush.bf16.msra.mxu0 %v7167
    %7461 = vmatpush.bf16.msra.mxu0 %v7159
    %7462 = vmatpush.bf16.msra.mxu0 %v7151
    %7463 = vmatpush.bf16.msra.mxu0 %v7143
    %7464 = vmatpush.bf16.msra.mxu0 %v7135
    %7465 = vmatpush.bf16.msra.mxu0 %v7127
    %7466 = vmatmul.bf16.gmra.mxu0 %v6610
    %v7467 = vpop.f32.mrf.mxu0
    %v7468 = vadd.f32 0.0, %v7467
    %v7469 = vpop.f32.mrf.mxu0
    %7470 = vdwg.mxu0
    %7471 = vmatpush.bf16.msra.mxu0 %v7247
    %7472 = vmatpush.bf16.msra.mxu0 %v7239
    %7473 = vmatpush.bf16.msra.mxu0 %v7231
    %7474 = vmatpush.bf16.msra.mxu0 %v7223
    %7475 = vmatpush.bf16.msra.mxu0 %v7215
    %7476 = vmatpush.bf16.msra.mxu0 %v7207
    %7477 = vmatpush.bf16.msra.mxu0 %v7199
    %7478 = vmatpush.bf16.msra.mxu0 %v7191
    %7479 = vmatmul.bf16.gmra.mxu0 %v6611
    %v7480 = vpop.f32.mrf.mxu0
    %v7481 = vadd.f32 %v7468, %v7480
    %v7482 = vpop.f32.mrf.mxu0
    %7483 = vdwg.mxu0
    %7484 = vmatpush.bf16.msra.mxu0 %v7184
    %7485 = vmatpush.bf16.msra.mxu0 %v7176
    %7486 = vmatpush.bf16.msra.mxu0 %v7168
    %7487 = vmatpush.bf16.msra.mxu0 %v7160
    %7488 = vmatpush.bf16.msra.mxu0 %v7152
    %7489 = vmatpush.bf16.msra.mxu0 %v7144
    %7490 = vmatpush.bf16.msra.mxu0 %v7136
    %7491 = vmatpush.bf16.msra.mxu0 %v7128
    %7492 = vmatmul.bf16.gmra.mxu0 %v6610
    %v7493 = vpop.f32.mrf.mxu0
    %v7494 = vadd.f32 0.0, %v7493
    %v7495 = vpop.f32.mrf.mxu0
    %7496 = vdwg.mxu0
    %7497 = vmatpush.bf16.msra.mxu0 %v7248
    %7498 = vmatpush.bf16.msra.mxu0 %v7240
    %7499 = vmatpush.bf16.msra.mxu0 %v7232
    %7500 = vmatpush.bf16.msra.mxu0 %v7224
    %7501 = vmatpush.bf16.msra.mxu0 %v7216
    %7502 = vmatpush.bf16.msra.mxu0 %v7208
    %7503 = vmatpush.bf16.msra.mxu0 %v7200
    %7504 = vmatpush.bf16.msra.mxu0 %v7192
    %7505 = vmatmul.bf16.gmra.mxu0 %v6611
    %v7506 = vpop.f32.mrf.mxu0
    %v7507 = vadd.f32 %v7494, %v7506
    %v7508 = vpop.f32.mrf.mxu0
    %7509 = vdwg.mxu0
    %7510 = vmatpush.bf16.msra.mxu0 %v7185
    %7511 = vmatpush.bf16.msra.mxu0 %v7177
    %7512 = vmatpush.bf16.msra.mxu0 %v7169
    %7513 = vmatpush.bf16.msra.mxu0 %v7161
    %7514 = vmatpush.bf16.msra.mxu0 %v7153
    %7515 = vmatpush.bf16.msra.mxu0 %v7145
    %7516 = vmatpush.bf16.msra.mxu0 %v7137
    %7517 = vmatpush.bf16.msra.mxu0 %v7129
    %7518 = vmatmul.bf16.gmra.mxu0 %v6610
    %v7519 = vpop.f32.mrf.mxu0
    %v7520 = vadd.f32 0.0, %v7519
    %v7521 = vpop.f32.mrf.mxu0
    %7522 = vdwg.mxu0
    %7523 = vmatpush.bf16.msra.mxu0 %v7249
    %7524 = vmatpush.bf16.msra.mxu0 %v7241
    %7525 = vmatpush.bf16.msra.mxu0 %v7233
    %7526 = vmatpush.bf16.msra.mxu0 %v7225
    %7527 = vmatpush.bf16.msra.mxu0 %v7217
    %7528 = vmatpush.bf16.msra.mxu0 %v7209
    %7529 = vmatpush.bf16.msra.mxu0 %v7201
    %7530 = vmatpush.bf16.msra.mxu0 %v7193
    %7531 = vmatmul.bf16.gmra.mxu0 %v6611
    %v7532 = vpop.f32.mrf.mxu0
    %v7533 = vadd.f32 %v7520, %v7532
    %v7534 = vpop.f32.mrf.mxu0
    %7535 = vdwg.mxu0
    %7536 = vmatpush.bf16.msra.mxu0 %v7186
    %7537 = vmatpush.bf16.msra.mxu0 %v7178
    %7538 = vmatpush.bf16.msra.mxu0 %v7170
    %7539 = vmatpush.bf16.msra.mxu0 %v7162
    %7540 = vmatpush.bf16.msra.mxu0 %v7154
    %7541 = vmatpush.bf16.msra.mxu0 %v7146
    %7542 = vmatpush.bf16.msra.mxu0 %v7138
    %7543 = vmatpush.bf16.msra.mxu0 %v7130
    %7544 = vmatmul.bf16.gmra.mxu0 %v6610
    %v7545 = vpop.f32.mrf.mxu0
    %v7546 = vadd.f32 0.0, %v7545
    %v7547 = vpop.f32.mrf.mxu0
    %7548 = vdwg.mxu0
    %7549 = vmatpush.bf16.msra.mxu0 %v7250
    %7550 = vmatpush.bf16.msra.mxu0 %v7242
    %7551 = vmatpush.bf16.msra.mxu0 %v7234
    %7552 = vmatpush.bf16.msra.mxu0 %v7226
    %7553 = vmatpush.bf16.msra.mxu0 %v7218
    %7554 = vmatpush.bf16.msra.mxu0 %v7210
    %7555 = vmatpush.bf16.msra.mxu0 %v7202
    %7556 = vmatpush.bf16.msra.mxu0 %v7194
    %7557 = vmatmul.bf16.gmra.mxu0 %v6611
    %v7558 = vpop.f32.mrf.mxu0
    %v7559 = vadd.f32 %v7546, %v7558
    %v7560 = vpop.f32.mrf.mxu0
    %7561 = vdwg.mxu0
    %7562 = vmatpush.bf16.msra.mxu0 %v7187
    %7563 = vmatpush.bf16.msra.mxu0 %v7179
    %7564 = vmatpush.bf16.msra.mxu0 %v7171
    %7565 = vmatpush.bf16.msra.mxu0 %v7163
    %7566 = vmatpush.bf16.msra.mxu0 %v7155
    %7567 = vmatpush.bf16.msra.mxu0 %v7147
    %7568 = vmatpush.bf16.msra.mxu0 %v7139
    %7569 = vmatpush.bf16.msra.mxu0 %v7131
    %7570 = vmatmul.bf16.gmra.mxu0 %v6610
    %v7571 = vpop.f32.mrf.mxu0
    %v7572 = vadd.f32 0.0, %v7571
    %v7573 = vpop.f32.mrf.mxu0
    %7574 = vdwg.mxu0
    %7575 = vmatpush.bf16.msra.mxu0 %v7251
    %7576 = vmatpush.bf16.msra.mxu0 %v7243
    %7577 = vmatpush.bf16.msra.mxu0 %v7235
    %7578 = vmatpush.bf16.msra.mxu0 %v7227
    %7579 = vmatpush.bf16.msra.mxu0 %v7219
    %7580 = vmatpush.bf16.msra.mxu0 %v7211
    %7581 = vmatpush.bf16.msra.mxu0 %v7203
    %7582 = vmatpush.bf16.msra.mxu0 %v7195
    %7583 = vmatmul.bf16.gmra.mxu0 %v6611
    %v7584 = vpop.f32.mrf.mxu0
    %v7585 = vadd.f32 %v7572, %v7584
    %v7586 = vpop.f32.mrf.mxu0
    %7587 = vdwg.mxu0
    %v7588 = vadd.f32 %v826, %v7403
    %v7589 = vadd.f32 %v855, %v7429
    %v7590 = vadd.f32 %v884, %v7455
    %v7591 = vadd.f32 %v913, %v7481
    %v7592 = vadd.f32 %v942, %v7507
    %v7593 = vadd.f32 %v971, %v7533
    %v7594 = vadd.f32 %v1000, %v7559
    %v7595 = vadd.f32 %v1029, %v7585
    %v7596 = vxor.u32 %v7588, 2147483648
    %v7597 = vxor.u32 %v7589, 2147483648
    %v7598 = vmul.f32 %v7596, 1.442695
    %v7599 = vpow.pop %v7598
    %v7600 = vmul.f32 %v7597, 1.442695
    %v7601 = vpow.pop %v7600
    %v7602 = vadd.f32 %v7599, 1.0
    %v7603 = vadd.f32 %v7601, 1.0
    %v7604 = vrcp.pop %v7602
    %v7605 = vmul.f32 %v7602, %v7604
    %v7606 = vsub.f32 1.0, %v7605
    %v7607 = vmul.f32 %v7604, %v7606
    %v7608 = vadd.f32 %v7604, %v7607
    %vm7609 = vweird.f32 %v7602
    %vm7610 = vweird.f32 %v7604
    %vm7611 = vmor %vm7609, %vm7610
    %v7612 = vsel %vm7611, %v7604, %v7608
    %v7613 = vand.u32 2147483647, %v7602
    %vm7614 = vcmp.eq.f32.partialorder %v7613, 8.507059e+37
    %v7615 = vand.u32 %v7602, 2147483648
    %v7616 = vor.u32 1.1754944e-38, %v7615
    %v7617 = vsel %vm7614, %v7616, %v7612
    %v7618 = vmul.f32 1.0, %v7617
    %v7619 = vrcp.pop %v7603
    %v7620 = vmul.f32 %v7603, %v7619
    %v7621 = vsub.f32 1.0, %v7620
    %v7622 = vmul.f32 %v7619, %v7621
    %v7623 = vadd.f32 %v7619, %v7622
    %vm7624 = vweird.f32 %v7603
    %vm7625 = vweird.f32 %v7619
    %vm7626 = vmor %vm7624, %vm7625
    %v7627 = vsel %vm7626, %v7619, %v7623
    %v7628 = vand.u32 2147483647, %v7603
    %vm7629 = vcmp.eq.f32.partialorder %v7628, 8.507059e+37
    %v7630 = vand.u32 %v7603, 2147483648
    %v7631 = vor.u32 1.1754944e-38, %v7630
    %v7632 = vsel %vm7629, %v7631, %v7627
    %v7633 = vmul.f32 1.0, %v7632
    %v7634 = vxor.u32 %v7590, 2147483648
    %v7635 = vxor.u32 %v7591, 2147483648
    %v7636 = vmul.f32 %v7634, 1.442695
    %v7637 = vpow.pop %v7636
    %v7638 = vmul.f32 %v7635, 1.442695
    %v7639 = vpow.pop %v7638
    %v7640 = vadd.f32 %v7637, 1.0
    %v7641 = vadd.f32 %v7639, 1.0
    %v7642 = vrcp.pop %v7640
    %v7643 = vmul.f32 %v7640, %v7642
    %v7644 = vsub.f32 1.0, %v7643
    %v7645 = vmul.f32 %v7642, %v7644
    %v7646 = vadd.f32 %v7642, %v7645
    %vm7647 = vweird.f32 %v7640
    %vm7648 = vweird.f32 %v7642
    %vm7649 = vmor %vm7647, %vm7648
    %v7650 = vsel %vm7649, %v7642, %v7646
    %v7651 = vand.u32 2147483647, %v7640
    %vm7652 = vcmp.eq.f32.partialorder %v7651, 8.507059e+37
    %v7653 = vand.u32 %v7640, 2147483648
    %v7654 = vor.u32 1.1754944e-38, %v7653
    %v7655 = vsel %vm7652, %v7654, %v7650
    %v7656 = vmul.f32 1.0, %v7655
    %v7657 = vrcp.pop %v7641
    %v7658 = vmul.f32 %v7641, %v7657
    %v7659 = vsub.f32 1.0, %v7658
    %v7660 = vmul.f32 %v7657, %v7659
    %v7661 = vadd.f32 %v7657, %v7660
    %vm7662 = vweird.f32 %v7641
    %vm7663 = vweird.f32 %v7657
    %vm7664 = vmor %vm7662, %vm7663
    %v7665 = vsel %vm7664, %v7657, %v7661
    %v7666 = vand.u32 2147483647, %v7641
    %vm7667 = vcmp.eq.f32.partialorder %v7666, 8.507059e+37
    %v7668 = vand.u32 %v7641, 2147483648
    %v7669 = vor.u32 1.1754944e-38, %v7668
    %v7670 = vsel %vm7667, %v7669, %v7665
    %v7671 = vmul.f32 1.0, %v7670
    %v7672 = vtanh.pop %v7592
    %v7673 = vtanh.pop %v7593
    %v7674 = vxor.u32 %v7594, 2147483648
    %v7675 = vxor.u32 %v7595, 2147483648
    %v7676 = vmul.f32 %v7674, 1.442695
    %v7677 = vpow.pop %v7676
    %v7678 = vmul.f32 %v7675, 1.442695
    %v7679 = vpow.pop %v7678
    %v7680 = vadd.f32 %v7677, 1.0
    %v7681 = vadd.f32 %v7679, 1.0
    %v7682 = vrcp.pop %v7680
    %v7683 = vmul.f32 %v7680, %v7682
    %v7684 = vsub.f32 1.0, %v7683
    %v7685 = vmul.f32 %v7682, %v7684
    %v7686 = vadd.f32 %v7682, %v7685
    %vm7687 = vweird.f32 %v7680
    %vm7688 = vweird.f32 %v7682
    %vm7689 = vmor %vm7687, %vm7688
    %v7690 = vsel %vm7689, %v7682, %v7686
    %v7691 = vand.u32 2147483647, %v7680
    %vm7692 = vcmp.eq.f32.partialorder %v7691, 8.507059e+37
    %v7693 = vand.u32 %v7680, 2147483648
    %v7694 = vor.u32 1.1754944e-38, %v7693
    %v7695 = vsel %vm7692, %v7694, %v7690
    %v7696 = vmul.f32 1.0, %v7695
    %v7697 = vrcp.pop %v7681
    %v7698 = vmul.f32 %v7681, %v7697
    %v7699 = vsub.f32 1.0, %v7698
    %v7700 = vmul.f32 %v7697, %v7699
    %v7701 = vadd.f32 %v7697, %v7700
    %vm7702 = vweird.f32 %v7681
    %vm7703 = vweird.f32 %v7697
    %vm7704 = vmor %vm7702, %vm7703
    %v7705 = vsel %vm7704, %v7697, %v7701
    %v7706 = vand.u32 2147483647, %v7681
    %vm7707 = vcmp.eq.f32.partialorder %v7706, 8.507059e+37
    %v7708 = vand.u32 %v7681, 2147483648
    %v7709 = vor.u32 1.1754944e-38, %v7708
    %v7710 = vsel %vm7707, %v7709, %v7705
    %v7711 = vmul.f32 1.0, %v7710
    %v7712 = vmul.f32 %v7656, %v6602
    %v7713 = vmul.f32 %v7671, %v6603
    %v7714 = vmul.f32 %v7618, %v7672
    %v7715 = vmul.f32 %v7633, %v7673
    %v7716 = vadd.f32 %v7712, %v7714
    %v7717 = vadd.f32 %v7713, %v7715
    %v7718 = vtanh.pop %v7716
    %v7719 = vtanh.pop %v7717
    %v7720 = vmul.f32 %v7696, %v7718
    %v7721 = vmul.f32 %v7711, %v7719
    %7722 = vst [vmem:[#allocation2 + $0x50] sm:$0xff] %v7720
    %7723 = vst [vmem:[#allocation2 + $0x58] sm:$0xff] %v7721
    %v7724 = vpack.c.bf16 %v7720, %v7720
    %v7725 = vpack.c.bf16 %v7721, %v7721
    %v7726 = vld [vmem:[#allocation10] sm:$0xff]
    %v7727 = vld [vmem:[#allocation10 + $0x8] sm:$0xff]
    %v7728 = vld [vmem:[#allocation10 + $0x10] sm:$0xff]
    %v7729 = vld [vmem:[#allocation10 + $0x18] sm:$0xff]
    %v7730 = vld [vmem:[#allocation10 + $0x20] sm:$0xff]
    %v7731 = vld [vmem:[#allocation10 + $0x28] sm:$0xff]
    %v7732 = vld [vmem:[#allocation10 + $0x30] sm:$0xff]
    %v7733 = vld [vmem:[#allocation10 + $0x38] sm:$0xff]
    %v7734 = vld [vmem:[#allocation10 + $0x40] sm:$0xff]
    %v7735 = vld [vmem:[#allocation10 + $0x48] sm:$0xff]
    %v7736 = vld [vmem:[#allocation10 + $0x50] sm:$0xff]
    %v7737 = vld [vmem:[#allocation10 + $0x58] sm:$0xff]
    %v7738 = vld [vmem:[#allocation10 + $0x60] sm:$0xff]
    %v7739 = vld [vmem:[#allocation10 + $0x68] sm:$0xff]
    %v7740 = vld [vmem:[#allocation10 + $0x70] sm:$0xff]
    %v7741 = vld [vmem:[#allocation10 + $0x78] sm:$0xff]
    %v7742 = vld [vmem:[#allocation10 + $0x80] sm:$0xff]
    %v7743 = vld [vmem:[#allocation10 + $0x88] sm:$0xff]
    %v7744 = vld [vmem:[#allocation10 + $0x90] sm:$0xff]
    %v7745 = vld [vmem:[#allocation10 + $0x98] sm:$0xff]
    %v7746 = vld [vmem:[#allocation10 + $0xa0] sm:$0xff]
    %v7747 = vld [vmem:[#allocation10 + $0xa8] sm:$0xff]
    %v7748 = vld [vmem:[#allocation10 + $0xb0] sm:$0xff]
    %v7749 = vld [vmem:[#allocation10 + $0xb8] sm:$0xff]
    %v7750 = vld [vmem:[#allocation10 + $0xc0] sm:$0xff]
    %v7751 = vld [vmem:[#allocation10 + $0xc8] sm:$0xff]
    %v7752 = vld [vmem:[#allocation10 + $0xd0] sm:$0xff]
    %v7753 = vld [vmem:[#allocation10 + $0xd8] sm:$0xff]
    %v7754 = vld [vmem:[#allocation10 + $0xe0] sm:$0xff]
    %v7755 = vld [vmem:[#allocation10 + $0xe8] sm:$0xff]
    %v7756 = vld [vmem:[#allocation10 + $0xf0] sm:$0xff]
    %v7757 = vld [vmem:[#allocation10 + $0xf8] sm:$0xff]
    %v7758 = vld [vmem:[#allocation10 + $0x100] sm:$0xff]
    %v7759 = vld [vmem:[#allocation10 + $0x108] sm:$0xff]
    %v7760 = vld [vmem:[#allocation10 + $0x110] sm:$0xff]
    %v7761 = vld [vmem:[#allocation10 + $0x118] sm:$0xff]
    %v7762 = vld [vmem:[#allocation10 + $0x120] sm:$0xff]
    %v7763 = vld [vmem:[#allocation10 + $0x128] sm:$0xff]
    %v7764 = vld [vmem:[#allocation10 + $0x130] sm:$0xff]
    %v7765 = vld [vmem:[#allocation10 + $0x138] sm:$0xff]
    %v7766 = vld [vmem:[#allocation10 + $0x140] sm:$0xff]
    %v7767 = vld [vmem:[#allocation10 + $0x148] sm:$0xff]
    %v7768 = vld [vmem:[#allocation10 + $0x150] sm:$0xff]
    %v7769 = vld [vmem:[#allocation10 + $0x158] sm:$0xff]
    %v7770 = vld [vmem:[#allocation10 + $0x160] sm:$0xff]
    %v7771 = vld [vmem:[#allocation10 + $0x168] sm:$0xff]
    %v7772 = vld [vmem:[#allocation10 + $0x170] sm:$0xff]
    %v7773 = vld [vmem:[#allocation10 + $0x178] sm:$0xff]
    %v7774 = vld [vmem:[#allocation10 + $0x180] sm:$0xff]
    %v7775 = vld [vmem:[#allocation10 + $0x188] sm:$0xff]
    %v7776 = vld [vmem:[#allocation10 + $0x190] sm:$0xff]
    %v7777 = vld [vmem:[#allocation10 + $0x198] sm:$0xff]
    %v7778 = vld [vmem:[#allocation10 + $0x1a0] sm:$0xff]
    %v7779 = vld [vmem:[#allocation10 + $0x1a8] sm:$0xff]
    %v7780 = vld [vmem:[#allocation10 + $0x1b0] sm:$0xff]
    %v7781 = vld [vmem:[#allocation10 + $0x1b8] sm:$0xff]
    %v7782 = vld [vmem:[#allocation10 + $0x1c0] sm:$0xff]
    %v7783 = vld [vmem:[#allocation10 + $0x1c8] sm:$0xff]
    %v7784 = vld [vmem:[#allocation10 + $0x1d0] sm:$0xff]
    %v7785 = vld [vmem:[#allocation10 + $0x1d8] sm:$0xff]
    %v7786 = vld [vmem:[#allocation10 + $0x1e0] sm:$0xff]
    %v7787 = vld [vmem:[#allocation10 + $0x1e8] sm:$0xff]
    %v7788 = vld [vmem:[#allocation10 + $0x1f0] sm:$0xff]
    %v7789 = vld [vmem:[#allocation10 + $0x1f8] sm:$0xff]
    %v7790 = vld [vmem:[#allocation10 + $0x200] sm:$0xff]
    %v7791 = vld [vmem:[#allocation10 + $0x208] sm:$0xff]
    %v7792 = vld [vmem:[#allocation10 + $0x210] sm:$0xff]
    %v7793 = vld [vmem:[#allocation10 + $0x218] sm:$0xff]
    %v7794 = vld [vmem:[#allocation10 + $0x220] sm:$0xff]
    %v7795 = vld [vmem:[#allocation10 + $0x228] sm:$0xff]
    %v7796 = vld [vmem:[#allocation10 + $0x230] sm:$0xff]
    %v7797 = vld [vmem:[#allocation10 + $0x238] sm:$0xff]
    %v7798 = vld [vmem:[#allocation10 + $0x240] sm:$0xff]
    %v7799 = vld [vmem:[#allocation10 + $0x248] sm:$0xff]
    %v7800 = vld [vmem:[#allocation10 + $0x250] sm:$0xff]
    %v7801 = vld [vmem:[#allocation10 + $0x258] sm:$0xff]
    %v7802 = vld [vmem:[#allocation10 + $0x260] sm:$0xff]
    %v7803 = vld [vmem:[#allocation10 + $0x268] sm:$0xff]
    %v7804 = vld [vmem:[#allocation10 + $0x270] sm:$0xff]
    %v7805 = vld [vmem:[#allocation10 + $0x278] sm:$0xff]
    %v7806 = vld [vmem:[#allocation10 + $0x280] sm:$0xff]
    %v7807 = vld [vmem:[#allocation10 + $0x288] sm:$0xff]
    %v7808 = vld [vmem:[#allocation10 + $0x290] sm:$0xff]
    %v7809 = vld [vmem:[#allocation10 + $0x298] sm:$0xff]
    %v7810 = vld [vmem:[#allocation10 + $0x2a0] sm:$0xff]
    %v7811 = vld [vmem:[#allocation10 + $0x2a8] sm:$0xff]
    %v7812 = vld [vmem:[#allocation10 + $0x2b0] sm:$0xff]
    %v7813 = vld [vmem:[#allocation10 + $0x2b8] sm:$0xff]
    %v7814 = vld [vmem:[#allocation10 + $0x2c0] sm:$0xff]
    %v7815 = vld [vmem:[#allocation10 + $0x2c8] sm:$0xff]
    %v7816 = vld [vmem:[#allocation10 + $0x2d0] sm:$0xff]
    %v7817 = vld [vmem:[#allocation10 + $0x2d8] sm:$0xff]
    %v7818 = vld [vmem:[#allocation10 + $0x2e0] sm:$0xff]
    %v7819 = vld [vmem:[#allocation10 + $0x2e8] sm:$0xff]
    %v7820 = vld [vmem:[#allocation10 + $0x2f0] sm:$0xff]
    %v7821 = vld [vmem:[#allocation10 + $0x2f8] sm:$0xff]
    %v7822 = vld [vmem:[#allocation10 + $0x300] sm:$0xff]
    %v7823 = vld [vmem:[#allocation10 + $0x308] sm:$0xff]
    %v7824 = vld [vmem:[#allocation10 + $0x310] sm:$0xff]
    %v7825 = vld [vmem:[#allocation10 + $0x318] sm:$0xff]
    %v7826 = vld [vmem:[#allocation10 + $0x320] sm:$0xff]
    %v7827 = vld [vmem:[#allocation10 + $0x328] sm:$0xff]
    %v7828 = vld [vmem:[#allocation10 + $0x330] sm:$0xff]
    %v7829 = vld [vmem:[#allocation10 + $0x338] sm:$0xff]
    %v7830 = vld [vmem:[#allocation10 + $0x340] sm:$0xff]
    %v7831 = vld [vmem:[#allocation10 + $0x348] sm:$0xff]
    %v7832 = vld [vmem:[#allocation10 + $0x350] sm:$0xff]
    %v7833 = vld [vmem:[#allocation10 + $0x358] sm:$0xff]
    %v7834 = vld [vmem:[#allocation10 + $0x360] sm:$0xff]
    %v7835 = vld [vmem:[#allocation10 + $0x368] sm:$0xff]
    %v7836 = vld [vmem:[#allocation10 + $0x370] sm:$0xff]
    %v7837 = vld [vmem:[#allocation10 + $0x378] sm:$0xff]
    %v7838 = vld [vmem:[#allocation10 + $0x380] sm:$0xff]
    %v7839 = vld [vmem:[#allocation10 + $0x388] sm:$0xff]
    %v7840 = vld [vmem:[#allocation10 + $0x390] sm:$0xff]
    %v7841 = vld [vmem:[#allocation10 + $0x398] sm:$0xff]
    %v7842 = vld [vmem:[#allocation10 + $0x3a0] sm:$0xff]
    %v7843 = vld [vmem:[#allocation10 + $0x3a8] sm:$0xff]
    %v7844 = vld [vmem:[#allocation10 + $0x3b0] sm:$0xff]
    %v7845 = vld [vmem:[#allocation10 + $0x3b8] sm:$0xff]
    %v7846 = vld [vmem:[#allocation10 + $0x3c0] sm:$0xff]
    %v7847 = vld [vmem:[#allocation10 + $0x3c8] sm:$0xff]
    %v7848 = vld [vmem:[#allocation10 + $0x3d0] sm:$0xff]
    %v7849 = vld [vmem:[#allocation10 + $0x3d8] sm:$0xff]
    %v7850 = vld [vmem:[#allocation10 + $0x3e0] sm:$0xff]
    %v7851 = vld [vmem:[#allocation10 + $0x3e8] sm:$0xff]
    %v7852 = vld [vmem:[#allocation10 + $0x3f0] sm:$0xff]
    %v7853 = vld [vmem:[#allocation10 + $0x3f8] sm:$0xff]
    %v7982 = vunpack.c.l.b16 %v7726
    %v7983 = vunpack.c.h.b16 %v7726
    %v7984 = vunpack.c.l.b16 %v7727
    %v7985 = vunpack.c.h.b16 %v7727
    %v7986 = vunpack.c.l.b16 %v7728
    %v7987 = vunpack.c.h.b16 %v7728
    %v7988 = vunpack.c.l.b16 %v7729
    %v7989 = vunpack.c.h.b16 %v7729
    %v7990 = vunpack.c.l.b16 %v7730
    %v7991 = vunpack.c.h.b16 %v7730
    %v7992 = vunpack.c.l.b16 %v7731
    %v7993 = vunpack.c.h.b16 %v7731
    %v7994 = vunpack.c.l.b16 %v7732
    %v7995 = vunpack.c.h.b16 %v7732
    %v7996 = vunpack.c.l.b16 %v7733
    %v7997 = vunpack.c.h.b16 %v7733
    %v7998 = vunpack.c.l.b16 %v7734
    %v7999 = vunpack.c.h.b16 %v7734
    %v8000 = vunpack.c.l.b16 %v7735
    %v8001 = vunpack.c.h.b16 %v7735
    %v8002 = vunpack.c.l.b16 %v7736
    %v8003 = vunpack.c.h.b16 %v7736
    %v8004 = vunpack.c.l.b16 %v7737
    %v8005 = vunpack.c.h.b16 %v7737
    %v8006 = vunpack.c.l.b16 %v7738
    %v8007 = vunpack.c.h.b16 %v7738
    %v8008 = vunpack.c.l.b16 %v7739
    %v8009 = vunpack.c.h.b16 %v7739
    %v8010 = vunpack.c.l.b16 %v7740
    %v8011 = vunpack.c.h.b16 %v7740
    %v8012 = vunpack.c.l.b16 %v7741
    %v8013 = vunpack.c.h.b16 %v7741
    %v8014 = vunpack.c.l.b16 %v7742
    %v8015 = vunpack.c.h.b16 %v7742
    %v8016 = vunpack.c.l.b16 %v7743
    %v8017 = vunpack.c.h.b16 %v7743
    %v8018 = vunpack.c.l.b16 %v7744
    %v8019 = vunpack.c.h.b16 %v7744
    %v8020 = vunpack.c.l.b16 %v7745
    %v8021 = vunpack.c.h.b16 %v7745
    %v8022 = vunpack.c.l.b16 %v7746
    %v8023 = vunpack.c.h.b16 %v7746
    %v8024 = vunpack.c.l.b16 %v7747
    %v8025 = vunpack.c.h.b16 %v7747
    %v8026 = vunpack.c.l.b16 %v7748
    %v8027 = vunpack.c.h.b16 %v7748
    %v8028 = vunpack.c.l.b16 %v7749
    %v8029 = vunpack.c.h.b16 %v7749
    %v8030 = vunpack.c.l.b16 %v7750
    %v8031 = vunpack.c.h.b16 %v7750
    %v8032 = vunpack.c.l.b16 %v7751
    %v8033 = vunpack.c.h.b16 %v7751
    %v8034 = vunpack.c.l.b16 %v7752
    %v8035 = vunpack.c.h.b16 %v7752
    %v8036 = vunpack.c.l.b16 %v7753
    %v8037 = vunpack.c.h.b16 %v7753
    %v8038 = vunpack.c.l.b16 %v7754
    %v8039 = vunpack.c.h.b16 %v7754
    %v8040 = vunpack.c.l.b16 %v7755
    %v8041 = vunpack.c.h.b16 %v7755
    %v8042 = vunpack.c.l.b16 %v7756
    %v8043 = vunpack.c.h.b16 %v7756
    %v8044 = vunpack.c.l.b16 %v7757
    %v8045 = vunpack.c.h.b16 %v7757
    %v8046 = vunpack.c.l.b16 %v7758
    %v8047 = vunpack.c.h.b16 %v7758
    %v8048 = vunpack.c.l.b16 %v7759
    %v8049 = vunpack.c.h.b16 %v7759
    %v8050 = vunpack.c.l.b16 %v7760
    %v8051 = vunpack.c.h.b16 %v7760
    %v8052 = vunpack.c.l.b16 %v7761
    %v8053 = vunpack.c.h.b16 %v7761
    %v8054 = vunpack.c.l.b16 %v7762
    %v8055 = vunpack.c.h.b16 %v7762
    %v8056 = vunpack.c.l.b16 %v7763
    %v8057 = vunpack.c.h.b16 %v7763
    %v8058 = vunpack.c.l.b16 %v7764
    %v8059 = vunpack.c.h.b16 %v7764
    %v8060 = vunpack.c.l.b16 %v7765
    %v8061 = vunpack.c.h.b16 %v7765
    %v8062 = vunpack.c.l.b16 %v7766
    %v8063 = vunpack.c.h.b16 %v7766
    %v8064 = vunpack.c.l.b16 %v7767
    %v8065 = vunpack.c.h.b16 %v7767
    %v8066 = vunpack.c.l.b16 %v7768
    %v8067 = vunpack.c.h.b16 %v7768
    %v8068 = vunpack.c.l.b16 %v7769
    %v8069 = vunpack.c.h.b16 %v7769
    %v8070 = vunpack.c.l.b16 %v7770
    %v8071 = vunpack.c.h.b16 %v7770
    %v8072 = vunpack.c.l.b16 %v7771
    %v8073 = vunpack.c.h.b16 %v7771
    %v8074 = vunpack.c.l.b16 %v7772
    %v8075 = vunpack.c.h.b16 %v7772
    %v8076 = vunpack.c.l.b16 %v7773
    %v8077 = vunpack.c.h.b16 %v7773
    %v8078 = vunpack.c.l.b16 %v7774
    %v8079 = vunpack.c.h.b16 %v7774
    %v8080 = vunpack.c.l.b16 %v7775
    %v8081 = vunpack.c.h.b16 %v7775
    %v8082 = vunpack.c.l.b16 %v7776
    %v8083 = vunpack.c.h.b16 %v7776
    %v8084 = vunpack.c.l.b16 %v7777
    %v8085 = vunpack.c.h.b16 %v7777
    %v8086 = vunpack.c.l.b16 %v7778
    %v8087 = vunpack.c.h.b16 %v7778
    %v8088 = vunpack.c.l.b16 %v7779
    %v8089 = vunpack.c.h.b16 %v7779
    %v8090 = vunpack.c.l.b16 %v7780
    %v8091 = vunpack.c.h.b16 %v7780
    %v8092 = vunpack.c.l.b16 %v7781
    %v8093 = vunpack.c.h.b16 %v7781
    %v8094 = vunpack.c.l.b16 %v7782
    %v8095 = vunpack.c.h.b16 %v7782
    %v8096 = vunpack.c.l.b16 %v7783
    %v8097 = vunpack.c.h.b16 %v7783
    %v8098 = vunpack.c.l.b16 %v7784
    %v8099 = vunpack.c.h.b16 %v7784
    %v8100 = vunpack.c.l.b16 %v7785
    %v8101 = vunpack.c.h.b16 %v7785
    %v8102 = vunpack.c.l.b16 %v7786
    %v8103 = vunpack.c.h.b16 %v7786
    %v8104 = vunpack.c.l.b16 %v7787
    %v8105 = vunpack.c.h.b16 %v7787
    %v8106 = vunpack.c.l.b16 %v7788
    %v8107 = vunpack.c.h.b16 %v7788
    %v8108 = vunpack.c.l.b16 %v7789
    %v8109 = vunpack.c.h.b16 %v7789
    %v8110 = vunpack.c.l.b16 %v7790
    %v8111 = vunpack.c.h.b16 %v7790
    %v8112 = vunpack.c.l.b16 %v7791
    %v8113 = vunpack.c.h.b16 %v7791
    %v8114 = vunpack.c.l.b16 %v7792
    %v8115 = vunpack.c.h.b16 %v7792
    %v8116 = vunpack.c.l.b16 %v7793
    %v8117 = vunpack.c.h.b16 %v7793
    %v8118 = vunpack.c.l.b16 %v7794
    %v8119 = vunpack.c.h.b16 %v7794
    %v8120 = vunpack.c.l.b16 %v7795
    %v8121 = vunpack.c.h.b16 %v7795
    %v8122 = vunpack.c.l.b16 %v7796
    %v8123 = vunpack.c.h.b16 %v7796
    %v8124 = vunpack.c.l.b16 %v7797
    %v8125 = vunpack.c.h.b16 %v7797
    %v8126 = vunpack.c.l.b16 %v7798
    %v8127 = vunpack.c.h.b16 %v7798
    %v8128 = vunpack.c.l.b16 %v7799
    %v8129 = vunpack.c.h.b16 %v7799
    %v8130 = vunpack.c.l.b16 %v7800
    %v8131 = vunpack.c.h.b16 %v7800
    %v8132 = vunpack.c.l.b16 %v7801
    %v8133 = vunpack.c.h.b16 %v7801
    %v8134 = vunpack.c.l.b16 %v7802
    %v8135 = vunpack.c.h.b16 %v7802
    %v8136 = vunpack.c.l.b16 %v7803
    %v8137 = vunpack.c.h.b16 %v7803
    %v8138 = vunpack.c.l.b16 %v7804
    %v8139 = vunpack.c.h.b16 %v7804
    %v8140 = vunpack.c.l.b16 %v7805
    %v8141 = vunpack.c.h.b16 %v7805
    %v8142 = vunpack.c.l.b16 %v7806
    %v8143 = vunpack.c.h.b16 %v7806
    %v8144 = vunpack.c.l.b16 %v7807
    %v8145 = vunpack.c.h.b16 %v7807
    %v8146 = vunpack.c.l.b16 %v7808
    %v8147 = vunpack.c.h.b16 %v7808
    %v8148 = vunpack.c.l.b16 %v7809
    %v8149 = vunpack.c.h.b16 %v7809
    %v8150 = vunpack.c.l.b16 %v7810
    %v8151 = vunpack.c.h.b16 %v7810
    %v8152 = vunpack.c.l.b16 %v7811
    %v8153 = vunpack.c.h.b16 %v7811
    %v8154 = vunpack.c.l.b16 %v7812
    %v8155 = vunpack.c.h.b16 %v7812
    %v8156 = vunpack.c.l.b16 %v7813
    %v8157 = vunpack.c.h.b16 %v7813
    %v8158 = vunpack.c.l.b16 %v7814
    %v8159 = vunpack.c.h.b16 %v7814
    %v8160 = vunpack.c.l.b16 %v7815
    %v8161 = vunpack.c.h.b16 %v7815
    %v8162 = vunpack.c.l.b16 %v7816
    %v8163 = vunpack.c.h.b16 %v7816
    %v8164 = vunpack.c.l.b16 %v7817
    %v8165 = vunpack.c.h.b16 %v7817
    %v8166 = vunpack.c.l.b16 %v7818
    %v8167 = vunpack.c.h.b16 %v7818
    %v8168 = vunpack.c.l.b16 %v7819
    %v8169 = vunpack.c.h.b16 %v7819
    %v8170 = vunpack.c.l.b16 %v7820
    %v8171 = vunpack.c.h.b16 %v7820
    %v8172 = vunpack.c.l.b16 %v7821
    %v8173 = vunpack.c.h.b16 %v7821
    %v8174 = vunpack.c.l.b16 %v7822
    %v8175 = vunpack.c.h.b16 %v7822
    %v8176 = vunpack.c.l.b16 %v7823
    %v8177 = vunpack.c.h.b16 %v7823
    %v8178 = vunpack.c.l.b16 %v7824
    %v8179 = vunpack.c.h.b16 %v7824
    %v8180 = vunpack.c.l.b16 %v7825
    %v8181 = vunpack.c.h.b16 %v7825
    %v8182 = vunpack.c.l.b16 %v7826
    %v8183 = vunpack.c.h.b16 %v7826
    %v8184 = vunpack.c.l.b16 %v7827
    %v8185 = vunpack.c.h.b16 %v7827
    %v8186 = vunpack.c.l.b16 %v7828
    %v8187 = vunpack.c.h.b16 %v7828
    %v8188 = vunpack.c.l.b16 %v7829
    %v8189 = vunpack.c.h.b16 %v7829
    %v8190 = vunpack.c.l.b16 %v7830
    %v8191 = vunpack.c.h.b16 %v7830
    %v8192 = vunpack.c.l.b16 %v7831
    %v8193 = vunpack.c.h.b16 %v7831
    %v8194 = vunpack.c.l.b16 %v7832
    %v8195 = vunpack.c.h.b16 %v7832
    %v8196 = vunpack.c.l.b16 %v7833
    %v8197 = vunpack.c.h.b16 %v7833
    %v8198 = vunpack.c.l.b16 %v7834
    %v8199 = vunpack.c.h.b16 %v7834
    %v8200 = vunpack.c.l.b16 %v7835
    %v8201 = vunpack.c.h.b16 %v7835
    %v8202 = vunpack.c.l.b16 %v7836
    %v8203 = vunpack.c.h.b16 %v7836
    %v8204 = vunpack.c.l.b16 %v7837
    %v8205 = vunpack.c.h.b16 %v7837
    %v8206 = vunpack.c.l.b16 %v7838
    %v8207 = vunpack.c.h.b16 %v7838
    %v8208 = vunpack.c.l.b16 %v7839
    %v8209 = vunpack.c.h.b16 %v7839
    %v8210 = vunpack.c.l.b16 %v7840
    %v8211 = vunpack.c.h.b16 %v7840
    %v8212 = vunpack.c.l.b16 %v7841
    %v8213 = vunpack.c.h.b16 %v7841
    %v8214 = vunpack.c.l.b16 %v7842
    %v8215 = vunpack.c.h.b16 %v7842
    %v8216 = vunpack.c.l.b16 %v7843
    %v8217 = vunpack.c.h.b16 %v7843
    %v8218 = vunpack.c.l.b16 %v7844
    %v8219 = vunpack.c.h.b16 %v7844
    %v8220 = vunpack.c.l.b16 %v7845
    %v8221 = vunpack.c.h.b16 %v7845
    %v8222 = vunpack.c.l.b16 %v7846
    %v8223 = vunpack.c.h.b16 %v7846
    %v8224 = vunpack.c.l.b16 %v7847
    %v8225 = vunpack.c.h.b16 %v7847
    %v8226 = vunpack.c.l.b16 %v7848
    %v8227 = vunpack.c.h.b16 %v7848
    %v8228 = vunpack.c.l.b16 %v7849
    %v8229 = vunpack.c.h.b16 %v7849
    %v8230 = vunpack.c.l.b16 %v7850
    %v8231 = vunpack.c.h.b16 %v7850
    %v8232 = vunpack.c.l.b16 %v7851
    %v8233 = vunpack.c.h.b16 %v7851
    %v8234 = vunpack.c.l.b16 %v7852
    %v8235 = vunpack.c.h.b16 %v7852
    %v8236 = vunpack.c.l.b16 %v7853
    %v8237 = vunpack.c.h.b16 %v7853
    %v8238 = vpack.c.b16 %v7990, %v7982
    %v8239 = vpack.c.b16 %v7991, %v7983
    %v8240 = vpack.c.b16 %v7992, %v7984
    %v8241 = vpack.c.b16 %v7993, %v7985
    %v8242 = vpack.c.b16 %v7994, %v7986
    %v8243 = vpack.c.b16 %v7995, %v7987
    %v8244 = vpack.c.b16 %v7996, %v7988
    %v8245 = vpack.c.b16 %v7997, %v7989
    %v8246 = vpack.c.b16 %v8006, %v7998
    %v8247 = vpack.c.b16 %v8007, %v7999
    %v8248 = vpack.c.b16 %v8008, %v8000
    %v8249 = vpack.c.b16 %v8009, %v8001
    %v8250 = vpack.c.b16 %v8010, %v8002
    %v8251 = vpack.c.b16 %v8011, %v8003
    %v8252 = vpack.c.b16 %v8012, %v8004
    %v8253 = vpack.c.b16 %v8013, %v8005
    %v8254 = vpack.c.b16 %v8022, %v8014
    %v8255 = vpack.c.b16 %v8023, %v8015
    %v8256 = vpack.c.b16 %v8024, %v8016
    %v8257 = vpack.c.b16 %v8025, %v8017
    %v8258 = vpack.c.b16 %v8026, %v8018
    %v8259 = vpack.c.b16 %v8027, %v8019
    %v8260 = vpack.c.b16 %v8028, %v8020
    %v8261 = vpack.c.b16 %v8029, %v8021
    %v8262 = vpack.c.b16 %v8038, %v8030
    %v8263 = vpack.c.b16 %v8039, %v8031
    %v8264 = vpack.c.b16 %v8040, %v8032
    %v8265 = vpack.c.b16 %v8041, %v8033
    %v8266 = vpack.c.b16 %v8042, %v8034
    %v8267 = vpack.c.b16 %v8043, %v8035
    %v8268 = vpack.c.b16 %v8044, %v8036
    %v8269 = vpack.c.b16 %v8045, %v8037
    %v8270 = vpack.c.b16 %v8054, %v8046
    %v8271 = vpack.c.b16 %v8055, %v8047
    %v8272 = vpack.c.b16 %v8056, %v8048
    %v8273 = vpack.c.b16 %v8057, %v8049
    %v8274 = vpack.c.b16 %v8058, %v8050
    %v8275 = vpack.c.b16 %v8059, %v8051
    %v8276 = vpack.c.b16 %v8060, %v8052
    %v8277 = vpack.c.b16 %v8061, %v8053
    %v8278 = vpack.c.b16 %v8070, %v8062
    %v8279 = vpack.c.b16 %v8071, %v8063
    %v8280 = vpack.c.b16 %v8072, %v8064
    %v8281 = vpack.c.b16 %v8073, %v8065
    %v8282 = vpack.c.b16 %v8074, %v8066
    %v8283 = vpack.c.b16 %v8075, %v8067
    %v8284 = vpack.c.b16 %v8076, %v8068
    %v8285 = vpack.c.b16 %v8077, %v8069
    %v8286 = vpack.c.b16 %v8086, %v8078
    %v8287 = vpack.c.b16 %v8087, %v8079
    %v8288 = vpack.c.b16 %v8088, %v8080
    %v8289 = vpack.c.b16 %v8089, %v8081
    %v8290 = vpack.c.b16 %v8090, %v8082
    %v8291 = vpack.c.b16 %v8091, %v8083
    %v8292 = vpack.c.b16 %v8092, %v8084
    %v8293 = vpack.c.b16 %v8093, %v8085
    %v8294 = vpack.c.b16 %v8102, %v8094
    %v8295 = vpack.c.b16 %v8103, %v8095
    %v8296 = vpack.c.b16 %v8104, %v8096
    %v8297 = vpack.c.b16 %v8105, %v8097
    %v8298 = vpack.c.b16 %v8106, %v8098
    %v8299 = vpack.c.b16 %v8107, %v8099
    %v8300 = vpack.c.b16 %v8108, %v8100
    %v8301 = vpack.c.b16 %v8109, %v8101
    %v8302 = vpack.c.b16 %v8118, %v8110
    %v8303 = vpack.c.b16 %v8119, %v8111
    %v8304 = vpack.c.b16 %v8120, %v8112
    %v8305 = vpack.c.b16 %v8121, %v8113
    %v8306 = vpack.c.b16 %v8122, %v8114
    %v8307 = vpack.c.b16 %v8123, %v8115
    %v8308 = vpack.c.b16 %v8124, %v8116
    %v8309 = vpack.c.b16 %v8125, %v8117
    %v8310 = vpack.c.b16 %v8134, %v8126
    %v8311 = vpack.c.b16 %v8135, %v8127
    %v8312 = vpack.c.b16 %v8136, %v8128
    %v8313 = vpack.c.b16 %v8137, %v8129
    %v8314 = vpack.c.b16 %v8138, %v8130
    %v8315 = vpack.c.b16 %v8139, %v8131
    %v8316 = vpack.c.b16 %v8140, %v8132
    %v8317 = vpack.c.b16 %v8141, %v8133
    %v8318 = vpack.c.b16 %v8150, %v8142
    %v8319 = vpack.c.b16 %v8151, %v8143
    %v8320 = vpack.c.b16 %v8152, %v8144
    %v8321 = vpack.c.b16 %v8153, %v8145
    %v8322 = vpack.c.b16 %v8154, %v8146
    %v8323 = vpack.c.b16 %v8155, %v8147
    %v8324 = vpack.c.b16 %v8156, %v8148
    %v8325 = vpack.c.b16 %v8157, %v8149
    %v8326 = vpack.c.b16 %v8166, %v8158
    %v8327 = vpack.c.b16 %v8167, %v8159
    %v8328 = vpack.c.b16 %v8168, %v8160
    %v8329 = vpack.c.b16 %v8169, %v8161
    %v8330 = vpack.c.b16 %v8170, %v8162
    %v8331 = vpack.c.b16 %v8171, %v8163
    %v8332 = vpack.c.b16 %v8172, %v8164
    %v8333 = vpack.c.b16 %v8173, %v8165
    %v8334 = vpack.c.b16 %v8182, %v8174
    %v8335 = vpack.c.b16 %v8183, %v8175
    %v8336 = vpack.c.b16 %v8184, %v8176
    %v8337 = vpack.c.b16 %v8185, %v8177
    %v8338 = vpack.c.b16 %v8186, %v8178
    %v8339 = vpack.c.b16 %v8187, %v8179
    %v8340 = vpack.c.b16 %v8188, %v8180
    %v8341 = vpack.c.b16 %v8189, %v8181
    %v8342 = vpack.c.b16 %v8198, %v8190
    %v8343 = vpack.c.b16 %v8199, %v8191
    %v8344 = vpack.c.b16 %v8200, %v8192
    %v8345 = vpack.c.b16 %v8201, %v8193
    %v8346 = vpack.c.b16 %v8202, %v8194
    %v8347 = vpack.c.b16 %v8203, %v8195
    %v8348 = vpack.c.b16 %v8204, %v8196
    %v8349 = vpack.c.b16 %v8205, %v8197
    %v8350 = vpack.c.b16 %v8214, %v8206
    %v8351 = vpack.c.b16 %v8215, %v8207
    %v8352 = vpack.c.b16 %v8216, %v8208
    %v8353 = vpack.c.b16 %v8217, %v8209
    %v8354 = vpack.c.b16 %v8218, %v8210
    %v8355 = vpack.c.b16 %v8219, %v8211
    %v8356 = vpack.c.b16 %v8220, %v8212
    %v8357 = vpack.c.b16 %v8221, %v8213
    %v8358 = vpack.c.b16 %v8230, %v8222
    %v8359 = vpack.c.b16 %v8231, %v8223
    %v8360 = vpack.c.b16 %v8232, %v8224
    %v8361 = vpack.c.b16 %v8233, %v8225
    %v8362 = vpack.c.b16 %v8234, %v8226
    %v8363 = vpack.c.b16 %v8235, %v8227
    %v8364 = vpack.c.b16 %v8236, %v8228
    %v8365 = vpack.c.b16 %v8237, %v8229
    %8494 = vmatpush.bf16.msra.mxu0 %v8294
    %8495 = vmatpush.bf16.msra.mxu0 %v8286
    %8496 = vmatpush.bf16.msra.mxu0 %v8278
    %8497 = vmatpush.bf16.msra.mxu0 %v8270
    %8498 = vmatpush.bf16.msra.mxu0 %v8262
    %8499 = vmatpush.bf16.msra.mxu0 %v8254
    %8500 = vmatpush.bf16.msra.mxu0 %v8246
    %8501 = vmatpush.bf16.msra.mxu0 %v8238
    %8502 = vmatmul.bf16.gmra.mxu0 %v7724
    %v8503 = vpop.f32.mrf.mxu0
    %v8504 = vadd.f32 0.0, %v8503
    %v8505 = vpop.f32.mrf.mxu0
    %8506 = vdwg.mxu0
    %8507 = vmatpush.bf16.msra.mxu0 %v8358
    %8508 = vmatpush.bf16.msra.mxu0 %v8350
    %8509 = vmatpush.bf16.msra.mxu0 %v8342
    %8510 = vmatpush.bf16.msra.mxu0 %v8334
    %8511 = vmatpush.bf16.msra.mxu0 %v8326
    %8512 = vmatpush.bf16.msra.mxu0 %v8318
    %8513 = vmatpush.bf16.msra.mxu0 %v8310
    %8514 = vmatpush.bf16.msra.mxu0 %v8302
    %8515 = vmatmul.bf16.gmra.mxu0 %v7725
    %v8516 = vpop.f32.mrf.mxu0
    %v8517 = vadd.f32 %v8504, %v8516
    %v8518 = vpop.f32.mrf.mxu0
    %8519 = vdwg.mxu0
    %8520 = vmatpush.bf16.msra.mxu0 %v8295
    %8521 = vmatpush.bf16.msra.mxu0 %v8287
    %8522 = vmatpush.bf16.msra.mxu0 %v8279
    %8523 = vmatpush.bf16.msra.mxu0 %v8271
    %8524 = vmatpush.bf16.msra.mxu0 %v8263
    %8525 = vmatpush.bf16.msra.mxu0 %v8255
    %8526 = vmatpush.bf16.msra.mxu0 %v8247
    %8527 = vmatpush.bf16.msra.mxu0 %v8239
    %8528 = vmatmul.bf16.gmra.mxu0 %v7724
    %v8529 = vpop.f32.mrf.mxu0
    %v8530 = vadd.f32 0.0, %v8529
    %v8531 = vpop.f32.mrf.mxu0
    %8532 = vdwg.mxu0
    %8533 = vmatpush.bf16.msra.mxu0 %v8359
    %8534 = vmatpush.bf16.msra.mxu0 %v8351
    %8535 = vmatpush.bf16.msra.mxu0 %v8343
    %8536 = vmatpush.bf16.msra.mxu0 %v8335
    %8537 = vmatpush.bf16.msra.mxu0 %v8327
    %8538 = vmatpush.bf16.msra.mxu0 %v8319
    %8539 = vmatpush.bf16.msra.mxu0 %v8311
    %8540 = vmatpush.bf16.msra.mxu0 %v8303
    %8541 = vmatmul.bf16.gmra.mxu0 %v7725
    %v8542 = vpop.f32.mrf.mxu0
    %v8543 = vadd.f32 %v8530, %v8542
    %v8544 = vpop.f32.mrf.mxu0
    %8545 = vdwg.mxu0
    %8546 = vmatpush.bf16.msra.mxu0 %v8296
    %8547 = vmatpush.bf16.msra.mxu0 %v8288
    %8548 = vmatpush.bf16.msra.mxu0 %v8280
    %8549 = vmatpush.bf16.msra.mxu0 %v8272
    %8550 = vmatpush.bf16.msra.mxu0 %v8264
    %8551 = vmatpush.bf16.msra.mxu0 %v8256
    %8552 = vmatpush.bf16.msra.mxu0 %v8248
    %8553 = vmatpush.bf16.msra.mxu0 %v8240
    %8554 = vmatmul.bf16.gmra.mxu0 %v7724
    %v8555 = vpop.f32.mrf.mxu0
    %v8556 = vadd.f32 0.0, %v8555
    %v8557 = vpop.f32.mrf.mxu0
    %8558 = vdwg.mxu0
    %8559 = vmatpush.bf16.msra.mxu0 %v8360
    %8560 = vmatpush.bf16.msra.mxu0 %v8352
    %8561 = vmatpush.bf16.msra.mxu0 %v8344
    %8562 = vmatpush.bf16.msra.mxu0 %v8336
    %8563 = vmatpush.bf16.msra.mxu0 %v8328
    %8564 = vmatpush.bf16.msra.mxu0 %v8320
    %8565 = vmatpush.bf16.msra.mxu0 %v8312
    %8566 = vmatpush.bf16.msra.mxu0 %v8304
    %8567 = vmatmul.bf16.gmra.mxu0 %v7725
    %v8568 = vpop.f32.mrf.mxu0
    %v8569 = vadd.f32 %v8556, %v8568
    %v8570 = vpop.f32.mrf.mxu0
    %8571 = vdwg.mxu0
    %8572 = vmatpush.bf16.msra.mxu0 %v8297
    %8573 = vmatpush.bf16.msra.mxu0 %v8289
    %8574 = vmatpush.bf16.msra.mxu0 %v8281
    %8575 = vmatpush.bf16.msra.mxu0 %v8273
    %8576 = vmatpush.bf16.msra.mxu0 %v8265
    %8577 = vmatpush.bf16.msra.mxu0 %v8257
    %8578 = vmatpush.bf16.msra.mxu0 %v8249
    %8579 = vmatpush.bf16.msra.mxu0 %v8241
    %8580 = vmatmul.bf16.gmra.mxu0 %v7724
    %v8581 = vpop.f32.mrf.mxu0
    %v8582 = vadd.f32 0.0, %v8581
    %v8583 = vpop.f32.mrf.mxu0
    %8584 = vdwg.mxu0
    %8585 = vmatpush.bf16.msra.mxu0 %v8361
    %8586 = vmatpush.bf16.msra.mxu0 %v8353
    %8587 = vmatpush.bf16.msra.mxu0 %v8345
    %8588 = vmatpush.bf16.msra.mxu0 %v8337
    %8589 = vmatpush.bf16.msra.mxu0 %v8329
    %8590 = vmatpush.bf16.msra.mxu0 %v8321
    %8591 = vmatpush.bf16.msra.mxu0 %v8313
    %8592 = vmatpush.bf16.msra.mxu0 %v8305
    %8593 = vmatmul.bf16.gmra.mxu0 %v7725
    %v8594 = vpop.f32.mrf.mxu0
    %v8595 = vadd.f32 %v8582, %v8594
    %v8596 = vpop.f32.mrf.mxu0
    %8597 = vdwg.mxu0
    %8598 = vmatpush.bf16.msra.mxu0 %v8298
    %8599 = vmatpush.bf16.msra.mxu0 %v8290
    %8600 = vmatpush.bf16.msra.mxu0 %v8282
    %8601 = vmatpush.bf16.msra.mxu0 %v8274
    %8602 = vmatpush.bf16.msra.mxu0 %v8266
    %8603 = vmatpush.bf16.msra.mxu0 %v8258
    %8604 = vmatpush.bf16.msra.mxu0 %v8250
    %8605 = vmatpush.bf16.msra.mxu0 %v8242
    %8606 = vmatmul.bf16.gmra.mxu0 %v7724
    %v8607 = vpop.f32.mrf.mxu0
    %v8608 = vadd.f32 0.0, %v8607
    %v8609 = vpop.f32.mrf.mxu0
    %8610 = vdwg.mxu0
    %8611 = vmatpush.bf16.msra.mxu0 %v8362
    %8612 = vmatpush.bf16.msra.mxu0 %v8354
    %8613 = vmatpush.bf16.msra.mxu0 %v8346
    %8614 = vmatpush.bf16.msra.mxu0 %v8338
    %8615 = vmatpush.bf16.msra.mxu0 %v8330
    %8616 = vmatpush.bf16.msra.mxu0 %v8322
    %8617 = vmatpush.bf16.msra.mxu0 %v8314
    %8618 = vmatpush.bf16.msra.mxu0 %v8306
    %8619 = vmatmul.bf16.gmra.mxu0 %v7725
    %v8620 = vpop.f32.mrf.mxu0
    %v8621 = vadd.f32 %v8608, %v8620
    %v8622 = vpop.f32.mrf.mxu0
    %8623 = vdwg.mxu0
    %8624 = vmatpush.bf16.msra.mxu0 %v8299
    %8625 = vmatpush.bf16.msra.mxu0 %v8291
    %8626 = vmatpush.bf16.msra.mxu0 %v8283
    %8627 = vmatpush.bf16.msra.mxu0 %v8275
    %8628 = vmatpush.bf16.msra.mxu0 %v8267
    %8629 = vmatpush.bf16.msra.mxu0 %v8259
    %8630 = vmatpush.bf16.msra.mxu0 %v8251
    %8631 = vmatpush.bf16.msra.mxu0 %v8243
    %8632 = vmatmul.bf16.gmra.mxu0 %v7724
    %v8633 = vpop.f32.mrf.mxu0
    %v8634 = vadd.f32 0.0, %v8633
    %v8635 = vpop.f32.mrf.mxu0
    %8636 = vdwg.mxu0
    %8637 = vmatpush.bf16.msra.mxu0 %v8363
    %8638 = vmatpush.bf16.msra.mxu0 %v8355
    %8639 = vmatpush.bf16.msra.mxu0 %v8347
    %8640 = vmatpush.bf16.msra.mxu0 %v8339
    %8641 = vmatpush.bf16.msra.mxu0 %v8331
    %8642 = vmatpush.bf16.msra.mxu0 %v8323
    %8643 = vmatpush.bf16.msra.mxu0 %v8315
    %8644 = vmatpush.bf16.msra.mxu0 %v8307
    %8645 = vmatmul.bf16.gmra.mxu0 %v7725
    %v8646 = vpop.f32.mrf.mxu0
    %v8647 = vadd.f32 %v8634, %v8646
    %v8648 = vpop.f32.mrf.mxu0
    %8649 = vdwg.mxu0
    %8650 = vmatpush.bf16.msra.mxu0 %v8300
    %8651 = vmatpush.bf16.msra.mxu0 %v8292
    %8652 = vmatpush.bf16.msra.mxu0 %v8284
    %8653 = vmatpush.bf16.msra.mxu0 %v8276
    %8654 = vmatpush.bf16.msra.mxu0 %v8268
    %8655 = vmatpush.bf16.msra.mxu0 %v8260
    %8656 = vmatpush.bf16.msra.mxu0 %v8252
    %8657 = vmatpush.bf16.msra.mxu0 %v8244
    %8658 = vmatmul.bf16.gmra.mxu0 %v7724
    %v8659 = vpop.f32.mrf.mxu0
    %v8660 = vadd.f32 0.0, %v8659
    %v8661 = vpop.f32.mrf.mxu0
    %8662 = vdwg.mxu0
    %8663 = vmatpush.bf16.msra.mxu0 %v8364
    %8664 = vmatpush.bf16.msra.mxu0 %v8356
    %8665 = vmatpush.bf16.msra.mxu0 %v8348
    %8666 = vmatpush.bf16.msra.mxu0 %v8340
    %8667 = vmatpush.bf16.msra.mxu0 %v8332
    %8668 = vmatpush.bf16.msra.mxu0 %v8324
    %8669 = vmatpush.bf16.msra.mxu0 %v8316
    %8670 = vmatpush.bf16.msra.mxu0 %v8308
    %8671 = vmatmul.bf16.gmra.mxu0 %v7725
    %v8672 = vpop.f32.mrf.mxu0
    %v8673 = vadd.f32 %v8660, %v8672
    %v8674 = vpop.f32.mrf.mxu0
    %8675 = vdwg.mxu0
    %8676 = vmatpush.bf16.msra.mxu0 %v8301
    %8677 = vmatpush.bf16.msra.mxu0 %v8293
    %8678 = vmatpush.bf16.msra.mxu0 %v8285
    %8679 = vmatpush.bf16.msra.mxu0 %v8277
    %8680 = vmatpush.bf16.msra.mxu0 %v8269
    %8681 = vmatpush.bf16.msra.mxu0 %v8261
    %8682 = vmatpush.bf16.msra.mxu0 %v8253
    %8683 = vmatpush.bf16.msra.mxu0 %v8245
    %8684 = vmatmul.bf16.gmra.mxu0 %v7724
    %v8685 = vpop.f32.mrf.mxu0
    %v8686 = vadd.f32 0.0, %v8685
    %v8687 = vpop.f32.mrf.mxu0
    %8688 = vdwg.mxu0
    %8689 = vmatpush.bf16.msra.mxu0 %v8365
    %8690 = vmatpush.bf16.msra.mxu0 %v8357
    %8691 = vmatpush.bf16.msra.mxu0 %v8349
    %8692 = vmatpush.bf16.msra.mxu0 %v8341
    %8693 = vmatpush.bf16.msra.mxu0 %v8333
    %8694 = vmatpush.bf16.msra.mxu0 %v8325
    %8695 = vmatpush.bf16.msra.mxu0 %v8317
    %8696 = vmatpush.bf16.msra.mxu0 %v8309
    %8697 = vmatmul.bf16.gmra.mxu0 %v7725
    %v8698 = vpop.f32.mrf.mxu0
    %v8699 = vadd.f32 %v8686, %v8698
    %v8700 = vpop.f32.mrf.mxu0
    %8701 = vdwg.mxu0
    %v8702 = vadd.f32 %v829, %v8517
    %v8703 = vadd.f32 %v858, %v8543
    %v8704 = vadd.f32 %v887, %v8569
    %v8705 = vadd.f32 %v916, %v8595
    %v8706 = vadd.f32 %v945, %v8621
    %v8707 = vadd.f32 %v974, %v8647
    %v8708 = vadd.f32 %v1003, %v8673
    %v8709 = vadd.f32 %v1032, %v8699
    %v8710 = vxor.u32 %v8702, 2147483648
    %v8711 = vxor.u32 %v8703, 2147483648
    %v8712 = vmul.f32 %v8710, 1.442695
    %v8713 = vpow.pop %v8712
    %v8714 = vmul.f32 %v8711, 1.442695
    %v8715 = vpow.pop %v8714
    %v8716 = vadd.f32 %v8713, 1.0
    %v8717 = vadd.f32 %v8715, 1.0
    %v8718 = vrcp.pop %v8716
    %v8719 = vmul.f32 %v8716, %v8718
    %v8720 = vsub.f32 1.0, %v8719
    %v8721 = vmul.f32 %v8718, %v8720
    %v8722 = vadd.f32 %v8718, %v8721
    %vm8723 = vweird.f32 %v8716
    %vm8724 = vweird.f32 %v8718
    %vm8725 = vmor %vm8723, %vm8724
    %v8726 = vsel %vm8725, %v8718, %v8722
    %v8727 = vand.u32 2147483647, %v8716
    %vm8728 = vcmp.eq.f32.partialorder %v8727, 8.507059e+37
    %v8729 = vand.u32 %v8716, 2147483648
    %v8730 = vor.u32 1.1754944e-38, %v8729
    %v8731 = vsel %vm8728, %v8730, %v8726
    %v8732 = vmul.f32 1.0, %v8731
    %v8733 = vrcp.pop %v8717
    %v8734 = vmul.f32 %v8717, %v8733
    %v8735 = vsub.f32 1.0, %v8734
    %v8736 = vmul.f32 %v8733, %v8735
    %v8737 = vadd.f32 %v8733, %v8736
    %vm8738 = vweird.f32 %v8717
    %vm8739 = vweird.f32 %v8733
    %vm8740 = vmor %vm8738, %vm8739
    %v8741 = vsel %vm8740, %v8733, %v8737
    %v8742 = vand.u32 2147483647, %v8717
    %vm8743 = vcmp.eq.f32.partialorder %v8742, 8.507059e+37
    %v8744 = vand.u32 %v8717, 2147483648
    %v8745 = vor.u32 1.1754944e-38, %v8744
    %v8746 = vsel %vm8743, %v8745, %v8741
    %v8747 = vmul.f32 1.0, %v8746
    %v8748 = vxor.u32 %v8704, 2147483648
    %v8749 = vxor.u32 %v8705, 2147483648
    %v8750 = vmul.f32 %v8748, 1.442695
    %v8751 = vpow.pop %v8750
    %v8752 = vmul.f32 %v8749, 1.442695
    %v8753 = vpow.pop %v8752
    %v8754 = vadd.f32 %v8751, 1.0
    %v8755 = vadd.f32 %v8753, 1.0
    %v8756 = vrcp.pop %v8754
    %v8757 = vmul.f32 %v8754, %v8756
    %v8758 = vsub.f32 1.0, %v8757
    %v8759 = vmul.f32 %v8756, %v8758
    %v8760 = vadd.f32 %v8756, %v8759
    %vm8761 = vweird.f32 %v8754
    %vm8762 = vweird.f32 %v8756
    %vm8763 = vmor %vm8761, %vm8762
    %v8764 = vsel %vm8763, %v8756, %v8760
    %v8765 = vand.u32 2147483647, %v8754
    %vm8766 = vcmp.eq.f32.partialorder %v8765, 8.507059e+37
    %v8767 = vand.u32 %v8754, 2147483648
    %v8768 = vor.u32 1.1754944e-38, %v8767
    %v8769 = vsel %vm8766, %v8768, %v8764
    %v8770 = vmul.f32 1.0, %v8769
    %v8771 = vrcp.pop %v8755
    %v8772 = vmul.f32 %v8755, %v8771
    %v8773 = vsub.f32 1.0, %v8772
    %v8774 = vmul.f32 %v8771, %v8773
    %v8775 = vadd.f32 %v8771, %v8774
    %vm8776 = vweird.f32 %v8755
    %vm8777 = vweird.f32 %v8771
    %vm8778 = vmor %vm8776, %vm8777
    %v8779 = vsel %vm8778, %v8771, %v8775
    %v8780 = vand.u32 2147483647, %v8755
    %vm8781 = vcmp.eq.f32.partialorder %v8780, 8.507059e+37
    %v8782 = vand.u32 %v8755, 2147483648
    %v8783 = vor.u32 1.1754944e-38, %v8782
    %v8784 = vsel %vm8781, %v8783, %v8779
    %v8785 = vmul.f32 1.0, %v8784
    %v8786 = vtanh.pop %v8706
    %v8787 = vtanh.pop %v8707
    %v8788 = vxor.u32 %v8708, 2147483648
    %v8789 = vxor.u32 %v8709, 2147483648
    %v8790 = vmul.f32 %v8788, 1.442695
    %v8791 = vpow.pop %v8790
    %v8792 = vmul.f32 %v8789, 1.442695
    %v8793 = vpow.pop %v8792
    %v8794 = vadd.f32 %v8791, 1.0
    %v8795 = vadd.f32 %v8793, 1.0
    %v8796 = vrcp.pop %v8794
    %v8797 = vmul.f32 %v8794, %v8796
    %v8798 = vsub.f32 1.0, %v8797
    %v8799 = vmul.f32 %v8796, %v8798
    %v8800 = vadd.f32 %v8796, %v8799
    %vm8801 = vweird.f32 %v8794
    %vm8802 = vweird.f32 %v8796
    %vm8803 = vmor %vm8801, %vm8802
    %v8804 = vsel %vm8803, %v8796, %v8800
    %v8805 = vand.u32 2147483647, %v8794
    %vm8806 = vcmp.eq.f32.partialorder %v8805, 8.507059e+37
    %v8807 = vand.u32 %v8794, 2147483648
    %v8808 = vor.u32 1.1754944e-38, %v8807
    %v8809 = vsel %vm8806, %v8808, %v8804
    %v8810 = vmul.f32 1.0, %v8809
    %v8811 = vrcp.pop %v8795
    %v8812 = vmul.f32 %v8795, %v8811
    %v8813 = vsub.f32 1.0, %v8812
    %v8814 = vmul.f32 %v8811, %v8813
    %v8815 = vadd.f32 %v8811, %v8814
    %vm8816 = vweird.f32 %v8795
    %vm8817 = vweird.f32 %v8811
    %vm8818 = vmor %vm8816, %vm8817
    %v8819 = vsel %vm8818, %v8811, %v8815
    %v8820 = vand.u32 2147483647, %v8795
    %vm8821 = vcmp.eq.f32.partialorder %v8820, 8.507059e+37
    %v8822 = vand.u32 %v8795, 2147483648
    %v8823 = vor.u32 1.1754944e-38, %v8822
    %v8824 = vsel %vm8821, %v8823, %v8819
    %v8825 = vmul.f32 1.0, %v8824
    %v8826 = vmul.f32 %v8770, %v7716
    %v8827 = vmul.f32 %v8785, %v7717
    %v8828 = vmul.f32 %v8732, %v8786
    %v8829 = vmul.f32 %v8747, %v8787
    %v8830 = vadd.f32 %v8826, %v8828
    %v8831 = vadd.f32 %v8827, %v8829
    %v8832 = vtanh.pop %v8830
    %v8833 = vtanh.pop %v8831
    %v8834 = vmul.f32 %v8810, %v8832
    %v8835 = vmul.f32 %v8825, %v8833
    %8836 = vst [vmem:[#allocation2 + $0x60] sm:$0xff] %v8834
    %8837 = vst [vmem:[#allocation2 + $0x68] sm:$0xff] %v8835
    %v8838 = vpack.c.bf16 %v8834, %v8834
    %v8839 = vpack.c.bf16 %v8835, %v8835
    %v8840 = vld [vmem:[#allocation10] sm:$0xff]
    %v8841 = vld [vmem:[#allocation10 + $0x8] sm:$0xff]
    %v8842 = vld [vmem:[#allocation10 + $0x10] sm:$0xff]
    %v8843 = vld [vmem:[#allocation10 + $0x18] sm:$0xff]
    %v8844 = vld [vmem:[#allocation10 + $0x20] sm:$0xff]
    %v8845 = vld [vmem:[#allocation10 + $0x28] sm:$0xff]
    %v8846 = vld [vmem:[#allocation10 + $0x30] sm:$0xff]
    %v8847 = vld [vmem:[#allocation10 + $0x38] sm:$0xff]
    %v8848 = vld [vmem:[#allocation10 + $0x40] sm:$0xff]
    %v8849 = vld [vmem:[#allocation10 + $0x48] sm:$0xff]
    %v8850 = vld [vmem:[#allocation10 + $0x50] sm:$0xff]
    %v8851 = vld [vmem:[#allocation10 + $0x58] sm:$0xff]
    %v8852 = vld [vmem:[#allocation10 + $0x60] sm:$0xff]
    %v8853 = vld [vmem:[#allocation10 + $0x68] sm:$0xff]
    %v8854 = vld [vmem:[#allocation10 + $0x70] sm:$0xff]
    %v8855 = vld [vmem:[#allocation10 + $0x78] sm:$0xff]
    %v8856 = vld [vmem:[#allocation10 + $0x80] sm:$0xff]
    %v8857 = vld [vmem:[#allocation10 + $0x88] sm:$0xff]
    %v8858 = vld [vmem:[#allocation10 + $0x90] sm:$0xff]
    %v8859 = vld [vmem:[#allocation10 + $0x98] sm:$0xff]
    %v8860 = vld [vmem:[#allocation10 + $0xa0] sm:$0xff]
    %v8861 = vld [vmem:[#allocation10 + $0xa8] sm:$0xff]
    %v8862 = vld [vmem:[#allocation10 + $0xb0] sm:$0xff]
    %v8863 = vld [vmem:[#allocation10 + $0xb8] sm:$0xff]
    %v8864 = vld [vmem:[#allocation10 + $0xc0] sm:$0xff]
    %v8865 = vld [vmem:[#allocation10 + $0xc8] sm:$0xff]
    %v8866 = vld [vmem:[#allocation10 + $0xd0] sm:$0xff]
    %v8867 = vld [vmem:[#allocation10 + $0xd8] sm:$0xff]
    %v8868 = vld [vmem:[#allocation10 + $0xe0] sm:$0xff]
    %v8869 = vld [vmem:[#allocation10 + $0xe8] sm:$0xff]
    %v8870 = vld [vmem:[#allocation10 + $0xf0] sm:$0xff]
    %v8871 = vld [vmem:[#allocation10 + $0xf8] sm:$0xff]
    %v8872 = vld [vmem:[#allocation10 + $0x100] sm:$0xff]
    %v8873 = vld [vmem:[#allocation10 + $0x108] sm:$0xff]
    %v8874 = vld [vmem:[#allocation10 + $0x110] sm:$0xff]
    %v8875 = vld [vmem:[#allocation10 + $0x118] sm:$0xff]
    %v8876 = vld [vmem:[#allocation10 + $0x120] sm:$0xff]
    %v8877 = vld [vmem:[#allocation10 + $0x128] sm:$0xff]
    %v8878 = vld [vmem:[#allocation10 + $0x130] sm:$0xff]
    %v8879 = vld [vmem:[#allocation10 + $0x138] sm:$0xff]
    %v8880 = vld [vmem:[#allocation10 + $0x140] sm:$0xff]
    %v8881 = vld [vmem:[#allocation10 + $0x148] sm:$0xff]
    %v8882 = vld [vmem:[#allocation10 + $0x150] sm:$0xff]
    %v8883 = vld [vmem:[#allocation10 + $0x158] sm:$0xff]
    %v8884 = vld [vmem:[#allocation10 + $0x160] sm:$0xff]
    %v8885 = vld [vmem:[#allocation10 + $0x168] sm:$0xff]
    %v8886 = vld [vmem:[#allocation10 + $0x170] sm:$0xff]
    %v8887 = vld [vmem:[#allocation10 + $0x178] sm:$0xff]
    %v8888 = vld [vmem:[#allocation10 + $0x180] sm:$0xff]
    %v8889 = vld [vmem:[#allocation10 + $0x188] sm:$0xff]
    %v8890 = vld [vmem:[#allocation10 + $0x190] sm:$0xff]
    %v8891 = vld [vmem:[#allocation10 + $0x198] sm:$0xff]
    %v8892 = vld [vmem:[#allocation10 + $0x1a0] sm:$0xff]
    %v8893 = vld [vmem:[#allocation10 + $0x1a8] sm:$0xff]
    %v8894 = vld [vmem:[#allocation10 + $0x1b0] sm:$0xff]
    %v8895 = vld [vmem:[#allocation10 + $0x1b8] sm:$0xff]
    %v8896 = vld [vmem:[#allocation10 + $0x1c0] sm:$0xff]
    %v8897 = vld [vmem:[#allocation10 + $0x1c8] sm:$0xff]
    %v8898 = vld [vmem:[#allocation10 + $0x1d0] sm:$0xff]
    %v8899 = vld [vmem:[#allocation10 + $0x1d8] sm:$0xff]
    %v8900 = vld [vmem:[#allocation10 + $0x1e0] sm:$0xff]
    %v8901 = vld [vmem:[#allocation10 + $0x1e8] sm:$0xff]
    %v8902 = vld [vmem:[#allocation10 + $0x1f0] sm:$0xff]
    %v8903 = vld [vmem:[#allocation10 + $0x1f8] sm:$0xff]
    %v8904 = vld [vmem:[#allocation10 + $0x200] sm:$0xff]
    %v8905 = vld [vmem:[#allocation10 + $0x208] sm:$0xff]
    %v8906 = vld [vmem:[#allocation10 + $0x210] sm:$0xff]
    %v8907 = vld [vmem:[#allocation10 + $0x218] sm:$0xff]
    %v8908 = vld [vmem:[#allocation10 + $0x220] sm:$0xff]
    %v8909 = vld [vmem:[#allocation10 + $0x228] sm:$0xff]
    %v8910 = vld [vmem:[#allocation10 + $0x230] sm:$0xff]
    %v8911 = vld [vmem:[#allocation10 + $0x238] sm:$0xff]
    %v8912 = vld [vmem:[#allocation10 + $0x240] sm:$0xff]
    %v8913 = vld [vmem:[#allocation10 + $0x248] sm:$0xff]
    %v8914 = vld [vmem:[#allocation10 + $0x250] sm:$0xff]
    %v8915 = vld [vmem:[#allocation10 + $0x258] sm:$0xff]
    %v8916 = vld [vmem:[#allocation10 + $0x260] sm:$0xff]
    %v8917 = vld [vmem:[#allocation10 + $0x268] sm:$0xff]
    %v8918 = vld [vmem:[#allocation10 + $0x270] sm:$0xff]
    %v8919 = vld [vmem:[#allocation10 + $0x278] sm:$0xff]
    %v8920 = vld [vmem:[#allocation10 + $0x280] sm:$0xff]
    %v8921 = vld [vmem:[#allocation10 + $0x288] sm:$0xff]
    %v8922 = vld [vmem:[#allocation10 + $0x290] sm:$0xff]
    %v8923 = vld [vmem:[#allocation10 + $0x298] sm:$0xff]
    %v8924 = vld [vmem:[#allocation10 + $0x2a0] sm:$0xff]
    %v8925 = vld [vmem:[#allocation10 + $0x2a8] sm:$0xff]
    %v8926 = vld [vmem:[#allocation10 + $0x2b0] sm:$0xff]
    %v8927 = vld [vmem:[#allocation10 + $0x2b8] sm:$0xff]
    %v8928 = vld [vmem:[#allocation10 + $0x2c0] sm:$0xff]
    %v8929 = vld [vmem:[#allocation10 + $0x2c8] sm:$0xff]
    %v8930 = vld [vmem:[#allocation10 + $0x2d0] sm:$0xff]
    %v8931 = vld [vmem:[#allocation10 + $0x2d8] sm:$0xff]
    %v8932 = vld [vmem:[#allocation10 + $0x2e0] sm:$0xff]
    %v8933 = vld [vmem:[#allocation10 + $0x2e8] sm:$0xff]
    %v8934 = vld [vmem:[#allocation10 + $0x2f0] sm:$0xff]
    %v8935 = vld [vmem:[#allocation10 + $0x2f8] sm:$0xff]
    %v8936 = vld [vmem:[#allocation10 + $0x300] sm:$0xff]
    %v8937 = vld [vmem:[#allocation10 + $0x308] sm:$0xff]
    %v8938 = vld [vmem:[#allocation10 + $0x310] sm:$0xff]
    %v8939 = vld [vmem:[#allocation10 + $0x318] sm:$0xff]
    %v8940 = vld [vmem:[#allocation10 + $0x320] sm:$0xff]
    %v8941 = vld [vmem:[#allocation10 + $0x328] sm:$0xff]
    %v8942 = vld [vmem:[#allocation10 + $0x330] sm:$0xff]
    %v8943 = vld [vmem:[#allocation10 + $0x338] sm:$0xff]
    %v8944 = vld [vmem:[#allocation10 + $0x340] sm:$0xff]
    %v8945 = vld [vmem:[#allocation10 + $0x348] sm:$0xff]
    %v8946 = vld [vmem:[#allocation10 + $0x350] sm:$0xff]
    %v8947 = vld [vmem:[#allocation10 + $0x358] sm:$0xff]
    %v8948 = vld [vmem:[#allocation10 + $0x360] sm:$0xff]
    %v8949 = vld [vmem:[#allocation10 + $0x368] sm:$0xff]
    %v8950 = vld [vmem:[#allocation10 + $0x370] sm:$0xff]
    %v8951 = vld [vmem:[#allocation10 + $0x378] sm:$0xff]
    %v8952 = vld [vmem:[#allocation10 + $0x380] sm:$0xff]
    %v8953 = vld [vmem:[#allocation10 + $0x388] sm:$0xff]
    %v8954 = vld [vmem:[#allocation10 + $0x390] sm:$0xff]
    %v8955 = vld [vmem:[#allocation10 + $0x398] sm:$0xff]
    %v8956 = vld [vmem:[#allocation10 + $0x3a0] sm:$0xff]
    %v8957 = vld [vmem:[#allocation10 + $0x3a8] sm:$0xff]
    %v8958 = vld [vmem:[#allocation10 + $0x3b0] sm:$0xff]
    %v8959 = vld [vmem:[#allocation10 + $0x3b8] sm:$0xff]
    %v8960 = vld [vmem:[#allocation10 + $0x3c0] sm:$0xff]
    %v8961 = vld [vmem:[#allocation10 + $0x3c8] sm:$0xff]
    %v8962 = vld [vmem:[#allocation10 + $0x3d0] sm:$0xff]
    %v8963 = vld [vmem:[#allocation10 + $0x3d8] sm:$0xff]
    %v8964 = vld [vmem:[#allocation10 + $0x3e0] sm:$0xff]
    %v8965 = vld [vmem:[#allocation10 + $0x3e8] sm:$0xff]
    %v8966 = vld [vmem:[#allocation10 + $0x3f0] sm:$0xff]
    %v8967 = vld [vmem:[#allocation10 + $0x3f8] sm:$0xff]
    %v9096 = vunpack.c.l.b16 %v8840
    %v9097 = vunpack.c.h.b16 %v8840
    %v9098 = vunpack.c.l.b16 %v8841
    %v9099 = vunpack.c.h.b16 %v8841
    %v9100 = vunpack.c.l.b16 %v8842
    %v9101 = vunpack.c.h.b16 %v8842
    %v9102 = vunpack.c.l.b16 %v8843
    %v9103 = vunpack.c.h.b16 %v8843
    %v9104 = vunpack.c.l.b16 %v8844
    %v9105 = vunpack.c.h.b16 %v8844
    %v9106 = vunpack.c.l.b16 %v8845
    %v9107 = vunpack.c.h.b16 %v8845
    %v9108 = vunpack.c.l.b16 %v8846
    %v9109 = vunpack.c.h.b16 %v8846
    %v9110 = vunpack.c.l.b16 %v8847
    %v9111 = vunpack.c.h.b16 %v8847
    %v9112 = vunpack.c.l.b16 %v8848
    %v9113 = vunpack.c.h.b16 %v8848
    %v9114 = vunpack.c.l.b16 %v8849
    %v9115 = vunpack.c.h.b16 %v8849
    %v9116 = vunpack.c.l.b16 %v8850
    %v9117 = vunpack.c.h.b16 %v8850
    %v9118 = vunpack.c.l.b16 %v8851
    %v9119 = vunpack.c.h.b16 %v8851
    %v9120 = vunpack.c.l.b16 %v8852
    %v9121 = vunpack.c.h.b16 %v8852
    %v9122 = vunpack.c.l.b16 %v8853
    %v9123 = vunpack.c.h.b16 %v8853
    %v9124 = vunpack.c.l.b16 %v8854
    %v9125 = vunpack.c.h.b16 %v8854
    %v9126 = vunpack.c.l.b16 %v8855
    %v9127 = vunpack.c.h.b16 %v8855
    %v9128 = vunpack.c.l.b16 %v8856
    %v9129 = vunpack.c.h.b16 %v8856
    %v9130 = vunpack.c.l.b16 %v8857
    %v9131 = vunpack.c.h.b16 %v8857
    %v9132 = vunpack.c.l.b16 %v8858
    %v9133 = vunpack.c.h.b16 %v8858
    %v9134 = vunpack.c.l.b16 %v8859
    %v9135 = vunpack.c.h.b16 %v8859
    %v9136 = vunpack.c.l.b16 %v8860
    %v9137 = vunpack.c.h.b16 %v8860
    %v9138 = vunpack.c.l.b16 %v8861
    %v9139 = vunpack.c.h.b16 %v8861
    %v9140 = vunpack.c.l.b16 %v8862
    %v9141 = vunpack.c.h.b16 %v8862
    %v9142 = vunpack.c.l.b16 %v8863
    %v9143 = vunpack.c.h.b16 %v8863
    %v9144 = vunpack.c.l.b16 %v8864
    %v9145 = vunpack.c.h.b16 %v8864
    %v9146 = vunpack.c.l.b16 %v8865
    %v9147 = vunpack.c.h.b16 %v8865
    %v9148 = vunpack.c.l.b16 %v8866
    %v9149 = vunpack.c.h.b16 %v8866
    %v9150 = vunpack.c.l.b16 %v8867
    %v9151 = vunpack.c.h.b16 %v8867
    %v9152 = vunpack.c.l.b16 %v8868
    %v9153 = vunpack.c.h.b16 %v8868
    %v9154 = vunpack.c.l.b16 %v8869
    %v9155 = vunpack.c.h.b16 %v8869
    %v9156 = vunpack.c.l.b16 %v8870
    %v9157 = vunpack.c.h.b16 %v8870
    %v9158 = vunpack.c.l.b16 %v8871
    %v9159 = vunpack.c.h.b16 %v8871
    %v9160 = vunpack.c.l.b16 %v8872
    %v9161 = vunpack.c.h.b16 %v8872
    %v9162 = vunpack.c.l.b16 %v8873
    %v9163 = vunpack.c.h.b16 %v8873
    %v9164 = vunpack.c.l.b16 %v8874
    %v9165 = vunpack.c.h.b16 %v8874
    %v9166 = vunpack.c.l.b16 %v8875
    %v9167 = vunpack.c.h.b16 %v8875
    %v9168 = vunpack.c.l.b16 %v8876
    %v9169 = vunpack.c.h.b16 %v8876
    %v9170 = vunpack.c.l.b16 %v8877
    %v9171 = vunpack.c.h.b16 %v8877
    %v9172 = vunpack.c.l.b16 %v8878
    %v9173 = vunpack.c.h.b16 %v8878
    %v9174 = vunpack.c.l.b16 %v8879
    %v9175 = vunpack.c.h.b16 %v8879
    %v9176 = vunpack.c.l.b16 %v8880
    %v9177 = vunpack.c.h.b16 %v8880
    %v9178 = vunpack.c.l.b16 %v8881
    %v9179 = vunpack.c.h.b16 %v8881
    %v9180 = vunpack.c.l.b16 %v8882
    %v9181 = vunpack.c.h.b16 %v8882
    %v9182 = vunpack.c.l.b16 %v8883
    %v9183 = vunpack.c.h.b16 %v8883
    %v9184 = vunpack.c.l.b16 %v8884
    %v9185 = vunpack.c.h.b16 %v8884
    %v9186 = vunpack.c.l.b16 %v8885
    %v9187 = vunpack.c.h.b16 %v8885
    %v9188 = vunpack.c.l.b16 %v8886
    %v9189 = vunpack.c.h.b16 %v8886
    %v9190 = vunpack.c.l.b16 %v8887
    %v9191 = vunpack.c.h.b16 %v8887
    %v9192 = vunpack.c.l.b16 %v8888
    %v9193 = vunpack.c.h.b16 %v8888
    %v9194 = vunpack.c.l.b16 %v8889
    %v9195 = vunpack.c.h.b16 %v8889
    %v9196 = vunpack.c.l.b16 %v8890
    %v9197 = vunpack.c.h.b16 %v8890
    %v9198 = vunpack.c.l.b16 %v8891
    %v9199 = vunpack.c.h.b16 %v8891
    %v9200 = vunpack.c.l.b16 %v8892
    %v9201 = vunpack.c.h.b16 %v8892
    %v9202 = vunpack.c.l.b16 %v8893
    %v9203 = vunpack.c.h.b16 %v8893
    %v9204 = vunpack.c.l.b16 %v8894
    %v9205 = vunpack.c.h.b16 %v8894
    %v9206 = vunpack.c.l.b16 %v8895
    %v9207 = vunpack.c.h.b16 %v8895
    %v9208 = vunpack.c.l.b16 %v8896
    %v9209 = vunpack.c.h.b16 %v8896
    %v9210 = vunpack.c.l.b16 %v8897
    %v9211 = vunpack.c.h.b16 %v8897
    %v9212 = vunpack.c.l.b16 %v8898
    %v9213 = vunpack.c.h.b16 %v8898
    %v9214 = vunpack.c.l.b16 %v8899
    %v9215 = vunpack.c.h.b16 %v8899
    %v9216 = vunpack.c.l.b16 %v8900
    %v9217 = vunpack.c.h.b16 %v8900
    %v9218 = vunpack.c.l.b16 %v8901
    %v9219 = vunpack.c.h.b16 %v8901
    %v9220 = vunpack.c.l.b16 %v8902
    %v9221 = vunpack.c.h.b16 %v8902
    %v9222 = vunpack.c.l.b16 %v8903
    %v9223 = vunpack.c.h.b16 %v8903
    %v9224 = vunpack.c.l.b16 %v8904
    %v9225 = vunpack.c.h.b16 %v8904
    %v9226 = vunpack.c.l.b16 %v8905
    %v9227 = vunpack.c.h.b16 %v8905
    %v9228 = vunpack.c.l.b16 %v8906
    %v9229 = vunpack.c.h.b16 %v8906
    %v9230 = vunpack.c.l.b16 %v8907
    %v9231 = vunpack.c.h.b16 %v8907
    %v9232 = vunpack.c.l.b16 %v8908
    %v9233 = vunpack.c.h.b16 %v8908
    %v9234 = vunpack.c.l.b16 %v8909
    %v9235 = vunpack.c.h.b16 %v8909
    %v9236 = vunpack.c.l.b16 %v8910
    %v9237 = vunpack.c.h.b16 %v8910
    %v9238 = vunpack.c.l.b16 %v8911
    %v9239 = vunpack.c.h.b16 %v8911
    %v9240 = vunpack.c.l.b16 %v8912
    %v9241 = vunpack.c.h.b16 %v8912
    %v9242 = vunpack.c.l.b16 %v8913
    %v9243 = vunpack.c.h.b16 %v8913
    %v9244 = vunpack.c.l.b16 %v8914
    %v9245 = vunpack.c.h.b16 %v8914
    %v9246 = vunpack.c.l.b16 %v8915
    %v9247 = vunpack.c.h.b16 %v8915
    %v9248 = vunpack.c.l.b16 %v8916
    %v9249 = vunpack.c.h.b16 %v8916
    %v9250 = vunpack.c.l.b16 %v8917
    %v9251 = vunpack.c.h.b16 %v8917
    %v9252 = vunpack.c.l.b16 %v8918
    %v9253 = vunpack.c.h.b16 %v8918
    %v9254 = vunpack.c.l.b16 %v8919
    %v9255 = vunpack.c.h.b16 %v8919
    %v9256 = vunpack.c.l.b16 %v8920
    %v9257 = vunpack.c.h.b16 %v8920
    %v9258 = vunpack.c.l.b16 %v8921
    %v9259 = vunpack.c.h.b16 %v8921
    %v9260 = vunpack.c.l.b16 %v8922
    %v9261 = vunpack.c.h.b16 %v8922
    %v9262 = vunpack.c.l.b16 %v8923
    %v9263 = vunpack.c.h.b16 %v8923
    %v9264 = vunpack.c.l.b16 %v8924
    %v9265 = vunpack.c.h.b16 %v8924
    %v9266 = vunpack.c.l.b16 %v8925
    %v9267 = vunpack.c.h.b16 %v8925
    %v9268 = vunpack.c.l.b16 %v8926
    %v9269 = vunpack.c.h.b16 %v8926
    %v9270 = vunpack.c.l.b16 %v8927
    %v9271 = vunpack.c.h.b16 %v8927
    %v9272 = vunpack.c.l.b16 %v8928
    %v9273 = vunpack.c.h.b16 %v8928
    %v9274 = vunpack.c.l.b16 %v8929
    %v9275 = vunpack.c.h.b16 %v8929
    %v9276 = vunpack.c.l.b16 %v8930
    %v9277 = vunpack.c.h.b16 %v8930
    %v9278 = vunpack.c.l.b16 %v8931
    %v9279 = vunpack.c.h.b16 %v8931
    %v9280 = vunpack.c.l.b16 %v8932
    %v9281 = vunpack.c.h.b16 %v8932
    %v9282 = vunpack.c.l.b16 %v8933
    %v9283 = vunpack.c.h.b16 %v8933
    %v9284 = vunpack.c.l.b16 %v8934
    %v9285 = vunpack.c.h.b16 %v8934
    %v9286 = vunpack.c.l.b16 %v8935
    %v9287 = vunpack.c.h.b16 %v8935
    %v9288 = vunpack.c.l.b16 %v8936
    %v9289 = vunpack.c.h.b16 %v8936
    %v9290 = vunpack.c.l.b16 %v8937
    %v9291 = vunpack.c.h.b16 %v8937
    %v9292 = vunpack.c.l.b16 %v8938
    %v9293 = vunpack.c.h.b16 %v8938
    %v9294 = vunpack.c.l.b16 %v8939
    %v9295 = vunpack.c.h.b16 %v8939
    %v9296 = vunpack.c.l.b16 %v8940
    %v9297 = vunpack.c.h.b16 %v8940
    %v9298 = vunpack.c.l.b16 %v8941
    %v9299 = vunpack.c.h.b16 %v8941
    %v9300 = vunpack.c.l.b16 %v8942
    %v9301 = vunpack.c.h.b16 %v8942
    %v9302 = vunpack.c.l.b16 %v8943
    %v9303 = vunpack.c.h.b16 %v8943
    %v9304 = vunpack.c.l.b16 %v8944
    %v9305 = vunpack.c.h.b16 %v8944
    %v9306 = vunpack.c.l.b16 %v8945
    %v9307 = vunpack.c.h.b16 %v8945
    %v9308 = vunpack.c.l.b16 %v8946
    %v9309 = vunpack.c.h.b16 %v8946
    %v9310 = vunpack.c.l.b16 %v8947
    %v9311 = vunpack.c.h.b16 %v8947
    %v9312 = vunpack.c.l.b16 %v8948
    %v9313 = vunpack.c.h.b16 %v8948
    %v9314 = vunpack.c.l.b16 %v8949
    %v9315 = vunpack.c.h.b16 %v8949
    %v9316 = vunpack.c.l.b16 %v8950
    %v9317 = vunpack.c.h.b16 %v8950
    %v9318 = vunpack.c.l.b16 %v8951
    %v9319 = vunpack.c.h.b16 %v8951
    %v9320 = vunpack.c.l.b16 %v8952
    %v9321 = vunpack.c.h.b16 %v8952
    %v9322 = vunpack.c.l.b16 %v8953
    %v9323 = vunpack.c.h.b16 %v8953
    %v9324 = vunpack.c.l.b16 %v8954
    %v9325 = vunpack.c.h.b16 %v8954
    %v9326 = vunpack.c.l.b16 %v8955
    %v9327 = vunpack.c.h.b16 %v8955
    %v9328 = vunpack.c.l.b16 %v8956
    %v9329 = vunpack.c.h.b16 %v8956
    %v9330 = vunpack.c.l.b16 %v8957
    %v9331 = vunpack.c.h.b16 %v8957
    %v9332 = vunpack.c.l.b16 %v8958
    %v9333 = vunpack.c.h.b16 %v8958
    %v9334 = vunpack.c.l.b16 %v8959
    %v9335 = vunpack.c.h.b16 %v8959
    %v9336 = vunpack.c.l.b16 %v8960
    %v9337 = vunpack.c.h.b16 %v8960
    %v9338 = vunpack.c.l.b16 %v8961
    %v9339 = vunpack.c.h.b16 %v8961
    %v9340 = vunpack.c.l.b16 %v8962
    %v9341 = vunpack.c.h.b16 %v8962
    %v9342 = vunpack.c.l.b16 %v8963
    %v9343 = vunpack.c.h.b16 %v8963
    %v9344 = vunpack.c.l.b16 %v8964
    %v9345 = vunpack.c.h.b16 %v8964
    %v9346 = vunpack.c.l.b16 %v8965
    %v9347 = vunpack.c.h.b16 %v8965
    %v9348 = vunpack.c.l.b16 %v8966
    %v9349 = vunpack.c.h.b16 %v8966
    %v9350 = vunpack.c.l.b16 %v8967
    %v9351 = vunpack.c.h.b16 %v8967
    %v9352 = vpack.c.b16 %v9104, %v9096
    %v9353 = vpack.c.b16 %v9105, %v9097
    %v9354 = vpack.c.b16 %v9106, %v9098
    %v9355 = vpack.c.b16 %v9107, %v9099
    %v9356 = vpack.c.b16 %v9108, %v9100
    %v9357 = vpack.c.b16 %v9109, %v9101
    %v9358 = vpack.c.b16 %v9110, %v9102
    %v9359 = vpack.c.b16 %v9111, %v9103
    %v9360 = vpack.c.b16 %v9120, %v9112
    %v9361 = vpack.c.b16 %v9121, %v9113
    %v9362 = vpack.c.b16 %v9122, %v9114
    %v9363 = vpack.c.b16 %v9123, %v9115
    %v9364 = vpack.c.b16 %v9124, %v9116
    %v9365 = vpack.c.b16 %v9125, %v9117
    %v9366 = vpack.c.b16 %v9126, %v9118
    %v9367 = vpack.c.b16 %v9127, %v9119
    %v9368 = vpack.c.b16 %v9136, %v9128
    %v9369 = vpack.c.b16 %v9137, %v9129
    %v9370 = vpack.c.b16 %v9138, %v9130
    %v9371 = vpack.c.b16 %v9139, %v9131
    %v9372 = vpack.c.b16 %v9140, %v9132
    %v9373 = vpack.c.b16 %v9141, %v9133
    %v9374 = vpack.c.b16 %v9142, %v9134
    %v9375 = vpack.c.b16 %v9143, %v9135
    %v9376 = vpack.c.b16 %v9152, %v9144
    %v9377 = vpack.c.b16 %v9153, %v9145
    %v9378 = vpack.c.b16 %v9154, %v9146
    %v9379 = vpack.c.b16 %v9155, %v9147
    %v9380 = vpack.c.b16 %v9156, %v9148
    %v9381 = vpack.c.b16 %v9157, %v9149
    %v9382 = vpack.c.b16 %v9158, %v9150
    %v9383 = vpack.c.b16 %v9159, %v9151
    %v9384 = vpack.c.b16 %v9168, %v9160
    %v9385 = vpack.c.b16 %v9169, %v9161
    %v9386 = vpack.c.b16 %v9170, %v9162
    %v9387 = vpack.c.b16 %v9171, %v9163
    %v9388 = vpack.c.b16 %v9172, %v9164
    %v9389 = vpack.c.b16 %v9173, %v9165
    %v9390 = vpack.c.b16 %v9174, %v9166
    %v9391 = vpack.c.b16 %v9175, %v9167
    %v9392 = vpack.c.b16 %v9184, %v9176
    %v9393 = vpack.c.b16 %v9185, %v9177
    %v9394 = vpack.c.b16 %v9186, %v9178
    %v9395 = vpack.c.b16 %v9187, %v9179
    %v9396 = vpack.c.b16 %v9188, %v9180
    %v9397 = vpack.c.b16 %v9189, %v9181
    %v9398 = vpack.c.b16 %v9190, %v9182
    %v9399 = vpack.c.b16 %v9191, %v9183
    %v9400 = vpack.c.b16 %v9200, %v9192
    %v9401 = vpack.c.b16 %v9201, %v9193
    %v9402 = vpack.c.b16 %v9202, %v9194
    %v9403 = vpack.c.b16 %v9203, %v9195
    %v9404 = vpack.c.b16 %v9204, %v9196
    %v9405 = vpack.c.b16 %v9205, %v9197
    %v9406 = vpack.c.b16 %v9206, %v9198
    %v9407 = vpack.c.b16 %v9207, %v9199
    %v9408 = vpack.c.b16 %v9216, %v9208
    %v9409 = vpack.c.b16 %v9217, %v9209
    %v9410 = vpack.c.b16 %v9218, %v9210
    %v9411 = vpack.c.b16 %v9219, %v9211
    %v9412 = vpack.c.b16 %v9220, %v9212
    %v9413 = vpack.c.b16 %v9221, %v9213
    %v9414 = vpack.c.b16 %v9222, %v9214
    %v9415 = vpack.c.b16 %v9223, %v9215
    %v9416 = vpack.c.b16 %v9232, %v9224
    %v9417 = vpack.c.b16 %v9233, %v9225
    %v9418 = vpack.c.b16 %v9234, %v9226
    %v9419 = vpack.c.b16 %v9235, %v9227
    %v9420 = vpack.c.b16 %v9236, %v9228
    %v9421 = vpack.c.b16 %v9237, %v9229
    %v9422 = vpack.c.b16 %v9238, %v9230
    %v9423 = vpack.c.b16 %v9239, %v9231
    %v9424 = vpack.c.b16 %v9248, %v9240
    %v9425 = vpack.c.b16 %v9249, %v9241
    %v9426 = vpack.c.b16 %v9250, %v9242
    %v9427 = vpack.c.b16 %v9251, %v9243
    %v9428 = vpack.c.b16 %v9252, %v9244
    %v9429 = vpack.c.b16 %v9253, %v9245
    %v9430 = vpack.c.b16 %v9254, %v9246
    %v9431 = vpack.c.b16 %v9255, %v9247
    %v9432 = vpack.c.b16 %v9264, %v9256
    %v9433 = vpack.c.b16 %v9265, %v9257
    %v9434 = vpack.c.b16 %v9266, %v9258
    %v9435 = vpack.c.b16 %v9267, %v9259
    %v9436 = vpack.c.b16 %v9268, %v9260
    %v9437 = vpack.c.b16 %v9269, %v9261
    %v9438 = vpack.c.b16 %v9270, %v9262
    %v9439 = vpack.c.b16 %v9271, %v9263
    %v9440 = vpack.c.b16 %v9280, %v9272
    %v9441 = vpack.c.b16 %v9281, %v9273
    %v9442 = vpack.c.b16 %v9282, %v9274
    %v9443 = vpack.c.b16 %v9283, %v9275
    %v9444 = vpack.c.b16 %v9284, %v9276
    %v9445 = vpack.c.b16 %v9285, %v9277
    %v9446 = vpack.c.b16 %v9286, %v9278
    %v9447 = vpack.c.b16 %v9287, %v9279
    %v9448 = vpack.c.b16 %v9296, %v9288
    %v9449 = vpack.c.b16 %v9297, %v9289
    %v9450 = vpack.c.b16 %v9298, %v9290
    %v9451 = vpack.c.b16 %v9299, %v9291
    %v9452 = vpack.c.b16 %v9300, %v9292
    %v9453 = vpack.c.b16 %v9301, %v9293
    %v9454 = vpack.c.b16 %v9302, %v9294
    %v9455 = vpack.c.b16 %v9303, %v9295
    %v9456 = vpack.c.b16 %v9312, %v9304
    %v9457 = vpack.c.b16 %v9313, %v9305
    %v9458 = vpack.c.b16 %v9314, %v9306
    %v9459 = vpack.c.b16 %v9315, %v9307
    %v9460 = vpack.c.b16 %v9316, %v9308
    %v9461 = vpack.c.b16 %v9317, %v9309
    %v9462 = vpack.c.b16 %v9318, %v9310
    %v9463 = vpack.c.b16 %v9319, %v9311
    %v9464 = vpack.c.b16 %v9328, %v9320
    %v9465 = vpack.c.b16 %v9329, %v9321
    %v9466 = vpack.c.b16 %v9330, %v9322
    %v9467 = vpack.c.b16 %v9331, %v9323
    %v9468 = vpack.c.b16 %v9332, %v9324
    %v9469 = vpack.c.b16 %v9333, %v9325
    %v9470 = vpack.c.b16 %v9334, %v9326
    %v9471 = vpack.c.b16 %v9335, %v9327
    %v9472 = vpack.c.b16 %v9344, %v9336
    %v9473 = vpack.c.b16 %v9345, %v9337
    %v9474 = vpack.c.b16 %v9346, %v9338
    %v9475 = vpack.c.b16 %v9347, %v9339
    %v9476 = vpack.c.b16 %v9348, %v9340
    %v9477 = vpack.c.b16 %v9349, %v9341
    %v9478 = vpack.c.b16 %v9350, %v9342
    %v9479 = vpack.c.b16 %v9351, %v9343
    %9608 = vmatpush.bf16.msra.mxu0 %v9408
    %9609 = vmatpush.bf16.msra.mxu0 %v9400
    %9610 = vmatpush.bf16.msra.mxu0 %v9392
    %9611 = vmatpush.bf16.msra.mxu0 %v9384
    %9612 = vmatpush.bf16.msra.mxu0 %v9376
    %9613 = vmatpush.bf16.msra.mxu0 %v9368
    %9614 = vmatpush.bf16.msra.mxu0 %v9360
    %9615 = vmatpush.bf16.msra.mxu0 %v9352
    %9616 = vmatmul.bf16.gmra.mxu0 %v8838
    %v9617 = vpop.f32.mrf.mxu0
    %v9618 = vadd.f32 0.0, %v9617
    %v9619 = vpop.f32.mrf.mxu0
    %9620 = vdwg.mxu0
    %9621 = vmatpush.bf16.msra.mxu0 %v9472
    %9622 = vmatpush.bf16.msra.mxu0 %v9464
    %9623 = vmatpush.bf16.msra.mxu0 %v9456
    %9624 = vmatpush.bf16.msra.mxu0 %v9448
    %9625 = vmatpush.bf16.msra.mxu0 %v9440
    %9626 = vmatpush.bf16.msra.mxu0 %v9432
    %9627 = vmatpush.bf16.msra.mxu0 %v9424
    %9628 = vmatpush.bf16.msra.mxu0 %v9416
    %9629 = vmatmul.bf16.gmra.mxu0 %v8839
    %v9630 = vpop.f32.mrf.mxu0
    %v9631 = vadd.f32 %v9618, %v9630
    %v9632 = vpop.f32.mrf.mxu0
    %9633 = vdwg.mxu0
    %9634 = vmatpush.bf16.msra.mxu0 %v9409
    %9635 = vmatpush.bf16.msra.mxu0 %v9401
    %9636 = vmatpush.bf16.msra.mxu0 %v9393
    %9637 = vmatpush.bf16.msra.mxu0 %v9385
    %9638 = vmatpush.bf16.msra.mxu0 %v9377
    %9639 = vmatpush.bf16.msra.mxu0 %v9369
    %9640 = vmatpush.bf16.msra.mxu0 %v9361
    %9641 = vmatpush.bf16.msra.mxu0 %v9353
    %9642 = vmatmul.bf16.gmra.mxu0 %v8838
    %v9643 = vpop.f32.mrf.mxu0
    %v9644 = vadd.f32 0.0, %v9643
    %v9645 = vpop.f32.mrf.mxu0
    %9646 = vdwg.mxu0
    %9647 = vmatpush.bf16.msra.mxu0 %v9473
    %9648 = vmatpush.bf16.msra.mxu0 %v9465
    %9649 = vmatpush.bf16.msra.mxu0 %v9457
    %9650 = vmatpush.bf16.msra.mxu0 %v9449
    %9651 = vmatpush.bf16.msra.mxu0 %v9441
    %9652 = vmatpush.bf16.msra.mxu0 %v9433
    %9653 = vmatpush.bf16.msra.mxu0 %v9425
    %9654 = vmatpush.bf16.msra.mxu0 %v9417
    %9655 = vmatmul.bf16.gmra.mxu0 %v8839
    %v9656 = vpop.f32.mrf.mxu0
    %v9657 = vadd.f32 %v9644, %v9656
    %v9658 = vpop.f32.mrf.mxu0
    %9659 = vdwg.mxu0
    %9660 = vmatpush.bf16.msra.mxu0 %v9410
    %9661 = vmatpush.bf16.msra.mxu0 %v9402
    %9662 = vmatpush.bf16.msra.mxu0 %v9394
    %9663 = vmatpush.bf16.msra.mxu0 %v9386
    %9664 = vmatpush.bf16.msra.mxu0 %v9378
    %9665 = vmatpush.bf16.msra.mxu0 %v9370
    %9666 = vmatpush.bf16.msra.mxu0 %v9362
    %9667 = vmatpush.bf16.msra.mxu0 %v9354
    %9668 = vmatmul.bf16.gmra.mxu0 %v8838
    %v9669 = vpop.f32.mrf.mxu0
    %v9670 = vadd.f32 0.0, %v9669
    %v9671 = vpop.f32.mrf.mxu0
    %9672 = vdwg.mxu0
    %9673 = vmatpush.bf16.msra.mxu0 %v9474
    %9674 = vmatpush.bf16.msra.mxu0 %v9466
    %9675 = vmatpush.bf16.msra.mxu0 %v9458
    %9676 = vmatpush.bf16.msra.mxu0 %v9450
    %9677 = vmatpush.bf16.msra.mxu0 %v9442
    %9678 = vmatpush.bf16.msra.mxu0 %v9434
    %9679 = vmatpush.bf16.msra.mxu0 %v9426
    %9680 = vmatpush.bf16.msra.mxu0 %v9418
    %9681 = vmatmul.bf16.gmra.mxu0 %v8839
    %v9682 = vpop.f32.mrf.mxu0
    %v9683 = vadd.f32 %v9670, %v9682
    %v9684 = vpop.f32.mrf.mxu0
    %9685 = vdwg.mxu0
    %9686 = vmatpush.bf16.msra.mxu0 %v9411
    %9687 = vmatpush.bf16.msra.mxu0 %v9403
    %9688 = vmatpush.bf16.msra.mxu0 %v9395
    %9689 = vmatpush.bf16.msra.mxu0 %v9387
    %9690 = vmatpush.bf16.msra.mxu0 %v9379
    %9691 = vmatpush.bf16.msra.mxu0 %v9371
    %9692 = vmatpush.bf16.msra.mxu0 %v9363
    %9693 = vmatpush.bf16.msra.mxu0 %v9355
    %9694 = vmatmul.bf16.gmra.mxu0 %v8838
    %v9695 = vpop.f32.mrf.mxu0
    %v9696 = vadd.f32 0.0, %v9695
    %v9697 = vpop.f32.mrf.mxu0
    %9698 = vdwg.mxu0
    %9699 = vmatpush.bf16.msra.mxu0 %v9475
    %9700 = vmatpush.bf16.msra.mxu0 %v9467
    %9701 = vmatpush.bf16.msra.mxu0 %v9459
    %9702 = vmatpush.bf16.msra.mxu0 %v9451
    %9703 = vmatpush.bf16.msra.mxu0 %v9443
    %9704 = vmatpush.bf16.msra.mxu0 %v9435
    %9705 = vmatpush.bf16.msra.mxu0 %v9427
    %9706 = vmatpush.bf16.msra.mxu0 %v9419
    %9707 = vmatmul.bf16.gmra.mxu0 %v8839
    %v9708 = vpop.f32.mrf.mxu0
    %v9709 = vadd.f32 %v9696, %v9708
    %v9710 = vpop.f32.mrf.mxu0
    %9711 = vdwg.mxu0
    %9712 = vmatpush.bf16.msra.mxu0 %v9412
    %9713 = vmatpush.bf16.msra.mxu0 %v9404
    %9714 = vmatpush.bf16.msra.mxu0 %v9396
    %9715 = vmatpush.bf16.msra.mxu0 %v9388
    %9716 = vmatpush.bf16.msra.mxu0 %v9380
    %9717 = vmatpush.bf16.msra.mxu0 %v9372
    %9718 = vmatpush.bf16.msra.mxu0 %v9364
    %9719 = vmatpush.bf16.msra.mxu0 %v9356
    %9720 = vmatmul.bf16.gmra.mxu0 %v8838
    %v9721 = vpop.f32.mrf.mxu0
    %v9722 = vadd.f32 0.0, %v9721
    %v9723 = vpop.f32.mrf.mxu0
    %9724 = vdwg.mxu0
    %9725 = vmatpush.bf16.msra.mxu0 %v9476
    %9726 = vmatpush.bf16.msra.mxu0 %v9468
    %9727 = vmatpush.bf16.msra.mxu0 %v9460
    %9728 = vmatpush.bf16.msra.mxu0 %v9452
    %9729 = vmatpush.bf16.msra.mxu0 %v9444
    %9730 = vmatpush.bf16.msra.mxu0 %v9436
    %9731 = vmatpush.bf16.msra.mxu0 %v9428
    %9732 = vmatpush.bf16.msra.mxu0 %v9420
    %9733 = vmatmul.bf16.gmra.mxu0 %v8839
    %v9734 = vpop.f32.mrf.mxu0
    %v9735 = vadd.f32 %v9722, %v9734
    %v9736 = vpop.f32.mrf.mxu0
    %9737 = vdwg.mxu0
    %9738 = vmatpush.bf16.msra.mxu0 %v9413
    %9739 = vmatpush.bf16.msra.mxu0 %v9405
    %9740 = vmatpush.bf16.msra.mxu0 %v9397
    %9741 = vmatpush.bf16.msra.mxu0 %v9389
    %9742 = vmatpush.bf16.msra.mxu0 %v9381
    %9743 = vmatpush.bf16.msra.mxu0 %v9373
    %9744 = vmatpush.bf16.msra.mxu0 %v9365
    %9745 = vmatpush.bf16.msra.mxu0 %v9357
    %9746 = vmatmul.bf16.gmra.mxu0 %v8838
    %v9747 = vpop.f32.mrf.mxu0
    %v9748 = vadd.f32 0.0, %v9747
    %v9749 = vpop.f32.mrf.mxu0
    %9750 = vdwg.mxu0
    %9751 = vmatpush.bf16.msra.mxu0 %v9477
    %9752 = vmatpush.bf16.msra.mxu0 %v9469
    %9753 = vmatpush.bf16.msra.mxu0 %v9461
    %9754 = vmatpush.bf16.msra.mxu0 %v9453
    %9755 = vmatpush.bf16.msra.mxu0 %v9445
    %9756 = vmatpush.bf16.msra.mxu0 %v9437
    %9757 = vmatpush.bf16.msra.mxu0 %v9429
    %9758 = vmatpush.bf16.msra.mxu0 %v9421
    %9759 = vmatmul.bf16.gmra.mxu0 %v8839
    %v9760 = vpop.f32.mrf.mxu0
    %v9761 = vadd.f32 %v9748, %v9760
    %v9762 = vpop.f32.mrf.mxu0
    %9763 = vdwg.mxu0
    %9764 = vmatpush.bf16.msra.mxu0 %v9414
    %9765 = vmatpush.bf16.msra.mxu0 %v9406
    %9766 = vmatpush.bf16.msra.mxu0 %v9398
    %9767 = vmatpush.bf16.msra.mxu0 %v9390
    %9768 = vmatpush.bf16.msra.mxu0 %v9382
    %9769 = vmatpush.bf16.msra.mxu0 %v9374
    %9770 = vmatpush.bf16.msra.mxu0 %v9366
    %9771 = vmatpush.bf16.msra.mxu0 %v9358
    %9772 = vmatmul.bf16.gmra.mxu0 %v8838
    %v9773 = vpop.f32.mrf.mxu0
    %v9774 = vadd.f32 0.0, %v9773
    %v9775 = vpop.f32.mrf.mxu0
    %9776 = vdwg.mxu0
    %9777 = vmatpush.bf16.msra.mxu0 %v9478
    %9778 = vmatpush.bf16.msra.mxu0 %v9470
    %9779 = vmatpush.bf16.msra.mxu0 %v9462
    %9780 = vmatpush.bf16.msra.mxu0 %v9454
    %9781 = vmatpush.bf16.msra.mxu0 %v9446
    %9782 = vmatpush.bf16.msra.mxu0 %v9438
    %9783 = vmatpush.bf16.msra.mxu0 %v9430
    %9784 = vmatpush.bf16.msra.mxu0 %v9422
    %9785 = vmatmul.bf16.gmra.mxu0 %v8839
    %v9786 = vpop.f32.mrf.mxu0
    %v9787 = vadd.f32 %v9774, %v9786
    %v9788 = vpop.f32.mrf.mxu0
    %9789 = vdwg.mxu0
    %9790 = vmatpush.bf16.msra.mxu0 %v9415
    %9791 = vmatpush.bf16.msra.mxu0 %v9407
    %9792 = vmatpush.bf16.msra.mxu0 %v9399
    %9793 = vmatpush.bf16.msra.mxu0 %v9391
    %9794 = vmatpush.bf16.msra.mxu0 %v9383
    %9795 = vmatpush.bf16.msra.mxu0 %v9375
    %9796 = vmatpush.bf16.msra.mxu0 %v9367
    %9797 = vmatpush.bf16.msra.mxu0 %v9359
    %9798 = vmatmul.bf16.gmra.mxu0 %v8838
    %v9799 = vpop.f32.mrf.mxu0
    %v9800 = vadd.f32 0.0, %v9799
    %v9801 = vpop.f32.mrf.mxu0
    %9802 = vdwg.mxu0
    %9803 = vmatpush.bf16.msra.mxu0 %v9479
    %9804 = vmatpush.bf16.msra.mxu0 %v9471
    %9805 = vmatpush.bf16.msra.mxu0 %v9463
    %9806 = vmatpush.bf16.msra.mxu0 %v9455
    %9807 = vmatpush.bf16.msra.mxu0 %v9447
    %9808 = vmatpush.bf16.msra.mxu0 %v9439
    %9809 = vmatpush.bf16.msra.mxu0 %v9431
    %9810 = vmatpush.bf16.msra.mxu0 %v9423
    %9811 = vmatmul.bf16.gmra.mxu0 %v8839
    %v9812 = vpop.f32.mrf.mxu0
    %v9813 = vadd.f32 %v9800, %v9812
    %v9814 = vpop.f32.mrf.mxu0
    %9815 = vdwg.mxu0
    %v9816 = vadd.f32 %v831, %v9631
    %v9817 = vadd.f32 %v860, %v9657
    %v9818 = vadd.f32 %v889, %v9683
    %v9819 = vadd.f32 %v918, %v9709
    %v9820 = vadd.f32 %v947, %v9735
    %v9821 = vadd.f32 %v976, %v9761
    %v9822 = vadd.f32 %v1005, %v9787
    %v9823 = vadd.f32 %v1034, %v9813
    %v9824 = vxor.u32 %v9816, 2147483648
    %v9825 = vxor.u32 %v9817, 2147483648
    %v9826 = vmul.f32 %v9824, 1.442695
    %v9827 = vpow.pop %v9826
    %v9828 = vmul.f32 %v9825, 1.442695
    %v9829 = vpow.pop %v9828
    %v9830 = vadd.f32 %v9827, 1.0
    %v9831 = vadd.f32 %v9829, 1.0
    %v9832 = vrcp.pop %v9830
    %v9833 = vmul.f32 %v9830, %v9832
    %v9834 = vsub.f32 1.0, %v9833
    %v9835 = vmul.f32 %v9832, %v9834
    %v9836 = vadd.f32 %v9832, %v9835
    %vm9837 = vweird.f32 %v9830
    %vm9838 = vweird.f32 %v9832
    %vm9839 = vmor %vm9837, %vm9838
    %v9840 = vsel %vm9839, %v9832, %v9836
    %v9841 = vand.u32 2147483647, %v9830
    %vm9842 = vcmp.eq.f32.partialorder %v9841, 8.507059e+37
    %v9843 = vand.u32 %v9830, 2147483648
    %v9844 = vor.u32 1.1754944e-38, %v9843
    %v9845 = vsel %vm9842, %v9844, %v9840
    %v9846 = vmul.f32 1.0, %v9845
    %v9847 = vrcp.pop %v9831
    %v9848 = vmul.f32 %v9831, %v9847
    %v9849 = vsub.f32 1.0, %v9848
    %v9850 = vmul.f32 %v9847, %v9849
    %v9851 = vadd.f32 %v9847, %v9850
    %vm9852 = vweird.f32 %v9831
    %vm9853 = vweird.f32 %v9847
    %vm9854 = vmor %vm9852, %vm9853
    %v9855 = vsel %vm9854, %v9847, %v9851
    %v9856 = vand.u32 2147483647, %v9831
    %vm9857 = vcmp.eq.f32.partialorder %v9856, 8.507059e+37
    %v9858 = vand.u32 %v9831, 2147483648
    %v9859 = vor.u32 1.1754944e-38, %v9858
    %v9860 = vsel %vm9857, %v9859, %v9855
    %v9861 = vmul.f32 1.0, %v9860
    %v9862 = vxor.u32 %v9818, 2147483648
    %v9863 = vxor.u32 %v9819, 2147483648
    %v9864 = vmul.f32 %v9862, 1.442695
    %v9865 = vpow.pop %v9864
    %v9866 = vmul.f32 %v9863, 1.442695
    %v9867 = vpow.pop %v9866
    %v9868 = vadd.f32 %v9865, 1.0
    %v9869 = vadd.f32 %v9867, 1.0
    %v9870 = vrcp.pop %v9868
    %v9871 = vmul.f32 %v9868, %v9870
    %v9872 = vsub.f32 1.0, %v9871
    %v9873 = vmul.f32 %v9870, %v9872
    %v9874 = vadd.f32 %v9870, %v9873
    %vm9875 = vweird.f32 %v9868
    %vm9876 = vweird.f32 %v9870
    %vm9877 = vmor %vm9875, %vm9876
    %v9878 = vsel %vm9877, %v9870, %v9874
    %v9879 = vand.u32 2147483647, %v9868
    %vm9880 = vcmp.eq.f32.partialorder %v9879, 8.507059e+37
    %v9881 = vand.u32 %v9868, 2147483648
    %v9882 = vor.u32 1.1754944e-38, %v9881
    %v9883 = vsel %vm9880, %v9882, %v9878
    %v9884 = vmul.f32 1.0, %v9883
    %v9885 = vrcp.pop %v9869
    %v9886 = vmul.f32 %v9869, %v9885
    %v9887 = vsub.f32 1.0, %v9886
    %v9888 = vmul.f32 %v9885, %v9887
    %v9889 = vadd.f32 %v9885, %v9888
    %vm9890 = vweird.f32 %v9869
    %vm9891 = vweird.f32 %v9885
    %vm9892 = vmor %vm9890, %vm9891
    %v9893 = vsel %vm9892, %v9885, %v9889
    %v9894 = vand.u32 2147483647, %v9869
    %vm9895 = vcmp.eq.f32.partialorder %v9894, 8.507059e+37
    %v9896 = vand.u32 %v9869, 2147483648
    %v9897 = vor.u32 1.1754944e-38, %v9896
    %v9898 = vsel %vm9895, %v9897, %v9893
    %v9899 = vmul.f32 1.0, %v9898
    %v9900 = vtanh.pop %v9820
    %v9901 = vtanh.pop %v9821
    %v9902 = vxor.u32 %v9822, 2147483648
    %v9903 = vxor.u32 %v9823, 2147483648
    %v9904 = vmul.f32 %v9902, 1.442695
    %v9905 = vpow.pop %v9904
    %v9906 = vmul.f32 %v9903, 1.442695
    %v9907 = vpow.pop %v9906
    %v9908 = vadd.f32 %v9905, 1.0
    %v9909 = vadd.f32 %v9907, 1.0
    %v9910 = vrcp.pop %v9908
    %v9911 = vmul.f32 %v9908, %v9910
    %v9912 = vsub.f32 1.0, %v9911
    %v9913 = vmul.f32 %v9910, %v9912
    %v9914 = vadd.f32 %v9910, %v9913
    %vm9915 = vweird.f32 %v9908
    %vm9916 = vweird.f32 %v9910
    %vm9917 = vmor %vm9915, %vm9916
    %v9918 = vsel %vm9917, %v9910, %v9914
    %v9919 = vand.u32 2147483647, %v9908
    %vm9920 = vcmp.eq.f32.partialorder %v9919, 8.507059e+37
    %v9921 = vand.u32 %v9908, 2147483648
    %v9922 = vor.u32 1.1754944e-38, %v9921
    %v9923 = vsel %vm9920, %v9922, %v9918
    %v9924 = vmul.f32 1.0, %v9923
    %v9925 = vrcp.pop %v9909
    %v9926 = vmul.f32 %v9909, %v9925
    %v9927 = vsub.f32 1.0, %v9926
    %v9928 = vmul.f32 %v9925, %v9927
    %v9929 = vadd.f32 %v9925, %v9928
    %vm9930 = vweird.f32 %v9909
    %vm9931 = vweird.f32 %v9925
    %vm9932 = vmor %vm9930, %vm9931
    %v9933 = vsel %vm9932, %v9925, %v9929
    %v9934 = vand.u32 2147483647, %v9909
    %vm9935 = vcmp.eq.f32.partialorder %v9934, 8.507059e+37
    %v9936 = vand.u32 %v9909, 2147483648
    %v9937 = vor.u32 1.1754944e-38, %v9936
    %v9938 = vsel %vm9935, %v9937, %v9933
    %v9939 = vmul.f32 1.0, %v9938
    %v9940 = vmul.f32 %v9884, %v8830
    %v9941 = vmul.f32 %v9899, %v8831
    %v9942 = vmul.f32 %v9846, %v9900
    %v9943 = vmul.f32 %v9861, %v9901
    %v9944 = vadd.f32 %v9940, %v9942
    %v9945 = vadd.f32 %v9941, %v9943
    %v9946 = vtanh.pop %v9944
    %v9947 = vtanh.pop %v9945
    %v9948 = vmul.f32 %v9924, %v9946
    %v9949 = vmul.f32 %v9939, %v9947
    %9950 = vst [vmem:[#allocation2 + $0x70] sm:$0xff] %v9948
    %9951 = vst [vmem:[#allocation2 + $0x78] sm:$0xff] %v9949
    %9952 = vst [vmem:[%s20] sm:$0xff] %v9948
    %9953 = vst [vmem:[%s20 + $0x8] sm:$0xff] %v9949
    %9954 = vst [vmem:[%s21] sm:$0xff] %v9944
    %9955 = vst [vmem:[%s21 + $0x8] sm:$0xff] %v9945
    %s9956 = smul.u32 4, 32
    %s9957 = smul.u32 %s9956, 2
    %s9958 = sshll.u32 %s9957, 4
    %9959 = dma.done [#allocation7], %s9958
    %s9960 = sshll.u32 %s9957, 4
    %9961 = dma.done %s103, %s9960
    %s9962 = smul.u32 %s9956, 4
    %s9963 = sshll.u32 %s9962, 4
    %9964 = dma.done %s117, %s9963
    %s9965 = sshll.u32 %s9962, 4
    %9966 = dma.done %s131, %s9965
    %v9967 = vld [vmem:[#allocation2] sm:$0xff]
    %v9968 = vld [vmem:[#allocation2 + $0x8] sm:$0xff]
    %v9969 = vld [vmem:[#allocation2 + $0x10] sm:$0xff]
    %v9970 = vld [vmem:[#allocation2 + $0x18] sm:$0xff]
    %v9971 = vld [vmem:[#allocation2 + $0x20] sm:$0xff]
    %v9972 = vld [vmem:[#allocation2 + $0x28] sm:$0xff]
    %v9973 = vld [vmem:[#allocation2 + $0x30] sm:$0xff]
    %v9974 = vld [vmem:[#allocation2 + $0x38] sm:$0xff]
    %v9975 = vld [vmem:[#allocation2 + $0x40] sm:$0xff]
    %v9976 = vld [vmem:[#allocation2 + $0x48] sm:$0xff]
    %v9977 = vld [vmem:[#allocation2 + $0x50] sm:$0xff]
    %v9978 = vld [vmem:[#allocation2 + $0x58] sm:$0xff]
    %v9979 = vld [vmem:[#allocation2 + $0x60] sm:$0xff]
    %v9980 = vld [vmem:[#allocation2 + $0x68] sm:$0xff]
    %v9981 = vld [vmem:[#allocation2 + $0x70] sm:$0xff]
    %v9982 = vld [vmem:[#allocation2 + $0x78] sm:$0xff]
    %v9983 = vpack.c.bf16 %v9969, %v9967
    %v9984 = vpack.c.bf16 %v9970, %v9968
    %v9985 = vpack.c.bf16 %v9973, %v9971
    %v9986 = vpack.c.bf16 %v9974, %v9972
    %v9987 = vpack.c.bf16 %v9977, %v9975
    %v9988 = vpack.c.bf16 %v9978, %v9976
    %v9989 = vpack.c.bf16 %v9981, %v9979
    %v9990 = vpack.c.bf16 %v9982, %v9980
    %v9991 = vld [vmem:[#allocation3] sm:$0xff]
    %v9992 = vld [vmem:[#allocation3 + $0x8] sm:$0xff]
    %v9993 = vld [vmem:[#allocation3 + $0x10] sm:$0xff]
    %v9994 = vld [vmem:[#allocation3 + $0x18] sm:$0xff]
    %v9995 = vld [vmem:[#allocation3 + $0x20] sm:$0xff]
    %v9996 = vld [vmem:[#allocation3 + $0x28] sm:$0xff]
    %v9997 = vld [vmem:[#allocation3 + $0x30] sm:$0xff]
    %v9998 = vld [vmem:[#allocation3 + $0x38] sm:$0xff]
    %v9999 = vld [vmem:[#allocation3 + $0x40] sm:$0xff]
    %v10000 = vld [vmem:[#allocation3 + $0x48] sm:$0xff]
    %v10001 = vld [vmem:[#allocation3 + $0x50] sm:$0xff]
    %v10002 = vld [vmem:[#allocation3 + $0x58] sm:$0xff]
    %v10003 = vld [vmem:[#allocation3 + $0x60] sm:$0xff]
    %v10004 = vld [vmem:[#allocation3 + $0x68] sm:$0xff]
    %v10005 = vld [vmem:[#allocation3 + $0x70] sm:$0xff]
    %v10006 = vld [vmem:[#allocation3 + $0x78] sm:$0xff]
    %v10007 = vld [vmem:[#allocation3 + $0x80] sm:$0xff]
    %v10008 = vld [vmem:[#allocation3 + $0x88] sm:$0xff]
    %v10009 = vld [vmem:[#allocation3 + $0x90] sm:$0xff]
    %v10010 = vld [vmem:[#allocation3 + $0x98] sm:$0xff]
    %v10011 = vld [vmem:[#allocation3 + $0xa0] sm:$0xff]
    %v10012 = vld [vmem:[#allocation3 + $0xa8] sm:$0xff]
    %v10013 = vld [vmem:[#allocation3 + $0xb0] sm:$0xff]
    %v10014 = vld [vmem:[#allocation3 + $0xb8] sm:$0xff]
    %v10015 = vld [vmem:[#allocation3 + $0xc0] sm:$0xff]
    %v10016 = vld [vmem:[#allocation3 + $0xc8] sm:$0xff]
    %v10017 = vld [vmem:[#allocation3 + $0xd0] sm:$0xff]
    %v10018 = vld [vmem:[#allocation3 + $0xd8] sm:$0xff]
    %v10019 = vld [vmem:[#allocation3 + $0xe0] sm:$0xff]
    %v10020 = vld [vmem:[#allocation3 + $0xe8] sm:$0xff]
    %v10021 = vld [vmem:[#allocation3 + $0xf0] sm:$0xff]
    %v10022 = vld [vmem:[#allocation3 + $0xf8] sm:$0xff]
    %v10023 = vld [vmem:[%s12] sm:$0x3]
    %v10025 = vperm.slane %v10023, 0
    %v10026 = vperm.slane %v10023, 1
    %v10061 = vunpack.c.l.b16 %v9991
    %v10062 = vunpack.c.h.b16 %v9991
    %v10063 = vunpack.c.l.b16 %v9992
    %v10064 = vunpack.c.h.b16 %v9992
    %v10065 = vunpack.c.l.b16 %v9993
    %v10066 = vunpack.c.h.b16 %v9993
    %v10067 = vunpack.c.l.b16 %v9994
    %v10068 = vunpack.c.h.b16 %v9994
    %v10069 = vunpack.c.l.b16 %v9995
    %v10070 = vunpack.c.h.b16 %v9995
    %v10071 = vunpack.c.l.b16 %v9996
    %v10072 = vunpack.c.h.b16 %v9996
    %v10073 = vunpack.c.l.b16 %v9997
    %v10074 = vunpack.c.h.b16 %v9997
    %v10075 = vunpack.c.l.b16 %v9998
    %v10076 = vunpack.c.h.b16 %v9998
    %v10077 = vunpack.c.l.b16 %v9999
    %v10078 = vunpack.c.h.b16 %v9999
    %v10079 = vunpack.c.l.b16 %v10000
    %v10080 = vunpack.c.h.b16 %v10000
    %v10081 = vunpack.c.l.b16 %v10001
    %v10082 = vunpack.c.h.b16 %v10001
    %v10083 = vunpack.c.l.b16 %v10002
    %v10084 = vunpack.c.h.b16 %v10002
    %v10085 = vunpack.c.l.b16 %v10003
    %v10086 = vunpack.c.h.b16 %v10003
    %v10087 = vunpack.c.l.b16 %v10004
    %v10088 = vunpack.c.h.b16 %v10004
    %v10089 = vunpack.c.l.b16 %v10005
    %v10090 = vunpack.c.h.b16 %v10005
    %v10091 = vunpack.c.l.b16 %v10006
    %v10092 = vunpack.c.h.b16 %v10006
    %v10093 = vunpack.c.l.b16 %v10007
    %v10094 = vunpack.c.h.b16 %v10007
    %v10095 = vunpack.c.l.b16 %v10008
    %v10096 = vunpack.c.h.b16 %v10008
    %v10097 = vunpack.c.l.b16 %v10009
    %v10098 = vunpack.c.h.b16 %v10009
    %v10099 = vunpack.c.l.b16 %v10010
    %v10100 = vunpack.c.h.b16 %v10010
    %v10101 = vunpack.c.l.b16 %v10011
    %v10102 = vunpack.c.h.b16 %v10011
    %v10103 = vunpack.c.l.b16 %v10012
    %v10104 = vunpack.c.h.b16 %v10012
    %v10105 = vunpack.c.l.b16 %v10013
    %v10106 = vunpack.c.h.b16 %v10013
    %v10107 = vunpack.c.l.b16 %v10014
    %v10108 = vunpack.c.h.b16 %v10014
    %v10109 = vunpack.c.l.b16 %v10015
    %v10110 = vunpack.c.h.b16 %v10015
    %v10111 = vunpack.c.l.b16 %v10016
    %v10112 = vunpack.c.h.b16 %v10016
    %v10113 = vunpack.c.l.b16 %v10017
    %v10114 = vunpack.c.h.b16 %v10017
    %v10115 = vunpack.c.l.b16 %v10018
    %v10116 = vunpack.c.h.b16 %v10018
    %v10117 = vunpack.c.l.b16 %v10019
    %v10118 = vunpack.c.h.b16 %v10019
    %v10119 = vunpack.c.l.b16 %v10020
    %v10120 = vunpack.c.h.b16 %v10020
    %v10121 = vunpack.c.l.b16 %v10021
    %v10122 = vunpack.c.h.b16 %v10021
    %v10123 = vunpack.c.l.b16 %v10022
    %v10124 = vunpack.c.h.b16 %v10022
    %v10125 = vpack.c.b16 %v10063, %v10061
    %v10126 = vpack.c.b16 %v10064, %v10062
    %v10127 = vpack.c.b16 %v10067, %v10065
    %v10128 = vpack.c.b16 %v10068, %v10066
    %v10129 = vpack.c.b16 %v10071, %v10069
    %v10130 = vpack.c.b16 %v10072, %v10070
    %v10131 = vpack.c.b16 %v10075, %v10073
    %v10132 = vpack.c.b16 %v10076, %v10074
    %v10133 = vpack.c.b16 %v10079, %v10077
    %v10134 = vpack.c.b16 %v10080, %v10078
    %v10135 = vpack.c.b16 %v10083, %v10081
    %v10136 = vpack.c.b16 %v10084, %v10082
    %v10137 = vpack.c.b16 %v10087, %v10085
    %v10138 = vpack.c.b16 %v10088, %v10086
    %v10139 = vpack.c.b16 %v10091, %v10089
    %v10140 = vpack.c.b16 %v10092, %v10090
    %v10141 = vpack.c.b16 %v10095, %v10093
    %v10142 = vpack.c.b16 %v10096, %v10094
    %v10143 = vpack.c.b16 %v10099, %v10097
    %v10144 = vpack.c.b16 %v10100, %v10098
    %v10145 = vpack.c.b16 %v10103, %v10101
    %v10146 = vpack.c.b16 %v10104, %v10102
    %v10147 = vpack.c.b16 %v10107, %v10105
    %v10148 = vpack.c.b16 %v10108, %v10106
    %v10149 = vpack.c.b16 %v10111, %v10109
    %v10150 = vpack.c.b16 %v10112, %v10110
    %v10151 = vpack.c.b16 %v10115, %v10113
    %v10152 = vpack.c.b16 %v10116, %v10114
    %v10153 = vpack.c.b16 %v10119, %v10117
    %v10154 = vpack.c.b16 %v10120, %v10118
    %v10155 = vpack.c.b16 %v10123, %v10121
    %v10156 = vpack.c.b16 %v10124, %v10122
    %10189 = vmatpush.bf16.msra.mxu0 %v10139
    %10190 = vmatpush.bf16.msra.mxu0 %v10137
    %10191 = vmatpush.bf16.msra.mxu0 %v10135
    %10192 = vmatpush.bf16.msra.mxu0 %v10133
    %10193 = vmatpush.bf16.msra.mxu0 %v10131
    %10194 = vmatpush.bf16.msra.mxu0 %v10129
    %10195 = vmatpush.bf16.msra.mxu0 %v10127
    %10196 = vmatpush.bf16.msra.mxu0 %v10125
    %10197 = vmatmul.bf16.gmra.mxu0 %v9983
    %v10198 = vpop.f32.mrf.mxu0
    %v10199 = vadd.f32 %v10025, %v10198
    %v10200 = vpop.f32.mrf.mxu0
    %v10201 = vadd.f32 %v10025, %v10200
    %10202 = vmatmul.bf16.gmra.mxu0 %v9985
    %v10203 = vpop.f32.mrf.mxu0
    %v10204 = vadd.f32 %v10025, %v10203
    %v10205 = vpop.f32.mrf.mxu0
    %v10206 = vadd.f32 %v10025, %v10205
    %10207 = vmatmul.bf16.gmra.mxu0 %v9987
    %v10208 = vpop.f32.mrf.mxu0
    %v10209 = vadd.f32 %v10025, %v10208
    %v10210 = vpop.f32.mrf.mxu0
    %v10211 = vadd.f32 %v10025, %v10210
    %10212 = vmatmul.bf16.gmra.mxu0 %v9989
    %v10213 = vpop.f32.mrf.mxu0
    %v10214 = vadd.f32 %v10025, %v10213
    %v10215 = vpop.f32.mrf.mxu0
    %v10216 = vadd.f32 %v10025, %v10215
    %10217 = vdwg.mxu0
    %10218 = vmatpush.bf16.msra.mxu0 %v10155
    %10219 = vmatpush.bf16.msra.mxu0 %v10153
    %10220 = vmatpush.bf16.msra.mxu0 %v10151
    %10221 = vmatpush.bf16.msra.mxu0 %v10149
    %10222 = vmatpush.bf16.msra.mxu0 %v10147
    %10223 = vmatpush.bf16.msra.mxu0 %v10145
    %10224 = vmatpush.bf16.msra.mxu0 %v10143
    %10225 = vmatpush.bf16.msra.mxu0 %v10141
    %10226 = vmatmul.bf16.gmra.mxu0 %v9984
    %v10227 = vpop.f32.mrf.mxu0
    %v10228 = vadd.f32 %v10199, %v10227
    %v10229 = vpop.f32.mrf.mxu0
    %v10230 = vadd.f32 %v10201, %v10229
    %10231 = vmatmul.bf16.gmra.mxu0 %v9986
    %v10232 = vpop.f32.mrf.mxu0
    %v10233 = vadd.f32 %v10204, %v10232
    %v10234 = vpop.f32.mrf.mxu0
    %v10235 = vadd.f32 %v10206, %v10234
    %10236 = vmatmul.bf16.gmra.mxu0 %v9988
    %v10237 = vpop.f32.mrf.mxu0
    %v10238 = vadd.f32 %v10209, %v10237
    %v10239 = vpop.f32.mrf.mxu0
    %v10240 = vadd.f32 %v10211, %v10239
    %10241 = vmatmul.bf16.gmra.mxu0 %v9990
    %v10242 = vpop.f32.mrf.mxu0
    %v10243 = vadd.f32 %v10214, %v10242
    %v10244 = vpop.f32.mrf.mxu0
    %v10245 = vadd.f32 %v10216, %v10244
    %10246 = vdwg.mxu0
    %10247 = vmatpush.bf16.msra.mxu0 %v10140
    %10248 = vmatpush.bf16.msra.mxu0 %v10138
    %10249 = vmatpush.bf16.msra.mxu0 %v10136
    %10250 = vmatpush.bf16.msra.mxu0 %v10134
    %10251 = vmatpush.bf16.msra.mxu0 %v10132
    %10252 = vmatpush.bf16.msra.mxu0 %v10130
    %10253 = vmatpush.bf16.msra.mxu0 %v10128
    %10254 = vmatpush.bf16.msra.mxu0 %v10126
    %10255 = vmatmul.bf16.gmra.mxu0 %v9983
    %v10256 = vpop.f32.mrf.mxu0
    %v10257 = vadd.f32 %v10026, %v10256
    %v10258 = vpop.f32.mrf.mxu0
    %v10259 = vadd.f32 %v10026, %v10258
    %10260 = vmatmul.bf16.gmra.mxu0 %v9985
    %v10261 = vpop.f32.mrf.mxu0
    %v10262 = vadd.f32 %v10026, %v10261
    %v10263 = vpop.f32.mrf.mxu0
    %v10264 = vadd.f32 %v10026, %v10263
    %10265 = vmatmul.bf16.gmra.mxu0 %v9987
    %v10266 = vpop.f32.mrf.mxu0
    %v10267 = vadd.f32 %v10026, %v10266
    %v10268 = vpop.f32.mrf.mxu0
    %v10269 = vadd.f32 %v10026, %v10268
    %10270 = vmatmul.bf16.gmra.mxu0 %v9989
    %v10271 = vpop.f32.mrf.mxu0
    %v10272 = vadd.f32 %v10026, %v10271
    %v10273 = vpop.f32.mrf.mxu0
    %v10274 = vadd.f32 %v10026, %v10273
    %10275 = vdwg.mxu0
    %10276 = vmatpush.bf16.msra.mxu0 %v10156
    %10277 = vmatpush.bf16.msra.mxu0 %v10154
    %10278 = vmatpush.bf16.msra.mxu0 %v10152
    %10279 = vmatpush.bf16.msra.mxu0 %v10150
    %10280 = vmatpush.bf16.msra.mxu0 %v10148
    %10281 = vmatpush.bf16.msra.mxu0 %v10146
    %10282 = vmatpush.bf16.msra.mxu0 %v10144
    %10283 = vmatpush.bf16.msra.mxu0 %v10142
    %10284 = vmatmul.bf16.gmra.mxu0 %v9984
    %v10285 = vpop.f32.mrf.mxu0
    %v10286 = vadd.f32 %v10257, %v10285
    %v10287 = vpop.f32.mrf.mxu0
    %v10288 = vadd.f32 %v10259, %v10287
    %10289 = vmatmul.bf16.gmra.mxu0 %v9986
    %v10290 = vpop.f32.mrf.mxu0
    %v10291 = vadd.f32 %v10262, %v10290
    %v10292 = vpop.f32.mrf.mxu0
    %v10293 = vadd.f32 %v10264, %v10292
    %10294 = vmatmul.bf16.gmra.mxu0 %v9988
    %v10295 = vpop.f32.mrf.mxu0
    %v10296 = vadd.f32 %v10267, %v10295
    %v10297 = vpop.f32.mrf.mxu0
    %v10298 = vadd.f32 %v10269, %v10297
    %10299 = vmatmul.bf16.gmra.mxu0 %v9990
    %v10300 = vpop.f32.mrf.mxu0
    %v10301 = vadd.f32 %v10272, %v10300
    %v10302 = vpop.f32.mrf.mxu0
    %v10303 = vadd.f32 %v10274, %v10302
    %10304 = vdwg.mxu0
    %v10305 = vmax.f32 %v10228, 0.0
    %v10306 = vmax.f32 %v10286, 0.0
    %v10307 = vmax.f32 %v10230, 0.0
    %v10308 = vmax.f32 %v10288, 0.0
    %v10309 = vmax.f32 %v10233, 0.0
    %v10310 = vmax.f32 %v10291, 0.0
    %v10311 = vmax.f32 %v10235, 0.0
    %v10312 = vmax.f32 %v10293, 0.0
    %v10313 = vmax.f32 %v10238, 0.0
    %v10314 = vmax.f32 %v10296, 0.0
    %v10315 = vmax.f32 %v10240, 0.0
    %v10316 = vmax.f32 %v10298, 0.0
    %v10317 = vmax.f32 %v10243, 0.0
    %v10318 = vmax.f32 %v10301, 0.0
    %v10319 = vmax.f32 %v10245, 0.0
    %v10320 = vmax.f32 %v10303, 0.0
    %v10321 = vld [vmem:[#allocation4] sm:$0xff]
    %v10322 = vld [vmem:[#allocation4 + $0x8] sm:$0xff]
    %v10323 = vld [vmem:[#allocation4 + $0x10] sm:$0xff]
    %v10324 = vld [vmem:[#allocation4 + $0x18] sm:$0xff]
    %v10325 = vld [vmem:[#allocation4 + $0x20] sm:$0xff]
    %v10326 = vld [vmem:[#allocation4 + $0x28] sm:$0xff]
    %v10327 = vld [vmem:[#allocation4 + $0x30] sm:$0xff]
    %v10328 = vld [vmem:[#allocation4 + $0x38] sm:$0xff]
    %v10329 = vld [vmem:[#allocation4 + $0x40] sm:$0xff]
    %v10330 = vld [vmem:[#allocation4 + $0x48] sm:$0xff]
    %v10331 = vld [vmem:[#allocation4 + $0x50] sm:$0xff]
    %v10332 = vld [vmem:[#allocation4 + $0x58] sm:$0xff]
    %v10333 = vld [vmem:[#allocation4 + $0x60] sm:$0xff]
    %v10334 = vld [vmem:[#allocation4 + $0x68] sm:$0xff]
    %v10335 = vld [vmem:[#allocation4 + $0x70] sm:$0xff]
    %v10336 = vld [vmem:[#allocation4 + $0x78] sm:$0xff]
    %v10337 = vld [vmem:[#allocation4 + $0x80] sm:$0xff]
    %v10338 = vld [vmem:[#allocation4 + $0x88] sm:$0xff]
    %v10339 = vld [vmem:[#allocation4 + $0x90] sm:$0xff]
    %v10340 = vld [vmem:[#allocation4 + $0x98] sm:$0xff]
    %v10341 = vld [vmem:[#allocation4 + $0xa0] sm:$0xff]
    %v10342 = vld [vmem:[#allocation4 + $0xa8] sm:$0xff]
    %v10343 = vld [vmem:[#allocation4 + $0xb0] sm:$0xff]
    %v10344 = vld [vmem:[#allocation4 + $0xb8] sm:$0xff]
    %v10345 = vld [vmem:[#allocation4 + $0xc0] sm:$0xff]
    %v10346 = vld [vmem:[#allocation4 + $0xc8] sm:$0xff]
    %v10347 = vld [vmem:[#allocation4 + $0xd0] sm:$0xff]
    %v10348 = vld [vmem:[#allocation4 + $0xd8] sm:$0xff]
    %v10349 = vld [vmem:[#allocation4 + $0xe0] sm:$0xff]
    %v10350 = vld [vmem:[#allocation4 + $0xe8] sm:$0xff]
    %v10351 = vld [vmem:[#allocation4 + $0xf0] sm:$0xff]
    %v10352 = vld [vmem:[#allocation4 + $0xf8] sm:$0xff]
    %v10353 = vld [vmem:[%s13] sm:$0x3]
    %v10355 = vperm.slane %v10353, 0
    %v10356 = vperm.slane %v10353, 1
    %v10391 = vunpack.c.l.b16 %v10321
    %v10392 = vunpack.c.h.b16 %v10321
    %v10393 = vunpack.c.l.b16 %v10322
    %v10394 = vunpack.c.h.b16 %v10322
    %v10395 = vunpack.c.l.b16 %v10323
    %v10396 = vunpack.c.h.b16 %v10323
    %v10397 = vunpack.c.l.b16 %v10324
    %v10398 = vunpack.c.h.b16 %v10324
    %v10399 = vunpack.c.l.b16 %v10325
    %v10400 = vunpack.c.h.b16 %v10325
    %v10401 = vunpack.c.l.b16 %v10326
    %v10402 = vunpack.c.h.b16 %v10326
    %v10403 = vunpack.c.l.b16 %v10327
    %v10404 = vunpack.c.h.b16 %v10327
    %v10405 = vunpack.c.l.b16 %v10328
    %v10406 = vunpack.c.h.b16 %v10328
    %v10407 = vunpack.c.l.b16 %v10329
    %v10408 = vunpack.c.h.b16 %v10329
    %v10409 = vunpack.c.l.b16 %v10330
    %v10410 = vunpack.c.h.b16 %v10330
    %v10411 = vunpack.c.l.b16 %v10331
    %v10412 = vunpack.c.h.b16 %v10331
    %v10413 = vunpack.c.l.b16 %v10332
    %v10414 = vunpack.c.h.b16 %v10332
    %v10415 = vunpack.c.l.b16 %v10333
    %v10416 = vunpack.c.h.b16 %v10333
    %v10417 = vunpack.c.l.b16 %v10334
    %v10418 = vunpack.c.h.b16 %v10334
    %v10419 = vunpack.c.l.b16 %v10335
    %v10420 = vunpack.c.h.b16 %v10335
    %v10421 = vunpack.c.l.b16 %v10336
    %v10422 = vunpack.c.h.b16 %v10336
    %v10423 = vunpack.c.l.b16 %v10337
    %v10424 = vunpack.c.h.b16 %v10337
    %v10425 = vunpack.c.l.b16 %v10338
    %v10426 = vunpack.c.h.b16 %v10338
    %v10427 = vunpack.c.l.b16 %v10339
    %v10428 = vunpack.c.h.b16 %v10339
    %v10429 = vunpack.c.l.b16 %v10340
    %v10430 = vunpack.c.h.b16 %v10340
    %v10431 = vunpack.c.l.b16 %v10341
    %v10432 = vunpack.c.h.b16 %v10341
    %v10433 = vunpack.c.l.b16 %v10342
    %v10434 = vunpack.c.h.b16 %v10342
    %v10435 = vunpack.c.l.b16 %v10343
    %v10436 = vunpack.c.h.b16 %v10343
    %v10437 = vunpack.c.l.b16 %v10344
    %v10438 = vunpack.c.h.b16 %v10344
    %v10439 = vunpack.c.l.b16 %v10345
    %v10440 = vunpack.c.h.b16 %v10345
    %v10441 = vunpack.c.l.b16 %v10346
    %v10442 = vunpack.c.h.b16 %v10346
    %v10443 = vunpack.c.l.b16 %v10347
    %v10444 = vunpack.c.h.b16 %v10347
    %v10445 = vunpack.c.l.b16 %v10348
    %v10446 = vunpack.c.h.b16 %v10348
    %v10447 = vunpack.c.l.b16 %v10349
    %v10448 = vunpack.c.h.b16 %v10349
    %v10449 = vunpack.c.l.b16 %v10350
    %v10450 = vunpack.c.h.b16 %v10350
    %v10451 = vunpack.c.l.b16 %v10351
    %v10452 = vunpack.c.h.b16 %v10351
    %v10453 = vunpack.c.l.b16 %v10352
    %v10454 = vunpack.c.h.b16 %v10352
    %v10455 = vpack.c.b16 %v10393, %v10391
    %v10456 = vpack.c.b16 %v10394, %v10392
    %v10457 = vpack.c.b16 %v10397, %v10395
    %v10458 = vpack.c.b16 %v10398, %v10396
    %v10459 = vpack.c.b16 %v10401, %v10399
    %v10460 = vpack.c.b16 %v10402, %v10400
    %v10461 = vpack.c.b16 %v10405, %v10403
    %v10462 = vpack.c.b16 %v10406, %v10404
    %v10463 = vpack.c.b16 %v10409, %v10407
    %v10464 = vpack.c.b16 %v10410, %v10408
    %v10465 = vpack.c.b16 %v10413, %v10411
    %v10466 = vpack.c.b16 %v10414, %v10412
    %v10467 = vpack.c.b16 %v10417, %v10415
    %v10468 = vpack.c.b16 %v10418, %v10416
    %v10469 = vpack.c.b16 %v10421, %v10419
    %v10470 = vpack.c.b16 %v10422, %v10420
    %v10471 = vpack.c.b16 %v10425, %v10423
    %v10472 = vpack.c.b16 %v10426, %v10424
    %v10473 = vpack.c.b16 %v10429, %v10427
    %v10474 = vpack.c.b16 %v10430, %v10428
    %v10475 = vpack.c.b16 %v10433, %v10431
    %v10476 = vpack.c.b16 %v10434, %v10432
    %v10477 = vpack.c.b16 %v10437, %v10435
    %v10478 = vpack.c.b16 %v10438, %v10436
    %v10479 = vpack.c.b16 %v10441, %v10439
    %v10480 = vpack.c.b16 %v10442, %v10440
    %v10481 = vpack.c.b16 %v10445, %v10443
    %v10482 = vpack.c.b16 %v10446, %v10444
    %v10483 = vpack.c.b16 %v10449, %v10447
    %v10484 = vpack.c.b16 %v10450, %v10448
    %v10485 = vpack.c.b16 %v10453, %v10451
    %v10486 = vpack.c.b16 %v10454, %v10452
    %10519 = vmatpush.bf16.msra.mxu0 %v10469
    %10520 = vmatpush.bf16.msra.mxu0 %v10467
    %10521 = vmatpush.bf16.msra.mxu0 %v10465
    %10522 = vmatpush.bf16.msra.mxu0 %v10463
    %10523 = vmatpush.bf16.msra.mxu0 %v10461
    %10524 = vmatpush.bf16.msra.mxu0 %v10459
    %10525 = vmatpush.bf16.msra.mxu0 %v10457
    %10526 = vmatpush.bf16.msra.mxu0 %v10455
    %10527 = vmatmul.bf16.gmra.mxu0 %v9983
    %v10528 = vpop.f32.mrf.mxu0
    %v10529 = vadd.f32 %v10355, %v10528
    %v10530 = vpop.f32.mrf.mxu0
    %v10531 = vadd.f32 %v10355, %v10530
    %10532 = vmatmul.bf16.gmra.mxu0 %v9985
    %v10533 = vpop.f32.mrf.mxu0
    %v10534 = vadd.f32 %v10355, %v10533
    %v10535 = vpop.f32.mrf.mxu0
    %v10536 = vadd.f32 %v10355, %v10535
    %10537 = vmatmul.bf16.gmra.mxu0 %v9987
    %v10538 = vpop.f32.mrf.mxu0
    %v10539 = vadd.f32 %v10355, %v10538
    %v10540 = vpop.f32.mrf.mxu0
    %v10541 = vadd.f32 %v10355, %v10540
    %10542 = vmatmul.bf16.gmra.mxu0 %v9989
    %v10543 = vpop.f32.mrf.mxu0
    %v10544 = vadd.f32 %v10355, %v10543
    %v10545 = vpop.f32.mrf.mxu0
    %v10546 = vadd.f32 %v10355, %v10545
    %10547 = vdwg.mxu0
    %10548 = vmatpush.bf16.msra.mxu0 %v10485
    %10549 = vmatpush.bf16.msra.mxu0 %v10483
    %10550 = vmatpush.bf16.msra.mxu0 %v10481
    %10551 = vmatpush.bf16.msra.mxu0 %v10479
    %10552 = vmatpush.bf16.msra.mxu0 %v10477
    %10553 = vmatpush.bf16.msra.mxu0 %v10475
    %10554 = vmatpush.bf16.msra.mxu0 %v10473
    %10555 = vmatpush.bf16.msra.mxu0 %v10471
    %10556 = vmatmul.bf16.gmra.mxu0 %v9984
    %v10557 = vpop.f32.mrf.mxu0
    %v10558 = vadd.f32 %v10529, %v10557
    %v10559 = vpop.f32.mrf.mxu0
    %v10560 = vadd.f32 %v10531, %v10559
    %10561 = vmatmul.bf16.gmra.mxu0 %v9986
    %v10562 = vpop.f32.mrf.mxu0
    %v10563 = vadd.f32 %v10534, %v10562
    %v10564 = vpop.f32.mrf.mxu0
    %v10565 = vadd.f32 %v10536, %v10564
    %10566 = vmatmul.bf16.gmra.mxu0 %v9988
    %v10567 = vpop.f32.mrf.mxu0
    %v10568 = vadd.f32 %v10539, %v10567
    %v10569 = vpop.f32.mrf.mxu0
    %v10570 = vadd.f32 %v10541, %v10569
    %10571 = vmatmul.bf16.gmra.mxu0 %v9990
    %v10572 = vpop.f32.mrf.mxu0
    %v10573 = vadd.f32 %v10544, %v10572
    %v10574 = vpop.f32.mrf.mxu0
    %v10575 = vadd.f32 %v10546, %v10574
    %10576 = vdwg.mxu0
    %10577 = vmatpush.bf16.msra.mxu0 %v10470
    %10578 = vmatpush.bf16.msra.mxu0 %v10468
    %10579 = vmatpush.bf16.msra.mxu0 %v10466
    %10580 = vmatpush.bf16.msra.mxu0 %v10464
    %10581 = vmatpush.bf16.msra.mxu0 %v10462
    %10582 = vmatpush.bf16.msra.mxu0 %v10460
    %10583 = vmatpush.bf16.msra.mxu0 %v10458
    %10584 = vmatpush.bf16.msra.mxu0 %v10456
    %10585 = vmatmul.bf16.gmra.mxu0 %v9983
    %v10586 = vpop.f32.mrf.mxu0
    %v10587 = vadd.f32 %v10356, %v10586
    %v10588 = vpop.f32.mrf.mxu0
    %v10589 = vadd.f32 %v10356, %v10588
    %10590 = vmatmul.bf16.gmra.mxu0 %v9985
    %v10591 = vpop.f32.mrf.mxu0
    %v10592 = vadd.f32 %v10356, %v10591
    %v10593 = vpop.f32.mrf.mxu0
    %v10594 = vadd.f32 %v10356, %v10593
    %10595 = vmatmul.bf16.gmra.mxu0 %v9987
    %v10596 = vpop.f32.mrf.mxu0
    %v10597 = vadd.f32 %v10356, %v10596
    %v10598 = vpop.f32.mrf.mxu0
    %v10599 = vadd.f32 %v10356, %v10598
    %10600 = vmatmul.bf16.gmra.mxu0 %v9989
    %v10601 = vpop.f32.mrf.mxu0
    %v10602 = vadd.f32 %v10356, %v10601
    %v10603 = vpop.f32.mrf.mxu0
    %v10604 = vadd.f32 %v10356, %v10603
    %10605 = vdwg.mxu0
    %10606 = vmatpush.bf16.msra.mxu0 %v10486
    %10607 = vmatpush.bf16.msra.mxu0 %v10484
    %10608 = vmatpush.bf16.msra.mxu0 %v10482
    %10609 = vmatpush.bf16.msra.mxu0 %v10480
    %10610 = vmatpush.bf16.msra.mxu0 %v10478
    %10611 = vmatpush.bf16.msra.mxu0 %v10476
    %10612 = vmatpush.bf16.msra.mxu0 %v10474
    %10613 = vmatpush.bf16.msra.mxu0 %v10472
    %10614 = vmatmul.bf16.gmra.mxu0 %v9984
    %v10615 = vpop.f32.mrf.mxu0
    %v10616 = vadd.f32 %v10587, %v10615
    %v10617 = vpop.f32.mrf.mxu0
    %v10618 = vadd.f32 %v10589, %v10617
    %10619 = vmatmul.bf16.gmra.mxu0 %v9986
    %v10620 = vpop.f32.mrf.mxu0
    %v10621 = vadd.f32 %v10592, %v10620
    %v10622 = vpop.f32.mrf.mxu0
    %v10623 = vadd.f32 %v10594, %v10622
    %10624 = vmatmul.bf16.gmra.mxu0 %v9988
    %v10625 = vpop.f32.mrf.mxu0
    %v10626 = vadd.f32 %v10597, %v10625
    %v10627 = vpop.f32.mrf.mxu0
    %v10628 = vadd.f32 %v10599, %v10627
    %10629 = vmatmul.bf16.gmra.mxu0 %v9990
    %v10630 = vpop.f32.mrf.mxu0
    %v10631 = vadd.f32 %v10602, %v10630
    %v10632 = vpop.f32.mrf.mxu0
    %v10633 = vadd.f32 %v10604, %v10632
    %10634 = vdwg.mxu0
    %v10635 = vmax.f32 %v10558, 0.0
    %v10636 = vmax.f32 %v10616, 0.0
    %v10637 = vmax.f32 %v10560, 0.0
    %v10638 = vmax.f32 %v10618, 0.0
    %v10639 = vmax.f32 %v10563, 0.0
    %v10640 = vmax.f32 %v10621, 0.0
    %v10641 = vmax.f32 %v10565, 0.0
    %v10642 = vmax.f32 %v10623, 0.0
    %v10643 = vmax.f32 %v10568, 0.0
    %v10644 = vmax.f32 %v10626, 0.0
    %v10645 = vmax.f32 %v10570, 0.0
    %v10646 = vmax.f32 %v10628, 0.0
    %v10647 = vmax.f32 %v10573, 0.0
    %v10648 = vmax.f32 %v10631, 0.0
    %v10649 = vmax.f32 %v10575, 0.0
    %v10650 = vmax.f32 %v10633, 0.0
    %v10651 = vpack.c.bf16 %v10307, %v10305
    %v10652 = vpack.c.bf16 %v10308, %v10306
    %v10653 = vpack.c.bf16 %v10311, %v10309
    %v10654 = vpack.c.bf16 %v10312, %v10310
    %v10655 = vpack.c.bf16 %v10315, %v10313
    %v10656 = vpack.c.bf16 %v10316, %v10314
    %v10657 = vpack.c.bf16 %v10319, %v10317
    %v10658 = vpack.c.bf16 %v10320, %v10318
    %v10659 = vld [vmem:[#allocation5] sm:$0xff]
    %v10660 = vld [vmem:[#allocation5 + $0x8] sm:$0xff]
    %v10661 = vld [vmem:[#allocation5 + $0x10] sm:$0xff]
    %v10662 = vld [vmem:[#allocation5 + $0x18] sm:$0xff]
    %v10663 = vld [vmem:[#allocation5 + $0x20] sm:$0xff]
    %v10664 = vld [vmem:[#allocation5 + $0x28] sm:$0xff]
    %v10665 = vld [vmem:[#allocation5 + $0x30] sm:$0xff]
    %v10666 = vld [vmem:[#allocation5 + $0x38] sm:$0xff]
    %v10667 = vld [vmem:[#allocation5 + $0x40] sm:$0xff]
    %v10668 = vld [vmem:[#allocation5 + $0x48] sm:$0xff]
    %v10669 = vld [vmem:[#allocation5 + $0x50] sm:$0xff]
    %v10670 = vld [vmem:[#allocation5 + $0x58] sm:$0xff]
    %v10671 = vld [vmem:[#allocation5 + $0x60] sm:$0xff]
    %v10672 = vld [vmem:[#allocation5 + $0x68] sm:$0xff]
    %v10673 = vld [vmem:[#allocation5 + $0x70] sm:$0xff]
    %v10674 = vld [vmem:[#allocation5 + $0x78] sm:$0xff]
    %v10675 = vld [vmem:[#allocation5 + $0x80] sm:$0xff]
    %v10676 = vld [vmem:[#allocation5 + $0x88] sm:$0xff]
    %v10677 = vld [vmem:[#allocation5 + $0x90] sm:$0xff]
    %v10678 = vld [vmem:[#allocation5 + $0x98] sm:$0xff]
    %v10679 = vld [vmem:[#allocation5 + $0xa0] sm:$0xff]
    %v10680 = vld [vmem:[#allocation5 + $0xa8] sm:$0xff]
    %v10681 = vld [vmem:[#allocation5 + $0xb0] sm:$0xff]
    %v10682 = vld [vmem:[#allocation5 + $0xb8] sm:$0xff]
    %v10683 = vld [vmem:[#allocation5 + $0xc0] sm:$0xff]
    %v10684 = vld [vmem:[#allocation5 + $0xc8] sm:$0xff]
    %v10685 = vld [vmem:[#allocation5 + $0xd0] sm:$0xff]
    %v10686 = vld [vmem:[#allocation5 + $0xd8] sm:$0xff]
    %v10687 = vld [vmem:[#allocation5 + $0xe0] sm:$0xff]
    %v10688 = vld [vmem:[#allocation5 + $0xe8] sm:$0xff]
    %v10689 = vld [vmem:[#allocation5 + $0xf0] sm:$0xff]
    %v10690 = vld [vmem:[#allocation5 + $0xf8] sm:$0xff]
    %v10691 = vld [vmem:[#allocation5 + $0x100] sm:$0xff]
    %v10692 = vld [vmem:[#allocation5 + $0x108] sm:$0xff]
    %v10693 = vld [vmem:[#allocation5 + $0x110] sm:$0xff]
    %v10694 = vld [vmem:[#allocation5 + $0x118] sm:$0xff]
    %v10695 = vld [vmem:[#allocation5 + $0x120] sm:$0xff]
    %v10696 = vld [vmem:[#allocation5 + $0x128] sm:$0xff]
    %v10697 = vld [vmem:[#allocation5 + $0x130] sm:$0xff]
    %v10698 = vld [vmem:[#allocation5 + $0x138] sm:$0xff]
    %v10699 = vld [vmem:[#allocation5 + $0x140] sm:$0xff]
    %v10700 = vld [vmem:[#allocation5 + $0x148] sm:$0xff]
    %v10701 = vld [vmem:[#allocation5 + $0x150] sm:$0xff]
    %v10702 = vld [vmem:[#allocation5 + $0x158] sm:$0xff]
    %v10703 = vld [vmem:[#allocation5 + $0x160] sm:$0xff]
    %v10704 = vld [vmem:[#allocation5 + $0x168] sm:$0xff]
    %v10705 = vld [vmem:[#allocation5 + $0x170] sm:$0xff]
    %v10706 = vld [vmem:[#allocation5 + $0x178] sm:$0xff]
    %v10707 = vld [vmem:[#allocation5 + $0x180] sm:$0xff]
    %v10708 = vld [vmem:[#allocation5 + $0x188] sm:$0xff]
    %v10709 = vld [vmem:[#allocation5 + $0x190] sm:$0xff]
    %v10710 = vld [vmem:[#allocation5 + $0x198] sm:$0xff]
    %v10711 = vld [vmem:[#allocation5 + $0x1a0] sm:$0xff]
    %v10712 = vld [vmem:[#allocation5 + $0x1a8] sm:$0xff]
    %v10713 = vld [vmem:[#allocation5 + $0x1b0] sm:$0xff]
    %v10714 = vld [vmem:[#allocation5 + $0x1b8] sm:$0xff]
    %v10715 = vld [vmem:[#allocation5 + $0x1c0] sm:$0xff]
    %v10716 = vld [vmem:[#allocation5 + $0x1c8] sm:$0xff]
    %v10717 = vld [vmem:[#allocation5 + $0x1d0] sm:$0xff]
    %v10718 = vld [vmem:[#allocation5 + $0x1d8] sm:$0xff]
    %v10719 = vld [vmem:[#allocation5 + $0x1e0] sm:$0xff]
    %v10720 = vld [vmem:[#allocation5 + $0x1e8] sm:$0xff]
    %v10721 = vld [vmem:[#allocation5 + $0x1f0] sm:$0xff]
    %v10722 = vld [vmem:[#allocation5 + $0x1f8] sm:$0xff]
    %v10723 = vpack.c.bf16 %v10637, %v10635
    %v10724 = vpack.c.bf16 %v10638, %v10636
    %v10725 = vpack.c.bf16 %v10641, %v10639
    %v10726 = vpack.c.bf16 %v10642, %v10640
    %v10727 = vpack.c.bf16 %v10645, %v10643
    %v10728 = vpack.c.bf16 %v10646, %v10644
    %v10729 = vpack.c.bf16 %v10649, %v10647
    %v10730 = vpack.c.bf16 %v10650, %v10648
    %v10731 = vld [vmem:[#allocation6] sm:$0xff]
    %v10732 = vld [vmem:[#allocation6 + $0x8] sm:$0xff]
    %v10733 = vld [vmem:[#allocation6 + $0x10] sm:$0xff]
    %v10734 = vld [vmem:[#allocation6 + $0x18] sm:$0xff]
    %v10735 = vld [vmem:[#allocation6 + $0x20] sm:$0xff]
    %v10736 = vld [vmem:[#allocation6 + $0x28] sm:$0xff]
    %v10737 = vld [vmem:[#allocation6 + $0x30] sm:$0xff]
    %v10738 = vld [vmem:[#allocation6 + $0x38] sm:$0xff]
    %v10739 = vld [vmem:[#allocation6 + $0x40] sm:$0xff]
    %v10740 = vld [vmem:[#allocation6 + $0x48] sm:$0xff]
    %v10741 = vld [vmem:[#allocation6 + $0x50] sm:$0xff]
    %v10742 = vld [vmem:[#allocation6 + $0x58] sm:$0xff]
    %v10743 = vld [vmem:[#allocation6 + $0x60] sm:$0xff]
    %v10744 = vld [vmem:[#allocation6 + $0x68] sm:$0xff]
    %v10745 = vld [vmem:[#allocation6 + $0x70] sm:$0xff]
    %v10746 = vld [vmem:[#allocation6 + $0x78] sm:$0xff]
    %v10747 = vld [vmem:[#allocation6 + $0x80] sm:$0xff]
    %v10748 = vld [vmem:[#allocation6 + $0x88] sm:$0xff]
    %v10749 = vld [vmem:[#allocation6 + $0x90] sm:$0xff]
    %v10750 = vld [vmem:[#allocation6 + $0x98] sm:$0xff]
    %v10751 = vld [vmem:[#allocation6 + $0xa0] sm:$0xff]
    %v10752 = vld [vmem:[#allocation6 + $0xa8] sm:$0xff]
    %v10753 = vld [vmem:[#allocation6 + $0xb0] sm:$0xff]
    %v10754 = vld [vmem:[#allocation6 + $0xb8] sm:$0xff]
    %v10755 = vld [vmem:[#allocation6 + $0xc0] sm:$0xff]
    %v10756 = vld [vmem:[#allocation6 + $0xc8] sm:$0xff]
    %v10757 = vld [vmem:[#allocation6 + $0xd0] sm:$0xff]
    %v10758 = vld [vmem:[#allocation6 + $0xd8] sm:$0xff]
    %v10759 = vld [vmem:[#allocation6 + $0xe0] sm:$0xff]
    %v10760 = vld [vmem:[#allocation6 + $0xe8] sm:$0xff]
    %v10761 = vld [vmem:[#allocation6 + $0xf0] sm:$0xff]
    %v10762 = vld [vmem:[#allocation6 + $0xf8] sm:$0xff]
    %v10763 = vld [vmem:[#allocation6 + $0x100] sm:$0xff]
    %v10764 = vld [vmem:[#allocation6 + $0x108] sm:$0xff]
    %v10765 = vld [vmem:[#allocation6 + $0x110] sm:$0xff]
    %v10766 = vld [vmem:[#allocation6 + $0x118] sm:$0xff]
    %v10767 = vld [vmem:[#allocation6 + $0x120] sm:$0xff]
    %v10768 = vld [vmem:[#allocation6 + $0x128] sm:$0xff]
    %v10769 = vld [vmem:[#allocation6 + $0x130] sm:$0xff]
    %v10770 = vld [vmem:[#allocation6 + $0x138] sm:$0xff]
    %v10771 = vld [vmem:[#allocation6 + $0x140] sm:$0xff]
    %v10772 = vld [vmem:[#allocation6 + $0x148] sm:$0xff]
    %v10773 = vld [vmem:[#allocation6 + $0x150] sm:$0xff]
    %v10774 = vld [vmem:[#allocation6 + $0x158] sm:$0xff]
    %v10775 = vld [vmem:[#allocation6 + $0x160] sm:$0xff]
    %v10776 = vld [vmem:[#allocation6 + $0x168] sm:$0xff]
    %v10777 = vld [vmem:[#allocation6 + $0x170] sm:$0xff]
    %v10778 = vld [vmem:[#allocation6 + $0x178] sm:$0xff]
    %v10779 = vld [vmem:[#allocation6 + $0x180] sm:$0xff]
    %v10780 = vld [vmem:[#allocation6 + $0x188] sm:$0xff]
    %v10781 = vld [vmem:[#allocation6 + $0x190] sm:$0xff]
    %v10782 = vld [vmem:[#allocation6 + $0x198] sm:$0xff]
    %v10783 = vld [vmem:[#allocation6 + $0x1a0] sm:$0xff]
    %v10784 = vld [vmem:[#allocation6 + $0x1a8] sm:$0xff]
    %v10785 = vld [vmem:[#allocation6 + $0x1b0] sm:$0xff]
    %v10786 = vld [vmem:[#allocation6 + $0x1b8] sm:$0xff]
    %v10787 = vld [vmem:[#allocation6 + $0x1c0] sm:$0xff]
    %v10788 = vld [vmem:[#allocation6 + $0x1c8] sm:$0xff]
    %v10789 = vld [vmem:[#allocation6 + $0x1d0] sm:$0xff]
    %v10790 = vld [vmem:[#allocation6 + $0x1d8] sm:$0xff]
    %v10791 = vld [vmem:[#allocation6 + $0x1e0] sm:$0xff]
    %v10792 = vld [vmem:[#allocation6 + $0x1e8] sm:$0xff]
    %v10793 = vld [vmem:[#allocation6 + $0x1f0] sm:$0xff]
    %v10794 = vld [vmem:[#allocation6 + $0x1f8] sm:$0xff]
    %v10859 = vunpack.c.l.b16 %v10731
    %v10860 = vunpack.c.h.b16 %v10731
    %v10861 = vunpack.c.l.b16 %v10732
    %v10862 = vunpack.c.h.b16 %v10732
    %v10863 = vunpack.c.l.b16 %v10733
    %v10864 = vunpack.c.h.b16 %v10733
    %v10865 = vunpack.c.l.b16 %v10734
    %v10866 = vunpack.c.h.b16 %v10734
    %v10867 = vunpack.c.l.b16 %v10735
    %v10868 = vunpack.c.h.b16 %v10735
    %v10869 = vunpack.c.l.b16 %v10736
    %v10870 = vunpack.c.h.b16 %v10736
    %v10871 = vunpack.c.l.b16 %v10737
    %v10872 = vunpack.c.h.b16 %v10737
    %v10873 = vunpack.c.l.b16 %v10738
    %v10874 = vunpack.c.h.b16 %v10738
    %v10875 = vunpack.c.l.b16 %v10739
    %v10876 = vunpack.c.h.b16 %v10739
    %v10877 = vunpack.c.l.b16 %v10740
    %v10878 = vunpack.c.h.b16 %v10740
    %v10879 = vunpack.c.l.b16 %v10741
    %v10880 = vunpack.c.h.b16 %v10741
    %v10881 = vunpack.c.l.b16 %v10742
    %v10882 = vunpack.c.h.b16 %v10742
    %v10883 = vunpack.c.l.b16 %v10743
    %v10884 = vunpack.c.h.b16 %v10743
    %v10885 = vunpack.c.l.b16 %v10744
    %v10886 = vunpack.c.h.b16 %v10744
    %v10887 = vunpack.c.l.b16 %v10745
    %v10888 = vunpack.c.h.b16 %v10745
    %v10889 = vunpack.c.l.b16 %v10746
    %v10890 = vunpack.c.h.b16 %v10746
    %v10891 = vunpack.c.l.b16 %v10747
    %v10892 = vunpack.c.h.b16 %v10747
    %v10893 = vunpack.c.l.b16 %v10748
    %v10894 = vunpack.c.h.b16 %v10748
    %v10895 = vunpack.c.l.b16 %v10749
    %v10896 = vunpack.c.h.b16 %v10749
    %v10897 = vunpack.c.l.b16 %v10750
    %v10898 = vunpack.c.h.b16 %v10750
    %v10899 = vunpack.c.l.b16 %v10751
    %v10900 = vunpack.c.h.b16 %v10751
    %v10901 = vunpack.c.l.b16 %v10752
    %v10902 = vunpack.c.h.b16 %v10752
    %v10903 = vunpack.c.l.b16 %v10753
    %v10904 = vunpack.c.h.b16 %v10753
    %v10905 = vunpack.c.l.b16 %v10754
    %v10906 = vunpack.c.h.b16 %v10754
    %v10907 = vunpack.c.l.b16 %v10755
    %v10908 = vunpack.c.h.b16 %v10755
    %v10909 = vunpack.c.l.b16 %v10756
    %v10910 = vunpack.c.h.b16 %v10756
    %v10911 = vunpack.c.l.b16 %v10757
    %v10912 = vunpack.c.h.b16 %v10757
    %v10913 = vunpack.c.l.b16 %v10758
    %v10914 = vunpack.c.h.b16 %v10758
    %v10915 = vunpack.c.l.b16 %v10759
    %v10916 = vunpack.c.h.b16 %v10759
    %v10917 = vunpack.c.l.b16 %v10760
    %v10918 = vunpack.c.h.b16 %v10760
    %v10919 = vunpack.c.l.b16 %v10761
    %v10920 = vunpack.c.h.b16 %v10761
    %v10921 = vunpack.c.l.b16 %v10762
    %v10922 = vunpack.c.h.b16 %v10762
    %v10923 = vunpack.c.l.b16 %v10763
    %v10924 = vunpack.c.h.b16 %v10763
    %v10925 = vunpack.c.l.b16 %v10764
    %v10926 = vunpack.c.h.b16 %v10764
    %v10927 = vunpack.c.l.b16 %v10765
    %v10928 = vunpack.c.h.b16 %v10765
    %v10929 = vunpack.c.l.b16 %v10766
    %v10930 = vunpack.c.h.b16 %v10766
    %v10931 = vunpack.c.l.b16 %v10767
    %v10932 = vunpack.c.h.b16 %v10767
    %v10933 = vunpack.c.l.b16 %v10768
    %v10934 = vunpack.c.h.b16 %v10768
    %v10935 = vunpack.c.l.b16 %v10769
    %v10936 = vunpack.c.h.b16 %v10769
    %v10937 = vunpack.c.l.b16 %v10770
    %v10938 = vunpack.c.h.b16 %v10770
    %v10939 = vunpack.c.l.b16 %v10771
    %v10940 = vunpack.c.h.b16 %v10771
    %v10941 = vunpack.c.l.b16 %v10772
    %v10942 = vunpack.c.h.b16 %v10772
    %v10943 = vunpack.c.l.b16 %v10773
    %v10944 = vunpack.c.h.b16 %v10773
    %v10945 = vunpack.c.l.b16 %v10774
    %v10946 = vunpack.c.h.b16 %v10774
    %v10947 = vunpack.c.l.b16 %v10775
    %v10948 = vunpack.c.h.b16 %v10775
    %v10949 = vunpack.c.l.b16 %v10776
    %v10950 = vunpack.c.h.b16 %v10776
    %v10951 = vunpack.c.l.b16 %v10777
    %v10952 = vunpack.c.h.b16 %v10777
    %v10953 = vunpack.c.l.b16 %v10778
    %v10954 = vunpack.c.h.b16 %v10778
    %v10955 = vunpack.c.l.b16 %v10779
    %v10956 = vunpack.c.h.b16 %v10779
    %v10957 = vunpack.c.l.b16 %v10780
    %v10958 = vunpack.c.h.b16 %v10780
    %v10959 = vunpack.c.l.b16 %v10781
    %v10960 = vunpack.c.h.b16 %v10781
    %v10961 = vunpack.c.l.b16 %v10782
    %v10962 = vunpack.c.h.b16 %v10782
    %v10963 = vunpack.c.l.b16 %v10783
    %v10964 = vunpack.c.h.b16 %v10783
    %v10965 = vunpack.c.l.b16 %v10784
    %v10966 = vunpack.c.h.b16 %v10784
    %v10967 = vunpack.c.l.b16 %v10785
    %v10968 = vunpack.c.h.b16 %v10785
    %v10969 = vunpack.c.l.b16 %v10786
    %v10970 = vunpack.c.h.b16 %v10786
    %v10971 = vunpack.c.l.b16 %v10787
    %v10972 = vunpack.c.h.b16 %v10787
    %v10973 = vunpack.c.l.b16 %v10788
    %v10974 = vunpack.c.h.b16 %v10788
    %v10975 = vunpack.c.l.b16 %v10789
    %v10976 = vunpack.c.h.b16 %v10789
    %v10977 = vunpack.c.l.b16 %v10790
    %v10978 = vunpack.c.h.b16 %v10790
    %v10979 = vunpack.c.l.b16 %v10791
    %v10980 = vunpack.c.h.b16 %v10791
    %v10981 = vunpack.c.l.b16 %v10792
    %v10982 = vunpack.c.h.b16 %v10792
    %v10983 = vunpack.c.l.b16 %v10793
    %v10984 = vunpack.c.h.b16 %v10793
    %v10985 = vunpack.c.l.b16 %v10794
    %v10986 = vunpack.c.h.b16 %v10794
    %v10987 = vpack.c.b16 %v10863, %v10859
    %v10988 = vpack.c.b16 %v10864, %v10860
    %v10989 = vpack.c.b16 %v10865, %v10861
    %v10990 = vpack.c.b16 %v10866, %v10862
    %v10991 = vpack.c.b16 %v10871, %v10867
    %v10992 = vpack.c.b16 %v10872, %v10868
    %v10993 = vpack.c.b16 %v10873, %v10869
    %v10994 = vpack.c.b16 %v10874, %v10870
    %v10995 = vpack.c.b16 %v10879, %v10875
    %v10996 = vpack.c.b16 %v10880, %v10876
    %v10997 = vpack.c.b16 %v10881, %v10877
    %v10998 = vpack.c.b16 %v10882, %v10878
    %v10999 = vpack.c.b16 %v10887, %v10883
    %v11000 = vpack.c.b16 %v10888, %v10884
    %v11001 = vpack.c.b16 %v10889, %v10885
    %v11002 = vpack.c.b16 %v10890, %v10886
    %v11003 = vpack.c.b16 %v10895, %v10891
    %v11004 = vpack.c.b16 %v10896, %v10892
    %v11005 = vpack.c.b16 %v10897, %v10893
    %v11006 = vpack.c.b16 %v10898, %v10894
    %v11007 = vpack.c.b16 %v10903, %v10899
    %v11008 = vpack.c.b16 %v10904, %v10900
    %v11009 = vpack.c.b16 %v10905, %v10901
    %v11010 = vpack.c.b16 %v10906, %v10902
    %v11011 = vpack.c.b16 %v10911, %v10907
    %v11012 = vpack.c.b16 %v10912, %v10908
    %v11013 = vpack.c.b16 %v10913, %v10909
    %v11014 = vpack.c.b16 %v10914, %v10910
    %v11015 = vpack.c.b16 %v10919, %v10915
    %v11016 = vpack.c.b16 %v10920, %v10916
    %v11017 = vpack.c.b16 %v10921, %v10917
    %v11018 = vpack.c.b16 %v10922, %v10918
    %v11019 = vpack.c.b16 %v10927, %v10923
    %v11020 = vpack.c.b16 %v10928, %v10924
    %v11021 = vpack.c.b16 %v10929, %v10925
    %v11022 = vpack.c.b16 %v10930, %v10926
    %v11023 = vpack.c.b16 %v10935, %v10931
    %v11024 = vpack.c.b16 %v10936, %v10932
    %v11025 = vpack.c.b16 %v10937, %v10933
    %v11026 = vpack.c.b16 %v10938, %v10934
    %v11027 = vpack.c.b16 %v10943, %v10939
    %v11028 = vpack.c.b16 %v10944, %v10940
    %v11029 = vpack.c.b16 %v10945, %v10941
    %v11030 = vpack.c.b16 %v10946, %v10942
    %v11031 = vpack.c.b16 %v10951, %v10947
    %v11032 = vpack.c.b16 %v10952, %v10948
    %v11033 = vpack.c.b16 %v10953, %v10949
    %v11034 = vpack.c.b16 %v10954, %v10950
    %v11035 = vpack.c.b16 %v10959, %v10955
    %v11036 = vpack.c.b16 %v10960, %v10956
    %v11037 = vpack.c.b16 %v10961, %v10957
    %v11038 = vpack.c.b16 %v10962, %v10958
    %v11039 = vpack.c.b16 %v10967, %v10963
    %v11040 = vpack.c.b16 %v10968, %v10964
    %v11041 = vpack.c.b16 %v10969, %v10965
    %v11042 = vpack.c.b16 %v10970, %v10966
    %v11043 = vpack.c.b16 %v10975, %v10971
    %v11044 = vpack.c.b16 %v10976, %v10972
    %v11045 = vpack.c.b16 %v10977, %v10973
    %v11046 = vpack.c.b16 %v10978, %v10974
    %v11047 = vpack.c.b16 %v10983, %v10979
    %v11048 = vpack.c.b16 %v10984, %v10980
    %v11049 = vpack.c.b16 %v10985, %v10981
    %v11050 = vpack.c.b16 %v10986, %v10982
    %11115 = vmatpush.bf16.msra.mxu0 %v11015
    %11116 = vmatpush.bf16.msra.mxu0 %v11011
    %11117 = vmatpush.bf16.msra.mxu0 %v11007
    %11118 = vmatpush.bf16.msra.mxu0 %v11003
    %11119 = vmatpush.bf16.msra.mxu0 %v10999
    %11120 = vmatpush.bf16.msra.mxu0 %v10995
    %11121 = vmatpush.bf16.msra.mxu0 %v10991
    %11122 = vmatpush.bf16.msra.mxu0 %v10987
    %11123 = vmatmul.bf16.gmra.mxu0 %v10723
    %v11124 = vpop.f32.mrf.mxu0
    %v11125 = vadd.f32 0.0, %v11124
    %v11126 = vpop.f32.mrf.mxu0
    %v11127 = vadd.f32 0.0, %v11126
    %11128 = vmatmul.bf16.gmra.mxu0 %v10725
    %v11129 = vpop.f32.mrf.mxu0
    %v11130 = vadd.f32 0.0, %v11129
    %v11131 = vpop.f32.mrf.mxu0
    %v11132 = vadd.f32 0.0, %v11131
    %11133 = vmatmul.bf16.gmra.mxu0 %v10727
    %v11134 = vpop.f32.mrf.mxu0
    %v11135 = vadd.f32 0.0, %v11134
    %v11136 = vpop.f32.mrf.mxu0
    %v11137 = vadd.f32 0.0, %v11136
    %11138 = vmatmul.bf16.gmra.mxu0 %v10729
    %v11139 = vpop.f32.mrf.mxu0
    %v11140 = vadd.f32 0.0, %v11139
    %v11141 = vpop.f32.mrf.mxu0
    %v11142 = vadd.f32 0.0, %v11141
    %11143 = vdwg.mxu0
    %11144 = vmatpush.bf16.msra.mxu0 %v11047
    %11145 = vmatpush.bf16.msra.mxu0 %v11043
    %11146 = vmatpush.bf16.msra.mxu0 %v11039
    %11147 = vmatpush.bf16.msra.mxu0 %v11035
    %11148 = vmatpush.bf16.msra.mxu0 %v11031
    %11149 = vmatpush.bf16.msra.mxu0 %v11027
    %11150 = vmatpush.bf16.msra.mxu0 %v11023
    %11151 = vmatpush.bf16.msra.mxu0 %v11019
    %11152 = vmatmul.bf16.gmra.mxu0 %v10724
    %v11153 = vpop.f32.mrf.mxu0
    %v11154 = vadd.f32 %v11125, %v11153
    %v11155 = vpop.f32.mrf.mxu0
    %v11156 = vadd.f32 %v11127, %v11155
    %11157 = vmatmul.bf16.gmra.mxu0 %v10726
    %v11158 = vpop.f32.mrf.mxu0
    %v11159 = vadd.f32 %v11130, %v11158
    %v11160 = vpop.f32.mrf.mxu0
    %v11161 = vadd.f32 %v11132, %v11160
    %11162 = vmatmul.bf16.gmra.mxu0 %v10728
    %v11163 = vpop.f32.mrf.mxu0
    %v11164 = vadd.f32 %v11135, %v11163
    %v11165 = vpop.f32.mrf.mxu0
    %v11166 = vadd.f32 %v11137, %v11165
    %11167 = vmatmul.bf16.gmra.mxu0 %v10730
    %v11168 = vpop.f32.mrf.mxu0
    %v11169 = vadd.f32 %v11140, %v11168
    %v11170 = vpop.f32.mrf.mxu0
    %v11171 = vadd.f32 %v11142, %v11170
    %11172 = vdwg.mxu0
    %11173 = vmatpush.bf16.msra.mxu0 %v11016
    %11174 = vmatpush.bf16.msra.mxu0 %v11012
    %11175 = vmatpush.bf16.msra.mxu0 %v11008
    %11176 = vmatpush.bf16.msra.mxu0 %v11004
    %11177 = vmatpush.bf16.msra.mxu0 %v11000
    %11178 = vmatpush.bf16.msra.mxu0 %v10996
    %11179 = vmatpush.bf16.msra.mxu0 %v10992
    %11180 = vmatpush.bf16.msra.mxu0 %v10988
    %11181 = vmatmul.bf16.gmra.mxu0 %v10723
    %v11182 = vpop.f32.mrf.mxu0
    %v11183 = vadd.f32 0.0, %v11182
    %v11184 = vpop.f32.mrf.mxu0
    %v11185 = vadd.f32 0.0, %v11184
    %11186 = vmatmul.bf16.gmra.mxu0 %v10725
    %v11187 = vpop.f32.mrf.mxu0
    %v11188 = vadd.f32 0.0, %v11187
    %v11189 = vpop.f32.mrf.mxu0
    %v11190 = vadd.f32 0.0, %v11189
    %11191 = vmatmul.bf16.gmra.mxu0 %v10727
    %v11192 = vpop.f32.mrf.mxu0
    %v11193 = vadd.f32 0.0, %v11192
    %v11194 = vpop.f32.mrf.mxu0
    %v11195 = vadd.f32 0.0, %v11194
    %11196 = vmatmul.bf16.gmra.mxu0 %v10729
    %v11197 = vpop.f32.mrf.mxu0
    %v11198 = vadd.f32 0.0, %v11197
    %v11199 = vpop.f32.mrf.mxu0
    %v11200 = vadd.f32 0.0, %v11199
    %11201 = vdwg.mxu0
    %11202 = vmatpush.bf16.msra.mxu0 %v11048
    %11203 = vmatpush.bf16.msra.mxu0 %v11044
    %11204 = vmatpush.bf16.msra.mxu0 %v11040
    %11205 = vmatpush.bf16.msra.mxu0 %v11036
    %11206 = vmatpush.bf16.msra.mxu0 %v11032
    %11207 = vmatpush.bf16.msra.mxu0 %v11028
    %11208 = vmatpush.bf16.msra.mxu0 %v11024
    %11209 = vmatpush.bf16.msra.mxu0 %v11020
    %11210 = vmatmul.bf16.gmra.mxu0 %v10724
    %v11211 = vpop.f32.mrf.mxu0
    %v11212 = vadd.f32 %v11183, %v11211
    %v11213 = vpop.f32.mrf.mxu0
    %v11214 = vadd.f32 %v11185, %v11213
    %11215 = vmatmul.bf16.gmra.mxu0 %v10726
    %v11216 = vpop.f32.mrf.mxu0
    %v11217 = vadd.f32 %v11188, %v11216
    %v11218 = vpop.f32.mrf.mxu0
    %v11219 = vadd.f32 %v11190, %v11218
    %11220 = vmatmul.bf16.gmra.mxu0 %v10728
    %v11221 = vpop.f32.mrf.mxu0
    %v11222 = vadd.f32 %v11193, %v11221
    %v11223 = vpop.f32.mrf.mxu0
    %v11224 = vadd.f32 %v11195, %v11223
    %11225 = vmatmul.bf16.gmra.mxu0 %v10730
    %v11226 = vpop.f32.mrf.mxu0
    %v11227 = vadd.f32 %v11198, %v11226
    %v11228 = vpop.f32.mrf.mxu0
    %v11229 = vadd.f32 %v11200, %v11228
    %11230 = vdwg.mxu0
    %11231 = vmatpush.bf16.msra.mxu0 %v11017
    %11232 = vmatpush.bf16.msra.mxu0 %v11013
    %11233 = vmatpush.bf16.msra.mxu0 %v11009
    %11234 = vmatpush.bf16.msra.mxu0 %v11005
    %11235 = vmatpush.bf16.msra.mxu0 %v11001
    %11236 = vmatpush.bf16.msra.mxu0 %v10997
    %11237 = vmatpush.bf16.msra.mxu0 %v10993
    %11238 = vmatpush.bf16.msra.mxu0 %v10989
    %11239 = vmatmul.bf16.gmra.mxu0 %v10723
    %v11240 = vpop.f32.mrf.mxu0
    %v11241 = vadd.f32 0.0, %v11240
    %v11242 = vpop.f32.mrf.mxu0
    %v11243 = vadd.f32 0.0, %v11242
    %11244 = vmatmul.bf16.gmra.mxu0 %v10725
    %v11245 = vpop.f32.mrf.mxu0
    %v11246 = vadd.f32 0.0, %v11245
    %v11247 = vpop.f32.mrf.mxu0
    %v11248 = vadd.f32 0.0, %v11247
    %11249 = vmatmul.bf16.gmra.mxu0 %v10727
    %v11250 = vpop.f32.mrf.mxu0
    %v11251 = vadd.f32 0.0, %v11250
    %v11252 = vpop.f32.mrf.mxu0
    %v11253 = vadd.f32 0.0, %v11252
    %11254 = vmatmul.bf16.gmra.mxu0 %v10729
    %v11255 = vpop.f32.mrf.mxu0
    %v11256 = vadd.f32 0.0, %v11255
    %v11257 = vpop.f32.mrf.mxu0
    %v11258 = vadd.f32 0.0, %v11257
    %11259 = vdwg.mxu0
    %11260 = vmatpush.bf16.msra.mxu0 %v11049
    %11261 = vmatpush.bf16.msra.mxu0 %v11045
    %11262 = vmatpush.bf16.msra.mxu0 %v11041
    %11263 = vmatpush.bf16.msra.mxu0 %v11037
    %11264 = vmatpush.bf16.msra.mxu0 %v11033
    %11265 = vmatpush.bf16.msra.mxu0 %v11029
    %11266 = vmatpush.bf16.msra.mxu0 %v11025
    %11267 = vmatpush.bf16.msra.mxu0 %v11021
    %11268 = vmatmul.bf16.gmra.mxu0 %v10724
    %v11269 = vpop.f32.mrf.mxu0
    %v11270 = vadd.f32 %v11241, %v11269
    %v11271 = vpop.f32.mrf.mxu0
    %v11272 = vadd.f32 %v11243, %v11271
    %11273 = vmatmul.bf16.gmra.mxu0 %v10726
    %v11274 = vpop.f32.mrf.mxu0
    %v11275 = vadd.f32 %v11246, %v11274
    %v11276 = vpop.f32.mrf.mxu0
    %v11277 = vadd.f32 %v11248, %v11276
    %11278 = vmatmul.bf16.gmra.mxu0 %v10728
    %v11279 = vpop.f32.mrf.mxu0
    %v11280 = vadd.f32 %v11251, %v11279
    %v11281 = vpop.f32.mrf.mxu0
    %v11282 = vadd.f32 %v11253, %v11281
    %11283 = vmatmul.bf16.gmra.mxu0 %v10730
    %v11284 = vpop.f32.mrf.mxu0
    %v11285 = vadd.f32 %v11256, %v11284
    %v11286 = vpop.f32.mrf.mxu0
    %v11287 = vadd.f32 %v11258, %v11286
    %11288 = vdwg.mxu0
    %11289 = vmatpush.bf16.msra.mxu0 %v11018
    %11290 = vmatpush.bf16.msra.mxu0 %v11014
    %11291 = vmatpush.bf16.msra.mxu0 %v11010
    %11292 = vmatpush.bf16.msra.mxu0 %v11006
    %11293 = vmatpush.bf16.msra.mxu0 %v11002
    %11294 = vmatpush.bf16.msra.mxu0 %v10998
    %11295 = vmatpush.bf16.msra.mxu0 %v10994
    %11296 = vmatpush.bf16.msra.mxu0 %v10990
    %11297 = vmatmul.bf16.gmra.mxu0 %v10723
    %v11298 = vpop.f32.mrf.mxu0
    %v11299 = vadd.f32 0.0, %v11298
    %v11300 = vpop.f32.mrf.mxu0
    %v11301 = vadd.f32 0.0, %v11300
    %11302 = vmatmul.bf16.gmra.mxu0 %v10725
    %v11303 = vpop.f32.mrf.mxu0
    %v11304 = vadd.f32 0.0, %v11303
    %v11305 = vpop.f32.mrf.mxu0
    %v11306 = vadd.f32 0.0, %v11305
    %11307 = vmatmul.bf16.gmra.mxu0 %v10727
    %v11308 = vpop.f32.mrf.mxu0
    %v11309 = vadd.f32 0.0, %v11308
    %v11310 = vpop.f32.mrf.mxu0
    %v11311 = vadd.f32 0.0, %v11310
    %11312 = vmatmul.bf16.gmra.mxu0 %v10729
    %v11313 = vpop.f32.mrf.mxu0
    %v11314 = vadd.f32 0.0, %v11313
    %v11315 = vpop.f32.mrf.mxu0
    %v11316 = vadd.f32 0.0, %v11315
    %11317 = vdwg.mxu0
    %11318 = vmatpush.bf16.msra.mxu0 %v11050
    %11319 = vmatpush.bf16.msra.mxu0 %v11046
    %11320 = vmatpush.bf16.msra.mxu0 %v11042
    %11321 = vmatpush.bf16.msra.mxu0 %v11038
    %11322 = vmatpush.bf16.msra.mxu0 %v11034
    %11323 = vmatpush.bf16.msra.mxu0 %v11030
    %11324 = vmatpush.bf16.msra.mxu0 %v11026
    %11325 = vmatpush.bf16.msra.mxu0 %v11022
    %11326 = vmatmul.bf16.gmra.mxu0 %v10724
    %v11327 = vpop.f32.mrf.mxu0
    %v11328 = vadd.f32 %v11299, %v11327
    %v11329 = vpop.f32.mrf.mxu0
    %v11330 = vadd.f32 %v11301, %v11329
    %11331 = vmatmul.bf16.gmra.mxu0 %v10726
    %v11332 = vpop.f32.mrf.mxu0
    %v11333 = vadd.f32 %v11304, %v11332
    %v11334 = vpop.f32.mrf.mxu0
    %v11335 = vadd.f32 %v11306, %v11334
    %11336 = vmatmul.bf16.gmra.mxu0 %v10728
    %v11337 = vpop.f32.mrf.mxu0
    %v11338 = vadd.f32 %v11309, %v11337
    %v11339 = vpop.f32.mrf.mxu0
    %v11340 = vadd.f32 %v11311, %v11339
    %11341 = vmatmul.bf16.gmra.mxu0 %v10730
    %v11342 = vpop.f32.mrf.mxu0
    %v11343 = vadd.f32 %v11314, %v11342
    %v11344 = vpop.f32.mrf.mxu0
    %v11345 = vadd.f32 %v11316, %v11344
    %11346 = vdwg.mxu0
    %v11411 = vunpack.c.l.b16 %v10659
    %v11412 = vunpack.c.h.b16 %v10659
    %v11413 = vunpack.c.l.b16 %v10660
    %v11414 = vunpack.c.h.b16 %v10660
    %v11415 = vunpack.c.l.b16 %v10661
    %v11416 = vunpack.c.h.b16 %v10661
    %v11417 = vunpack.c.l.b16 %v10662
    %v11418 = vunpack.c.h.b16 %v10662
    %v11419 = vunpack.c.l.b16 %v10663
    %v11420 = vunpack.c.h.b16 %v10663
    %v11421 = vunpack.c.l.b16 %v10664
    %v11422 = vunpack.c.h.b16 %v10664
    %v11423 = vunpack.c.l.b16 %v10665
    %v11424 = vunpack.c.h.b16 %v10665
    %v11425 = vunpack.c.l.b16 %v10666
    %v11426 = vunpack.c.h.b16 %v10666
    %v11427 = vunpack.c.l.b16 %v10667
    %v11428 = vunpack.c.h.b16 %v10667
    %v11429 = vunpack.c.l.b16 %v10668
    %v11430 = vunpack.c.h.b16 %v10668
    %v11431 = vunpack.c.l.b16 %v10669
    %v11432 = vunpack.c.h.b16 %v10669
    %v11433 = vunpack.c.l.b16 %v10670
    %v11434 = vunpack.c.h.b16 %v10670
    %v11435 = vunpack.c.l.b16 %v10671
    %v11436 = vunpack.c.h.b16 %v10671
    %v11437 = vunpack.c.l.b16 %v10672
    %v11438 = vunpack.c.h.b16 %v10672
    %v11439 = vunpack.c.l.b16 %v10673
    %v11440 = vunpack.c.h.b16 %v10673
    %v11441 = vunpack.c.l.b16 %v10674
    %v11442 = vunpack.c.h.b16 %v10674
    %v11443 = vunpack.c.l.b16 %v10675
    %v11444 = vunpack.c.h.b16 %v10675
    %v11445 = vunpack.c.l.b16 %v10676
    %v11446 = vunpack.c.h.b16 %v10676
    %v11447 = vunpack.c.l.b16 %v10677
    %v11448 = vunpack.c.h.b16 %v10677
    %v11449 = vunpack.c.l.b16 %v10678
    %v11450 = vunpack.c.h.b16 %v10678
    %v11451 = vunpack.c.l.b16 %v10679
    %v11452 = vunpack.c.h.b16 %v10679
    %v11453 = vunpack.c.l.b16 %v10680
    %v11454 = vunpack.c.h.b16 %v10680
    %v11455 = vunpack.c.l.b16 %v10681
    %v11456 = vunpack.c.h.b16 %v10681
    %v11457 = vunpack.c.l.b16 %v10682
    %v11458 = vunpack.c.h.b16 %v10682
    %v11459 = vunpack.c.l.b16 %v10683
    %v11460 = vunpack.c.h.b16 %v10683
    %v11461 = vunpack.c.l.b16 %v10684
    %v11462 = vunpack.c.h.b16 %v10684
    %v11463 = vunpack.c.l.b16 %v10685
    %v11464 = vunpack.c.h.b16 %v10685
    %v11465 = vunpack.c.l.b16 %v10686
    %v11466 = vunpack.c.h.b16 %v10686
    %v11467 = vunpack.c.l.b16 %v10687
    %v11468 = vunpack.c.h.b16 %v10687
    %v11469 = vunpack.c.l.b16 %v10688
    %v11470 = vunpack.c.h.b16 %v10688
    %v11471 = vunpack.c.l.b16 %v10689
    %v11472 = vunpack.c.h.b16 %v10689
    %v11473 = vunpack.c.l.b16 %v10690
    %v11474 = vunpack.c.h.b16 %v10690
    %v11475 = vunpack.c.l.b16 %v10691
    %v11476 = vunpack.c.h.b16 %v10691
    %v11477 = vunpack.c.l.b16 %v10692
    %v11478 = vunpack.c.h.b16 %v10692
    %v11479 = vunpack.c.l.b16 %v10693
    %v11480 = vunpack.c.h.b16 %v10693
    %v11481 = vunpack.c.l.b16 %v10694
    %v11482 = vunpack.c.h.b16 %v10694
    %v11483 = vunpack.c.l.b16 %v10695
    %v11484 = vunpack.c.h.b16 %v10695
    %v11485 = vunpack.c.l.b16 %v10696
    %v11486 = vunpack.c.h.b16 %v10696
    %v11487 = vunpack.c.l.b16 %v10697
    %v11488 = vunpack.c.h.b16 %v10697
    %v11489 = vunpack.c.l.b16 %v10698
    %v11490 = vunpack.c.h.b16 %v10698
    %v11491 = vunpack.c.l.b16 %v10699
    %v11492 = vunpack.c.h.b16 %v10699
    %v11493 = vunpack.c.l.b16 %v10700
    %v11494 = vunpack.c.h.b16 %v10700
    %v11495 = vunpack.c.l.b16 %v10701
    %v11496 = vunpack.c.h.b16 %v10701
    %v11497 = vunpack.c.l.b16 %v10702
    %v11498 = vunpack.c.h.b16 %v10702
    %v11499 = vunpack.c.l.b16 %v10703
    %v11500 = vunpack.c.h.b16 %v10703
    %v11501 = vunpack.c.l.b16 %v10704
    %v11502 = vunpack.c.h.b16 %v10704
    %v11503 = vunpack.c.l.b16 %v10705
    %v11504 = vunpack.c.h.b16 %v10705
    %v11505 = vunpack.c.l.b16 %v10706
    %v11506 = vunpack.c.h.b16 %v10706
    %v11507 = vunpack.c.l.b16 %v10707
    %v11508 = vunpack.c.h.b16 %v10707
    %v11509 = vunpack.c.l.b16 %v10708
    %v11510 = vunpack.c.h.b16 %v10708
    %v11511 = vunpack.c.l.b16 %v10709
    %v11512 = vunpack.c.h.b16 %v10709
    %v11513 = vunpack.c.l.b16 %v10710
    %v11514 = vunpack.c.h.b16 %v10710
    %v11515 = vunpack.c.l.b16 %v10711
    %v11516 = vunpack.c.h.b16 %v10711
    %v11517 = vunpack.c.l.b16 %v10712
    %v11518 = vunpack.c.h.b16 %v10712
    %v11519 = vunpack.c.l.b16 %v10713
    %v11520 = vunpack.c.h.b16 %v10713
    %v11521 = vunpack.c.l.b16 %v10714
    %v11522 = vunpack.c.h.b16 %v10714
    %v11523 = vunpack.c.l.b16 %v10715
    %v11524 = vunpack.c.h.b16 %v10715
    %v11525 = vunpack.c.l.b16 %v10716
    %v11526 = vunpack.c.h.b16 %v10716
    %v11527 = vunpack.c.l.b16 %v10717
    %v11528 = vunpack.c.h.b16 %v10717
    %v11529 = vunpack.c.l.b16 %v10718
    %v11530 = vunpack.c.h.b16 %v10718
    %v11531 = vunpack.c.l.b16 %v10719
    %v11532 = vunpack.c.h.b16 %v10719
    %v11533 = vunpack.c.l.b16 %v10720
    %v11534 = vunpack.c.h.b16 %v10720
    %v11535 = vunpack.c.l.b16 %v10721
    %v11536 = vunpack.c.h.b16 %v10721
    %v11537 = vunpack.c.l.b16 %v10722
    %v11538 = vunpack.c.h.b16 %v10722
    %v11539 = vpack.c.b16 %v11415, %v11411
    %v11540 = vpack.c.b16 %v11416, %v11412
    %v11541 = vpack.c.b16 %v11417, %v11413
    %v11542 = vpack.c.b16 %v11418, %v11414
    %v11543 = vpack.c.b16 %v11423, %v11419
    %v11544 = vpack.c.b16 %v11424, %v11420
    %v11545 = vpack.c.b16 %v11425, %v11421
    %v11546 = vpack.c.b16 %v11426, %v11422
    %v11547 = vpack.c.b16 %v11431, %v11427
    %v11548 = vpack.c.b16 %v11432, %v11428
    %v11549 = vpack.c.b16 %v11433, %v11429
    %v11550 = vpack.c.b16 %v11434, %v11430
    %v11551 = vpack.c.b16 %v11439, %v11435
    %v11552 = vpack.c.b16 %v11440, %v11436
    %v11553 = vpack.c.b16 %v11441, %v11437
    %v11554 = vpack.c.b16 %v11442, %v11438
    %v11555 = vpack.c.b16 %v11447, %v11443
    %v11556 = vpack.c.b16 %v11448, %v11444
    %v11557 = vpack.c.b16 %v11449, %v11445
    %v11558 = vpack.c.b16 %v11450, %v11446
    %v11559 = vpack.c.b16 %v11455, %v11451
    %v11560 = vpack.c.b16 %v11456, %v11452
    %v11561 = vpack.c.b16 %v11457, %v11453
    %v11562 = vpack.c.b16 %v11458, %v11454
    %v11563 = vpack.c.b16 %v11463, %v11459
    %v11564 = vpack.c.b16 %v11464, %v11460
    %v11565 = vpack.c.b16 %v11465, %v11461
    %v11566 = vpack.c.b16 %v11466, %v11462
    %v11567 = vpack.c.b16 %v11471, %v11467
    %v11568 = vpack.c.b16 %v11472, %v11468
    %v11569 = vpack.c.b16 %v11473, %v11469
    %v11570 = vpack.c.b16 %v11474, %v11470
    %v11571 = vpack.c.b16 %v11479, %v11475
    %v11572 = vpack.c.b16 %v11480, %v11476
    %v11573 = vpack.c.b16 %v11481, %v11477
    %v11574 = vpack.c.b16 %v11482, %v11478
    %v11575 = vpack.c.b16 %v11487, %v11483
    %v11576 = vpack.c.b16 %v11488, %v11484
    %v11577 = vpack.c.b16 %v11489, %v11485
    %v11578 = vpack.c.b16 %v11490, %v11486
    %v11579 = vpack.c.b16 %v11495, %v11491
    %v11580 = vpack.c.b16 %v11496, %v11492
    %v11581 = vpack.c.b16 %v11497, %v11493
    %v11582 = vpack.c.b16 %v11498, %v11494
    %v11583 = vpack.c.b16 %v11503, %v11499
    %v11584 = vpack.c.b16 %v11504, %v11500
    %v11585 = vpack.c.b16 %v11505, %v11501
    %v11586 = vpack.c.b16 %v11506, %v11502
    %v11587 = vpack.c.b16 %v11511, %v11507
    %v11588 = vpack.c.b16 %v11512, %v11508
    %v11589 = vpack.c.b16 %v11513, %v11509
    %v11590 = vpack.c.b16 %v11514, %v11510
    %v11591 = vpack.c.b16 %v11519, %v11515
    %v11592 = vpack.c.b16 %v11520, %v11516
    %v11593 = vpack.c.b16 %v11521, %v11517
    %v11594 = vpack.c.b16 %v11522, %v11518
    %v11595 = vpack.c.b16 %v11527, %v11523
    %v11596 = vpack.c.b16 %v11528, %v11524
    %v11597 = vpack.c.b16 %v11529, %v11525
    %v11598 = vpack.c.b16 %v11530, %v11526
    %v11599 = vpack.c.b16 %v11535, %v11531
    %v11600 = vpack.c.b16 %v11536, %v11532
    %v11601 = vpack.c.b16 %v11537, %v11533
    %v11602 = vpack.c.b16 %v11538, %v11534
    %11667 = vmatpush.bf16.msra.mxu0 %v11567
    %11668 = vmatpush.bf16.msra.mxu0 %v11563
    %11669 = vmatpush.bf16.msra.mxu0 %v11559
    %11670 = vmatpush.bf16.msra.mxu0 %v11555
    %11671 = vmatpush.bf16.msra.mxu0 %v11551
    %11672 = vmatpush.bf16.msra.mxu0 %v11547
    %11673 = vmatpush.bf16.msra.mxu0 %v11543
    %11674 = vmatpush.bf16.msra.mxu0 %v11539
    %11675 = vmatmul.bf16.gmra.mxu0 %v10651
    %v11676 = vpop.f32.mrf.mxu0
    %v11677 = vadd.f32 %v11154, %v11676
    %v11678 = vpop.f32.mrf.mxu0
    %v11679 = vadd.f32 %v11156, %v11678
    %11680 = vmatmul.bf16.gmra.mxu0 %v10653
    %v11681 = vpop.f32.mrf.mxu0
    %v11682 = vadd.f32 %v11159, %v11681
    %v11683 = vpop.f32.mrf.mxu0
    %v11684 = vadd.f32 %v11161, %v11683
    %11685 = vmatmul.bf16.gmra.mxu0 %v10655
    %v11686 = vpop.f32.mrf.mxu0
    %v11687 = vadd.f32 %v11164, %v11686
    %v11688 = vpop.f32.mrf.mxu0
    %v11689 = vadd.f32 %v11166, %v11688
    %11690 = vmatmul.bf16.gmra.mxu0 %v10657
    %v11691 = vpop.f32.mrf.mxu0
    %v11692 = vadd.f32 %v11169, %v11691
    %v11693 = vpop.f32.mrf.mxu0
    %v11694 = vadd.f32 %v11171, %v11693
    %11695 = vdwg.mxu0
    %11696 = vmatpush.bf16.msra.mxu0 %v11599
    %11697 = vmatpush.bf16.msra.mxu0 %v11595
    %11698 = vmatpush.bf16.msra.mxu0 %v11591
    %11699 = vmatpush.bf16.msra.mxu0 %v11587
    %11700 = vmatpush.bf16.msra.mxu0 %v11583
    %11701 = vmatpush.bf16.msra.mxu0 %v11579
    %11702 = vmatpush.bf16.msra.mxu0 %v11575
    %11703 = vmatpush.bf16.msra.mxu0 %v11571
    %11704 = vmatmul.bf16.gmra.mxu0 %v10652
    %v11705 = vpop.f32.mrf.mxu0
    %v11706 = vadd.f32 %v11677, %v11705
    %v11707 = vpop.f32.mrf.mxu0
    %v11708 = vadd.f32 %v11679, %v11707
    %11709 = vmatmul.bf16.gmra.mxu0 %v10654
    %v11710 = vpop.f32.mrf.mxu0
    %v11711 = vadd.f32 %v11682, %v11710
    %v11712 = vpop.f32.mrf.mxu0
    %v11713 = vadd.f32 %v11684, %v11712
    %11714 = vmatmul.bf16.gmra.mxu0 %v10656
    %v11715 = vpop.f32.mrf.mxu0
    %v11716 = vadd.f32 %v11687, %v11715
    %v11717 = vpop.f32.mrf.mxu0
    %v11718 = vadd.f32 %v11689, %v11717
    %11719 = vmatmul.bf16.gmra.mxu0 %v10658
    %v11720 = vpop.f32.mrf.mxu0
    %v11721 = vadd.f32 %v11692, %v11720
    %v11722 = vpop.f32.mrf.mxu0
    %v11723 = vadd.f32 %v11694, %v11722
    %11724 = vdwg.mxu0
    %11725 = vmatpush.bf16.msra.mxu0 %v11568
    %11726 = vmatpush.bf16.msra.mxu0 %v11564
    %11727 = vmatpush.bf16.msra.mxu0 %v11560
    %11728 = vmatpush.bf16.msra.mxu0 %v11556
    %11729 = vmatpush.bf16.msra.mxu0 %v11552
    %11730 = vmatpush.bf16.msra.mxu0 %v11548
    %11731 = vmatpush.bf16.msra.mxu0 %v11544
    %11732 = vmatpush.bf16.msra.mxu0 %v11540
    %11733 = vmatmul.bf16.gmra.mxu0 %v10651
    %v11734 = vpop.f32.mrf.mxu0
    %v11735 = vadd.f32 %v11212, %v11734
    %v11736 = vpop.f32.mrf.mxu0
    %v11737 = vadd.f32 %v11214, %v11736
    %11738 = vmatmul.bf16.gmra.mxu0 %v10653
    %v11739 = vpop.f32.mrf.mxu0
    %v11740 = vadd.f32 %v11217, %v11739
    %v11741 = vpop.f32.mrf.mxu0
    %v11742 = vadd.f32 %v11219, %v11741
    %11743 = vmatmul.bf16.gmra.mxu0 %v10655
    %v11744 = vpop.f32.mrf.mxu0
    %v11745 = vadd.f32 %v11222, %v11744
    %v11746 = vpop.f32.mrf.mxu0
    %v11747 = vadd.f32 %v11224, %v11746
    %11748 = vmatmul.bf16.gmra.mxu0 %v10657
    %v11749 = vpop.f32.mrf.mxu0
    %v11750 = vadd.f32 %v11227, %v11749
    %v11751 = vpop.f32.mrf.mxu0
    %v11752 = vadd.f32 %v11229, %v11751
    %11753 = vdwg.mxu0
    %11754 = vmatpush.bf16.msra.mxu0 %v11600
    %11755 = vmatpush.bf16.msra.mxu0 %v11596
    %11756 = vmatpush.bf16.msra.mxu0 %v11592
    %11757 = vmatpush.bf16.msra.mxu0 %v11588
    %11758 = vmatpush.bf16.msra.mxu0 %v11584
    %11759 = vmatpush.bf16.msra.mxu0 %v11580
    %11760 = vmatpush.bf16.msra.mxu0 %v11576
    %11761 = vmatpush.bf16.msra.mxu0 %v11572
    %11762 = vmatmul.bf16.gmra.mxu0 %v10652
    %v11763 = vpop.f32.mrf.mxu0
    %v11764 = vadd.f32 %v11735, %v11763
    %v11765 = vpop.f32.mrf.mxu0
    %v11766 = vadd.f32 %v11737, %v11765
    %11767 = vmatmul.bf16.gmra.mxu0 %v10654
    %v11768 = vpop.f32.mrf.mxu0
    %v11769 = vadd.f32 %v11740, %v11768
    %v11770 = vpop.f32.mrf.mxu0
    %v11771 = vadd.f32 %v11742, %v11770
    %11772 = vmatmul.bf16.gmra.mxu0 %v10656
    %v11773 = vpop.f32.mrf.mxu0
    %v11774 = vadd.f32 %v11745, %v11773
    %v11775 = vpop.f32.mrf.mxu0
    %v11776 = vadd.f32 %v11747, %v11775
    %11777 = vmatmul.bf16.gmra.mxu0 %v10658
    %v11778 = vpop.f32.mrf.mxu0
    %v11779 = vadd.f32 %v11750, %v11778
    %v11780 = vpop.f32.mrf.mxu0
    %v11781 = vadd.f32 %v11752, %v11780
    %11782 = vdwg.mxu0
    %11783 = vmatpush.bf16.msra.mxu0 %v11569
    %11784 = vmatpush.bf16.msra.mxu0 %v11565
    %11785 = vmatpush.bf16.msra.mxu0 %v11561
    %11786 = vmatpush.bf16.msra.mxu0 %v11557
    %11787 = vmatpush.bf16.msra.mxu0 %v11553
    %11788 = vmatpush.bf16.msra.mxu0 %v11549
    %11789 = vmatpush.bf16.msra.mxu0 %v11545
    %11790 = vmatpush.bf16.msra.mxu0 %v11541
    %11791 = vmatmul.bf16.gmra.mxu0 %v10651
    %v11792 = vpop.f32.mrf.mxu0
    %v11793 = vadd.f32 %v11270, %v11792
    %v11794 = vpop.f32.mrf.mxu0
    %v11795 = vadd.f32 %v11272, %v11794
    %11796 = vmatmul.bf16.gmra.mxu0 %v10653
    %v11797 = vpop.f32.mrf.mxu0
    %v11798 = vadd.f32 %v11275, %v11797
    %v11799 = vpop.f32.mrf.mxu0
    %v11800 = vadd.f32 %v11277, %v11799
    %11801 = vmatmul.bf16.gmra.mxu0 %v10655
    %v11802 = vpop.f32.mrf.mxu0
    %v11803 = vadd.f32 %v11280, %v11802
    %v11804 = vpop.f32.mrf.mxu0
    %v11805 = vadd.f32 %v11282, %v11804
    %11806 = vmatmul.bf16.gmra.mxu0 %v10657
    %v11807 = vpop.f32.mrf.mxu0
    %v11808 = vadd.f32 %v11285, %v11807
    %v11809 = vpop.f32.mrf.mxu0
    %v11810 = vadd.f32 %v11287, %v11809
    %11811 = vdwg.mxu0
    %11812 = vmatpush.bf16.msra.mxu0 %v11601
    %11813 = vmatpush.bf16.msra.mxu0 %v11597
    %11814 = vmatpush.bf16.msra.mxu0 %v11593
    %11815 = vmatpush.bf16.msra.mxu0 %v11589
    %11816 = vmatpush.bf16.msra.mxu0 %v11585
    %11817 = vmatpush.bf16.msra.mxu0 %v11581
    %11818 = vmatpush.bf16.msra.mxu0 %v11577
    %11819 = vmatpush.bf16.msra.mxu0 %v11573
    %11820 = vmatmul.bf16.gmra.mxu0 %v10652
    %v11821 = vpop.f32.mrf.mxu0
    %v11822 = vadd.f32 %v11793, %v11821
    %v11823 = vpop.f32.mrf.mxu0
    %v11824 = vadd.f32 %v11795, %v11823
    %11825 = vmatmul.bf16.gmra.mxu0 %v10654
    %v11826 = vpop.f32.mrf.mxu0
    %v11827 = vadd.f32 %v11798, %v11826
    %v11828 = vpop.f32.mrf.mxu0
    %v11829 = vadd.f32 %v11800, %v11828
    %11830 = vmatmul.bf16.gmra.mxu0 %v10656
    %v11831 = vpop.f32.mrf.mxu0
    %v11832 = vadd.f32 %v11803, %v11831
    %v11833 = vpop.f32.mrf.mxu0
    %v11834 = vadd.f32 %v11805, %v11833
    %11835 = vmatmul.bf16.gmra.mxu0 %v10658
    %v11836 = vpop.f32.mrf.mxu0
    %v11837 = vadd.f32 %v11808, %v11836
    %v11838 = vpop.f32.mrf.mxu0
    %v11839 = vadd.f32 %v11810, %v11838
    %11840 = vdwg.mxu0
    %11841 = vmatpush.bf16.msra.mxu0 %v11570
    %11842 = vmatpush.bf16.msra.mxu0 %v11566
    %11843 = vmatpush.bf16.msra.mxu0 %v11562
    %11844 = vmatpush.bf16.msra.mxu0 %v11558
    %11845 = vmatpush.bf16.msra.mxu0 %v11554
    %11846 = vmatpush.bf16.msra.mxu0 %v11550
    %11847 = vmatpush.bf16.msra.mxu0 %v11546
    %11848 = vmatpush.bf16.msra.mxu0 %v11542
    %11849 = vmatmul.bf16.gmra.mxu0 %v10651
    %v11850 = vpop.f32.mrf.mxu0
    %v11851 = vadd.f32 %v11328, %v11850
    %v11852 = vpop.f32.mrf.mxu0
    %v11853 = vadd.f32 %v11330, %v11852
    %11854 = vmatmul.bf16.gmra.mxu0 %v10653
    %v11855 = vpop.f32.mrf.mxu0
    %v11856 = vadd.f32 %v11333, %v11855
    %v11857 = vpop.f32.mrf.mxu0
    %v11858 = vadd.f32 %v11335, %v11857
    %11859 = vmatmul.bf16.gmra.mxu0 %v10655
    %v11860 = vpop.f32.mrf.mxu0
    %v11861 = vadd.f32 %v11338, %v11860
    %v11862 = vpop.f32.mrf.mxu0
    %v11863 = vadd.f32 %v11340, %v11862
    %11864 = vmatmul.bf16.gmra.mxu0 %v10657
    %v11865 = vpop.f32.mrf.mxu0
    %v11866 = vadd.f32 %v11343, %v11865
    %v11867 = vpop.f32.mrf.mxu0
    %v11868 = vadd.f32 %v11345, %v11867
    %11869 = vdwg.mxu0
    %11870 = vmatpush.bf16.msra.mxu0 %v11602
    %11871 = vmatpush.bf16.msra.mxu0 %v11598
    %11872 = vmatpush.bf16.msra.mxu0 %v11594
    %11873 = vmatpush.bf16.msra.mxu0 %v11590
    %11874 = vmatpush.bf16.msra.mxu0 %v11586
    %11875 = vmatpush.bf16.msra.mxu0 %v11582
    %11876 = vmatpush.bf16.msra.mxu0 %v11578
    %11877 = vmatpush.bf16.msra.mxu0 %v11574
    %11878 = vmatmul.bf16.gmra.mxu0 %v10652
    %v11879 = vpop.f32.mrf.mxu0
    %v11880 = vadd.f32 %v11851, %v11879
    %v11881 = vpop.f32.mrf.mxu0
    %v11882 = vadd.f32 %v11853, %v11881
    %11883 = vmatmul.bf16.gmra.mxu0 %v10654
    %v11884 = vpop.f32.mrf.mxu0
    %v11885 = vadd.f32 %v11856, %v11884
    %v11886 = vpop.f32.mrf.mxu0
    %v11887 = vadd.f32 %v11858, %v11886
    %11888 = vmatmul.bf16.gmra.mxu0 %v10656
    %v11889 = vpop.f32.mrf.mxu0
    %v11890 = vadd.f32 %v11861, %v11889
    %v11891 = vpop.f32.mrf.mxu0
    %v11892 = vadd.f32 %v11863, %v11891
    %11893 = vmatmul.bf16.gmra.mxu0 %v10658
    %v11894 = vpop.f32.mrf.mxu0
    %v11895 = vadd.f32 %v11866, %v11894
    %v11896 = vpop.f32.mrf.mxu0
    %v11897 = vadd.f32 %v11868, %v11896
    %11898 = vdwg.mxu0
    %v11899 = vld [vmem:[%s14] sm:$0xf]
    %v11901 = vperm.slane %v11899, 0
    %v11902 = vperm.slane %v11899, 1
    %v11903 = vperm.slane %v11899, 2
    %v11904 = vperm.slane %v11899, 3
    %v11909 = vadd.f32 %v11706, %v11901
    %v11910 = vadd.f32 %v11764, %v11902
    %v11911 = vadd.f32 %v11822, %v11903
    %v11912 = vadd.f32 %v11880, %v11904
    %v11913 = vadd.f32 %v11708, %v11901
    %v11914 = vadd.f32 %v11766, %v11902
    %v11915 = vadd.f32 %v11824, %v11903
    %v11916 = vadd.f32 %v11882, %v11904
    %v11917 = vadd.f32 %v11711, %v11901
    %v11918 = vadd.f32 %v11769, %v11902
    %v11919 = vadd.f32 %v11827, %v11903
    %v11920 = vadd.f32 %v11885, %v11904
    %v11921 = vadd.f32 %v11713, %v11901
    %v11922 = vadd.f32 %v11771, %v11902
    %v11923 = vadd.f32 %v11829, %v11903
    %v11924 = vadd.f32 %v11887, %v11904
    %v11925 = vadd.f32 %v11716, %v11901
    %v11926 = vadd.f32 %v11774, %v11902
    %v11927 = vadd.f32 %v11832, %v11903
    %v11928 = vadd.f32 %v11890, %v11904
    %v11929 = vadd.f32 %v11718, %v11901
    %v11930 = vadd.f32 %v11776, %v11902
    %v11931 = vadd.f32 %v11834, %v11903
    %v11932 = vadd.f32 %v11892, %v11904
    %v11933 = vadd.f32 %v11721, %v11901
    %v11934 = vadd.f32 %v11779, %v11902
    %v11935 = vadd.f32 %v11837, %v11903
    %v11936 = vadd.f32 %v11895, %v11904
    %v11937 = vadd.f32 %v11723, %v11901
    %v11938 = vadd.f32 %v11781, %v11902
    %v11939 = vadd.f32 %v11839, %v11903
    %v11940 = vadd.f32 %v11897, %v11904
    %11941 = vmax.xlane.f32.xlu0 %v11909
    %v11942 = vpop.xlane.xlu0 %11941
    %11943 = vmax.xlane.f32.xlu0 %v11913
    %v11944 = vpop.xlane.xlu0 %11943
    %11945 = vmax.xlane.f32.xlu0 %v11917
    %v11946 = vpop.xlane.xlu0 %11945
    %11947 = vmax.xlane.f32.xlu0 %v11921
    %v11948 = vpop.xlane.xlu0 %11947
    %11949 = vmax.xlane.f32.xlu0 %v11925
    %v11950 = vpop.xlane.xlu0 %11949
    %11951 = vmax.xlane.f32.xlu0 %v11929
    %v11952 = vpop.xlane.xlu0 %11951
    %11953 = vmax.xlane.f32.xlu0 %v11933
    %v11954 = vpop.xlane.xlu0 %11953
    %11955 = vmax.xlane.f32.xlu0 %v11937
    %v11956 = vpop.xlane.xlu0 %11955
    %v11957 = vsub.f32 %v11909, %v11942
    %v11958 = vsub.f32 %v11913, %v11944
    %v11959 = vsub.f32 %v11917, %v11946
    %v11960 = vsub.f32 %v11921, %v11948
    %v11961 = vsub.f32 %v11925, %v11950
    %v11962 = vsub.f32 %v11929, %v11952
    %v11963 = vsub.f32 %v11933, %v11954
    %v11964 = vsub.f32 %v11937, %v11956
    %v11965 = vmul.f32 %v11957, 1.442695
    %v11966 = vpow.pop %v11965
    %v11967 = vmul.f32 %v11958, 1.442695
    %v11968 = vpow.pop %v11967
    %v11969 = vmul.f32 %v11959, 1.442695
    %v11970 = vpow.pop %v11969
    %v11971 = vmul.f32 %v11960, 1.442695
    %v11972 = vpow.pop %v11971
    %v11973 = vmul.f32 %v11961, 1.442695
    %v11974 = vpow.pop %v11973
    %v11975 = vmul.f32 %v11962, 1.442695
    %v11976 = vpow.pop %v11975
    %v11977 = vmul.f32 %v11963, 1.442695
    %v11978 = vpow.pop %v11977
    %v11979 = vmul.f32 %v11964, 1.442695
    %v11980 = vpow.pop %v11979
    %11981 = vadd.xlane.f32.xlu0 %v11966
    %v11982 = vpop.xlane.xlu0 %11981
    %11983 = vadd.xlane.f32.xlu0 %v11968
    %v11984 = vpop.xlane.xlu0 %11983
    %11985 = vadd.xlane.f32.xlu0 %v11970
    %v11986 = vpop.xlane.xlu0 %11985
    %11987 = vadd.xlane.f32.xlu0 %v11972
    %v11988 = vpop.xlane.xlu0 %11987
    %11989 = vadd.xlane.f32.xlu0 %v11974
    %v11990 = vpop.xlane.xlu0 %11989
    %11991 = vadd.xlane.f32.xlu0 %v11976
    %v11992 = vpop.xlane.xlu0 %11991
    %11993 = vadd.xlane.f32.xlu0 %v11978
    %v11994 = vpop.xlane.xlu0 %11993
    %11995 = vadd.xlane.f32.xlu0 %v11980
    %v11996 = vpop.xlane.xlu0 %11995
    %v11997 = vrcp.pop %v11982
    %v11998 = vrcp.pop %v11984
    %v11999 = vrcp.pop %v11986
    %v12000 = vrcp.pop %v11988
    %v12001 = vrcp.pop %v11990
    %v12002 = vrcp.pop %v11992
    %v12003 = vrcp.pop %v11994
    %v12004 = vrcp.pop %v11996
    %v12005 = vmul.f32 %v11982, %v11997
    %v12006 = vmul.f32 %v11984, %v11998
    %v12007 = vmul.f32 %v11986, %v11999
    %v12008 = vmul.f32 %v11988, %v12000
    %v12009 = vmul.f32 %v11990, %v12001
    %v12010 = vmul.f32 %v11992, %v12002
    %v12011 = vmul.f32 %v11994, %v12003
    %v12012 = vmul.f32 %v11996, %v12004
    %v12013 = vsub.f32 2.0, %v12005
    %v12014 = vsub.f32 2.0, %v12006
    %v12015 = vsub.f32 2.0, %v12007
    %v12016 = vsub.f32 2.0, %v12008
    %v12017 = vsub.f32 2.0, %v12009
    %v12018 = vsub.f32 2.0, %v12010
    %v12019 = vsub.f32 2.0, %v12011
    %v12020 = vsub.f32 2.0, %v12012
    %v12021 = vmul.f32 %v11997, %v12013
    %v12022 = vmul.f32 %v11998, %v12014
    %v12023 = vmul.f32 %v11999, %v12015
    %v12024 = vmul.f32 %v12000, %v12016
    %v12025 = vmul.f32 %v12001, %v12017
    %v12026 = vmul.f32 %v12002, %v12018
    %v12027 = vmul.f32 %v12003, %v12019
    %v12028 = vmul.f32 %v12004, %v12020
    %v12029 = vmul.f32 %v11966, %v12021
    %v12030 = vmul.f32 %v11968, %v12022
    %v12031 = vmul.f32 %v11970, %v12023
    %v12032 = vmul.f32 %v11972, %v12024
    %v12033 = vmul.f32 %v11974, %v12025
    %v12034 = vmul.f32 %v11976, %v12026
    %v12035 = vmul.f32 %v11978, %v12027
    %v12036 = vmul.f32 %v11980, %v12028
    %12037 = vst [vmem:[%s19] sm:$0xff] %v12029
    %12038 = vst [vmem:[%s19 + $0x20] sm:$0xff] %v12030
    %12039 = vst [vmem:[%s19 + $0x40] sm:$0xff] %v12031
    %12040 = vst [vmem:[%s19 + $0x60] sm:$0xff] %v12032
    %12041 = vst [vmem:[%s19 + $0x80] sm:$0xff] %v12033
    %12042 = vst [vmem:[%s19 + $0xa0] sm:$0xff] %v12034
    %12043 = vst [vmem:[%s19 + $0xc0] sm:$0xff] %v12035
    %12044 = vst [vmem:[%s19 + $0xe0] sm:$0xff] %v12036
    %12045 = vmax.xlane.f32.xlu0 %v11910
    %v12046 = vpop.xlane.xlu0 %12045
    %12047 = vmax.xlane.f32.xlu0 %v11914
    %v12048 = vpop.xlane.xlu0 %12047
    %12049 = vmax.xlane.f32.xlu0 %v11918
    %v12050 = vpop.xlane.xlu0 %12049
    %12051 = vmax.xlane.f32.xlu0 %v11922
    %v12052 = vpop.xlane.xlu0 %12051
    %12053 = vmax.xlane.f32.xlu0 %v11926
    %v12054 = vpop.xlane.xlu0 %12053
    %12055 = vmax.xlane.f32.xlu0 %v11930
    %v12056 = vpop.xlane.xlu0 %12055
    %12057 = vmax.xlane.f32.xlu0 %v11934
    %v12058 = vpop.xlane.xlu0 %12057
    %12059 = vmax.xlane.f32.xlu0 %v11938
    %v12060 = vpop.xlane.xlu0 %12059
    %v12061 = vsub.f32 %v11910, %v12046
    %v12062 = vsub.f32 %v11914, %v12048
    %v12063 = vsub.f32 %v11918, %v12050
    %v12064 = vsub.f32 %v11922, %v12052
    %v12065 = vsub.f32 %v11926, %v12054
    %v12066 = vsub.f32 %v11930, %v12056
    %v12067 = vsub.f32 %v11934, %v12058
    %v12068 = vsub.f32 %v11938, %v12060
    %v12069 = vmul.f32 %v12061, 1.442695
    %v12070 = vpow.pop %v12069
    %v12071 = vmul.f32 %v12062, 1.442695
    %v12072 = vpow.pop %v12071
    %v12073 = vmul.f32 %v12063, 1.442695
    %v12074 = vpow.pop %v12073
    %v12075 = vmul.f32 %v12064, 1.442695
    %v12076 = vpow.pop %v12075
    %v12077 = vmul.f32 %v12065, 1.442695
    %v12078 = vpow.pop %v12077
    %v12079 = vmul.f32 %v12066, 1.442695
    %v12080 = vpow.pop %v12079
    %v12081 = vmul.f32 %v12067, 1.442695
    %v12082 = vpow.pop %v12081
    %v12083 = vmul.f32 %v12068, 1.442695
    %v12084 = vpow.pop %v12083
    %12085 = vadd.xlane.f32.xlu0 %v12070
    %v12086 = vpop.xlane.xlu0 %12085
    %12087 = vadd.xlane.f32.xlu0 %v12072
    %v12088 = vpop.xlane.xlu0 %12087
    %12089 = vadd.xlane.f32.xlu0 %v12074
    %v12090 = vpop.xlane.xlu0 %12089
    %12091 = vadd.xlane.f32.xlu0 %v12076
    %v12092 = vpop.xlane.xlu0 %12091
    %12093 = vadd.xlane.f32.xlu0 %v12078
    %v12094 = vpop.xlane.xlu0 %12093
    %12095 = vadd.xlane.f32.xlu0 %v12080
    %v12096 = vpop.xlane.xlu0 %12095
    %12097 = vadd.xlane.f32.xlu0 %v12082
    %v12098 = vpop.xlane.xlu0 %12097
    %12099 = vadd.xlane.f32.xlu0 %v12084
    %v12100 = vpop.xlane.xlu0 %12099
    %v12101 = vrcp.pop %v12086
    %v12102 = vrcp.pop %v12088
    %v12103 = vrcp.pop %v12090
    %v12104 = vrcp.pop %v12092
    %v12105 = vrcp.pop %v12094
    %v12106 = vrcp.pop %v12096
    %v12107 = vrcp.pop %v12098
    %v12108 = vrcp.pop %v12100
    %v12109 = vmul.f32 %v12086, %v12101
    %v12110 = vmul.f32 %v12088, %v12102
    %v12111 = vmul.f32 %v12090, %v12103
    %v12112 = vmul.f32 %v12092, %v12104
    %v12113 = vmul.f32 %v12094, %v12105
    %v12114 = vmul.f32 %v12096, %v12106
    %v12115 = vmul.f32 %v12098, %v12107
    %v12116 = vmul.f32 %v12100, %v12108
    %v12117 = vsub.f32 2.0, %v12109
    %v12118 = vsub.f32 2.0, %v12110
    %v12119 = vsub.f32 2.0, %v12111
    %v12120 = vsub.f32 2.0, %v12112
    %v12121 = vsub.f32 2.0, %v12113
    %v12122 = vsub.f32 2.0, %v12114
    %v12123 = vsub.f32 2.0, %v12115
    %v12124 = vsub.f32 2.0, %v12116
    %v12125 = vmul.f32 %v12101, %v12117
    %v12126 = vmul.f32 %v12102, %v12118
    %v12127 = vmul.f32 %v12103, %v12119
    %v12128 = vmul.f32 %v12104, %v12120
    %v12129 = vmul.f32 %v12105, %v12121
    %v12130 = vmul.f32 %v12106, %v12122
    %v12131 = vmul.f32 %v12107, %v12123
    %v12132 = vmul.f32 %v12108, %v12124
    %v12133 = vmul.f32 %v12070, %v12125
    %v12134 = vmul.f32 %v12072, %v12126
    %v12135 = vmul.f32 %v12074, %v12127
    %v12136 = vmul.f32 %v12076, %v12128
    %v12137 = vmul.f32 %v12078, %v12129
    %v12138 = vmul.f32 %v12080, %v12130
    %v12139 = vmul.f32 %v12082, %v12131
    %v12140 = vmul.f32 %v12084, %v12132
    %12141 = vst [vmem:[%s19 + $0x8] sm:$0xff] %v12133
    %12142 = vst [vmem:[%s19 + $0x28] sm:$0xff] %v12134
    %12143 = vst [vmem:[%s19 + $0x48] sm:$0xff] %v12135
    %12144 = vst [vmem:[%s19 + $0x68] sm:$0xff] %v12136
    %12145 = vst [vmem:[%s19 + $0x88] sm:$0xff] %v12137
    %12146 = vst [vmem:[%s19 + $0xa8] sm:$0xff] %v12138
    %12147 = vst [vmem:[%s19 + $0xc8] sm:$0xff] %v12139
    %12148 = vst [vmem:[%s19 + $0xe8] sm:$0xff] %v12140
    %12149 = vmax.xlane.f32.xlu0 %v11911
    %v12150 = vpop.xlane.xlu0 %12149
    %12151 = vmax.xlane.f32.xlu0 %v11915
    %v12152 = vpop.xlane.xlu0 %12151
    %12153 = vmax.xlane.f32.xlu0 %v11919
    %v12154 = vpop.xlane.xlu0 %12153
    %12155 = vmax.xlane.f32.xlu0 %v11923
    %v12156 = vpop.xlane.xlu0 %12155
    %12157 = vmax.xlane.f32.xlu0 %v11927
    %v12158 = vpop.xlane.xlu0 %12157
    %12159 = vmax.xlane.f32.xlu0 %v11931
    %v12160 = vpop.xlane.xlu0 %12159
    %12161 = vmax.xlane.f32.xlu0 %v11935
    %v12162 = vpop.xlane.xlu0 %12161
    %12163 = vmax.xlane.f32.xlu0 %v11939
    %v12164 = vpop.xlane.xlu0 %12163
    %v12165 = vsub.f32 %v11911, %v12150
    %v12166 = vsub.f32 %v11915, %v12152
    %v12167 = vsub.f32 %v11919, %v12154
    %v12168 = vsub.f32 %v11923, %v12156
    %v12169 = vsub.f32 %v11927, %v12158
    %v12170 = vsub.f32 %v11931, %v12160
    %v12171 = vsub.f32 %v11935, %v12162
    %v12172 = vsub.f32 %v11939, %v12164
    %v12173 = vmul.f32 %v12165, 1.442695
    %v12174 = vpow.pop %v12173
    %v12175 = vmul.f32 %v12166, 1.442695
    %v12176 = vpow.pop %v12175
    %v12177 = vmul.f32 %v12167, 1.442695
    %v12178 = vpow.pop %v12177
    %v12179 = vmul.f32 %v12168, 1.442695
    %v12180 = vpow.pop %v12179
    %v12181 = vmul.f32 %v12169, 1.442695
    %v12182 = vpow.pop %v12181
    %v12183 = vmul.f32 %v12170, 1.442695
    %v12184 = vpow.pop %v12183
    %v12185 = vmul.f32 %v12171, 1.442695
    %v12186 = vpow.pop %v12185
    %v12187 = vmul.f32 %v12172, 1.442695
    %v12188 = vpow.pop %v12187
    %12189 = vadd.xlane.f32.xlu0 %v12174
    %v12190 = vpop.xlane.xlu0 %12189
    %12191 = vadd.xlane.f32.xlu0 %v12176
    %v12192 = vpop.xlane.xlu0 %12191
    %12193 = vadd.xlane.f32.xlu0 %v12178
    %v12194 = vpop.xlane.xlu0 %12193
    %12195 = vadd.xlane.f32.xlu0 %v12180
    %v12196 = vpop.xlane.xlu0 %12195
    %12197 = vadd.xlane.f32.xlu0 %v12182
    %v12198 = vpop.xlane.xlu0 %12197
    %12199 = vadd.xlane.f32.xlu0 %v12184
    %v12200 = vpop.xlane.xlu0 %12199
    %12201 = vadd.xlane.f32.xlu0 %v12186
    %v12202 = vpop.xlane.xlu0 %12201
    %12203 = vadd.xlane.f32.xlu0 %v12188
    %v12204 = vpop.xlane.xlu0 %12203
    %v12205 = vrcp.pop %v12190
    %v12206 = vrcp.pop %v12192
    %v12207 = vrcp.pop %v12194
    %v12208 = vrcp.pop %v12196
    %v12209 = vrcp.pop %v12198
    %v12210 = vrcp.pop %v12200
    %v12211 = vrcp.pop %v12202
    %v12212 = vrcp.pop %v12204
    %v12213 = vmul.f32 %v12190, %v12205
    %v12214 = vmul.f32 %v12192, %v12206
    %v12215 = vmul.f32 %v12194, %v12207
    %v12216 = vmul.f32 %v12196, %v12208
    %v12217 = vmul.f32 %v12198, %v12209
    %v12218 = vmul.f32 %v12200, %v12210
    %v12219 = vmul.f32 %v12202, %v12211
    %v12220 = vmul.f32 %v12204, %v12212
    %v12221 = vsub.f32 2.0, %v12213
    %v12222 = vsub.f32 2.0, %v12214
    %v12223 = vsub.f32 2.0, %v12215
    %v12224 = vsub.f32 2.0, %v12216
    %v12225 = vsub.f32 2.0, %v12217
    %v12226 = vsub.f32 2.0, %v12218
    %v12227 = vsub.f32 2.0, %v12219
    %v12228 = vsub.f32 2.0, %v12220
    %v12229 = vmul.f32 %v12205, %v12221
    %v12230 = vmul.f32 %v12206, %v12222
    %v12231 = vmul.f32 %v12207, %v12223
    %v12232 = vmul.f32 %v12208, %v12224
    %v12233 = vmul.f32 %v12209, %v12225
    %v12234 = vmul.f32 %v12210, %v12226
    %v12235 = vmul.f32 %v12211, %v12227
    %v12236 = vmul.f32 %v12212, %v12228
    %v12237 = vmul.f32 %v12174, %v12229
    %v12238 = vmul.f32 %v12176, %v12230
    %v12239 = vmul.f32 %v12178, %v12231
    %v12240 = vmul.f32 %v12180, %v12232
    %v12241 = vmul.f32 %v12182, %v12233
    %v12242 = vmul.f32 %v12184, %v12234
    %v12243 = vmul.f32 %v12186, %v12235
    %v12244 = vmul.f32 %v12188, %v12236
    %12245 = vst [vmem:[%s19 + $0x10] sm:$0xff] %v12237
    %12246 = vst [vmem:[%s19 + $0x30] sm:$0xff] %v12238
    %12247 = vst [vmem:[%s19 + $0x50] sm:$0xff] %v12239
    %12248 = vst [vmem:[%s19 + $0x70] sm:$0xff] %v12240
    %12249 = vst [vmem:[%s19 + $0x90] sm:$0xff] %v12241
    %12250 = vst [vmem:[%s19 + $0xb0] sm:$0xff] %v12242
    %12251 = vst [vmem:[%s19 + $0xd0] sm:$0xff] %v12243
    %12252 = vst [vmem:[%s19 + $0xf0] sm:$0xff] %v12244
    %12253 = vmax.xlane.f32.xlu0 %v11912
    %v12254 = vpop.xlane.xlu0 %12253
    %12255 = vmax.xlane.f32.xlu0 %v11916
    %v12256 = vpop.xlane.xlu0 %12255
    %12257 = vmax.xlane.f32.xlu0 %v11920
    %v12258 = vpop.xlane.xlu0 %12257
    %12259 = vmax.xlane.f32.xlu0 %v11924
    %v12260 = vpop.xlane.xlu0 %12259
    %12261 = vmax.xlane.f32.xlu0 %v11928
    %v12262 = vpop.xlane.xlu0 %12261
    %12263 = vmax.xlane.f32.xlu0 %v11932
    %v12264 = vpop.xlane.xlu0 %12263
    %12265 = vmax.xlane.f32.xlu0 %v11936
    %v12266 = vpop.xlane.xlu0 %12265
    %12267 = vmax.xlane.f32.xlu0 %v11940
    %v12268 = vpop.xlane.xlu0 %12267
    %v12269 = vsub.f32 %v11912, %v12254
    %v12270 = vsub.f32 %v11916, %v12256
    %v12271 = vsub.f32 %v11920, %v12258
    %v12272 = vsub.f32 %v11924, %v12260
    %v12273 = vsub.f32 %v11928, %v12262
    %v12274 = vsub.f32 %v11932, %v12264
    %v12275 = vsub.f32 %v11936, %v12266
    %v12276 = vsub.f32 %v11940, %v12268
    %v12277 = vmul.f32 %v12269, 1.442695
    %v12278 = vpow.pop %v12277
    %v12279 = vmul.f32 %v12270, 1.442695
    %v12280 = vpow.pop %v12279
    %v12281 = vmul.f32 %v12271, 1.442695
    %v12282 = vpow.pop %v12281
    %v12283 = vmul.f32 %v12272, 1.442695
    %v12284 = vpow.pop %v12283
    %v12285 = vmul.f32 %v12273, 1.442695
    %v12286 = vpow.pop %v12285
    %v12287 = vmul.f32 %v12274, 1.442695
    %v12288 = vpow.pop %v12287
    %v12289 = vmul.f32 %v12275, 1.442695
    %v12290 = vpow.pop %v12289
    %v12291 = vmul.f32 %v12276, 1.442695
    %v12292 = vpow.pop %v12291
    %12293 = vadd.xlane.f32.xlu0 %v12278
    %v12294 = vpop.xlane.xlu0 %12293
    %12295 = vadd.xlane.f32.xlu0 %v12280
    %v12296 = vpop.xlane.xlu0 %12295
    %12297 = vadd.xlane.f32.xlu0 %v12282
    %v12298 = vpop.xlane.xlu0 %12297
    %12299 = vadd.xlane.f32.xlu0 %v12284
    %v12300 = vpop.xlane.xlu0 %12299
    %12301 = vadd.xlane.f32.xlu0 %v12286
    %v12302 = vpop.xlane.xlu0 %12301
    %12303 = vadd.xlane.f32.xlu0 %v12288
    %v12304 = vpop.xlane.xlu0 %12303
    %12305 = vadd.xlane.f32.xlu0 %v12290
    %v12306 = vpop.xlane.xlu0 %12305
    %12307 = vadd.xlane.f32.xlu0 %v12292
    %v12308 = vpop.xlane.xlu0 %12307
    %v12309 = vrcp.pop %v12294
    %v12310 = vrcp.pop %v12296
    %v12311 = vrcp.pop %v12298
    %v12312 = vrcp.pop %v12300
    %v12313 = vrcp.pop %v12302
    %v12314 = vrcp.pop %v12304
    %v12315 = vrcp.pop %v12306
    %v12316 = vrcp.pop %v12308
    %v12317 = vmul.f32 %v12294, %v12309
    %v12318 = vmul.f32 %v12296, %v12310
    %v12319 = vmul.f32 %v12298, %v12311
    %v12320 = vmul.f32 %v12300, %v12312
    %v12321 = vmul.f32 %v12302, %v12313
    %v12322 = vmul.f32 %v12304, %v12314
    %v12323 = vmul.f32 %v12306, %v12315
    %v12324 = vmul.f32 %v12308, %v12316
    %v12325 = vsub.f32 2.0, %v12317
    %v12326 = vsub.f32 2.0, %v12318
    %v12327 = vsub.f32 2.0, %v12319
    %v12328 = vsub.f32 2.0, %v12320
    %v12329 = vsub.f32 2.0, %v12321
    %v12330 = vsub.f32 2.0, %v12322
    %v12331 = vsub.f32 2.0, %v12323
    %v12332 = vsub.f32 2.0, %v12324
    %v12333 = vmul.f32 %v12309, %v12325
    %v12334 = vmul.f32 %v12310, %v12326
    %v12335 = vmul.f32 %v12311, %v12327
    %v12336 = vmul.f32 %v12312, %v12328
    %v12337 = vmul.f32 %v12313, %v12329
    %v12338 = vmul.f32 %v12314, %v12330
    %v12339 = vmul.f32 %v12315, %v12331
    %v12340 = vmul.f32 %v12316, %v12332
    %v12341 = vmul.f32 %v12278, %v12333
    %v12342 = vmul.f32 %v12280, %v12334
    %v12343 = vmul.f32 %v12282, %v12335
    %v12344 = vmul.f32 %v12284, %v12336
    %v12345 = vmul.f32 %v12286, %v12337
    %v12346 = vmul.f32 %v12288, %v12338
    %v12347 = vmul.f32 %v12290, %v12339
    %v12348 = vmul.f32 %v12292, %v12340
    %12349 = vst [vmem:[%s19 + $0x18] sm:$0xff] %v12341
    %12350 = vst [vmem:[%s19 + $0x38] sm:$0xff] %v12342
    %12351 = vst [vmem:[%s19 + $0x58] sm:$0xff] %v12343
    %12352 = vst [vmem:[%s19 + $0x78] sm:$0xff] %v12344
    %12353 = vst [vmem:[%s19 + $0x98] sm:$0xff] %v12345
    %12354 = vst [vmem:[%s19 + $0xb8] sm:$0xff] %v12346
    %12355 = vst [vmem:[%s19 + $0xd8] sm:$0xff] %v12347
    %12356 = vst [vmem:[%s19 + $0xf8] sm:$0xff] %v12348
    // Predicated region
    $region86: #{rdqn_lstm_forward.1} parent=1 // pred_check
      _
    $region87: #{rdqn_lstm_forward.1} parent=1 // pred_check_branch
      %12358 = sbr.rel (0) target = $region89
    $region88: #{rdqn_lstm_forward.1} parent=1 // pred_region
      _
    $region89: #{rdqn_lstm_forward.1} parent=1 // pred_fallthru
      _
    // Predicated region
    $region90: #{rdqn_lstm_forward.1} parent=1 // pred_check
      _
    $region91: #{rdqn_lstm_forward.1} parent=1 // pred_check_branch
      %12360 = sbr.rel (0) target = $region93
    $region92: #{rdqn_lstm_forward.1} parent=1 // pred_region
      _
    $region93: #{rdqn_lstm_forward.1} parent=1 // pred_fallthru
      _
    // Predicated region
    $region94: #{rdqn_lstm_forward.1} parent=1 // pred_check
      _
    $region95: #{rdqn_lstm_forward.1} parent=1 // pred_check_branch
      %12362 = sbr.rel (0) target = $region97
    $region96: #{rdqn_lstm_forward.1} parent=1 // pred_region
      _
    $region97: #{rdqn_lstm_forward.1} parent=1 // pred_fallthru
      _
    // Predicated region
    $region98: #{rdqn_lstm_forward.1} parent=1 // pred_check
      _
    $region99: #{rdqn_lstm_forward.1} parent=1 // pred_check_branch
      %12364 = sbr.rel (0) target = $region101
    $region100: #{rdqn_lstm_forward.1} parent=1 // pred_region
      _
    $region101: #{rdqn_lstm_forward.1} parent=1 // pred_fallthru
      _
    // Predicated region
    $region102: #{rdqn_lstm_forward.1} parent=1 // pred_check
      _
    $region103: #{rdqn_lstm_forward.1} parent=1 // pred_check_branch
      %12366 = sbr.rel (0) target = $region105
    $region104: #{rdqn_lstm_forward.1} parent=1 // pred_region
      _
    $region105: #{rdqn_lstm_forward.1} parent=1 // pred_fallthru
      _
    // Predicated region
    $region106: #{rdqn_lstm_forward.1} parent=1 // pred_check
      _
    $region107: #{rdqn_lstm_forward.1} parent=1 // pred_check_branch
      %12368 = sbr.rel (0) target = $region109
    $region108: #{rdqn_lstm_forward.1} parent=1 // pred_region
      _
    $region109: #{rdqn_lstm_forward.1} parent=1 // pred_fallthru
      _
    %12369 = vsyncpa [#allocation9], 1
    %12370 = vsyncpa [#allocation11], 1
  %12371 = vsyncmov [#allocation7]
  %s12372 = vpop.sfrf %12371
  %p12373 = scmp.eq.s32.totalorder %s12372, 0
  %p12374 = pneg %p12373
  %12376 = shalt.err (%p12374)
  %s12377 = scalar_lea.sflag [#allocation7], 1
  %12378 = vsyncmov %s12377
  %s12379 = vpop.sfrf %12378
  %p12380 = scmp.eq.s32.totalorder %s12379, 0
  %p12381 = pneg %p12380
  %12383 = shalt.err (%p12381)
  %s12384 = scalar_lea.sflag [#allocation7], 2
  %12385 = vsyncmov %s12384
  %s12386 = vpop.sfrf %12385
  %p12387 = scmp.eq.s32.totalorder %s12386, 0
  %p12388 = pneg %p12387
  %12390 = shalt.err (%p12388)
  %s12391 = scalar_lea.sflag [#allocation7], 3
  %12392 = vsyncmov %s12391
  %s12393 = vpop.sfrf %12392
  %p12394 = scmp.eq.s32.totalorder %s12393, 0
  %p12395 = pneg %p12394
  %12397 = shalt.err (%p12395)

</llo_original>
